<compile_context>
chip_gen: v5e
topology: v5e:2x2
jax: 0.10.0
libtpu: 0.0.40
codegen_flags: <defaults>
</compile_context>

<pallas_src>
import functools

import jax
import jax.numpy as jnp
from jax.experimental import pallas as pl
from jax.experimental.pallas import tpu as pltpu


# ---------------------------------------------------------------------------
# Small helpers
# ---------------------------------------------------------------------------

def _round_up(x, m):
    return ((x + m - 1) // m) * m


def _largest_divisor_leq(n, cap):
    d = min(n, cap)
    while n % d:
        d -= 1
    return d


def _phase_flat(x, kh, kw, stride, pad, pad_value):
    """(N, H, W, C) -> (N, stride*stride, L, C) phase-decomposed, row-flattened layout.

    After this 1x-sized relayout (a reshape only for stride-1 convs), every
    conv/pool tap (dy, dx) is a contiguous row slice of one phase plane:
        tap value at output (ho, wo) == phases[n, p, off + ho*Wq + wo, :]
    with p = (dy%s)*s + (dx%s), off = (dy//s)*Wq + (dx//s).
    Columns wo in [Wo, Wq) of the kernel output are garbage and sliced off later.
    """
    n, h, w, c = x.shape
    s = stride
    ho = (h + 2 * pad - kh) // s + 1
    wo = (w + 2 * pad - kw) // s + 1
    hq = (kh - 1) // s + ho
    wq = (kw - 1) // s + wo
    hq_pad = hq + (1 if (kw - 1) // s > 0 else 0)  # slack row for flat-offset overrun
    hp, wp = s * hq_pad, s * wq
    pb = max(0, hp - (h + pad))
    pr = max(0, wp - (w + pad))
    xp = jnp.pad(x, ((0, 0), (pad, pb), (pad, pr), (0, 0)),
                 constant_values=pad_value)[:, :hp, :wp, :]
    if s == 1:
        ph = xp.reshape(n, 1, hq_pad * wq, c)
    else:
        ph = xp.reshape(n, hq_pad, s, wq, s, c).transpose(0, 2, 4, 1, 3, 5)
        ph = ph.reshape(n, s * s, hq_pad * wq, c)
    return ph, ho, wo, wq


def _taps(kh, kw, stride, wq):
    return tuple(((dy % stride) * stride + (dx % stride),
                  (dy // stride) * wq + (dx // stride))
                 for dy in range(kh) for dx in range(kw))


def _fold_bn(bn, c, cpad, eps=1e-5):
    """Inference BN -> per-channel (scale, shift) rows, padded to cpad lanes."""
    if bn is None:
        sc = jnp.ones((cpad,), jnp.float32)
        sh = jnp.zeros((cpad,), jnp.float32)
    else:
        sc = bn["gamma"] / jnp.sqrt(bn["var"] + eps)
        sh = bn["beta"] - bn["mean"] * sc
        if cpad > c:
            sc = jnp.pad(sc, (0, cpad - c), constant_values=1.0)
            sh = jnp.pad(sh, (0, cpad - c))
    return (sc.reshape(1, cpad).astype(jnp.float32),
            sh.reshape(1, cpad).astype(jnp.float32))


# ---------------------------------------------------------------------------
# Fused conv (+ optional pre/post BN + ReLU) kernel
# ---------------------------------------------------------------------------

def _conv_bn_kernel(x_ref, w_ref, ps_ref, pb_ref, qs_ref, qb_ref, o_ref, *,
                    taps, ma, pre, pre_relu, post, post_relu):
    # x_ref : (1, P, L, Cin)      bf16  phase-flattened activation (one batch elem)
    # w_ref : (KH*KW, Cin, Opad)  bf16
    # ps/pb : (1, Cin)  f32  pre-conv BN scale/shift  (BN -> ReLU -> Conv fusion)
    # qs/qb : (1, Opad) f32  post-conv BN scale/shift (Conv -> BN -> ReLU fusion)
    # o_ref : (1, MA, Opad)       bf16  lane-dense output slab (MA = Ho*Wq)
    opad = o_ref.shape[-1]
    acc = jnp.zeros((ma, opad), jnp.float32)
    for t, (p, off) in enumerate(taps):
        a = x_ref[0, p, pl.ds(off, ma), :]                  # (MA, Cin) bf16
        if pre:                                             # fused BN+ReLU prologue (f32)
            a = a.astype(jnp.float32) * ps_ref[...] + pb_ref[...]
            if pre_relu:
                a = jnp.maximum(a, 0.0)
            a = a.astype(jnp.bfloat16)
        acc = acc + jnp.dot(a, w_ref[t], preferred_element_type=jnp.float32)
    y = acc
    if post:                                                # fused BN+ReLU epilogue (f32)
        y = y * qs_ref[...] + qb_ref[...]
        if post_relu:
            y = jnp.maximum(y, 0.0)
    o_ref[0, :, :] = y.astype(o_ref.dtype)


def conv_bn_act(x, w, stride, pad, pre_bn=None, pre_relu=False,
                post_bn=None, post_relu=False):
    """x: (N, H, W, Cin) bf16, w: (O, Cin, KH, KW) f32 -> (N, Ho, Wo, O) bf16."""
    n, h, wd, cin = x.shape
    o, cin2, kh, kw = w.shape
    assert cin2 == cin
    # pre-BN fusion is only used on unpadded (1x1) convs so zero padding stays exact
    assert pre_bn is None or pad == 0

    ph, ho, wo, wq = _phase_flat(x, kh, kw, stride, pad, 0.0)
    p_dim, l_dim = ph.shape[1], ph.shape[2]
    ma = ho * wq
    opad = _round_up(o, 128)                 # lane-dense output -> unmasked stores

    wt = jnp.transpose(w, (2, 3, 1, 0)).reshape(kh * kw, cin, o)
    wt = jnp.pad(wt, ((0, 0), (0, 0), (0, opad - o))).astype(jnp.bfloat16)

    ps, pb = _fold_bn(pre_bn, cin, cin)
    qs, qb = _fold_bn(post_bn, o, opad)

    taps = _taps(kh, kw, stride, wq)
    kernel = functools.partial(
        _conv_bn_kernel, taps=taps, ma=ma,
        pre=pre_bn is not None, pre_relu=pre_relu,
        post=post_bn is not None, post_relu=post_relu)

    flops = 2 * n * ma * cin * opad * kh * kw
    bytes_accessed = (ph.size * ph.dtype.itemsize
                      + wt.size * wt.dtype.itemsize
                      + n * ma * opad * 2)

    # Grid over batch ("parallel" -> megacore sharding).  K (=Cin) is tiny here;
    # at real densenet161 widths a K/row-tile grid axis with a pl.when-gated
    # accumulator would bound the VMEM working set (see scratch pattern below).
    out = pl.pallas_call(
        kernel,
        out_shape=jax.ShapeDtypeStruct((n, ma, opad), jnp.bfloat16),
        grid=(n,),
        in_specs=[
            pl.BlockSpec((1, p_dim, l_dim, cin), lambda i: (i, 0, 0, 0)),
            pl.BlockSpec((kh * kw, cin, opad), lambda i: (0, 0, 0)),
            pl.BlockSpec((1, cin), lambda i: (0, 0)),
            pl.BlockSpec((1, cin), lambda i: (0, 0)),
            pl.BlockSpec((1, opad), lambda i: (0, 0)),
            pl.BlockSpec((1, opad), lambda i: (0, 0)),
        ],
        out_specs=pl.BlockSpec((1, ma, opad), lambda i: (i, 0, 0)),
        compiler_params=pltpu.CompilerParams(
            dimension_semantics=("parallel",),
            vmem_limit_bytes=32 * 1024 * 1024),
        cost_estimate=pl.CostEstimate(flops=flops, transcendentals=0,
                                      bytes_accessed=bytes_accessed),
    )(ph, wt, ps, pb, qs, qb)

    # Drop garbage columns (wq -> wo) and channel padding (opad -> o).
    return out.reshape(n, ho, wq, opad)[:, :, :wo, :o]


# ---------------------------------------------------------------------------
# Pooling kernel (max / mean) over the same phase-flattened layout
# ---------------------------------------------------------------------------

def _pool_kernel(x_ref, o_ref, *, taps, ma, op):
    acc = None
    for p, off in taps:
        v = x_ref[0, p, pl.ds(off, ma), :]
        if op == "max":
            acc = v if acc is None else jnp.maximum(acc, v)
        else:
            v = v.astype(jnp.float32)
            acc = v if acc is None else acc + v
    if op == "mean":
        acc = acc * (1.0 / len(taps))
    o_ref[0, :, :] = acc.astype(o_ref.dtype)


def pool2d(x, k, stride, pad, op):
    n, h, w, c = x.shape
    pad_value = float("-inf") if op == "max" else 0.0
    ph, ho, wo, wq = _phase_flat(x, k, k, stride, pad, pad_value)
    p_dim, l_dim = ph.shape[1], ph.shape[2]
    ma = ho * wq
    taps = _taps(k, k, stride, wq)
    out = pl.pallas_call(
        functools.partial(_pool_kernel, taps=taps, ma=ma, op=op),
        out_shape=jax.ShapeDtypeStruct((n, ma, c), x.dtype),
        grid=(n,),
        in_specs=[pl.BlockSpec((1, p_dim, l_dim, c), lambda i: (i, 0, 0, 0))],
        out_specs=pl.BlockSpec((1, ma, c), lambda i: (i, 0, 0)),
        compiler_params=pltpu.CompilerParams(dimension_semantics=("parallel",)),
    )(ph)
    return out.reshape(n, ho, wq, c)[:, :, :wo, :]


# ---------------------------------------------------------------------------
# Fused norm5 (inference BN affine) + AdaptiveAvgPool2d(1)
# ---------------------------------------------------------------------------

def _bn_gap_kernel(x_ref, s_ref, b_ref, o_ref, acc_ref, *, inv_count):
    @pl.when(pl.program_id(0) == 0)
    def _():
        acc_ref[...] = jnp.zeros_like(acc_ref)

    acc_ref[...] += jnp.sum(x_ref[...].astype(jnp.float32), axis=1)

    @pl.when(pl.program_id(0) == pl.num_programs(0) - 1)
    def _():
        mean = acc_ref[...] * inv_count
        # BN affine commutes with the mean, so applying it once to the mean is exact.
        o_ref[...] = (mean * s_ref[...] + b_ref[...]).astype(o_ref.dtype)


def bn_global_avg_pool(x, bn, eps=1e-5):
    n, h, w, c = x.shape
    hw = h * w
    xf = x.reshape(n, hw, c)
    sc = (bn["gamma"] / jnp.sqrt(bn["var"] + eps)).astype(jnp.float32)
    sh = (bn["beta"] - bn["mean"] * sc).astype(jnp.float32)
    thw = _largest_divisor_leq(hw, 512)
    return pl.pallas_call(
        functools.partial(_bn_gap_kernel, inv_count=1.0 / hw),
        out_shape=jax.ShapeDtypeStruct((n, c), jnp.float32),
        grid=(hw // thw,),
        in_specs=[
            pl.BlockSpec((n, thw, c), lambda i: (0, i, 0)),
            pl.BlockSpec((1, c), lambda i: (0, 0)),
            pl.BlockSpec((1, c), lambda i: (0, 0)),
        ],
        out_specs=pl.BlockSpec((n, c), lambda i: (0, 0)),
        scratch_shapes=[pltpu.VMEM((n, c), jnp.float32)],
        compiler_params=pltpu.CompilerParams(dimension_semantics=("arbitrary",)),
    )(xf, sc.reshape(1, c), sh.reshape(1, c))


# ---------------------------------------------------------------------------
# Deterministic parameter init (synthetic stand-ins for pretrained weights)
# ---------------------------------------------------------------------------

def _init_bn(key, c):
    k1, k2, k3, k4 = jax.random.split(key, 4)
    return dict(
        gamma=(1.0 + 0.1 * jax.random.normal(k1, (c,))).astype(jnp.float32),
        beta=(0.05 * jax.random.normal(k2, (c,))).astype(jnp.float32),
        mean=(0.1 * jax.random.normal(k3, (c,))).astype(jnp.float32),
        var=(1.0 + 0.1 * jax.random.uniform(k4, (c,))).astype(jnp.float32),
    )


def _init_conv(key, o, i, kh, kw):
    fan_in = i * kh * kw
    w = jax.random.normal(key, (o, i, kh, kw)) * jnp.sqrt(2.0 / fan_in)
    return w.astype(jnp.float32)


def init_encoder_params(key, in_channels, num_init_features=16, growth_rate=8,
                        bn_size=4, block_config=(2, 2)):
    keys = iter(jax.random.split(key, 256))
    params = {}
    params["conv0_w"] = _init_conv(next(keys), num_init_features, in_channels, 7, 7)
    params["norm0"] = _init_bn(next(keys), num_init_features)

    blocks = []
    c = num_init_features
    for bi, n_layers in enumerate(block_config):
        layers = []
        for _ in range(n_layers):
            lp = dict(
                norm1=_init_bn(next(keys), c),
                conv1_w=_init_conv(next(keys), bn_size * growth_rate, c, 1, 1),
                norm2=_init_bn(next(keys), bn_size * growth_rate),
                conv2_w=_init_conv(next(keys), growth_rate, bn_size * growth_rate, 3, 3),
            )
            layers.append(lp)
            c += growth_rate
        block = {"layers": layers}
        if bi != len(block_config) - 1:
            c_out = c // 2  # DenseNet transition compression 0.5
            block["transition"] = dict(
                norm=_init_bn(next(keys), c),
                conv_w=_init_conv(next(keys), c_out, c, 1, 1),
            )
            c = c_out
        blocks.append(block)
    params["blocks"] = blocks
    params["norm5"] = _init_bn(next(keys), c)
    params["out_size"] = c
    return params


# ---------------------------------------------------------------------------
# Forward pass (torchvision DenseNet `features` Sequential + AdaptiveAvgPool2d(1))
# ---------------------------------------------------------------------------

def conv_encoder_forward(x_nchw, params):
    x = jnp.transpose(x_nchw, (0, 2, 3, 1)).astype(jnp.bfloat16)     # NCHW -> NHWC bf16

    # conv0 + norm0 + relu0 fused (Conv -> BN -> ReLU epilogue)
    x = conv_bn_act(x, params["conv0_w"], stride=2, pad=3,
                    post_bn=params["norm0"], post_relu=True)
    # pool0: MaxPool2d(3, stride=2, padding=1)
    x = pool2d(x, 3, 2, 1, "max")

    for block in params["blocks"]:
        for lp in block["layers"]:
            # bn1 + relu + conv1(1x1) + bn2 + relu fused into one kernel
            y = conv_bn_act(x, lp["conv1_w"], stride=1, pad=0,
                            pre_bn=lp["norm1"], pre_relu=True,
                            post_bn=lp["norm2"], post_relu=True)
            # conv2 (3x3, pad=1)
            y = conv_bn_act(y, lp["conv2_w"], stride=1, pad=1)
            x = jnp.concatenate([x, y], axis=-1)
        if "transition" in block:
            tp = block["transition"]
            # bn + relu + conv(1x1) fused, then AvgPool2d(2, 2)
            y = conv_bn_act(x, tp["conv_w"], stride=1, pad=0,
                            pre_bn=tp["norm"], pre_relu=True)
            x = pool2d(y, 2, 2, 0, "mean")

    # norm5 + AdaptiveAvgPool2d(1) fused
    feats = bn_global_avg_pool(x, params["norm5"])                   # (N, C) f32
    n, c = feats.shape
    return feats.reshape(n, c, 1, 1)                                 # PyTorch-style output


# ---------------------------------------------------------------------------
# Main
# ---------------------------------------------------------------------------

if __name__ == "__main__":
    key = jax.random.PRNGKey(0)
    k_x, k_p = jax.random.split(key)

    channels = 4
    x = jax.random.normal(k_x, (2, channels, 16, 16), dtype=jnp.float32)  # NCHW input

    params = init_encoder_params(k_p, in_channels=channels)

    fwd = jax.jit(lambda inp: conv_encoder_forward(inp, params))
    out = jax.block_until_ready(fwd(x))

    assert out.shape == (2, params["out_size"], 1, 1), out.shape
    assert jnp.all(jnp.isfinite(out))
    print("KERNEL_OK")
</pallas_src>

<mosaic_0001>
module attributes {stable_mosaic.version = 11 : i64} {
  func.func @_conv_bn_kernel(%arg0: i32, %arg1: memref<1x4x132x4xbf16, #tpu.memory_space<vmem>>, %arg2: memref<49x4x128xbf16, #tpu.memory_space<vmem>>, %arg3: memref<1x4xf32, #tpu.memory_space<vmem>>, %arg4: memref<1x4xf32, #tpu.memory_space<vmem>>, %arg5: memref<1x128xf32, #tpu.memory_space<vmem>>, %arg6: memref<1x128xf32, #tpu.memory_space<vmem>>, %arg7: memref<1x88x128xbf16, #tpu.memory_space<vmem>>) attributes {dimension_semantics = [#tpu.dimension_semantics<parallel>], iteration_bounds = array<i64: 2>, scalar_prefetch = 0 : i64, scratch_operands = 0 : i64, tpu.core_type = #tpu.core_type<tc>, window_params = [{transform_indices = @transform_0, window_bounds = array<i64: 1, 4, 132, 4>}, {pipeline_mode = #tpu.pipeline_mode<synchronous>, transform_indices = @transform_1, window_bounds = array<i64: 49, 4, 128>}, {pipeline_mode = #tpu.pipeline_mode<synchronous>, transform_indices = @transform_2, window_bounds = array<i64: 1, 4>}, {pipeline_mode = #tpu.pipeline_mode<synchronous>, transform_indices = @transform_3, window_bounds = array<i64: 1, 4>}, {pipeline_mode = #tpu.pipeline_mode<synchronous>, transform_indices = @transform_4, window_bounds = array<i64: 1, 128>}, {pipeline_mode = #tpu.pipeline_mode<synchronous>, transform_indices = @transform_5, window_bounds = array<i64: 1, 128>}, {transform_indices = @transform_6, window_bounds = array<i64: 1, 88, 128>}]} {
    %cst = arith.constant 0.000000e+00 : f32
    %0 = vector.broadcast %cst : f32 to vector<88x128xf32>
    %c0 = arith.constant 0 : index
    %c0_0 = arith.constant 0 : index
    %c0_1 = arith.constant 0 : index
    %c0_2 = arith.constant 0 : index
    %1 = vector.load %arg1[%c0, %c0_0, %c0_1, %c0_2] : memref<1x4x132x4xbf16, #tpu.memory_space<vmem>>, vector<1x1x88x4xbf16>
    %2 = vector.shape_cast %1 : vector<1x1x88x4xbf16> to vector<88x4xbf16>
    %c0_3 = arith.constant 0 : index
    %c0_4 = arith.constant 0 : index
    %c0_5 = arith.constant 0 : index
    %3 = vector.load %arg2[%c0_3, %c0_4, %c0_5] : memref<49x4x128xbf16, #tpu.memory_space<vmem>>, vector<1x4x128xbf16>
    %4 = vector.shape_cast %3 : vector<1x4x128xbf16> to vector<4x128xbf16>
    %cst_6 = arith.constant dense<0.000000e+00> : vector<88x128xf32>
    %5 = tpu.matmul %2, %4, %cst_6 {dimension_numbers = #tpu.dot_dimension_numbers<[1], [0], [0], [1], [0, 0, 1, 1], [], []>} : vector<88x4xbf16>, vector<4x128xbf16>, vector<88x128xf32> -> vector<88x128xf32>
    %6 = arith.addf %0, %5 : vector<88x128xf32>
    %c0_7 = arith.constant 0 : index
    %c1 = arith.constant 1 : index
    %c0_8 = arith.constant 0 : index
    %c0_9 = arith.constant 0 : index
    %7 = vector.load %arg1[%c0_7, %c1, %c0_8, %c0_9] : memref<1x4x132x4xbf16, #tpu.memory_space<vmem>>, vector<1x1x88x4xbf16>
    %8 = vector.shape_cast %7 : vector<1x1x88x4xbf16> to vector<88x4xbf16>
    %c1_10 = arith.constant 1 : index
    %c0_11 = arith.constant 0 : index
    %c0_12 = arith.constant 0 : index
    %9 = vector.load %arg2[%c1_10, %c0_11, %c0_12] : memref<49x4x128xbf16, #tpu.memory_space<vmem>>, vector<1x4x128xbf16>
    %10 = vector.shape_cast %9 : vector<1x4x128xbf16> to vector<4x128xbf16>
    %cst_13 = arith.constant dense<0.000000e+00> : vector<88x128xf32>
    %11 = tpu.matmul %8, %10, %cst_13 {dimension_numbers = #tpu.dot_dimension_numbers<[1], [0], [0], [1], [0, 0, 1, 1], [], []>} : vector<88x4xbf16>, vector<4x128xbf16>, vector<88x128xf32> -> vector<88x128xf32>
    %12 = arith.addf %6, %11 : vector<88x128xf32>
    %c0_14 = arith.constant 0 : index
    %c0_15 = arith.constant 0 : index
    %c1_16 = arith.constant 1 : index
    %c0_17 = arith.constant 0 : index
    %13 = vector.load %arg1[%c0_14, %c0_15, %c1_16, %c0_17] : memref<1x4x132x4xbf16, #tpu.memory_space<vmem>>, vector<1x1x88x4xbf16>
    %14 = vector.shape_cast %13 : vector<1x1x88x4xbf16> to vector<88x4xbf16>
    %c2 = arith.constant 2 : index
    %c0_18 = arith.constant 0 : index
    %c0_19 = arith.constant 0 : index
    %15 = vector.load %arg2[%c2, %c0_18, %c0_19] : memref<49x4x128xbf16, #tpu.memory_space<vmem>>, vector<1x4x128xbf16>
    %16 = vector.shape_cast %15 : vector<1x4x128xbf16> to vector<4x128xbf16>
    %cst_20 = arith.constant dense<0.000000e+00> : vector<88x128xf32>
    %17 = tpu.matmul %14, %16, %cst_20 {dimension_numbers = #tpu.dot_dimension_numbers<[1], [0], [0], [1], [0, 0, 1, 1], [], []>} : vector<88x4xbf16>, vector<4x128xbf16>, vector<88x128xf32> -> vector<88x128xf32>
    %18 = arith.addf %12, %17 : vector<88x128xf32>
    %c0_21 = arith.constant 0 : index
    %c1_22 = arith.constant 1 : index
    %c1_23 = arith.constant 1 : index
    %c0_24 = arith.constant 0 : index
    %19 = vector.load %arg1[%c0_21, %c1_22, %c1_23, %c0_24] : memref<1x4x132x4xbf16, #tpu.memory_space<vmem>>, vector<1x1x88x4xbf16>
    %20 = vector.shape_cast %19 : vector<1x1x88x4xbf16> to vector<88x4xbf16>
    %c3 = arith.constant 3 : index
    %c0_25 = arith.constant 0 : index
    %c0_26 = arith.constant 0 : index
    %21 = vector.load %arg2[%c3, %c0_25, %c0_26] : memref<49x4x128xbf16, #tpu.memory_space<vmem>>, vector<1x4x128xbf16>
    %22 = vector.shape_cast %21 : vector<1x4x128xbf16> to vector<4x128xbf16>
    %cst_27 = arith.constant dense<0.000000e+00> : vector<88x128xf32>
    %23 = tpu.matmul %20, %22, %cst_27 {dimension_numbers = #tpu.dot_dimension_numbers<[1], [0], [0], [1], [0, 0, 1, 1], [], []>} : vector<88x4xbf16>, vector<4x128xbf16>, vector<88x128xf32> -> vector<88x128xf32>
    %24 = arith.addf %18, %23 : vector<88x128xf32>
    %c0_28 = arith.constant 0 : index
    %c0_29 = arith.constant 0 : index
    %c2_30 = arith.constant 2 : index
    %c0_31 = arith.constant 0 : index
    %25 = vector.load %arg1[%c0_28, %c0_29, %c2_30, %c0_31] : memref<1x4x132x4xbf16, #tpu.memory_space<vmem>>, vector<1x1x88x4xbf16>
    %26 = vector.shape_cast %25 : vector<1x1x88x4xbf16> to vector<88x4xbf16>
    %c4 = arith.constant 4 : index
    %c0_32 = arith.constant 0 : index
    %c0_33 = arith.constant 0 : index
    %27 = vector.load %arg2[%c4, %c0_32, %c0_33] : memref<49x4x128xbf16, #tpu.memory_space<vmem>>, vector<1x4x128xbf16>
    %28 = vector.shape_cast %27 : vector<1x4x128xbf16> to vector<4x128xbf16>
    %cst_34 = arith.constant dense<0.000000e+00> : vector<88x128xf32>
    %29 = tpu.matmul %26, %28, %cst_34 {dimension_numbers = #tpu.dot_dimension_numbers<[1], [0], [0], [1], [0, 0, 1, 1], [], []>} : vector<88x4xbf16>, vector<4x128xbf16>, vector<88x128xf32> -> vector<88x128xf32>
    %30 = arith.addf %24, %29 : vector<88x128xf32>
    %c0_35 = arith.constant 0 : index
    %c1_36 = arith.constant 1 : index
    %c2_37 = arith.constant 2 : index
    %c0_38 = arith.constant 0 : index
    %31 = vector.load %arg1[%c0_35, %c1_36, %c2_37, %c0_38] : memref<1x4x132x4xbf16, #tpu.memory_space<vmem>>, vector<1x1x88x4xbf16>
    %32 = vector.shape_cast %31 : vector<1x1x88x4xbf16> to vector<88x4xbf16>
    %c5 = arith.constant 5 : index
    %c0_39 = arith.constant 0 : index
    %c0_40 = arith.constant 0 : index
    %33 = vector.load %arg2[%c5, %c0_39, %c0_40] : memref<49x4x128xbf16, #tpu.memory_space<vmem>>, vector<1x4x128xbf16>
    %34 = vector.shape_cast %33 : vector<1x4x128xbf16> to vector<4x128xbf16>
    %cst_41 = arith.constant dense<0.000000e+00> : vector<88x128xf32>
    %35 = tpu.matmul %32, %34, %cst_41 {dimension_numbers = #tpu.dot_dimension_numbers<[1], [0], [0], [1], [0, 0, 1, 1], [], []>} : vector<88x4xbf16>, vector<4x128xbf16>, vector<88x128xf32> -> vector<88x128xf32>
    %36 = arith.addf %30, %35 : vector<88x128xf32>
    %c0_42 = arith.constant 0 : index
    %c0_43 = arith.constant 0 : index
    %c3_44 = arith.constant 3 : index
    %c0_45 = arith.constant 0 : index
    %37 = vector.load %arg1[%c0_42, %c0_43, %c3_44, %c0_45] : memref<1x4x132x4xbf16, #tpu.memory_space<vmem>>, vector<1x1x88x4xbf16>
    %38 = vector.shape_cast %37 : vector<1x1x88x4xbf16> to vector<88x4xbf16>
    %c6 = arith.constant 6 : index
    %c0_46 = arith.constant 0 : index
    %c0_47 = arith.constant 0 : index
    %39 = vector.load %arg2[%c6, %c0_46, %c0_47] : memref<49x4x128xbf16, #tpu.memory_space<vmem>>, vector<1x4x128xbf16>
    %40 = vector.shape_cast %39 : vector<1x4x128xbf16> to vector<4x128xbf16>
    %cst_48 = arith.constant dense<0.000000e+00> : vector<88x128xf32>
    %41 = tpu.matmul %38, %40, %cst_48 {dimension_numbers = #tpu.dot_dimension_numbers<[1], [0], [0], [1], [0, 0, 1, 1], [], []>} : vector<88x4xbf16>, vector<4x128xbf16>, vector<88x128xf32> -> vector<88x128xf32>
    %42 = arith.addf %36, %41 : vector<88x128xf32>
    %c0_49 = arith.constant 0 : index
    %c2_50 = arith.constant 2 : index
    %c0_51 = arith.constant 0 : index
    %c0_52 = arith.constant 0 : index
    %43 = vector.load %arg1[%c0_49, %c2_50, %c0_51, %c0_52] : memref<1x4x132x4xbf16, #tpu.memory_space<vmem>>, vector<1x1x88x4xbf16>
    %44 = vector.shape_cast %43 : vector<1x1x88x4xbf16> to vector<88x4xbf16>
    %c7 = arith.constant 7 : index
    %c0_53 = arith.constant 0 : index
    %c0_54 = arith.constant 0 : index
    %45 = vector.load %arg2[%c7, %c0_53, %c0_54] : memref<49x4x128xbf16, #tpu.memory_space<vmem>>, vector<1x4x128xbf16>
    %46 = vector.shape_cast %45 : vector<1x4x128xbf16> to vector<4x128xbf16>
    %cst_55 = arith.constant dense<0.000000e+00> : vector<88x128xf32>
    %47 = tpu.matmul %44, %46, %cst_55 {dimension_numbers = #tpu.dot_dimension_numbers<[1], [0], [0], [1], [0, 0, 1, 1], [], []>} : vector<88x4xbf16>, vector<4x128xbf16>, vector<88x128xf32> -> vector<88x128xf32>
    %48 = arith.addf %42, %47 : vector<88x128xf32>
    %c0_56 = arith.constant 0 : index
    %c3_57 = arith.constant 3 : index
    %c0_58 = arith.constant 0 : index
    %c0_59 = arith.constant 0 : index
    %49 = vector.load %arg1[%c0_56, %c3_57, %c0_58, %c0_59] : memref<1x4x132x4xbf16, #tpu.memory_space<vmem>>, vector<1x1x88x4xbf16>
    %50 = vector.shape_cast %49 : vector<1x1x88x4xbf16> to vector<88x4xbf16>
    %c8 = arith.constant 8 : index
    %c0_60 = arith.constant 0 : index
    %c0_61 = arith.constant 0 : index
    %51 = vector.load %arg2[%c8, %c0_60, %c0_61] : memref<49x4x128xbf16, #tpu.memory_space<vmem>>, vector<1x4x128xbf16>
    %52 = vector.shape_cast %51 : vector<1x4x128xbf16> to vector<4x128xbf16>
    %cst_62 = arith.constant dense<0.000000e+00> : vector<88x128xf32>
    %53 = tpu.matmul %50, %52, %cst_62 {dimension_numbers = #tpu.dot_dimension_numbers<[1], [0], [0], [1], [0, 0, 1, 1], [], []>} : vector<88x4xbf16>, vector<4x128xbf16>, vector<88x128xf32> -> vector<88x128xf32>
    %54 = arith.addf %48, %53 : vector<88x128xf32>
    %c0_63 = arith.constant 0 : index
    %c2_64 = arith.constant 2 : index
    %c1_65 = arith.constant 1 : index
    %c0_66 = arith.constant 0 : index
    %55 = vector.load %arg1[%c0_63, %c2_64, %c1_65, %c0_66] : memref<1x4x132x4xbf16, #tpu.memory_space<vmem>>, vector<1x1x88x4xbf16>
    %56 = vector.shape_cast %55 : vector<1x1x88x4xbf16> to vector<88x4xbf16>
    %c9 = arith.constant 9 : index
    %c0_67 = arith.constant 0 : index
    %c0_68 = arith.constant 0 : index
    %57 = vector.load %arg2[%c9, %c0_67, %c0_68] : memref<49x4x128xbf16, #tpu.memory_space<vmem>>, vector<1x4x128xbf16>
    %58 = vector.shape_cast %57 : vector<1x4x128xbf16> to vector<4x128xbf16>
    %cst_69 = arith.constant dense<0.000000e+00> : vector<88x128xf32>
    %59 = tpu.matmul %56, %58, %cst_69 {dimension_numbers = #tpu.dot_dimension_numbers<[1], [0], [0], [1], [0, 0, 1, 1], [], []>} : vector<88x4xbf16>, vector<4x128xbf16>, vector<88x128xf32> -> vector<88x128xf32>
    %60 = arith.addf %54, %59 : vector<88x128xf32>
    %c0_70 = arith.constant 0 : index
    %c3_71 = arith.constant 3 : index
    %c1_72 = arith.constant 1 : index
    %c0_73 = arith.constant 0 : index
    %61 = vector.load %arg1[%c0_70, %c3_71, %c1_72, %c0_73] : memref<1x4x132x4xbf16, #tpu.memory_space<vmem>>, vector<1x1x88x4xbf16>
    %62 = vector.shape_cast %61 : vector<1x1x88x4xbf16> to vector<88x4xbf16>
    %c10 = arith.constant 10 : index
    %c0_74 = arith.constant 0 : index
    %c0_75 = arith.constant 0 : index
    %63 = vector.load %arg2[%c10, %c0_74, %c0_75] : memref<49x4x128xbf16, #tpu.memory_space<vmem>>, vector<1x4x128xbf16>
    %64 = vector.shape_cast %63 : vector<1x4x128xbf16> to vector<4x128xbf16>
    %cst_76 = arith.constant dense<0.000000e+00> : vector<88x128xf32>
    %65 = tpu.matmul %62, %64, %cst_76 {dimension_numbers = #tpu.dot_dimension_numbers<[1], [0], [0], [1], [0, 0, 1, 1], [], []>} : vector<88x4xbf16>, vector<4x128xbf16>, vector<88x128xf32> -> vector<88x128xf32>
    %66 = arith.addf %60, %65 : vector<88x128xf32>
    %c0_77 = arith.constant 0 : index
    %c2_78 = arith.constant 2 : index
    %c2_79 = arith.constant 2 : index
    %c0_80 = arith.constant 0 : index
    %67 = vector.load %arg1[%c0_77, %c2_78, %c2_79, %c0_80] : memref<1x4x132x4xbf16, #tpu.memory_space<vmem>>, vector<1x1x88x4xbf16>
    %68 = vector.shape_cast %67 : vector<1x1x88x4xbf16> to vector<88x4xbf16>
    %c11 = arith.constant 11 : index
    %c0_81 = arith.constant 0 : index
    %c0_82 = arith.constant 0 : index
    %69 = vector.load %arg2[%c11, %c0_81, %c0_82] : memref<49x4x128xbf16, #tpu.memory_space<vmem>>, vector<1x4x128xbf16>
    %70 = vector.shape_cast %69 : vector<1x4x128xbf16> to vector<4x128xbf16>
    %cst_83 = arith.constant dense<0.000000e+00> : vector<88x128xf32>
    %71 = tpu.matmul %68, %70, %cst_83 {dimension_numbers = #tpu.dot_dimension_numbers<[1], [0], [0], [1], [0, 0, 1, 1], [], []>} : vector<88x4xbf16>, vector<4x128xbf16>, vector<88x128xf32> -> vector<88x128xf32>
    %72 = arith.addf %66, %71 : vector<88x128xf32>
    %c0_84 = arith.constant 0 : index
    %c3_85 = arith.constant 3 : index
    %c2_86 = arith.constant 2 : index
    %c0_87 = arith.constant 0 : index
    %73 = vector.load %arg1[%c0_84, %c3_85, %c2_86, %c0_87] : memref<1x4x132x4xbf16, #tpu.memory_space<vmem>>, vector<1x1x88x4xbf16>
    %74 = vector.shape_cast %73 : vector<1x1x88x4xbf16> to vector<88x4xbf16>
    %c12 = arith.constant 12 : index
    %c0_88 = arith.constant 0 : index
    %c0_89 = arith.constant 0 : index
    %75 = vector.load %arg2[%c12, %c0_88, %c0_89] : memref<49x4x128xbf16, #tpu.memory_space<vmem>>, vector<1x4x128xbf16>
    %76 = vector.shape_cast %75 : vector<1x4x128xbf16> to vector<4x128xbf16>
    %cst_90 = arith.constant dense<0.000000e+00> : vector<88x128xf32>
    %77 = tpu.matmul %74, %76, %cst_90 {dimension_numbers = #tpu.dot_dimension_numbers<[1], [0], [0], [1], [0, 0, 1, 1], [], []>} : vector<88x4xbf16>, vector<4x128xbf16>, vector<88x128xf32> -> vector<88x128xf32>
    %78 = arith.addf %72, %77 : vector<88x128xf32>
    %c0_91 = arith.constant 0 : index
    %c2_92 = arith.constant 2 : index
    %c3_93 = arith.constant 3 : index
    %c0_94 = arith.constant 0 : index
    %79 = vector.load %arg1[%c0_91, %c2_92, %c3_93, %c0_94] : memref<1x4x132x4xbf16, #tpu.memory_space<vmem>>, vector<1x1x88x4xbf16>
    %80 = vector.shape_cast %79 : vector<1x1x88x4xbf16> to vector<88x4xbf16>
    %c13 = arith.constant 13 : index
    %c0_95 = arith.constant 0 : index
    %c0_96 = arith.constant 0 : index
    %81 = vector.load %arg2[%c13, %c0_95, %c0_96] : memref<49x4x128xbf16, #tpu.memory_space<vmem>>, vector<1x4x128xbf16>
    %82 = vector.shape_cast %81 : vector<1x4x128xbf16> to vector<4x128xbf16>
    %cst_97 = arith.constant dense<0.000000e+00> : vector<88x128xf32>
    %83 = tpu.matmul %80, %82, %cst_97 {dimension_numbers = #tpu.dot_dimension_numbers<[1], [0], [0], [1], [0, 0, 1, 1], [], []>} : vector<88x4xbf16>, vector<4x128xbf16>, vector<88x128xf32> -> vector<88x128xf32>
    %84 = arith.addf %78, %83 : vector<88x128xf32>
    %c0_98 = arith.constant 0 : index
    %c0_99 = arith.constant 0 : index
    %c11_100 = arith.constant 11 : index
    %c0_101 = arith.constant 0 : index
    %85 = vector.load %arg1[%c0_98, %c0_99, %c11_100, %c0_101] : memref<1x4x132x4xbf16, #tpu.memory_space<vmem>>, vector<1x1x88x4xbf16>
    %86 = vector.shape_cast %85 : vector<1x1x88x4xbf16> to vector<88x4xbf16>
    %c14 = arith.constant 14 : index
    %c0_102 = arith.constant 0 : index
    %c0_103 = arith.constant 0 : index
    %87 = vector.load %arg2[%c14, %c0_102, %c0_103] : memref<49x4x128xbf16, #tpu.memory_space<vmem>>, vector<1x4x128xbf16>
    %88 = vector.shape_cast %87 : vector<1x4x128xbf16> to vector<4x128xbf16>
    %cst_104 = arith.constant dense<0.000000e+00> : vector<88x128xf32>
    %89 = tpu.matmul %86, %88, %cst_104 {dimension_numbers = #tpu.dot_dimension_numbers<[1], [0], [0], [1], [0, 0, 1, 1], [], []>} : vector<88x4xbf16>, vector<4x128xbf16>, vector<88x128xf32> -> vector<88x128xf32>
    %90 = arith.addf %84, %89 : vector<88x128xf32>
    %c0_105 = arith.constant 0 : index
    %c1_106 = arith.constant 1 : index
    %c11_107 = arith.constant 11 : index
    %c0_108 = arith.constant 0 : index
    %91 = vector.load %arg1[%c0_105, %c1_106, %c11_107, %c0_108] : memref<1x4x132x4xbf16, #tpu.memory_space<vmem>>, vector<1x1x88x4xbf16>
    %92 = vector.shape_cast %91 : vector<1x1x88x4xbf16> to vector<88x4xbf16>
    %c15 = arith.constant 15 : index
    %c0_109 = arith.constant 0 : index
    %c0_110 = arith.constant 0 : index
    %93 = vector.load %arg2[%c15, %c0_109, %c0_110] : memref<49x4x128xbf16, #tpu.memory_space<vmem>>, vector<1x4x128xbf16>
    %94 = vector.shape_cast %93 : vector<1x4x128xbf16> to vector<4x128xbf16>
    %cst_111 = arith.constant dense<0.000000e+00> : vector<88x128xf32>
    %95 = tpu.matmul %92, %94, %cst_111 {dimension_numbers = #tpu.dot_dimension_numbers<[1], [0], [0], [1], [0, 0, 1, 1], [], []>} : vector<88x4xbf16>, vector<4x128xbf16>, vector<88x128xf32> -> vector<88x128xf32>
    %96 = arith.addf %90, %95 : vector<88x128xf32>
    %c0_112 = arith.constant 0 : index
    %c0_113 = arith.constant 0 : index
    %c12_114 = arith.constant 12 : index
    %c0_115 = arith.constant 0 : index
    %97 = vector.load %arg1[%c0_112, %c0_113, %c12_114, %c0_115] : memref<1x4x132x4xbf16, #tpu.memory_space<vmem>>, vector<1x1x88x4xbf16>
    %98 = vector.shape_cast %97 : vector<1x1x88x4xbf16> to vector<88x4xbf16>
    %c16 = arith.constant 16 : index
    %c0_116 = arith.constant 0 : index
    %c0_117 = arith.constant 0 : index
    %99 = vector.load %arg2[%c16, %c0_116, %c0_117] : memref<49x4x128xbf16, #tpu.memory_space<vmem>>, vector<1x4x128xbf16>
    %100 = vector.shape_cast %99 : vector<1x4x128xbf16> to vector<4x128xbf16>
    %cst_118 = arith.constant dense<0.000000e+00> : vector<88x128xf32>
    %101 = tpu.matmul %98, %100, %cst_118 {dimension_numbers = #tpu.dot_dimension_numbers<[1], [0], [0], [1], [0, 0, 1, 1], [], []>} : vector<88x4xbf16>, vector<4x128xbf16>, vector<88x128xf32> -> vector<88x128xf32>
    %102 = arith.addf %96, %101 : vector<88x128xf32>
    %c0_119 = arith.constant 0 : index
    %c1_120 = arith.constant 1 : index
    %c12_121 = arith.constant 12 : index
    %c0_122 = arith.constant 0 : index
    %103 = vector.load %arg1[%c0_119, %c1_120, %c12_121, %c0_122] : memref<1x4x132x4xbf16, #tpu.memory_space<vmem>>, vector<1x1x88x4xbf16>
    %104 = vector.shape_cast %103 : vector<1x1x88x4xbf16> to vector<88x4xbf16>
    %c17 = arith.constant 17 : index
    %c0_123 = arith.constant 0 : index
    %c0_124 = arith.constant 0 : index
    %105 = vector.load %arg2[%c17, %c0_123, %c0_124] : memref<49x4x128xbf16, #tpu.memory_space<vmem>>, vector<1x4x128xbf16>
    %106 = vector.shape_cast %105 : vector<1x4x128xbf16> to vector<4x128xbf16>
    %cst_125 = arith.constant dense<0.000000e+00> : vector<88x128xf32>
    %107 = tpu.matmul %104, %106, %cst_125 {dimension_numbers = #tpu.dot_dimension_numbers<[1], [0], [0], [1], [0, 0, 1, 1], [], []>} : vector<88x4xbf16>, vector<4x128xbf16>, vector<88x128xf32> -> vector<88x128xf32>
    %108 = arith.addf %102, %107 : vector<88x128xf32>
    %c0_126 = arith.constant 0 : index
    %c0_127 = arith.constant 0 : index
    %c13_128 = arith.constant 13 : index
    %c0_129 = arith.constant 0 : index
    %109 = vector.load %arg1[%c0_126, %c0_127, %c13_128, %c0_129] : memref<1x4x132x4xbf16, #tpu.memory_space<vmem>>, vector<1x1x88x4xbf16>
    %110 = vector.shape_cast %109 : vector<1x1x88x4xbf16> to vector<88x4xbf16>
    %c18 = arith.constant 18 : index
    %c0_130 = arith.constant 0 : index
    %c0_131 = arith.constant 0 : index
    %111 = vector.load %arg2[%c18, %c0_130, %c0_131] : memref<49x4x128xbf16, #tpu.memory_space<vmem>>, vector<1x4x128xbf16>
    %112 = vector.shape_cast %111 : vector<1x4x128xbf16> to vector<4x128xbf16>
    %cst_132 = arith.constant dense<0.000000e+00> : vector<88x128xf32>
    %113 = tpu.matmul %110, %112, %cst_132 {dimension_numbers = #tpu.dot_dimension_numbers<[1], [0], [0], [1], [0, 0, 1, 1], [], []>} : vector<88x4xbf16>, vector<4x128xbf16>, vector<88x128xf32> -> vector<88x128xf32>
    %114 = arith.addf %108, %113 : vector<88x128xf32>
    %c0_133 = arith.constant 0 : index
    %c1_134 = arith.constant 1 : index
    %c13_135 = arith.constant 13 : index
    %c0_136 = arith.constant 0 : index
    %115 = vector.load %arg1[%c0_133, %c1_134, %c13_135, %c0_136] : memref<1x4x132x4xbf16, #tpu.memory_space<vmem>>, vector<1x1x88x4xbf16>
    %116 = vector.shape_cast %115 : vector<1x1x88x4xbf16> to vector<88x4xbf16>
    %c19 = arith.constant 19 : index
    %c0_137 = arith.constant 0 : index
    %c0_138 = arith.constant 0 : index
    %117 = vector.load %arg2[%c19, %c0_137, %c0_138] : memref<49x4x128xbf16, #tpu.memory_space<vmem>>, vector<1x4x128xbf16>
    %118 = vector.shape_cast %117 : vector<1x4x128xbf16> to vector<4x128xbf16>
    %cst_139 = arith.constant dense<0.000000e+00> : vector<88x128xf32>
    %119 = tpu.matmul %116, %118, %cst_139 {dimension_numbers = #tpu.dot_dimension_numbers<[1], [0], [0], [1], [0, 0, 1, 1], [], []>} : vector<88x4xbf16>, vector<4x128xbf16>, vector<88x128xf32> -> vector<88x128xf32>
    %120 = arith.addf %114, %119 : vector<88x128xf32>
    %c0_140 = arith.constant 0 : index
    %c0_141 = arith.constant 0 : index
    %c14_142 = arith.constant 14 : index
    %c0_143 = arith.constant 0 : index
    %121 = vector.load %arg1[%c0_140, %c0_141, %c14_142, %c0_143] : memref<1x4x132x4xbf16, #tpu.memory_space<vmem>>, vector<1x1x88x4xbf16>
    %122 = vector.shape_cast %121 : vector<1x1x88x4xbf16> to vector<88x4xbf16>
    %c20 = arith.constant 20 : index
    %c0_144 = arith.constant 0 : index
    %c0_145 = arith.constant 0 : index
    %123 = vector.load %arg2[%c20, %c0_144, %c0_145] : memref<49x4x128xbf16, #tpu.memory_space<vmem>>, vector<1x4x128xbf16>
    %124 = vector.shape_cast %123 : vector<1x4x128xbf16> to vector<4x128xbf16>
    %cst_146 = arith.constant dense<0.000000e+00> : vector<88x128xf32>
    %125 = tpu.matmul %122, %124, %cst_146 {dimension_numbers = #tpu.dot_dimension_numbers<[1], [0], [0], [1], [0, 0, 1, 1], [], []>} : vector<88x4xbf16>, vector<4x128xbf16>, vector<88x128xf32> -> vector<88x128xf32>
    %126 = arith.addf %120, %125 : vector<88x128xf32>
    %c0_147 = arith.constant 0 : index
    %c2_148 = arith.constant 2 : index
    %c11_149 = arith.constant 11 : index
    %c0_150 = arith.constant 0 : index
    %127 = vector.load %arg1[%c0_147, %c2_148, %c11_149, %c0_150] : memref<1x4x132x4xbf16, #tpu.memory_space<vmem>>, vector<1x1x88x4xbf16>
    %128 = vector.shape_cast %127 : vector<1x1x88x4xbf16> to vector<88x4xbf16>
    %c21 = arith.constant 21 : index
    %c0_151 = arith.constant 0 : index
    %c0_152 = arith.constant 0 : index
    %129 = vector.load %arg2[%c21, %c0_151, %c0_152] : memref<49x4x128xbf16, #tpu.memory_space<vmem>>, vector<1x4x128xbf16>
    %130 = vector.shape_cast %129 : vector<1x4x128xbf16> to vector<4x128xbf16>
    %cst_153 = arith.constant dense<0.000000e+00> : vector<88x128xf32>
    %131 = tpu.matmul %128, %130, %cst_153 {dimension_numbers = #tpu.dot_dimension_numbers<[1], [0], [0], [1], [0, 0, 1, 1], [], []>} : vector<88x4xbf16>, vector<4x128xbf16>, vector<88x128xf32> -> vector<88x128xf32>
    %132 = arith.addf %126, %131 : vector<88x128xf32>
    %c0_154 = arith.constant 0 : index
    %c3_155 = arith.constant 3 : index
    %c11_156 = arith.constant 11 : index
    %c0_157 = arith.constant 0 : index
    %133 = vector.load %arg1[%c0_154, %c3_155, %c11_156, %c0_157] : memref<1x4x132x4xbf16, #tpu.memory_space<vmem>>, vector<1x1x88x4xbf16>
    %134 = vector.shape_cast %133 : vector<1x1x88x4xbf16> to vector<88x4xbf16>
    %c22 = arith.constant 22 : index
    %c0_158 = arith.constant 0 : index
    %c0_159 = arith.constant 0 : index
    %135 = vector.load %arg2[%c22, %c0_158, %c0_159] : memref<49x4x128xbf16, #tpu.memory_space<vmem>>, vector<1x4x128xbf16>
    %136 = vector.shape_cast %135 : vector<1x4x128xbf16> to vector<4x128xbf16>
    %cst_160 = arith.constant dense<0.000000e+00> : vector<88x128xf32>
    %137 = tpu.matmul %134, %136, %cst_160 {dimension_numbers = #tpu.dot_dimension_numbers<[1], [0], [0], [1], [0, 0, 1, 1], [], []>} : vector<88x4xbf16>, vector<4x128xbf16>, vector<88x128xf32> -> vector<88x128xf32>
    %138 = arith.addf %132, %137 : vector<88x128xf32>
    %c0_161 = arith.constant 0 : index
    %c2_162 = arith.constant 2 : index
    %c12_163 = arith.constant 12 : index
    %c0_164 = arith.constant 0 : index
    %139 = vector.load %arg1[%c0_161, %c2_162, %c12_163, %c0_164] : memref<1x4x132x4xbf16, #tpu.memory_space<vmem>>, vector<1x1x88x4xbf16>
    %140 = vector.shape_cast %139 : vector<1x1x88x4xbf16> to vector<88x4xbf16>
    %c23 = arith.constant 23 : index
    %c0_165 = arith.constant 0 : index
    %c0_166 = arith.constant 0 : index
    %141 = vector.load %arg2[%c23, %c0_165, %c0_166] : memref<49x4x128xbf16, #tpu.memory_space<vmem>>, vector<1x4x128xbf16>
    %142 = vector.shape_cast %141 : vector<1x4x128xbf16> to vector<4x128xbf16>
    %cst_167 = arith.constant dense<0.000000e+00> : vector<88x128xf32>
    %143 = tpu.matmul %140, %142, %cst_167 {dimension_numbers = #tpu.dot_dimension_numbers<[1], [0], [0], [1], [0, 0, 1, 1], [], []>} : vector<88x4xbf16>, vector<4x128xbf16>, vector<88x128xf32> -> vector<88x128xf32>
    %144 = arith.addf %138, %143 : vector<88x128xf32>
    %c0_168 = arith.constant 0 : index
    %c3_169 = arith.constant 3 : index
    %c12_170 = arith.constant 12 : index
    %c0_171 = arith.constant 0 : index
    %145 = vector.load %arg1[%c0_168, %c3_169, %c12_170, %c0_171] : memref<1x4x132x4xbf16, #tpu.memory_space<vmem>>, vector<1x1x88x4xbf16>
    %146 = vector.shape_cast %145 : vector<1x1x88x4xbf16> to vector<88x4xbf16>
    %c24 = arith.constant 24 : index
    %c0_172 = arith.constant 0 : index
    %c0_173 = arith.constant 0 : index
    %147 = vector.load %arg2[%c24, %c0_172, %c0_173] : memref<49x4x128xbf16, #tpu.memory_space<vmem>>, vector<1x4x128xbf16>
    %148 = vector.shape_cast %147 : vector<1x4x128xbf16> to vector<4x128xbf16>
    %cst_174 = arith.constant dense<0.000000e+00> : vector<88x128xf32>
    %149 = tpu.matmul %146, %148, %cst_174 {dimension_numbers = #tpu.dot_dimension_numbers<[1], [0], [0], [1], [0, 0, 1, 1], [], []>} : vector<88x4xbf16>, vector<4x128xbf16>, vector<88x128xf32> -> vector<88x128xf32>
    %150 = arith.addf %144, %149 : vector<88x128xf32>
    %c0_175 = arith.constant 0 : index
    %c2_176 = arith.constant 2 : index
    %c13_177 = arith.constant 13 : index
    %c0_178 = arith.constant 0 : index
    %151 = vector.load %arg1[%c0_175, %c2_176, %c13_177, %c0_178] : memref<1x4x132x4xbf16, #tpu.memory_space<vmem>>, vector<1x1x88x4xbf16>
    %152 = vector.shape_cast %151 : vector<1x1x88x4xbf16> to vector<88x4xbf16>
    %c25 = arith.constant 25 : index
    %c0_179 = arith.constant 0 : index
    %c0_180 = arith.constant 0 : index
    %153 = vector.load %arg2[%c25, %c0_179, %c0_180] : memref<49x4x128xbf16, #tpu.memory_space<vmem>>, vector<1x4x128xbf16>
    %154 = vector.shape_cast %153 : vector<1x4x128xbf16> to vector<4x128xbf16>
    %cst_181 = arith.constant dense<0.000000e+00> : vector<88x128xf32>
    %155 = tpu.matmul %152, %154, %cst_181 {dimension_numbers = #tpu.dot_dimension_numbers<[1], [0], [0], [1], [0, 0, 1, 1], [], []>} : vector<88x4xbf16>, vector<4x128xbf16>, vector<88x128xf32> -> vector<88x128xf32>
    %156 = arith.addf %150, %155 : vector<88x128xf32>
    %c0_182 = arith.constant 0 : index
    %c3_183 = arith.constant 3 : index
    %c13_184 = arith.constant 13 : index
    %c0_185 = arith.constant 0 : index
    %157 = vector.load %arg1[%c0_182, %c3_183, %c13_184, %c0_185] : memref<1x4x132x4xbf16, #tpu.memory_space<vmem>>, vector<1x1x88x4xbf16>
    %158 = vector.shape_cast %157 : vector<1x1x88x4xbf16> to vector<88x4xbf16>
    %c26 = arith.constant 26 : index
    %c0_186 = arith.constant 0 : index
    %c0_187 = arith.constant 0 : index
    %159 = vector.load %arg2[%c26, %c0_186, %c0_187] : memref<49x4x128xbf16, #tpu.memory_space<vmem>>, vector<1x4x128xbf16>
    %160 = vector.shape_cast %159 : vector<1x4x128xbf16> to vector<4x128xbf16>
    %cst_188 = arith.constant dense<0.000000e+00> : vector<88x128xf32>
    %161 = tpu.matmul %158, %160, %cst_188 {dimension_numbers = #tpu.dot_dimension_numbers<[1], [0], [0], [1], [0, 0, 1, 1], [], []>} : vector<88x4xbf16>, vector<4x128xbf16>, vector<88x128xf32> -> vector<88x128xf32>
    %162 = arith.addf %156, %161 : vector<88x128xf32>
    %c0_189 = arith.constant 0 : index
    %c2_190 = arith.constant 2 : index
    %c14_191 = arith.constant 14 : index
    %c0_192 = arith.constant 0 : index
    %163 = vector.load %arg1[%c0_189, %c2_190, %c14_191, %c0_192] : memref<1x4x132x4xbf16, #tpu.memory_space<vmem>>, vector<1x1x88x4xbf16>
    %164 = vector.shape_cast %163 : vector<1x1x88x4xbf16> to vector<88x4xbf16>
    %c27 = arith.constant 27 : index
    %c0_193 = arith.constant 0 : index
    %c0_194 = arith.constant 0 : index
    %165 = vector.load %arg2[%c27, %c0_193, %c0_194] : memref<49x4x128xbf16, #tpu.memory_space<vmem>>, vector<1x4x128xbf16>
    %166 = vector.shape_cast %165 : vector<1x4x128xbf16> to vector<4x128xbf16>
    %cst_195 = arith.constant dense<0.000000e+00> : vector<88x128xf32>
    %167 = tpu.matmul %164, %166, %cst_195 {dimension_numbers = #tpu.dot_dimension_numbers<[1], [0], [0], [1], [0, 0, 1, 1], [], []>} : vector<88x4xbf16>, vector<4x128xbf16>, vector<88x128xf32> -> vector<88x128xf32>
    %168 = arith.addf %162, %167 : vector<88x128xf32>
    %c0_196 = arith.constant 0 : index
    %c0_197 = arith.constant 0 : index
    %c22_198 = arith.constant 22 : index
    %c0_199 = arith.constant 0 : index
    %169 = vector.load %arg1[%c0_196, %c0_197, %c22_198, %c0_199] : memref<1x4x132x4xbf16, #tpu.memory_space<vmem>>, vector<1x1x88x4xbf16>
    %170 = vector.shape_cast %169 : vector<1x1x88x4xbf16> to vector<88x4xbf16>
    %c28 = arith.constant 28 : index
    %c0_200 = arith.constant 0 : index
    %c0_201 = arith.constant 0 : index
    %171 = vector.load %arg2[%c28, %c0_200, %c0_201] : memref<49x4x128xbf16, #tpu.memory_space<vmem>>, vector<1x4x128xbf16>
    %172 = vector.shape_cast %171 : vector<1x4x128xbf16> to vector<4x128xbf16>
    %cst_202 = arith.constant dense<0.000000e+00> : vector<88x128xf32>
    %173 = tpu.matmul %170, %172, %cst_202 {dimension_numbers = #tpu.dot_dimension_numbers<[1], [0], [0], [1], [0, 0, 1, 1], [], []>} : vector<88x4xbf16>, vector<4x128xbf16>, vector<88x128xf32> -> vector<88x128xf32>
    %174 = arith.addf %168, %173 : vector<88x128xf32>
    %c0_203 = arith.constant 0 : index
    %c1_204 = arith.constant 1 : index
    %c22_205 = arith.constant 22 : index
    %c0_206 = arith.constant 0 : index
    %175 = vector.load %arg1[%c0_203, %c1_204, %c22_205, %c0_206] : memref<1x4x132x4xbf16, #tpu.memory_space<vmem>>, vector<1x1x88x4xbf16>
    %176 = vector.shape_cast %175 : vector<1x1x88x4xbf16> to vector<88x4xbf16>
    %c29 = arith.constant 29 : index
    %c0_207 = arith.constant 0 : index
    %c0_208 = arith.constant 0 : index
    %177 = vector.load %arg2[%c29, %c0_207, %c0_208] : memref<49x4x128xbf16, #tpu.memory_space<vmem>>, vector<1x4x128xbf16>
    %178 = vector.shape_cast %177 : vector<1x4x128xbf16> to vector<4x128xbf16>
    %cst_209 = arith.constant dense<0.000000e+00> : vector<88x128xf32>
    %179 = tpu.matmul %176, %178, %cst_209 {dimension_numbers = #tpu.dot_dimension_numbers<[1], [0], [0], [1], [0, 0, 1, 1], [], []>} : vector<88x4xbf16>, vector<4x128xbf16>, vector<88x128xf32> -> vector<88x128xf32>
    %180 = arith.addf %174, %179 : vector<88x128xf32>
    %c0_210 = arith.constant 0 : index
    %c0_211 = arith.constant 0 : index
    %c23_212 = arith.constant 23 : index
    %c0_213 = arith.constant 0 : index
    %181 = vector.load %arg1[%c0_210, %c0_211, %c23_212, %c0_213] : memref<1x4x132x4xbf16, #tpu.memory_space<vmem>>, vector<1x1x88x4xbf16>
    %182 = vector.shape_cast %181 : vector<1x1x88x4xbf16> to vector<88x4xbf16>
    %c30 = arith.constant 30 : index
    %c0_214 = arith.constant 0 : index
    %c0_215 = arith.constant 0 : index
    %183 = vector.load %arg2[%c30, %c0_214, %c0_215] : memref<49x4x128xbf16, #tpu.memory_space<vmem>>, vector<1x4x128xbf16>
    %184 = vector.shape_cast %183 : vector<1x4x128xbf16> to vector<4x128xbf16>
    %cst_216 = arith.constant dense<0.000000e+00> : vector<88x128xf32>
    %185 = tpu.matmul %182, %184, %cst_216 {dimension_numbers = #tpu.dot_dimension_numbers<[1], [0], [0], [1], [0, 0, 1, 1], [], []>} : vector<88x4xbf16>, vector<4x128xbf16>, vector<88x128xf32> -> vector<88x128xf32>
    %186 = arith.addf %180, %185 : vector<88x128xf32>
    %c0_217 = arith.constant 0 : index
    %c1_218 = arith.constant 1 : index
    %c23_219 = arith.constant 23 : index
    %c0_220 = arith.constant 0 : index
    %187 = vector.load %arg1[%c0_217, %c1_218, %c23_219, %c0_220] : memref<1x4x132x4xbf16, #tpu.memory_space<vmem>>, vector<1x1x88x4xbf16>
    %188 = vector.shape_cast %187 : vector<1x1x88x4xbf16> to vector<88x4xbf16>
    %c31 = arith.constant 31 : index
    %c0_221 = arith.constant 0 : index
    %c0_222 = arith.constant 0 : index
    %189 = vector.load %arg2[%c31, %c0_221, %c0_222] : memref<49x4x128xbf16, #tpu.memory_space<vmem>>, vector<1x4x128xbf16>
    %190 = vector.shape_cast %189 : vector<1x4x128xbf16> to vector<4x128xbf16>
    %cst_223 = arith.constant dense<0.000000e+00> : vector<88x128xf32>
    %191 = tpu.matmul %188, %190, %cst_223 {dimension_numbers = #tpu.dot_dimension_numbers<[1], [0], [0], [1], [0, 0, 1, 1], [], []>} : vector<88x4xbf16>, vector<4x128xbf16>, vector<88x128xf32> -> vector<88x128xf32>
    %192 = arith.addf %186, %191 : vector<88x128xf32>
    %c0_224 = arith.constant 0 : index
    %c0_225 = arith.constant 0 : index
    %c24_226 = arith.constant 24 : index
    %c0_227 = arith.constant 0 : index
    %193 = vector.load %arg1[%c0_224, %c0_225, %c24_226, %c0_227] : memref<1x4x132x4xbf16, #tpu.memory_space<vmem>>, vector<1x1x88x4xbf16>
    %194 = vector.shape_cast %193 : vector<1x1x88x4xbf16> to vector<88x4xbf16>
    %c32 = arith.constant 32 : index
    %c0_228 = arith.constant 0 : index
    %c0_229 = arith.constant 0 : index
    %195 = vector.load %arg2[%c32, %c0_228, %c0_229] : memref<49x4x128xbf16, #tpu.memory_space<vmem>>, vector<1x4x128xbf16>
    %196 = vector.shape_cast %195 : vector<1x4x128xbf16> to vector<4x128xbf16>
    %cst_230 = arith.constant dense<0.000000e+00> : vector<88x128xf32>
    %197 = tpu.matmul %194, %196, %cst_230 {dimension_numbers = #tpu.dot_dimension_numbers<[1], [0], [0], [1], [0, 0, 1, 1], [], []>} : vector<88x4xbf16>, vector<4x128xbf16>, vector<88x128xf32> -> vector<88x128xf32>
    %198 = arith.addf %192, %197 : vector<88x128xf32>
    %c0_231 = arith.constant 0 : index
    %c1_232 = arith.constant 1 : index
    %c24_233 = arith.constant 24 : index
    %c0_234 = arith.constant 0 : index
    %199 = vector.load %arg1[%c0_231, %c1_232, %c24_233, %c0_234] : memref<1x4x132x4xbf16, #tpu.memory_space<vmem>>, vector<1x1x88x4xbf16>
    %200 = vector.shape_cast %199 : vector<1x1x88x4xbf16> to vector<88x4xbf16>
    %c33 = arith.constant 33 : index
    %c0_235 = arith.constant 0 : index
    %c0_236 = arith.constant 0 : index
    %201 = vector.load %arg2[%c33, %c0_235, %c0_236] : memref<49x4x128xbf16, #tpu.memory_space<vmem>>, vector<1x4x128xbf16>
    %202 = vector.shape_cast %201 : vector<1x4x128xbf16> to vector<4x128xbf16>
    %cst_237 = arith.constant dense<0.000000e+00> : vector<88x128xf32>
    %203 = tpu.matmul %200, %202, %cst_237 {dimension_numbers = #tpu.dot_dimension_numbers<[1], [0], [0], [1], [0, 0, 1, 1], [], []>} : vector<88x4xbf16>, vector<4x128xbf16>, vector<88x128xf32> -> vector<88x128xf32>
    %204 = arith.addf %198, %203 : vector<88x128xf32>
    %c0_238 = arith.constant 0 : index
    %c0_239 = arith.constant 0 : index
    %c25_240 = arith.constant 25 : index
    %c0_241 = arith.constant 0 : index
    %205 = vector.load %arg1[%c0_238, %c0_239, %c25_240, %c0_241] : memref<1x4x132x4xbf16, #tpu.memory_space<vmem>>, vector<1x1x88x4xbf16>
    %206 = vector.shape_cast %205 : vector<1x1x88x4xbf16> to vector<88x4xbf16>
    %c34 = arith.constant 34 : index
    %c0_242 = arith.constant 0 : index
    %c0_243 = arith.constant 0 : index
    %207 = vector.load %arg2[%c34, %c0_242, %c0_243] : memref<49x4x128xbf16, #tpu.memory_space<vmem>>, vector<1x4x128xbf16>
    %208 = vector.shape_cast %207 : vector<1x4x128xbf16> to vector<4x128xbf16>
    %cst_244 = arith.constant dense<0.000000e+00> : vector<88x128xf32>
    %209 = tpu.matmul %206, %208, %cst_244 {dimension_numbers = #tpu.dot_dimension_numbers<[1], [0], [0], [1], [0, 0, 1, 1], [], []>} : vector<88x4xbf16>, vector<4x128xbf16>, vector<88x128xf32> -> vector<88x128xf32>
    %210 = arith.addf %204, %209 : vector<88x128xf32>
    %c0_245 = arith.constant 0 : index
    %c2_246 = arith.constant 2 : index
    %c22_247 = arith.constant 22 : index
    %c0_248 = arith.constant 0 : index
    %211 = vector.load %arg1[%c0_245, %c2_246, %c22_247, %c0_248] : memref<1x4x132x4xbf16, #tpu.memory_space<vmem>>, vector<1x1x88x4xbf16>
    %212 = vector.shape_cast %211 : vector<1x1x88x4xbf16> to vector<88x4xbf16>
    %c35 = arith.constant 35 : index
    %c0_249 = arith.constant 0 : index
    %c0_250 = arith.constant 0 : index
    %213 = vector.load %arg2[%c35, %c0_249, %c0_250] : memref<49x4x128xbf16, #tpu.memory_space<vmem>>, vector<1x4x128xbf16>
    %214 = vector.shape_cast %213 : vector<1x4x128xbf16> to vector<4x128xbf16>
    %cst_251 = arith.constant dense<0.000000e+00> : vector<88x128xf32>
    %215 = tpu.matmul %212, %214, %cst_251 {dimension_numbers = #tpu.dot_dimension_numbers<[1], [0], [0], [1], [0, 0, 1, 1], [], []>} : vector<88x4xbf16>, vector<4x128xbf16>, vector<88x128xf32> -> vector<88x128xf32>
    %216 = arith.addf %210, %215 : vector<88x128xf32>
    %c0_252 = arith.constant 0 : index
    %c3_253 = arith.constant 3 : index
    %c22_254 = arith.constant 22 : index
    %c0_255 = arith.constant 0 : index
    %217 = vector.load %arg1[%c0_252, %c3_253, %c22_254, %c0_255] : memref<1x4x132x4xbf16, #tpu.memory_space<vmem>>, vector<1x1x88x4xbf16>
    %218 = vector.shape_cast %217 : vector<1x1x88x4xbf16> to vector<88x4xbf16>
    %c36 = arith.constant 36 : index
    %c0_256 = arith.constant 0 : index
    %c0_257 = arith.constant 0 : index
    %219 = vector.load %arg2[%c36, %c0_256, %c0_257] : memref<49x4x128xbf16, #tpu.memory_space<vmem>>, vector<1x4x128xbf16>
    %220 = vector.shape_cast %219 : vector<1x4x128xbf16> to vector<4x128xbf16>
    %cst_258 = arith.constant dense<0.000000e+00> : vector<88x128xf32>
    %221 = tpu.matmul %218, %220, %cst_258 {dimension_numbers = #tpu.dot_dimension_numbers<[1], [0], [0], [1], [0, 0, 1, 1], [], []>} : vector<88x4xbf16>, vector<4x128xbf16>, vector<88x128xf32> -> vector<88x128xf32>
    %222 = arith.addf %216, %221 : vector<88x128xf32>
    %c0_259 = arith.constant 0 : index
    %c2_260 = arith.constant 2 : index
    %c23_261 = arith.constant 23 : index
    %c0_262 = arith.constant 0 : index
    %223 = vector.load %arg1[%c0_259, %c2_260, %c23_261, %c0_262] : memref<1x4x132x4xbf16, #tpu.memory_space<vmem>>, vector<1x1x88x4xbf16>
    %224 = vector.shape_cast %223 : vector<1x1x88x4xbf16> to vector<88x4xbf16>
    %c37 = arith.constant 37 : index
    %c0_263 = arith.constant 0 : index
    %c0_264 = arith.constant 0 : index
    %225 = vector.load %arg2[%c37, %c0_263, %c0_264] : memref<49x4x128xbf16, #tpu.memory_space<vmem>>, vector<1x4x128xbf16>
    %226 = vector.shape_cast %225 : vector<1x4x128xbf16> to vector<4x128xbf16>
    %cst_265 = arith.constant dense<0.000000e+00> : vector<88x128xf32>
    %227 = tpu.matmul %224, %226, %cst_265 {dimension_numbers = #tpu.dot_dimension_numbers<[1], [0], [0], [1], [0, 0, 1, 1], [], []>} : vector<88x4xbf16>, vector<4x128xbf16>, vector<88x128xf32> -> vector<88x128xf32>
    %228 = arith.addf %222, %227 : vector<88x128xf32>
    %c0_266 = arith.constant 0 : index
    %c3_267 = arith.constant 3 : index
    %c23_268 = arith.constant 23 : index
    %c0_269 = arith.constant 0 : index
    %229 = vector.load %arg1[%c0_266, %c3_267, %c23_268, %c0_269] : memref<1x4x132x4xbf16, #tpu.memory_space<vmem>>, vector<1x1x88x4xbf16>
    %230 = vector.shape_cast %229 : vector<1x1x88x4xbf16> to vector<88x4xbf16>
    %c38 = arith.constant 38 : index
    %c0_270 = arith.constant 0 : index
    %c0_271 = arith.constant 0 : index
    %231 = vector.load %arg2[%c38, %c0_270, %c0_271] : memref<49x4x128xbf16, #tpu.memory_space<vmem>>, vector<1x4x128xbf16>
    %232 = vector.shape_cast %231 : vector<1x4x128xbf16> to vector<4x128xbf16>
    %cst_272 = arith.constant dense<0.000000e+00> : vector<88x128xf32>
    %233 = tpu.matmul %230, %232, %cst_272 {dimension_numbers = #tpu.dot_dimension_numbers<[1], [0], [0], [1], [0, 0, 1, 1], [], []>} : vector<88x4xbf16>, vector<4x128xbf16>, vector<88x128xf32> -> vector<88x128xf32>
    %234 = arith.addf %228, %233 : vector<88x128xf32>
    %c0_273 = arith.constant 0 : index
    %c2_274 = arith.constant 2 : index
    %c24_275 = arith.constant 24 : index
    %c0_276 = arith.constant 0 : index
    %235 = vector.load %arg1[%c0_273, %c2_274, %c24_275, %c0_276] : memref<1x4x132x4xbf16, #tpu.memory_space<vmem>>, vector<1x1x88x4xbf16>
    %236 = vector.shape_cast %235 : vector<1x1x88x4xbf16> to vector<88x4xbf16>
    %c39 = arith.constant 39 : index
    %c0_277 = arith.constant 0 : index
    %c0_278 = arith.constant 0 : index
    %237 = vector.load %arg2[%c39, %c0_277, %c0_278] : memref<49x4x128xbf16, #tpu.memory_space<vmem>>, vector<1x4x128xbf16>
    %238 = vector.shape_cast %237 : vector<1x4x128xbf16> to vector<4x128xbf16>
    %cst_279 = arith.constant dense<0.000000e+00> : vector<88x128xf32>
    %239 = tpu.matmul %236, %238, %cst_279 {dimension_numbers = #tpu.dot_dimension_numbers<[1], [0], [0], [1], [0, 0, 1, 1], [], []>} : vector<88x4xbf16>, vector<4x128xbf16>, vector<88x128xf32> -> vector<88x128xf32>
    %240 = arith.addf %234, %239 : vector<88x128xf32>
    %c0_280 = arith.constant 0 : index
    %c3_281 = arith.constant 3 : index
    %c24_282 = arith.constant 24 : index
    %c0_283 = arith.constant 0 : index
    %241 = vector.load %arg1[%c0_280, %c3_281, %c24_282, %c0_283] : memref<1x4x132x4xbf16, #tpu.memory_space<vmem>>, vector<1x1x88x4xbf16>
    %242 = vector.shape_cast %241 : vector<1x1x88x4xbf16> to vector<88x4xbf16>
    %c40 = arith.constant 40 : index
    %c0_284 = arith.constant 0 : index
    %c0_285 = arith.constant 0 : index
    %243 = vector.load %arg2[%c40, %c0_284, %c0_285] : memref<49x4x128xbf16, #tpu.memory_space<vmem>>, vector<1x4x128xbf16>
    %244 = vector.shape_cast %243 : vector<1x4x128xbf16> to vector<4x128xbf16>
    %cst_286 = arith.constant dense<0.000000e+00> : vector<88x128xf32>
    %245 = tpu.matmul %242, %244, %cst_286 {dimension_numbers = #tpu.dot_dimension_numbers<[1], [0], [0], [1], [0, 0, 1, 1], [], []>} : vector<88x4xbf16>, vector<4x128xbf16>, vector<88x128xf32> -> vector<88x128xf32>
    %246 = arith.addf %240, %245 : vector<88x128xf32>
    %c0_287 = arith.constant 0 : index
    %c2_288 = arith.constant 2 : index
    %c25_289 = arith.constant 25 : index
    %c0_290 = arith.constant 0 : index
    %247 = vector.load %arg1[%c0_287, %c2_288, %c25_289, %c0_290] : memref<1x4x132x4xbf16, #tpu.memory_space<vmem>>, vector<1x1x88x4xbf16>
    %248 = vector.shape_cast %247 : vector<1x1x88x4xbf16> to vector<88x4xbf16>
    %c41 = arith.constant 41 : index
    %c0_291 = arith.constant 0 : index
    %c0_292 = arith.constant 0 : index
    %249 = vector.load %arg2[%c41, %c0_291, %c0_292] : memref<49x4x128xbf16, #tpu.memory_space<vmem>>, vector<1x4x128xbf16>
    %250 = vector.shape_cast %249 : vector<1x4x128xbf16> to vector<4x128xbf16>
    %cst_293 = arith.constant dense<0.000000e+00> : vector<88x128xf32>
    %251 = tpu.matmul %248, %250, %cst_293 {dimension_numbers = #tpu.dot_dimension_numbers<[1], [0], [0], [1], [0, 0, 1, 1], [], []>} : vector<88x4xbf16>, vector<4x128xbf16>, vector<88x128xf32> -> vector<88x128xf32>
    %252 = arith.addf %246, %251 : vector<88x128xf32>
    %c0_294 = arith.constant 0 : index
    %c0_295 = arith.constant 0 : index
    %c33_296 = arith.constant 33 : index
    %c0_297 = arith.constant 0 : index
    %253 = vector.load %arg1[%c0_294, %c0_295, %c33_296, %c0_297] : memref<1x4x132x4xbf16, #tpu.memory_space<vmem>>, vector<1x1x88x4xbf16>
    %254 = vector.shape_cast %253 : vector<1x1x88x4xbf16> to vector<88x4xbf16>
    %c42 = arith.constant 42 : index
    %c0_298 = arith.constant 0 : index
    %c0_299 = arith.constant 0 : index
    %255 = vector.load %arg2[%c42, %c0_298, %c0_299] : memref<49x4x128xbf16, #tpu.memory_space<vmem>>, vector<1x4x128xbf16>
    %256 = vector.shape_cast %255 : vector<1x4x128xbf16> to vector<4x128xbf16>
    %cst_300 = arith.constant dense<0.000000e+00> : vector<88x128xf32>
    %257 = tpu.matmul %254, %256, %cst_300 {dimension_numbers = #tpu.dot_dimension_numbers<[1], [0], [0], [1], [0, 0, 1, 1], [], []>} : vector<88x4xbf16>, vector<4x128xbf16>, vector<88x128xf32> -> vector<88x128xf32>
    %258 = arith.addf %252, %257 : vector<88x128xf32>
    %c0_301 = arith.constant 0 : index
    %c1_302 = arith.constant 1 : index
    %c33_303 = arith.constant 33 : index
    %c0_304 = arith.constant 0 : index
    %259 = vector.load %arg1[%c0_301, %c1_302, %c33_303, %c0_304] : memref<1x4x132x4xbf16, #tpu.memory_space<vmem>>, vector<1x1x88x4xbf16>
    %260 = vector.shape_cast %259 : vector<1x1x88x4xbf16> to vector<88x4xbf16>
    %c43 = arith.constant 43 : index
    %c0_305 = arith.constant 0 : index
    %c0_306 = arith.constant 0 : index
    %261 = vector.load %arg2[%c43, %c0_305, %c0_306] : memref<49x4x128xbf16, #tpu.memory_space<vmem>>, vector<1x4x128xbf16>
    %262 = vector.shape_cast %261 : vector<1x4x128xbf16> to vector<4x128xbf16>
    %cst_307 = arith.constant dense<0.000000e+00> : vector<88x128xf32>
    %263 = tpu.matmul %260, %262, %cst_307 {dimension_numbers = #tpu.dot_dimension_numbers<[1], [0], [0], [1], [0, 0, 1, 1], [], []>} : vector<88x4xbf16>, vector<4x128xbf16>, vector<88x128xf32> -> vector<88x128xf32>
    %264 = arith.addf %258, %263 : vector<88x128xf32>
    %c0_308 = arith.constant 0 : index
    %c0_309 = arith.constant 0 : index
    %c34_310 = arith.constant 34 : index
    %c0_311 = arith.constant 0 : index
    %265 = vector.load %arg1[%c0_308, %c0_309, %c34_310, %c0_311] : memref<1x4x132x4xbf16, #tpu.memory_space<vmem>>, vector<1x1x88x4xbf16>
    %266 = vector.shape_cast %265 : vector<1x1x88x4xbf16> to vector<88x4xbf16>
    %c44 = arith.constant 44 : index
    %c0_312 = arith.constant 0 : index
    %c0_313 = arith.constant 0 : index
    %267 = vector.load %arg2[%c44, %c0_312, %c0_313] : memref<49x4x128xbf16, #tpu.memory_space<vmem>>, vector<1x4x128xbf16>
    %268 = vector.shape_cast %267 : vector<1x4x128xbf16> to vector<4x128xbf16>
    %cst_314 = arith.constant dense<0.000000e+00> : vector<88x128xf32>
    %269 = tpu.matmul %266, %268, %cst_314 {dimension_numbers = #tpu.dot_dimension_numbers<[1], [0], [0], [1], [0, 0, 1, 1], [], []>} : vector<88x4xbf16>, vector<4x128xbf16>, vector<88x128xf32> -> vector<88x128xf32>
    %270 = arith.addf %264, %269 : vector<88x128xf32>
    %c0_315 = arith.constant 0 : index
    %c1_316 = arith.constant 1 : index
    %c34_317 = arith.constant 34 : index
    %c0_318 = arith.constant 0 : index
    %271 = vector.load %arg1[%c0_315, %c1_316, %c34_317, %c0_318] : memref<1x4x132x4xbf16, #tpu.memory_space<vmem>>, vector<1x1x88x4xbf16>
    %272 = vector.shape_cast %271 : vector<1x1x88x4xbf16> to vector<88x4xbf16>
    %c45 = arith.constant 45 : index
    %c0_319 = arith.constant 0 : index
    %c0_320 = arith.constant 0 : index
    %273 = vector.load %arg2[%c45, %c0_319, %c0_320] : memref<49x4x128xbf16, #tpu.memory_space<vmem>>, vector<1x4x128xbf16>
    %274 = vector.shape_cast %273 : vector<1x4x128xbf16> to vector<4x128xbf16>
    %cst_321 = arith.constant dense<0.000000e+00> : vector<88x128xf32>
    %275 = tpu.matmul %272, %274, %cst_321 {dimension_numbers = #tpu.dot_dimension_numbers<[1], [0], [0], [1], [0, 0, 1, 1], [], []>} : vector<88x4xbf16>, vector<4x128xbf16>, vector<88x128xf32> -> vector<88x128xf32>
    %276 = arith.addf %270, %275 : vector<88x128xf32>
    %c0_322 = arith.constant 0 : index
    %c0_323 = arith.constant 0 : index
    %c35_324 = arith.constant 35 : index
    %c0_325 = arith.constant 0 : index
    %277 = vector.load %arg1[%c0_322, %c0_323, %c35_324, %c0_325] : memref<1x4x132x4xbf16, #tpu.memory_space<vmem>>, vector<1x1x88x4xbf16>
    %278 = vector.shape_cast %277 : vector<1x1x88x4xbf16> to vector<88x4xbf16>
    %c46 = arith.constant 46 : index
    %c0_326 = arith.constant 0 : index
    %c0_327 = arith.constant 0 : index
    %279 = vector.load %arg2[%c46, %c0_326, %c0_327] : memref<49x4x128xbf16, #tpu.memory_space<vmem>>, vector<1x4x128xbf16>
    %280 = vector.shape_cast %279 : vector<1x4x128xbf16> to vector<4x128xbf16>
    %cst_328 = arith.constant dense<0.000000e+00> : vector<88x128xf32>
    %281 = tpu.matmul %278, %280, %cst_328 {dimension_numbers = #tpu.dot_dimension_numbers<[1], [0], [0], [1], [0, 0, 1, 1], [], []>} : vector<88x4xbf16>, vector<4x128xbf16>, vector<88x128xf32> -> vector<88x128xf32>
    %282 = arith.addf %276, %281 : vector<88x128xf32>
    %c0_329 = arith.constant 0 : index
    %c1_330 = arith.constant 1 : index
    %c35_331 = arith.constant 35 : index
    %c0_332 = arith.constant 0 : index
    %283 = vector.load %arg1[%c0_329, %c1_330, %c35_331, %c0_332] : memref<1x4x132x4xbf16, #tpu.memory_space<vmem>>, vector<1x1x88x4xbf16>
    %284 = vector.shape_cast %283 : vector<1x1x88x4xbf16> to vector<88x4xbf16>
    %c47 = arith.constant 47 : index
    %c0_333 = arith.constant 0 : index
    %c0_334 = arith.constant 0 : index
    %285 = vector.load %arg2[%c47, %c0_333, %c0_334] : memref<49x4x128xbf16, #tpu.memory_space<vmem>>, vector<1x4x128xbf16>
    %286 = vector.shape_cast %285 : vector<1x4x128xbf16> to vector<4x128xbf16>
    %cst_335 = arith.constant dense<0.000000e+00> : vector<88x128xf32>
    %287 = tpu.matmul %284, %286, %cst_335 {dimension_numbers = #tpu.dot_dimension_numbers<[1], [0], [0], [1], [0, 0, 1, 1], [], []>} : vector<88x4xbf16>, vector<4x128xbf16>, vector<88x128xf32> -> vector<88x128xf32>
    %288 = arith.addf %282, %287 : vector<88x128xf32>
    %c0_336 = arith.constant 0 : index
    %c0_337 = arith.constant 0 : index
    %c36_338 = arith.constant 36 : index
    %c0_339 = arith.constant 0 : index
    %289 = vector.load %arg1[%c0_336, %c0_337, %c36_338, %c0_339] : memref<1x4x132x4xbf16, #tpu.memory_space<vmem>>, vector<1x1x88x4xbf16>
    %290 = vector.shape_cast %289 : vector<1x1x88x4xbf16> to vector<88x4xbf16>
    %c48 = arith.constant 48 : index
    %c0_340 = arith.constant 0 : index
    %c0_341 = arith.constant 0 : index
    %291 = vector.load %arg2[%c48, %c0_340, %c0_341] : memref<49x4x128xbf16, #tpu.memory_space<vmem>>, vector<1x4x128xbf16>
    %292 = vector.shape_cast %291 : vector<1x4x128xbf16> to vector<4x128xbf16>
    %cst_342 = arith.constant dense<0.000000e+00> : vector<88x128xf32>
    %293 = tpu.matmul %290, %292, %cst_342 {dimension_numbers = #tpu.dot_dimension_numbers<[1], [0], [0], [1], [0, 0, 1, 1], [], []>} : vector<88x4xbf16>, vector<4x128xbf16>, vector<88x128xf32> -> vector<88x128xf32>
    %294 = arith.addf %288, %293 : vector<88x128xf32>
    %c0_343 = arith.constant 0 : index
    %c0_344 = arith.constant 0 : index
    %295 = vector.load %arg5[%c0_343, %c0_344] : memref<1x128xf32, #tpu.memory_space<vmem>>, vector<1x128xf32>
    %296 = vector.broadcast %295 : vector<1x128xf32> to vector<88x128xf32>
    %297 = arith.mulf %294, %296 : vector<88x128xf32>
    %c0_345 = arith.constant 0 : index
    %c0_346 = arith.constant 0 : index
    %298 = vector.load %arg6[%c0_345, %c0_346] : memref<1x128xf32, #tpu.memory_space<vmem>>, vector<1x128xf32>
    %299 = vector.broadcast %298 : vector<1x128xf32> to vector<88x128xf32>
    %300 = arith.addf %297, %299 : vector<88x128xf32>
    %cst_347 = arith.constant 0.000000e+00 : f32
    %301 = vector.broadcast %cst_347 : f32 to vector<88x128xf32>
    %302 = arith.maximumf %300, %301 : vector<88x128xf32>
    %303 = arith.truncf %302 : vector<88x128xf32> to vector<88x128xbf16>
    %c0_348 = arith.constant 0 : index
    %c0_349 = arith.constant 0 : index
    %c0_350 = arith.constant 0 : index
    %304 = vector.load %arg7[%c0_348, %c0_349, %c0_350] : memref<1x88x128xbf16, #tpu.memory_space<vmem>>, vector<1x88x128xbf16>
    %305 = vector.shape_cast %304 : vector<1x88x128xbf16> to vector<88x128xbf16>
    %306 = vector.shape_cast %303 : vector<88x128xbf16> to vector<1x88x128xbf16>
    tpu.vector_store %arg7[%c0_348, %c0_349, %c0_350], %306 {strides = array<i32>} : memref<1x88x128xbf16, #tpu.memory_space<vmem>>, vector<1x88x128xbf16>,
    return
  }
  func.func @transform_0(%arg0: i32) -> (i32, i32, i32, i32) {
    %c0_i32 = arith.constant 0 : i32
    %c0_i32_0 = arith.constant 0 : i32
    %c0_i32_1 = arith.constant 0 : i32
    %c0_i32_2 = arith.constant 0 : i32
    return %arg0, %c0_i32, %c0_i32_0, %c0_i32_1 : i32, i32, i32, i32
  }
  func.func @transform_1(%arg0: i32) -> (i32, i32, i32) {
    %c0_i32 = arith.constant 0 : i32
    %c0_i32_0 = arith.constant 0 : i32
    %c0_i32_1 = arith.constant 0 : i32
    %c0_i32_2 = arith.constant 0 : i32
    return %c0_i32, %c0_i32_0, %c0_i32_1 : i32, i32, i32
  }
  func.func @transform_2(%arg0: i32) -> (i32, i32) {
    %c0_i32 = arith.constant 0 : i32
    %c0_i32_0 = arith.constant 0 : i32
    %c0_i32_1 = arith.constant 0 : i32
    return %c0_i32, %c0_i32_0 : i32, i32
  }
  func.func @transform_3(%arg0: i32) -> (i32, i32) {
    %c0_i32 = arith.constant 0 : i32
    %c0_i32_0 = arith.constant 0 : i32
    %c0_i32_1 = arith.constant 0 : i32
    return %c0_i32, %c0_i32_0 : i32, i32
  }
  func.func @transform_4(%arg0: i32) -> (i32, i32) {
    %c0_i32 = arith.constant 0 : i32
    %c0_i32_0 = arith.constant 0 : i32
    %c0_i32_1 = arith.constant 0 : i32
    return %c0_i32, %c0_i32_0 : i32, i32
  }
  func.func @transform_5(%arg0: i32) -> (i32, i32) {
    %c0_i32 = arith.constant 0 : i32
    %c0_i32_0 = arith.constant 0 : i32
    %c0_i32_1 = arith.constant 0 : i32
    return %c0_i32, %c0_i32_0 : i32, i32
  }
  func.func @transform_6(%arg0: i32) -> (i32, i32, i32) {
    %c0_i32 = arith.constant 0 : i32
    %c0_i32_0 = arith.constant 0 : i32
    %c0_i32_1 = arith.constant 0 : i32
    return %arg0, %c0_i32, %c0_i32_0 : i32, i32, i32
  }
}

module attributes {stable_mosaic.version = 11 : i64} {
  func.func @_pool_kernel(%arg0: i32, %arg1: memref<1x4x30x16xbf16, #tpu.memory_space<vmem>>, %arg2: memref<1x20x16xbf16, #tpu.memory_space<vmem>>) attributes {dimension_semantics = [#tpu.dimension_semantics<parallel>], iteration_bounds = array<i64: 2>, scalar_prefetch = 0 : i64, scratch_operands = 0 : i64, tpu.core_type = #tpu.core_type<tc>, window_params = [{transform_indices = @transform_0, window_bounds = array<i64: 1, 4, 30, 16>}, {transform_indices = @transform_1, window_bounds = array<i64: 1, 20, 16>}]} {
    %c0 = arith.constant 0 : index
    %c0_0 = arith.constant 0 : index
    %c0_1 = arith.constant 0 : index
    %c0_2 = arith.constant 0 : index
    %0 = vector.load %arg1[%c0, %c0_0, %c0_1, %c0_2] : memref<1x4x30x16xbf16, #tpu.memory_space<vmem>>, vector<1x1x20x16xbf16>
    %1 = vector.shape_cast %0 : vector<1x1x20x16xbf16> to vector<20x16xbf16>
    %c0_3 = arith.constant 0 : index
    %c1 = arith.constant 1 : index
    %c0_4 = arith.constant 0 : index
    %c0_5 = arith.constant 0 : index
    %2 = vector.load %arg1[%c0_3, %c1, %c0_4, %c0_5] : memref<1x4x30x16xbf16, #tpu.memory_space<vmem>>, vector<1x1x20x16xbf16>
    %3 = vector.shape_cast %2 : vector<1x1x20x16xbf16> to vector<20x16xbf16>
    %4 = arith.maximumf %1, %3 : vector<20x16xbf16>
    %c0_6 = arith.constant 0 : index
    %c0_7 = arith.constant 0 : index
    %c1_8 = arith.constant 1 : index
    %c0_9 = arith.constant 0 : index
    %5 = vector.load %arg1[%c0_6, %c0_7, %c1_8, %c0_9] : memref<1x4x30x16xbf16, #tpu.memory_space<vmem>>, vector<1x1x20x16xbf16>
    %6 = vector.shape_cast %5 : vector<1x1x20x16xbf16> to vector<20x16xbf16>
    %7 = arith.maximumf %4, %6 : vector<20x16xbf16>
    %c0_10 = arith.constant 0 : index
    %c2 = arith.constant 2 : index
    %c0_11 = arith.constant 0 : index
    %c0_12 = arith.constant 0 : index
    %8 = vector.load %arg1[%c0_10, %c2, %c0_11, %c0_12] : memref<1x4x30x16xbf16, #tpu.memory_space<vmem>>, vector<1x1x20x16xbf16>
    %9 = vector.shape_cast %8 : vector<1x1x20x16xbf16> to vector<20x16xbf16>
    %10 = arith.maximumf %7, %9 : vector<20x16xbf16>
    %c0_13 = arith.constant 0 : index
    %c3 = arith.constant 3 : index
    %c0_14 = arith.constant 0 : index
    %c0_15 = arith.constant 0 : index
    %11 = vector.load %arg1[%c0_13, %c3, %c0_14, %c0_15] : memref<1x4x30x16xbf16, #tpu.memory_space<vmem>>, vector<1x1x20x16xbf16>
    %12 = vector.shape_cast %11 : vector<1x1x20x16xbf16> to vector<20x16xbf16>
    %13 = arith.maximumf %10, %12 : vector<20x16xbf16>
    %c0_16 = arith.constant 0 : index
    %c2_17 = arith.constant 2 : index
    %c1_18 = arith.constant 1 : index
    %c0_19 = arith.constant 0 : index
    %14 = vector.load %arg1[%c0_16, %c2_17, %c1_18, %c0_19] : memref<1x4x30x16xbf16, #tpu.memory_space<vmem>>, vector<1x1x20x16xbf16>
    %15 = vector.shape_cast %14 : vector<1x1x20x16xbf16> to vector<20x16xbf16>
    %16 = arith.maximumf %13, %15 : vector<20x16xbf16>
    %c0_20 = arith.constant 0 : index
    %c0_21 = arith.constant 0 : index
    %c5 = arith.constant 5 : index
    %c0_22 = arith.constant 0 : index
    %17 = vector.load %arg1[%c0_20, %c0_21, %c5, %c0_22] : memref<1x4x30x16xbf16, #tpu.memory_space<vmem>>, vector<1x1x20x16xbf16>
    %18 = vector.shape_cast %17 : vector<1x1x20x16xbf16> to vector<20x16xbf16>
    %19 = arith.maximumf %16, %18 : vector<20x16xbf16>
    %c0_23 = arith.constant 0 : index
    %c1_24 = arith.constant 1 : index
    %c5_25 = arith.constant 5 : index
    %c0_26 = arith.constant 0 : index
    %20 = vector.load %arg1[%c0_23, %c1_24, %c5_25, %c0_26] : memref<1x4x30x16xbf16, #tpu.memory_space<vmem>>, vector<1x1x20x16xbf16>
    %21 = vector.shape_cast %20 : vector<1x1x20x16xbf16> to vector<20x16xbf16>
    %22 = arith.maximumf %19, %21 : vector<20x16xbf16>
    %c0_27 = arith.constant 0 : index
    %c0_28 = arith.constant 0 : index
    %c6 = arith.constant 6 : index
    %c0_29 = arith.constant 0 : index
    %23 = vector.load %arg1[%c0_27, %c0_28, %c6, %c0_29] : memref<1x4x30x16xbf16, #tpu.memory_space<vmem>>, vector<1x1x20x16xbf16>
    %24 = vector.shape_cast %23 : vector<1x1x20x16xbf16> to vector<20x16xbf16>
    %25 = arith.maximumf %22, %24 : vector<20x16xbf16>
    %c0_30 = arith.constant 0 : index
    %c0_31 = arith.constant 0 : index
    %c0_32 = arith.constant 0 : index
    %26 = vector.load %arg2[%c0_30, %c0_31, %c0_32] : memref<1x20x16xbf16, #tpu.memory_space<vmem>>, vector<1x20x16xbf16>
    %27 = vector.shape_cast %26 : vector<1x20x16xbf16> to vector<20x16xbf16>
    %28 = vector.shape_cast %25 : vector<20x16xbf16> to vector<1x20x16xbf16>
    tpu.vector_store %arg2[%c0_30, %c0_31, %c0_32], %28 {strides = array<i32>} : memref<1x20x16xbf16, #tpu.memory_space<vmem>>, vector<1x20x16xbf16>,
    return
  }
  func.func @transform_0(%arg0: i32) -> (i32, i32, i32, i32) {
    %c0_i32 = arith.constant 0 : i32
    %c0_i32_0 = arith.constant 0 : i32
    %c0_i32_1 = arith.constant 0 : i32
    %c0_i32_2 = arith.constant 0 : i32
    return %arg0, %c0_i32, %c0_i32_0, %c0_i32_1 : i32, i32, i32, i32
  }
  func.func @transform_1(%arg0: i32) -> (i32, i32, i32) {
    %c0_i32 = arith.constant 0 : i32
    %c0_i32_0 = arith.constant 0 : i32
    %c0_i32_1 = arith.constant 0 : i32
    return %arg0, %c0_i32, %c0_i32_0 : i32, i32, i32
  }
}

module attributes {stable_mosaic.version = 11 : i64} {
  func.func @_conv_bn_kernel(%arg0: i32, %arg1: memref<1x1x16x16xbf16, #tpu.memory_space<vmem>>, %arg2: memref<1x16x128xbf16, #tpu.memory_space<vmem>>, %arg3: memref<1x16xf32, #tpu.memory_space<vmem>>, %arg4: memref<1x16xf32, #tpu.memory_space<vmem>>, %arg5: memref<1x128xf32, #tpu.memory_space<vmem>>, %arg6: memref<1x128xf32, #tpu.memory_space<vmem>>, %arg7: memref<1x16x128xbf16, #tpu.memory_space<vmem>>) attributes {dimension_semantics = [#tpu.dimension_semantics<parallel>], iteration_bounds = array<i64: 2>, scalar_prefetch = 0 : i64, scratch_operands = 0 : i64, tpu.core_type = #tpu.core_type<tc>, window_params = [{transform_indices = @transform_0, window_bounds = array<i64: 1, 1, 16, 16>}, {pipeline_mode = #tpu.pipeline_mode<synchronous>, transform_indices = @transform_1, window_bounds = array<i64: 1, 16, 128>}, {pipeline_mode = #tpu.pipeline_mode<synchronous>, transform_indices = @transform_2, window_bounds = array<i64: 1, 16>}, {pipeline_mode = #tpu.pipeline_mode<synchronous>, transform_indices = @transform_3, window_bounds = array<i64: 1, 16>}, {pipeline_mode = #tpu.pipeline_mode<synchronous>, transform_indices = @transform_4, window_bounds = array<i64: 1, 128>}, {pipeline_mode = #tpu.pipeline_mode<synchronous>, transform_indices = @transform_5, window_bounds = array<i64: 1, 128>}, {transform_indices = @transform_6, window_bounds = array<i64: 1, 16, 128>}]} {
    %cst = arith.constant 0.000000e+00 : f32
    %0 = vector.broadcast %cst : f32 to vector<16x128xf32>
    %c0 = arith.constant 0 : index
    %c0_0 = arith.constant 0 : index
    %c0_1 = arith.constant 0 : index
    %c0_2 = arith.constant 0 : index
    %1 = vector.load %arg1[%c0, %c0_0, %c0_1, %c0_2] : memref<1x1x16x16xbf16, #tpu.memory_space<vmem>>, vector<1x1x16x16xbf16>
    %2 = vector.shape_cast %1 : vector<1x1x16x16xbf16> to vector<16x16xbf16>
    %3 = arith.extf %2 : vector<16x16xbf16> to vector<16x16xf32>
    %c0_3 = arith.constant 0 : index
    %c0_4 = arith.constant 0 : index
    %4 = vector.load %arg3[%c0_3, %c0_4] : memref<1x16xf32, #tpu.memory_space<vmem>>, vector<1x16xf32>
    %5 = vector.broadcast %4 : vector<1x16xf32> to vector<16x16xf32>
    %6 = arith.mulf %3, %5 : vector<16x16xf32>
    %c0_5 = arith.constant 0 : index
    %c0_6 = arith.constant 0 : index
    %7 = vector.load %arg4[%c0_5, %c0_6] : memref<1x16xf32, #tpu.memory_space<vmem>>, vector<1x16xf32>
    %8 = vector.broadcast %7 : vector<1x16xf32> to vector<16x16xf32>
    %9 = arith.addf %6, %8 : vector<16x16xf32>
    %cst_7 = arith.constant 0.000000e+00 : f32
    %10 = vector.broadcast %cst_7 : f32 to vector<16x16xf32>
    %11 = arith.maximumf %9, %10 : vector<16x16xf32>
    %12 = arith.truncf %11 : vector<16x16xf32> to vector<16x16xbf16>
    %c0_8 = arith.constant 0 : index
    %c0_9 = arith.constant 0 : index
    %c0_10 = arith.constant 0 : index
    %13 = vector.load %arg2[%c0_8, %c0_9, %c0_10] : memref<1x16x128xbf16, #tpu.memory_space<vmem>>, vector<1x16x128xbf16>
    %14 = vector.shape_cast %13 : vector<1x16x128xbf16> to vector<16x128xbf16>
    %cst_11 = arith.constant dense<0.000000e+00> : vector<16x128xf32>
    %15 = tpu.matmul %12, %14, %cst_11 {dimension_numbers = #tpu.dot_dimension_numbers<[1], [0], [0], [1], [0, 0, 1, 1], [], []>} : vector<16x16xbf16>, vector<16x128xbf16>, vector<16x128xf32> -> vector<16x128xf32>
    %16 = arith.addf %0, %15 : vector<16x128xf32>
    %c0_12 = arith.constant 0 : index
    %c0_13 = arith.constant 0 : index
    %17 = vector.load %arg5[%c0_12, %c0_13] : memref<1x128xf32, #tpu.memory_space<vmem>>, vector<1x128xf32>
    %18 = vector.broadcast %17 : vector<1x128xf32> to vector<16x128xf32>
    %19 = arith.mulf %16, %18 : vector<16x128xf32>
    %c0_14 = arith.constant 0 : index
    %c0_15 = arith.constant 0 : index
    %20 = vector.load %arg6[%c0_14, %c0_15] : memref<1x128xf32, #tpu.memory_space<vmem>>, vector<1x128xf32>
    %21 = vector.broadcast %20 : vector<1x128xf32> to vector<16x128xf32>
    %22 = arith.addf %19, %21 : vector<16x128xf32>
    %cst_16 = arith.constant 0.000000e+00 : f32
    %23 = vector.broadcast %cst_16 : f32 to vector<16x128xf32>
    %24 = arith.maximumf %22, %23 : vector<16x128xf32>
    %25 = arith.truncf %24 : vector<16x128xf32> to vector<16x128xbf16>
    %c0_17 = arith.constant 0 : index
    %c0_18 = arith.constant 0 : index
    %c0_19 = arith.constant 0 : index
    %26 = vector.load %arg7[%c0_17, %c0_18, %c0_19] : memref<1x16x128xbf16, #tpu.memory_space<vmem>>, vector<1x16x128xbf16>
    %27 = vector.shape_cast %26 : vector<1x16x128xbf16> to vector<16x128xbf16>
    %28 = vector.shape_cast %25 : vector<16x128xbf16> to vector<1x16x128xbf16>
    tpu.vector_store %arg7[%c0_17, %c0_18, %c0_19], %28 {strides = array<i32>} : memref<1x16x128xbf16, #tpu.memory_space<vmem>>, vector<1x16x128xbf16>,
    return
  }
  func.func @transform_0(%arg0: i32) -> (i32, i32, i32, i32) {
    %c0_i32 = arith.constant 0 : i32
    %c0_i32_0 = arith.constant 0 : i32
    %c0_i32_1 = arith.constant 0 : i32
    %c0_i32_2 = arith.constant 0 : i32
    return %arg0, %c0_i32, %c0_i32_0, %c0_i32_1 : i32, i32, i32, i32
  }
  func.func @transform_1(%arg0: i32) -> (i32, i32, i32) {
    %c0_i32 = arith.constant 0 : i32
    %c0_i32_0 = arith.constant 0 : i32
    %c0_i32_1 = arith.constant 0 : i32
    %c0_i32_2 = arith.constant 0 : i32
    return %c0_i32, %c0_i32_0, %c0_i32_1 : i32, i32, i32
  }
  func.func @transform_2(%arg0: i32) -> (i32, i32) {
    %c0_i32 = arith.constant 0 : i32
    %c0_i32_0 = arith.constant 0 : i32
    %c0_i32_1 = arith.constant 0 : i32
    return %c0_i32, %c0_i32_0 : i32, i32
  }
  func.func @transform_3(%arg0: i32) -> (i32, i32) {
    %c0_i32 = arith.constant 0 : i32
    %c0_i32_0 = arith.constant 0 : i32
    %c0_i32_1 = arith.constant 0 : i32
    return %c0_i32, %c0_i32_0 : i32, i32
  }
  func.func @transform_4(%arg0: i32) -> (i32, i32) {
    %c0_i32 = arith.constant 0 : i32
    %c0_i32_0 = arith.constant 0 : i32
    %c0_i32_1 = arith.constant 0 : i32
    return %c0_i32, %c0_i32_0 : i32, i32
  }
  func.func @transform_5(%arg0: i32) -> (i32, i32) {
    %c0_i32 = arith.constant 0 : i32
    %c0_i32_0 = arith.constant 0 : i32
    %c0_i32_1 = arith.constant 0 : i32
    return %c0_i32, %c0_i32_0 : i32, i32
  }
  func.func @transform_6(%arg0: i32) -> (i32, i32, i32) {
    %c0_i32 = arith.constant 0 : i32
    %c0_i32_0 = arith.constant 0 : i32
    %c0_i32_1 = arith.constant 0 : i32
    return %arg0, %c0_i32, %c0_i32_0 : i32, i32, i32
  }
}

module attributes {stable_mosaic.version = 11 : i64} {
  func.func @_conv_bn_kernel(%arg0: i32, %arg1: memref<1x1x42x32xbf16, #tpu.memory_space<vmem>>, %arg2: memref<9x32x128xbf16, #tpu.memory_space<vmem>>, %arg3: memref<1x32xf32, #tpu.memory_space<vmem>>, %arg4: memref<1x32xf32, #tpu.memory_space<vmem>>, %arg5: memref<1x128xf32, #tpu.memory_space<vmem>>, %arg6: memref<1x128xf32, #tpu.memory_space<vmem>>, %arg7: memref<1x24x128xbf16, #tpu.memory_space<vmem>>) attributes {dimension_semantics = [#tpu.dimension_semantics<parallel>], iteration_bounds = array<i64: 2>, scalar_prefetch = 0 : i64, scratch_operands = 0 : i64, tpu.core_type = #tpu.core_type<tc>, window_params = [{transform_indices = @transform_0, window_bounds = array<i64: 1, 1, 42, 32>}, {pipeline_mode = #tpu.pipeline_mode<synchronous>, transform_indices = @transform_1, window_bounds = array<i64: 9, 32, 128>}, {pipeline_mode = #tpu.pipeline_mode<synchronous>, transform_indices = @transform_2, window_bounds = array<i64: 1, 32>}, {pipeline_mode = #tpu.pipeline_mode<synchronous>, transform_indices = @transform_3, window_bounds = array<i64: 1, 32>}, {pipeline_mode = #tpu.pipeline_mode<synchronous>, transform_indices = @transform_4, window_bounds = array<i64: 1, 128>}, {pipeline_mode = #tpu.pipeline_mode<synchronous>, transform_indices = @transform_5, window_bounds = array<i64: 1, 128>}, {transform_indices = @transform_6, window_bounds = array<i64: 1, 24, 128>}]} {
    %cst = arith.constant 0.000000e+00 : f32
    %0 = vector.broadcast %cst : f32 to vector<24x128xf32>
    %c0 = arith.constant 0 : index
    %c0_0 = arith.constant 0 : index
    %c0_1 = arith.constant 0 : index
    %c0_2 = arith.constant 0 : index
    %1 = vector.load %arg1[%c0, %c0_0, %c0_1, %c0_2] : memref<1x1x42x32xbf16, #tpu.memory_space<vmem>>, vector<1x1x24x32xbf16>
    %2 = vector.shape_cast %1 : vector<1x1x24x32xbf16> to vector<24x32xbf16>
    %c0_3 = arith.constant 0 : index
    %c0_4 = arith.constant 0 : index
    %c0_5 = arith.constant 0 : index
    %3 = vector.load %arg2[%c0_3, %c0_4, %c0_5] : memref<9x32x128xbf16, #tpu.memory_space<vmem>>, vector<1x32x128xbf16>
    %4 = vector.shape_cast %3 : vector<1x32x128xbf16> to vector<32x128xbf16>
    %cst_6 = arith.constant dense<0.000000e+00> : vector<24x128xf32>
    %5 = tpu.matmul %2, %4, %cst_6 {dimension_numbers = #tpu.dot_dimension_numbers<[1], [0], [0], [1], [0, 0, 1, 1], [], []>} : vector<24x32xbf16>, vector<32x128xbf16>, vector<24x128xf32> -> vector<24x128xf32>
    %6 = arith.addf %0, %5 : vector<24x128xf32>
    %c0_7 = arith.constant 0 : index
    %c0_8 = arith.constant 0 : index
    %c1 = arith.constant 1 : index
    %c0_9 = arith.constant 0 : index
    %7 = vector.load %arg1[%c0_7, %c0_8, %c1, %c0_9] : memref<1x1x42x32xbf16, #tpu.memory_space<vmem>>, vector<1x1x24x32xbf16>
    %8 = vector.shape_cast %7 : vector<1x1x24x32xbf16> to vector<24x32xbf16>
    %c1_10 = arith.constant 1 : index
    %c0_11 = arith.constant 0 : index
    %c0_12 = arith.constant 0 : index
    %9 = vector.load %arg2[%c1_10, %c0_11, %c0_12] : memref<9x32x128xbf16, #tpu.memory_space<vmem>>, vector<1x32x128xbf16>
    %10 = vector.shape_cast %9 : vector<1x32x128xbf16> to vector<32x128xbf16>
    %cst_13 = arith.constant dense<0.000000e+00> : vector<24x128xf32>
    %11 = tpu.matmul %8, %10, %cst_13 {dimension_numbers = #tpu.dot_dimension_numbers<[1], [0], [0], [1], [0, 0, 1, 1], [], []>} : vector<24x32xbf16>, vector<32x128xbf16>, vector<24x128xf32> -> vector<24x128xf32>
    %12 = arith.addf %6, %11 : vector<24x128xf32>
    %c0_14 = arith.constant 0 : index
    %c0_15 = arith.constant 0 : index
    %c2 = arith.constant 2 : index
    %c0_16 = arith.constant 0 : index
    %13 = vector.load %arg1[%c0_14, %c0_15, %c2, %c0_16] : memref<1x1x42x32xbf16, #tpu.memory_space<vmem>>, vector<1x1x24x32xbf16>
    %14 = vector.shape_cast %13 : vector<1x1x24x32xbf16> to vector<24x32xbf16>
    %c2_17 = arith.constant 2 : index
    %c0_18 = arith.constant 0 : index
    %c0_19 = arith.constant 0 : index
    %15 = vector.load %arg2[%c2_17, %c0_18, %c0_19] : memref<9x32x128xbf16, #tpu.memory_space<vmem>>, vector<1x32x128xbf16>
    %16 = vector.shape_cast %15 : vector<1x32x128xbf16> to vector<32x128xbf16>
    %cst_20 = arith.constant dense<0.000000e+00> : vector<24x128xf32>
    %17 = tpu.matmul %14, %16, %cst_20 {dimension_numbers = #tpu.dot_dimension_numbers<[1], [0], [0], [1], [0, 0, 1, 1], [], []>} : vector<24x32xbf16>, vector<32x128xbf16>, vector<24x128xf32> -> vector<24x128xf32>
    %18 = arith.addf %12, %17 : vector<24x128xf32>
    %c0_21 = arith.constant 0 : index
    %c0_22 = arith.constant 0 : index
    %c6 = arith.constant 6 : index
    %c0_23 = arith.constant 0 : index
    %19 = vector.load %arg1[%c0_21, %c0_22, %c6, %c0_23] : memref<1x1x42x32xbf16, #tpu.memory_space<vmem>>, vector<1x1x24x32xbf16>
    %20 = vector.shape_cast %19 : vector<1x1x24x32xbf16> to vector<24x32xbf16>
    %c3 = arith.constant 3 : index
    %c0_24 = arith.constant 0 : index
    %c0_25 = arith.constant 0 : index
    %21 = vector.load %arg2[%c3, %c0_24, %c0_25] : memref<9x32x128xbf16, #tpu.memory_space<vmem>>, vector<1x32x128xbf16>
    %22 = vector.shape_cast %21 : vector<1x32x128xbf16> to vector<32x128xbf16>
    %cst_26 = arith.constant dense<0.000000e+00> : vector<24x128xf32>
    %23 = tpu.matmul %20, %22, %cst_26 {dimension_numbers = #tpu.dot_dimension_numbers<[1], [0], [0], [1], [0, 0, 1, 1], [], []>} : vector<24x32xbf16>, vector<32x128xbf16>, vector<24x128xf32> -> vector<24x128xf32>
    %24 = arith.addf %18, %23 : vector<24x128xf32>
    %c0_27 = arith.constant 0 : index
    %c0_28 = arith.constant 0 : index
    %c7 = arith.constant 7 : index
    %c0_29 = arith.constant 0 : index
    %25 = vector.load %arg1[%c0_27, %c0_28, %c7, %c0_29] : memref<1x1x42x32xbf16, #tpu.memory_space<vmem>>, vector<1x1x24x32xbf16>
    %26 = vector.shape_cast %25 : vector<1x1x24x32xbf16> to vector<24x32xbf16>
    %c4 = arith.constant 4 : index
    %c0_30 = arith.constant 0 : index
    %c0_31 = arith.constant 0 : index
    %27 = vector.load %arg2[%c4, %c0_30, %c0_31] : memref<9x32x128xbf16, #tpu.memory_space<vmem>>, vector<1x32x128xbf16>
    %28 = vector.shape_cast %27 : vector<1x32x128xbf16> to vector<32x128xbf16>
    %cst_32 = arith.constant dense<0.000000e+00> : vector<24x128xf32>
    %29 = tpu.matmul %26, %28, %cst_32 {dimension_numbers = #tpu.dot_dimension_numbers<[1], [0], [0], [1], [0, 0, 1, 1], [], []>} : vector<24x32xbf16>, vector<32x128xbf16>, vector<24x128xf32> -> vector<24x128xf32>
    %30 = arith.addf %24, %29 : vector<24x128xf32>
    %c0_33 = arith.constant 0 : index
    %c0_34 = arith.constant 0 : index
    %c8 = arith.constant 8 : index
    %c0_35 = arith.constant 0 : index
    %31 = vector.load %arg1[%c0_33, %c0_34, %c8, %c0_35] : memref<1x1x42x32xbf16, #tpu.memory_space<vmem>>, vector<1x1x24x32xbf16>
    %32 = vector.shape_cast %31 : vector<1x1x24x32xbf16> to vector<24x32xbf16>
    %c5 = arith.constant 5 : index
    %c0_36 = arith.constant 0 : index
    %c0_37 = arith.constant 0 : index
    %33 = vector.load %arg2[%c5, %c0_36, %c0_37] : memref<9x32x128xbf16, #tpu.memory_space<vmem>>, vector<1x32x128xbf16>
    %34 = vector.shape_cast %33 : vector<1x32x128xbf16> to vector<32x128xbf16>
    %cst_38 = arith.constant dense<0.000000e+00> : vector<24x128xf32>
    %35 = tpu.matmul %32, %34, %cst_38 {dimension_numbers = #tpu.dot_dimension_numbers<[1], [0], [0], [1], [0, 0, 1, 1], [], []>} : vector<24x32xbf16>, vector<32x128xbf16>, vector<24x128xf32> -> vector<24x128xf32>
    %36 = arith.addf %30, %35 : vector<24x128xf32>
    %c0_39 = arith.constant 0 : index
    %c0_40 = arith.constant 0 : index
    %c12 = arith.constant 12 : index
    %c0_41 = arith.constant 0 : index
    %37 = vector.load %arg1[%c0_39, %c0_40, %c12, %c0_41] : memref<1x1x42x32xbf16, #tpu.memory_space<vmem>>, vector<1x1x24x32xbf16>
    %38 = vector.shape_cast %37 : vector<1x1x24x32xbf16> to vector<24x32xbf16>
    %c6_42 = arith.constant 6 : index
    %c0_43 = arith.constant 0 : index
    %c0_44 = arith.constant 0 : index
    %39 = vector.load %arg2[%c6_42, %c0_43, %c0_44] : memref<9x32x128xbf16, #tpu.memory_space<vmem>>, vector<1x32x128xbf16>
    %40 = vector.shape_cast %39 : vector<1x32x128xbf16> to vector<32x128xbf16>
    %cst_45 = arith.constant dense<0.000000e+00> : vector<24x128xf32>
    %41 = tpu.matmul %38, %40, %cst_45 {dimension_numbers = #tpu.dot_dimension_numbers<[1], [0], [0], [1], [0, 0, 1, 1], [], []>} : vector<24x32xbf16>, vector<32x128xbf16>, vector<24x128xf32> -> vector<24x128xf32>
    %42 = arith.addf %36, %41 : vector<24x128xf32>
    %c0_46 = arith.constant 0 : index
    %c0_47 = arith.constant 0 : index
    %c13 = arith.constant 13 : index
    %c0_48 = arith.constant 0 : index
    %43 = vector.load %arg1[%c0_46, %c0_47, %c13, %c0_48] : memref<1x1x42x32xbf16, #tpu.memory_space<vmem>>, vector<1x1x24x32xbf16>
    %44 = vector.shape_cast %43 : vector<1x1x24x32xbf16> to vector<24x32xbf16>
    %c7_49 = arith.constant 7 : index
    %c0_50 = arith.constant 0 : index
    %c0_51 = arith.constant 0 : index
    %45 = vector.load %arg2[%c7_49, %c0_50, %c0_51] : memref<9x32x128xbf16, #tpu.memory_space<vmem>>, vector<1x32x128xbf16>
    %46 = vector.shape_cast %45 : vector<1x32x128xbf16> to vector<32x128xbf16>
    %cst_52 = arith.constant dense<0.000000e+00> : vector<24x128xf32>
    %47 = tpu.matmul %44, %46, %cst_52 {dimension_numbers = #tpu.dot_dimension_numbers<[1], [0], [0], [1], [0, 0, 1, 1], [], []>} : vector<24x32xbf16>, vector<32x128xbf16>, vector<24x128xf32> -> vector<24x128xf32>
    %48 = arith.addf %42, %47 : vector<24x128xf32>
    %c0_53 = arith.constant 0 : index
    %c0_54 = arith.constant 0 : index
    %c14 = arith.constant 14 : index
    %c0_55 = arith.constant 0 : index
    %49 = vector.load %arg1[%c0_53, %c0_54, %c14, %c0_55] : memref<1x1x42x32xbf16, #tpu.memory_space<vmem>>, vector<1x1x24x32xbf16>
    %50 = vector.shape_cast %49 : vector<1x1x24x32xbf16> to vector<24x32xbf16>
    %c8_56 = arith.constant 8 : index
    %c0_57 = arith.constant 0 : index
    %c0_58 = arith.constant 0 : index
    %51 = vector.load %arg2[%c8_56, %c0_57, %c0_58] : memref<9x32x128xbf16, #tpu.memory_space<vmem>>, vector<1x32x128xbf16>
    %52 = vector.shape_cast %51 : vector<1x32x128xbf16> to vector<32x128xbf16>
    %cst_59 = arith.constant dense<0.000000e+00> : vector<24x128xf32>
    %53 = tpu.matmul %50, %52, %cst_59 {dimension_numbers = #tpu.dot_dimension_numbers<[1], [0], [0], [1], [0, 0, 1, 1], [], []>} : vector<24x32xbf16>, vector<32x128xbf16>, vector<24x128xf32> -> vector<24x128xf32>
    %54 = arith.addf %48, %53 : vector<24x128xf32>
    %55 = arith.truncf %54 : vector<24x128xf32> to vector<24x128xbf16>
    %c0_60 = arith.constant 0 : index
    %c0_61 = arith.constant 0 : index
    %c0_62 = arith.constant 0 : index
    %56 = vector.load %arg7[%c0_60, %c0_61, %c0_62] : memref<1x24x128xbf16, #tpu.memory_space<vmem>>, vector<1x24x128xbf16>
    %57 = vector.shape_cast %56 : vector<1x24x128xbf16> to vector<24x128xbf16>
    %58 = vector.shape_cast %55 : vector<24x128xbf16> to vector<1x24x128xbf16>
    tpu.vector_store %arg7[%c0_60, %c0_61, %c0_62], %58 {strides = array<i32>} : memref<1x24x128xbf16, #tpu.memory_space<vmem>>, vector<1x24x128xbf16>,
    return
  }
  func.func @transform_0(%arg0: i32) -> (i32, i32, i32, i32) {
    %c0_i32 = arith.constant 0 : i32
    %c0_i32_0 = arith.constant 0 : i32
    %c0_i32_1 = arith.constant 0 : i32
    %c0_i32_2 = arith.constant 0 : i32
    return %arg0, %c0_i32, %c0_i32_0, %c0_i32_1 : i32, i32, i32, i32
  }
  func.func @transform_1(%arg0: i32) -> (i32, i32, i32) {
    %c0_i32 = arith.constant 0 : i32
    %c0_i32_0 = arith.constant 0 : i32
    %c0_i32_1 = arith.constant 0 : i32
    %c0_i32_2 = arith.constant 0 : i32
    return %c0_i32, %c0_i32_0, %c0_i32_1 : i32, i32, i32
  }
  func.func @transform_2(%arg0: i32) -> (i32, i32) {
    %c0_i32 = arith.constant 0 : i32
    %c0_i32_0 = arith.constant 0 : i32
    %c0_i32_1 = arith.constant 0 : i32
    return %c0_i32, %c0_i32_0 : i32, i32
  }
  func.func @transform_3(%arg0: i32) -> (i32, i32) {
    %c0_i32 = arith.constant 0 : i32
    %c0_i32_0 = arith.constant 0 : i32
    %c0_i32_1 = arith.constant 0 : i32
    return %c0_i32, %c0_i32_0 : i32, i32
  }
  func.func @transform_4(%arg0: i32) -> (i32, i32) {
    %c0_i32 = arith.constant 0 : i32
    %c0_i32_0 = arith.constant 0 : i32
    %c0_i32_1 = arith.constant 0 : i32
    return %c0_i32, %c0_i32_0 : i32, i32
  }
  func.func @transform_5(%arg0: i32) -> (i32, i32) {
    %c0_i32 = arith.constant 0 : i32
    %c0_i32_0 = arith.constant 0 : i32
    %c0_i32_1 = arith.constant 0 : i32
    return %c0_i32, %c0_i32_0 : i32, i32
  }
  func.func @transform_6(%arg0: i32) -> (i32, i32, i32) {
    %c0_i32 = arith.constant 0 : i32
    %c0_i32_0 = arith.constant 0 : i32
    %c0_i32_1 = arith.constant 0 : i32
    return %arg0, %c0_i32, %c0_i32_0 : i32, i32, i32
  }
}

module attributes {stable_mosaic.version = 11 : i64} {
  func.func @_conv_bn_kernel(%arg0: i32, %arg1: memref<1x1x16x24xbf16, #tpu.memory_space<vmem>>, %arg2: memref<1x24x128xbf16, #tpu.memory_space<vmem>>, %arg3: memref<1x24xf32, #tpu.memory_space<vmem>>, %arg4: memref<1x24xf32, #tpu.memory_space<vmem>>, %arg5: memref<1x128xf32, #tpu.memory_space<vmem>>, %arg6: memref<1x128xf32, #tpu.memory_space<vmem>>, %arg7: memref<1x16x128xbf16, #tpu.memory_space<vmem>>) attributes {dimension_semantics = [#tpu.dimension_semantics<parallel>], iteration_bounds = array<i64: 2>, scalar_prefetch = 0 : i64, scratch_operands = 0 : i64, tpu.core_type = #tpu.core_type<tc>, window_params = [{transform_indices = @transform_0, window_bounds = array<i64: 1, 1, 16, 24>}, {pipeline_mode = #tpu.pipeline_mode<synchronous>, transform_indices = @transform_1, window_bounds = array<i64: 1, 24, 128>}, {pipeline_mode = #tpu.pipeline_mode<synchronous>, transform_indices = @transform_2, window_bounds = array<i64: 1, 24>}, {pipeline_mode = #tpu.pipeline_mode<synchronous>, transform_indices = @transform_3, window_bounds = array<i64: 1, 24>}, {pipeline_mode = #tpu.pipeline_mode<synchronous>, transform_indices = @transform_4, window_bounds = array<i64: 1, 128>}, {pipeline_mode = #tpu.pipeline_mode<synchronous>, transform_indices = @transform_5, window_bounds = array<i64: 1, 128>}, {transform_indices = @transform_6, window_bounds = array<i64: 1, 16, 128>}]} {
    %cst = arith.constant 0.000000e+00 : f32
    %0 = vector.broadcast %cst : f32 to vector<16x128xf32>
    %c0 = arith.constant 0 : index
    %c0_0 = arith.constant 0 : index
    %c0_1 = arith.constant 0 : index
    %c0_2 = arith.constant 0 : index
    %1 = vector.load %arg1[%c0, %c0_0, %c0_1, %c0_2] : memref<1x1x16x24xbf16, #tpu.memory_space<vmem>>, vector<1x1x16x24xbf16>
    %2 = vector.shape_cast %1 : vector<1x1x16x24xbf16> to vector<16x24xbf16>
    %3 = arith.extf %2 : vector<16x24xbf16> to vector<16x24xf32>
    %c0_3 = arith.constant 0 : index
    %c0_4 = arith.constant 0 : index
    %4 = vector.load %arg3[%c0_3, %c0_4] : memref<1x24xf32, #tpu.memory_space<vmem>>, vector<1x24xf32>
    %5 = vector.broadcast %4 : vector<1x24xf32> to vector<16x24xf32>
    %6 = arith.mulf %3, %5 : vector<16x24xf32>
    %c0_5 = arith.constant 0 : index
    %c0_6 = arith.constant 0 : index
    %7 = vector.load %arg4[%c0_5, %c0_6] : memref<1x24xf32, #tpu.memory_space<vmem>>, vector<1x24xf32>
    %8 = vector.broadcast %7 : vector<1x24xf32> to vector<16x24xf32>
    %9 = arith.addf %6, %8 : vector<16x24xf32>
    %cst_7 = arith.constant 0.000000e+00 : f32
    %10 = vector.broadcast %cst_7 : f32 to vector<16x24xf32>
    %11 = arith.maximumf %9, %10 : vector<16x24xf32>
    %12 = arith.truncf %11 : vector<16x24xf32> to vector<16x24xbf16>
    %c0_8 = arith.constant 0 : index
    %c0_9 = arith.constant 0 : index
    %c0_10 = arith.constant 0 : index
    %13 = vector.load %arg2[%c0_8, %c0_9, %c0_10] : memref<1x24x128xbf16, #tpu.memory_space<vmem>>, vector<1x24x128xbf16>
    %14 = vector.shape_cast %13 : vector<1x24x128xbf16> to vector<24x128xbf16>
    %cst_11 = arith.constant dense<0.000000e+00> : vector<16x128xf32>
    %15 = tpu.matmul %12, %14, %cst_11 {dimension_numbers = #tpu.dot_dimension_numbers<[1], [0], [0], [1], [0, 0, 1, 1], [], []>} : vector<16x24xbf16>, vector<24x128xbf16>, vector<16x128xf32> -> vector<16x128xf32>
    %16 = arith.addf %0, %15 : vector<16x128xf32>
    %c0_12 = arith.constant 0 : index
    %c0_13 = arith.constant 0 : index
    %17 = vector.load %arg5[%c0_12, %c0_13] : memref<1x128xf32, #tpu.memory_space<vmem>>, vector<1x128xf32>
    %18 = vector.broadcast %17 : vector<1x128xf32> to vector<16x128xf32>
    %19 = arith.mulf %16, %18 : vector<16x128xf32>
    %c0_14 = arith.constant 0 : index
    %c0_15 = arith.constant 0 : index
    %20 = vector.load %arg6[%c0_14, %c0_15] : memref<1x128xf32, #tpu.memory_space<vmem>>, vector<1x128xf32>
    %21 = vector.broadcast %20 : vector<1x128xf32> to vector<16x128xf32>
    %22 = arith.addf %19, %21 : vector<16x128xf32>
    %cst_16 = arith.constant 0.000000e+00 : f32
    %23 = vector.broadcast %cst_16 : f32 to vector<16x128xf32>
    %24 = arith.maximumf %22, %23 : vector<16x128xf32>
    %25 = arith.truncf %24 : vector<16x128xf32> to vector<16x128xbf16>
    %c0_17 = arith.constant 0 : index
    %c0_18 = arith.constant 0 : index
    %c0_19 = arith.constant 0 : index
    %26 = vector.load %arg7[%c0_17, %c0_18, %c0_19] : memref<1x16x128xbf16, #tpu.memory_space<vmem>>, vector<1x16x128xbf16>
    %27 = vector.shape_cast %26 : vector<1x16x128xbf16> to vector<16x128xbf16>
    %28 = vector.shape_cast %25 : vector<16x128xbf16> to vector<1x16x128xbf16>
    tpu.vector_store %arg7[%c0_17, %c0_18, %c0_19], %28 {strides = array<i32>} : memref<1x16x128xbf16, #tpu.memory_space<vmem>>, vector<1x16x128xbf16>,
    return
  }
  func.func @transform_0(%arg0: i32) -> (i32, i32, i32, i32) {
    %c0_i32 = arith.constant 0 : i32
    %c0_i32_0 = arith.constant 0 : i32
    %c0_i32_1 = arith.constant 0 : i32
    %c0_i32_2 = arith.constant 0 : i32
    return %arg0, %c0_i32, %c0_i32_0, %c0_i32_1 : i32, i32, i32, i32
  }
  func.func @transform_1(%arg0: i32) -> (i32, i32, i32) {
    %c0_i32 = arith.constant 0 : i32
    %c0_i32_0 = arith.constant 0 : i32
    %c0_i32_1 = arith.constant 0 : i32
    %c0_i32_2 = arith.constant 0 : i32
    return %c0_i32, %c0_i32_0, %c0_i32_1 : i32, i32, i32
  }
  func.func @transform_2(%arg0: i32) -> (i32, i32) {
    %c0_i32 = arith.constant 0 : i32
    %c0_i32_0 = arith.constant 0 : i32
    %c0_i32_1 = arith.constant 0 : i32
    return %c0_i32, %c0_i32_0 : i32, i32
  }
  func.func @transform_3(%arg0: i32) -> (i32, i32) {
    %c0_i32 = arith.constant 0 : i32
    %c0_i32_0 = arith.constant 0 : i32
    %c0_i32_1 = arith.constant 0 : i32
    return %c0_i32, %c0_i32_0 : i32, i32
  }
  func.func @transform_4(%arg0: i32) -> (i32, i32) {
    %c0_i32 = arith.constant 0 : i32
    %c0_i32_0 = arith.constant 0 : i32
    %c0_i32_1 = arith.constant 0 : i32
    return %c0_i32, %c0_i32_0 : i32, i32
  }
  func.func @transform_5(%arg0: i32) -> (i32, i32) {
    %c0_i32 = arith.constant 0 : i32
    %c0_i32_0 = arith.constant 0 : i32
    %c0_i32_1 = arith.constant 0 : i32
    return %c0_i32, %c0_i32_0 : i32, i32
  }
  func.func @transform_6(%arg0: i32) -> (i32, i32, i32) {
    %c0_i32 = arith.constant 0 : i32
    %c0_i32_0 = arith.constant 0 : i32
    %c0_i32_1 = arith.constant 0 : i32
    return %arg0, %c0_i32, %c0_i32_0 : i32, i32, i32
  }
}

module attributes {stable_mosaic.version = 11 : i64} {
  func.func @_conv_bn_kernel(%arg0: i32, %arg1: memref<1x1x16x32xbf16, #tpu.memory_space<vmem>>, %arg2: memref<1x32x128xbf16, #tpu.memory_space<vmem>>, %arg3: memref<1x32xf32, #tpu.memory_space<vmem>>, %arg4: memref<1x32xf32, #tpu.memory_space<vmem>>, %arg5: memref<1x128xf32, #tpu.memory_space<vmem>>, %arg6: memref<1x128xf32, #tpu.memory_space<vmem>>, %arg7: memref<1x16x128xbf16, #tpu.memory_space<vmem>>) attributes {dimension_semantics = [#tpu.dimension_semantics<parallel>], iteration_bounds = array<i64: 2>, scalar_prefetch = 0 : i64, scratch_operands = 0 : i64, tpu.core_type = #tpu.core_type<tc>, window_params = [{transform_indices = @transform_0, window_bounds = array<i64: 1, 1, 16, 32>}, {pipeline_mode = #tpu.pipeline_mode<synchronous>, transform_indices = @transform_1, window_bounds = array<i64: 1, 32, 128>}, {pipeline_mode = #tpu.pipeline_mode<synchronous>, transform_indices = @transform_2, window_bounds = array<i64: 1, 32>}, {pipeline_mode = #tpu.pipeline_mode<synchronous>, transform_indices = @transform_3, window_bounds = array<i64: 1, 32>}, {pipeline_mode = #tpu.pipeline_mode<synchronous>, transform_indices = @transform_4, window_bounds = array<i64: 1, 128>}, {pipeline_mode = #tpu.pipeline_mode<synchronous>, transform_indices = @transform_5, window_bounds = array<i64: 1, 128>}, {transform_indices = @transform_6, window_bounds = array<i64: 1, 16, 128>}]} {
    %cst = arith.constant 0.000000e+00 : f32
    %0 = vector.broadcast %cst : f32 to vector<16x128xf32>
    %c0 = arith.constant 0 : index
    %c0_0 = arith.constant 0 : index
    %c0_1 = arith.constant 0 : index
    %c0_2 = arith.constant 0 : index
    %1 = vector.load %arg1[%c0, %c0_0, %c0_1, %c0_2] : memref<1x1x16x32xbf16, #tpu.memory_space<vmem>>, vector<1x1x16x32xbf16>
    %2 = vector.shape_cast %1 : vector<1x1x16x32xbf16> to vector<16x32xbf16>
    %3 = arith.extf %2 : vector<16x32xbf16> to vector<16x32xf32>
    %c0_3 = arith.constant 0 : index
    %c0_4 = arith.constant 0 : index
    %4 = vector.load %arg3[%c0_3, %c0_4] : memref<1x32xf32, #tpu.memory_space<vmem>>, vector<1x32xf32>
    %5 = vector.broadcast %4 : vector<1x32xf32> to vector<16x32xf32>
    %6 = arith.mulf %3, %5 : vector<16x32xf32>
    %c0_5 = arith.constant 0 : index
    %c0_6 = arith.constant 0 : index
    %7 = vector.load %arg4[%c0_5, %c0_6] : memref<1x32xf32, #tpu.memory_space<vmem>>, vector<1x32xf32>
    %8 = vector.broadcast %7 : vector<1x32xf32> to vector<16x32xf32>
    %9 = arith.addf %6, %8 : vector<16x32xf32>
    %cst_7 = arith.constant 0.000000e+00 : f32
    %10 = vector.broadcast %cst_7 : f32 to vector<16x32xf32>
    %11 = arith.maximumf %9, %10 : vector<16x32xf32>
    %12 = arith.truncf %11 : vector<16x32xf32> to vector<16x32xbf16>
    %c0_8 = arith.constant 0 : index
    %c0_9 = arith.constant 0 : index
    %c0_10 = arith.constant 0 : index
    %13 = vector.load %arg2[%c0_8, %c0_9, %c0_10] : memref<1x32x128xbf16, #tpu.memory_space<vmem>>, vector<1x32x128xbf16>
    %14 = vector.shape_cast %13 : vector<1x32x128xbf16> to vector<32x128xbf16>
    %cst_11 = arith.constant dense<0.000000e+00> : vector<16x128xf32>
    %15 = tpu.matmul %12, %14, %cst_11 {dimension_numbers = #tpu.dot_dimension_numbers<[1], [0], [0], [1], [0, 0, 1, 1], [], []>} : vector<16x32xbf16>, vector<32x128xbf16>, vector<16x128xf32> -> vector<16x128xf32>
    %16 = arith.addf %0, %15 : vector<16x128xf32>
    %17 = arith.truncf %16 : vector<16x128xf32> to vector<16x128xbf16>
    %c0_12 = arith.constant 0 : index
    %c0_13 = arith.constant 0 : index
    %c0_14 = arith.constant 0 : index
    %18 = vector.load %arg7[%c0_12, %c0_13, %c0_14] : memref<1x16x128xbf16, #tpu.memory_space<vmem>>, vector<1x16x128xbf16>
    %19 = vector.shape_cast %18 : vector<1x16x128xbf16> to vector<16x128xbf16>
    %20 = vector.shape_cast %17 : vector<16x128xbf16> to vector<1x16x128xbf16>
    tpu.vector_store %arg7[%c0_12, %c0_13, %c0_14], %20 {strides = array<i32>} : memref<1x16x128xbf16, #tpu.memory_space<vmem>>, vector<1x16x128xbf16>,
    return
  }
  func.func @transform_0(%arg0: i32) -> (i32, i32, i32, i32) {
    %c0_i32 = arith.constant 0 : i32
    %c0_i32_0 = arith.constant 0 : i32
    %c0_i32_1 = arith.constant 0 : i32
    %c0_i32_2 = arith.constant 0 : i32
    return %arg0, %c0_i32, %c0_i32_0, %c0_i32_1 : i32, i32, i32, i32
  }
  func.func @transform_1(%arg0: i32) -> (i32, i32, i32) {
    %c0_i32 = arith.constant 0 : i32
    %c0_i32_0 = arith.constant 0 : i32
    %c0_i32_1 = arith.constant 0 : i32
    %c0_i32_2 = arith.constant 0 : i32
    return %c0_i32, %c0_i32_0, %c0_i32_1 : i32, i32, i32
  }
  func.func @transform_2(%arg0: i32) -> (i32, i32) {
    %c0_i32 = arith.constant 0 : i32
    %c0_i32_0 = arith.constant 0 : i32
    %c0_i32_1 = arith.constant 0 : i32
    return %c0_i32, %c0_i32_0 : i32, i32
  }
  func.func @transform_3(%arg0: i32) -> (i32, i32) {
    %c0_i32 = arith.constant 0 : i32
    %c0_i32_0 = arith.constant 0 : i32
    %c0_i32_1 = arith.constant 0 : i32
    return %c0_i32, %c0_i32_0 : i32, i32
  }
  func.func @transform_4(%arg0: i32) -> (i32, i32) {
    %c0_i32 = arith.constant 0 : i32
    %c0_i32_0 = arith.constant 0 : i32
    %c0_i32_1 = arith.constant 0 : i32
    return %c0_i32, %c0_i32_0 : i32, i32
  }
  func.func @transform_5(%arg0: i32) -> (i32, i32) {
    %c0_i32 = arith.constant 0 : i32
    %c0_i32_0 = arith.constant 0 : i32
    %c0_i32_1 = arith.constant 0 : i32
    return %c0_i32, %c0_i32_0 : i32, i32
  }
  func.func @transform_6(%arg0: i32) -> (i32, i32, i32) {
    %c0_i32 = arith.constant 0 : i32
    %c0_i32_0 = arith.constant 0 : i32
    %c0_i32_1 = arith.constant 0 : i32
    return %arg0, %c0_i32, %c0_i32_0 : i32, i32, i32
  }
}

module attributes {stable_mosaic.version = 11 : i64} {
  func.func @_pool_kernel(%arg0: i32, %arg1: memref<1x4x4x16xbf16, #tpu.memory_space<vmem>>, %arg2: memref<1x4x16xbf16, #tpu.memory_space<vmem>>) attributes {dimension_semantics = [#tpu.dimension_semantics<parallel>], iteration_bounds = array<i64: 2>, scalar_prefetch = 0 : i64, scratch_operands = 0 : i64, tpu.core_type = #tpu.core_type<tc>, window_params = [{transform_indices = @transform_0, window_bounds = array<i64: 1, 4, 4, 16>}, {transform_indices = @transform_1, window_bounds = array<i64: 1, 4, 16>}]} {
    %c0 = arith.constant 0 : index
    %c0_0 = arith.constant 0 : index
    %c0_1 = arith.constant 0 : index
    %c0_2 = arith.constant 0 : index
    %0 = vector.load %arg1[%c0, %c0_0, %c0_1, %c0_2] : memref<1x4x4x16xbf16, #tpu.memory_space<vmem>>, vector<1x1x4x16xbf16>
    %1 = vector.shape_cast %0 : vector<1x1x4x16xbf16> to vector<4x16xbf16>
    %2 = arith.extf %1 : vector<4x16xbf16> to vector<4x16xf32>
    %c0_3 = arith.constant 0 : index
    %c1 = arith.constant 1 : index
    %c0_4 = arith.constant 0 : index
    %c0_5 = arith.constant 0 : index
    %3 = vector.load %arg1[%c0_3, %c1, %c0_4, %c0_5] : memref<1x4x4x16xbf16, #tpu.memory_space<vmem>>, vector<1x1x4x16xbf16>
    %4 = vector.shape_cast %3 : vector<1x1x4x16xbf16> to vector<4x16xbf16>
    %5 = arith.extf %4 : vector<4x16xbf16> to vector<4x16xf32>
    %6 = arith.addf %2, %5 : vector<4x16xf32>
    %c0_6 = arith.constant 0 : index
    %c2 = arith.constant 2 : index
    %c0_7 = arith.constant 0 : index
    %c0_8 = arith.constant 0 : index
    %7 = vector.load %arg1[%c0_6, %c2, %c0_7, %c0_8] : memref<1x4x4x16xbf16, #tpu.memory_space<vmem>>, vector<1x1x4x16xbf16>
    %8 = vector.shape_cast %7 : vector<1x1x4x16xbf16> to vector<4x16xbf16>
    %9 = arith.extf %8 : vector<4x16xbf16> to vector<4x16xf32>
    %10 = arith.addf %6, %9 : vector<4x16xf32>
    %c0_9 = arith.constant 0 : index
    %c3 = arith.constant 3 : index
    %c0_10 = arith.constant 0 : index
    %c0_11 = arith.constant 0 : index
    %11 = vector.load %arg1[%c0_9, %c3, %c0_10, %c0_11] : memref<1x4x4x16xbf16, #tpu.memory_space<vmem>>, vector<1x1x4x16xbf16>
    %12 = vector.shape_cast %11 : vector<1x1x4x16xbf16> to vector<4x16xbf16>
    %13 = arith.extf %12 : vector<4x16xbf16> to vector<4x16xf32>
    %14 = arith.addf %10, %13 : vector<4x16xf32>
    %cst = arith.constant 2.500000e-01 : f32
    %15 = vector.broadcast %cst : f32 to vector<4x16xf32>
    %16 = arith.mulf %14, %15 : vector<4x16xf32>
    %17 = arith.truncf %16 : vector<4x16xf32> to vector<4x16xbf16>
    %c0_12 = arith.constant 0 : index
    %c0_13 = arith.constant 0 : index
    %c0_14 = arith.constant 0 : index
    %18 = vector.load %arg2[%c0_12, %c0_13, %c0_14] : memref<1x4x16xbf16, #tpu.memory_space<vmem>>, vector<1x4x16xbf16>
    %19 = vector.shape_cast %18 : vector<1x4x16xbf16> to vector<4x16xbf16>
    %20 = vector.shape_cast %17 : vector<4x16xbf16> to vector<1x4x16xbf16>
    tpu.vector_store %arg2[%c0_12, %c0_13, %c0_14], %20 {strides = array<i32>} : memref<1x4x16xbf16, #tpu.memory_space<vmem>>, vector<1x4x16xbf16>,
    return
  }
  func.func @transform_0(%arg0: i32) -> (i32, i32, i32, i32) {
    %c0_i32 = arith.constant 0 : i32
    %c0_i32_0 = arith.constant 0 : i32
    %c0_i32_1 = arith.constant 0 : i32
    %c0_i32_2 = arith.constant 0 : i32
    return %arg0, %c0_i32, %c0_i32_0, %c0_i32_1 : i32, i32, i32, i32
  }
  func.func @transform_1(%arg0: i32) -> (i32, i32, i32) {
    %c0_i32 = arith.constant 0 : i32
    %c0_i32_0 = arith.constant 0 : i32
    %c0_i32_1 = arith.constant 0 : i32
    return %arg0, %c0_i32, %c0_i32_0 : i32, i32, i32
  }
}

module attributes {stable_mosaic.version = 11 : i64} {
  func.func @_conv_bn_kernel(%arg0: i32, %arg1: memref<1x1x4x16xbf16, #tpu.memory_space<vmem>>, %arg2: memref<1x16x128xbf16, #tpu.memory_space<vmem>>, %arg3: memref<1x16xf32, #tpu.memory_space<vmem>>, %arg4: memref<1x16xf32, #tpu.memory_space<vmem>>, %arg5: memref<1x128xf32, #tpu.memory_space<vmem>>, %arg6: memref<1x128xf32, #tpu.memory_space<vmem>>, %arg7: memref<1x4x128xbf16, #tpu.memory_space<vmem>>) attributes {dimension_semantics = [#tpu.dimension_semantics<parallel>], iteration_bounds = array<i64: 2>, scalar_prefetch = 0 : i64, scratch_operands = 0 : i64, tpu.core_type = #tpu.core_type<tc>, window_params = [{transform_indices = @transform_0, window_bounds = array<i64: 1, 1, 4, 16>}, {pipeline_mode = #tpu.pipeline_mode<synchronous>, transform_indices = @transform_1, window_bounds = array<i64: 1, 16, 128>}, {pipeline_mode = #tpu.pipeline_mode<synchronous>, transform_indices = @transform_2, window_bounds = array<i64: 1, 16>}, {pipeline_mode = #tpu.pipeline_mode<synchronous>, transform_indices = @transform_3, window_bounds = array<i64: 1, 16>}, {pipeline_mode = #tpu.pipeline_mode<synchronous>, transform_indices = @transform_4, window_bounds = array<i64: 1, 128>}, {pipeline_mode = #tpu.pipeline_mode<synchronous>, transform_indices = @transform_5, window_bounds = array<i64: 1, 128>}, {transform_indices = @transform_6, window_bounds = array<i64: 1, 4, 128>}]} {
    %cst = arith.constant 0.000000e+00 : f32
    %0 = vector.broadcast %cst : f32 to vector<4x128xf32>
    %c0 = arith.constant 0 : index
    %c0_0 = arith.constant 0 : index
    %c0_1 = arith.constant 0 : index
    %c0_2 = arith.constant 0 : index
    %1 = vector.load %arg1[%c0, %c0_0, %c0_1, %c0_2] : memref<1x1x4x16xbf16, #tpu.memory_space<vmem>>, vector<1x1x4x16xbf16>
    %2 = vector.shape_cast %1 : vector<1x1x4x16xbf16> to vector<4x16xbf16>
    %3 = arith.extf %2 : vector<4x16xbf16> to vector<4x16xf32>
    %c0_3 = arith.constant 0 : index
    %c0_4 = arith.constant 0 : index
    %4 = vector.load %arg3[%c0_3, %c0_4] : memref<1x16xf32, #tpu.memory_space<vmem>>, vector<1x16xf32>
    %5 = vector.broadcast %4 : vector<1x16xf32> to vector<4x16xf32>
    %6 = arith.mulf %3, %5 : vector<4x16xf32>
    %c0_5 = arith.constant 0 : index
    %c0_6 = arith.constant 0 : index
    %7 = vector.load %arg4[%c0_5, %c0_6] : memref<1x16xf32, #tpu.memory_space<vmem>>, vector<1x16xf32>
    %8 = vector.broadcast %7 : vector<1x16xf32> to vector<4x16xf32>
    %9 = arith.addf %6, %8 : vector<4x16xf32>
    %cst_7 = arith.constant 0.000000e+00 : f32
    %10 = vector.broadcast %cst_7 : f32 to vector<4x16xf32>
    %11 = arith.maximumf %9, %10 : vector<4x16xf32>
    %12 = arith.truncf %11 : vector<4x16xf32> to vector<4x16xbf16>
    %c0_8 = arith.constant 0 : index
    %c0_9 = arith.constant 0 : index
    %c0_10 = arith.constant 0 : index
    %13 = vector.load %arg2[%c0_8, %c0_9, %c0_10] : memref<1x16x128xbf16, #tpu.memory_space<vmem>>, vector<1x16x128xbf16>
    %14 = vector.shape_cast %13 : vector<1x16x128xbf16> to vector<16x128xbf16>
    %cst_11 = arith.constant dense<0.000000e+00> : vector<4x128xf32>
    %15 = tpu.matmul %12, %14, %cst_11 {dimension_numbers = #tpu.dot_dimension_numbers<[1], [0], [0], [1], [0, 0, 1, 1], [], []>} : vector<4x16xbf16>, vector<16x128xbf16>, vector<4x128xf32> -> vector<4x128xf32>
    %16 = arith.addf %0, %15 : vector<4x128xf32>
    %c0_12 = arith.constant 0 : index
    %c0_13 = arith.constant 0 : index
    %17 = vector.load %arg5[%c0_12, %c0_13] : memref<1x128xf32, #tpu.memory_space<vmem>>, vector<1x128xf32>
    %18 = vector.broadcast %17 : vector<1x128xf32> to vector<4x128xf32>
    %19 = arith.mulf %16, %18 : vector<4x128xf32>
    %c0_14 = arith.constant 0 : index
    %c0_15 = arith.constant 0 : index
    %20 = vector.load %arg6[%c0_14, %c0_15] : memref<1x128xf32, #tpu.memory_space<vmem>>, vector<1x128xf32>
    %21 = vector.broadcast %20 : vector<1x128xf32> to vector<4x128xf32>
    %22 = arith.addf %19, %21 : vector<4x128xf32>
    %cst_16 = arith.constant 0.000000e+00 : f32
    %23 = vector.broadcast %cst_16 : f32 to vector<4x128xf32>
    %24 = arith.maximumf %22, %23 : vector<4x128xf32>
    %25 = arith.truncf %24 : vector<4x128xf32> to vector<4x128xbf16>
    %c0_17 = arith.constant 0 : index
    %c0_18 = arith.constant 0 : index
    %c0_19 = arith.constant 0 : index
    %26 = vector.load %arg7[%c0_17, %c0_18, %c0_19] : memref<1x4x128xbf16, #tpu.memory_space<vmem>>, vector<1x4x128xbf16>
    %27 = vector.shape_cast %26 : vector<1x4x128xbf16> to vector<4x128xbf16>
    %28 = vector.shape_cast %25 : vector<4x128xbf16> to vector<1x4x128xbf16>
    tpu.vector_store %arg7[%c0_17, %c0_18, %c0_19], %28 {strides = array<i32>} : memref<1x4x128xbf16, #tpu.memory_space<vmem>>, vector<1x4x128xbf16>,
    return
  }
  func.func @transform_0(%arg0: i32) -> (i32, i32, i32, i32) {
    %c0_i32 = arith.constant 0 : i32
    %c0_i32_0 = arith.constant 0 : i32
    %c0_i32_1 = arith.constant 0 : i32
    %c0_i32_2 = arith.constant 0 : i32
    return %arg0, %c0_i32, %c0_i32_0, %c0_i32_1 : i32, i32, i32, i32
  }
  func.func @transform_1(%arg0: i32) -> (i32, i32, i32) {
    %c0_i32 = arith.constant 0 : i32
    %c0_i32_0 = arith.constant 0 : i32
    %c0_i32_1 = arith.constant 0 : i32
    %c0_i32_2 = arith.constant 0 : i32
    return %c0_i32, %c0_i32_0, %c0_i32_1 : i32, i32, i32
  }
  func.func @transform_2(%arg0: i32) -> (i32, i32) {
    %c0_i32 = arith.constant 0 : i32
    %c0_i32_0 = arith.constant 0 : i32
    %c0_i32_1 = arith.constant 0 : i32
    return %c0_i32, %c0_i32_0 : i32, i32
  }
  func.func @transform_3(%arg0: i32) -> (i32, i32) {
    %c0_i32 = arith.constant 0 : i32
    %c0_i32_0 = arith.constant 0 : i32
    %c0_i32_1 = arith.constant 0 : i32
    return %c0_i32, %c0_i32_0 : i32, i32
  }
  func.func @transform_4(%arg0: i32) -> (i32, i32) {
    %c0_i32 = arith.constant 0 : i32
    %c0_i32_0 = arith.constant 0 : i32
    %c0_i32_1 = arith.constant 0 : i32
    return %c0_i32, %c0_i32_0 : i32, i32
  }
  func.func @transform_5(%arg0: i32) -> (i32, i32) {
    %c0_i32 = arith.constant 0 : i32
    %c0_i32_0 = arith.constant 0 : i32
    %c0_i32_1 = arith.constant 0 : i32
    return %c0_i32, %c0_i32_0 : i32, i32
  }
  func.func @transform_6(%arg0: i32) -> (i32, i32, i32) {
    %c0_i32 = arith.constant 0 : i32
    %c0_i32_0 = arith.constant 0 : i32
    %c0_i32_1 = arith.constant 0 : i32
    return %arg0, %c0_i32, %c0_i32_0 : i32, i32, i32
  }
}

module attributes {stable_mosaic.version = 11 : i64} {
  func.func @_conv_bn_kernel(%arg0: i32, %arg1: memref<1x1x20x32xbf16, #tpu.memory_space<vmem>>, %arg2: memref<9x32x128xbf16, #tpu.memory_space<vmem>>, %arg3: memref<1x32xf32, #tpu.memory_space<vmem>>, %arg4: memref<1x32xf32, #tpu.memory_space<vmem>>, %arg5: memref<1x128xf32, #tpu.memory_space<vmem>>, %arg6: memref<1x128xf32, #tpu.memory_space<vmem>>, %arg7: memref<1x8x128xbf16, #tpu.memory_space<vmem>>) attributes {dimension_semantics = [#tpu.dimension_semantics<parallel>], iteration_bounds = array<i64: 2>, scalar_prefetch = 0 : i64, scratch_operands = 0 : i64, tpu.core_type = #tpu.core_type<tc>, window_params = [{transform_indices = @transform_0, window_bounds = array<i64: 1, 1, 20, 32>}, {pipeline_mode = #tpu.pipeline_mode<synchronous>, transform_indices = @transform_1, window_bounds = array<i64: 9, 32, 128>}, {pipeline_mode = #tpu.pipeline_mode<synchronous>, transform_indices = @transform_2, window_bounds = array<i64: 1, 32>}, {pipeline_mode = #tpu.pipeline_mode<synchronous>, transform_indices = @transform_3, window_bounds = array<i64: 1, 32>}, {pipeline_mode = #tpu.pipeline_mode<synchronous>, transform_indices = @transform_4, window_bounds = array<i64: 1, 128>}, {pipeline_mode = #tpu.pipeline_mode<synchronous>, transform_indices = @transform_5, window_bounds = array<i64: 1, 128>}, {transform_indices = @transform_6, window_bounds = array<i64: 1, 8, 128>}]} {
    %cst = arith.constant 0.000000e+00 : f32
    %0 = vector.broadcast %cst : f32 to vector<8x128xf32>
    %c0 = arith.constant 0 : index
    %c0_0 = arith.constant 0 : index
    %c0_1 = arith.constant 0 : index
    %c0_2 = arith.constant 0 : index
    %1 = vector.load %arg1[%c0, %c0_0, %c0_1, %c0_2] : memref<1x1x20x32xbf16, #tpu.memory_space<vmem>>, vector<1x1x8x32xbf16>
    %2 = vector.shape_cast %1 : vector<1x1x8x32xbf16> to vector<8x32xbf16>
    %c0_3 = arith.constant 0 : index
    %c0_4 = arith.constant 0 : index
    %c0_5 = arith.constant 0 : index
    %3 = vector.load %arg2[%c0_3, %c0_4, %c0_5] : memref<9x32x128xbf16, #tpu.memory_space<vmem>>, vector<1x32x128xbf16>
    %4 = vector.shape_cast %3 : vector<1x32x128xbf16> to vector<32x128xbf16>
    %cst_6 = arith.constant dense<0.000000e+00> : vector<8x128xf32>
    %5 = tpu.matmul %2, %4, %cst_6 {dimension_numbers = #tpu.dot_dimension_numbers<[1], [0], [0], [1], [0, 0, 1, 1], [], []>} : vector<8x32xbf16>, vector<32x128xbf16>, vector<8x128xf32> -> vector<8x128xf32>
    %6 = arith.addf %0, %5 : vector<8x128xf32>
    %c0_7 = arith.constant 0 : index
    %c0_8 = arith.constant 0 : index
    %c1 = arith.constant 1 : index
    %c0_9 = arith.constant 0 : index
    %7 = vector.load %arg1[%c0_7, %c0_8, %c1, %c0_9] : memref<1x1x20x32xbf16, #tpu.memory_space<vmem>>, vector<1x1x8x32xbf16>
    %8 = vector.shape_cast %7 : vector<1x1x8x32xbf16> to vector<8x32xbf16>
    %c1_10 = arith.constant 1 : index
    %c0_11 = arith.constant 0 : index
    %c0_12 = arith.constant 0 : index
    %9 = vector.load %arg2[%c1_10, %c0_11, %c0_12] : memref<9x32x128xbf16, #tpu.memory_space<vmem>>, vector<1x32x128xbf16>
    %10 = vector.shape_cast %9 : vector<1x32x128xbf16> to vector<32x128xbf16>
    %cst_13 = arith.constant dense<0.000000e+00> : vector<8x128xf32>
    %11 = tpu.matmul %8, %10, %cst_13 {dimension_numbers = #tpu.dot_dimension_numbers<[1], [0], [0], [1], [0, 0, 1, 1], [], []>} : vector<8x32xbf16>, vector<32x128xbf16>, vector<8x128xf32> -> vector<8x128xf32>
    %12 = arith.addf %6, %11 : vector<8x128xf32>
    %c0_14 = arith.constant 0 : index
    %c0_15 = arith.constant 0 : index
    %c2 = arith.constant 2 : index
    %c0_16 = arith.constant 0 : index
    %13 = vector.load %arg1[%c0_14, %c0_15, %c2, %c0_16] : memref<1x1x20x32xbf16, #tpu.memory_space<vmem>>, vector<1x1x8x32xbf16>
    %14 = vector.shape_cast %13 : vector<1x1x8x32xbf16> to vector<8x32xbf16>
    %c2_17 = arith.constant 2 : index
    %c0_18 = arith.constant 0 : index
    %c0_19 = arith.constant 0 : index
    %15 = vector.load %arg2[%c2_17, %c0_18, %c0_19] : memref<9x32x128xbf16, #tpu.memory_space<vmem>>, vector<1x32x128xbf16>
    %16 = vector.shape_cast %15 : vector<1x32x128xbf16> to vector<32x128xbf16>
    %cst_20 = arith.constant dense<0.000000e+00> : vector<8x128xf32>
    %17 = tpu.matmul %14, %16, %cst_20 {dimension_numbers = #tpu.dot_dimension_numbers<[1], [0], [0], [1], [0, 0, 1, 1], [], []>} : vector<8x32xbf16>, vector<32x128xbf16>, vector<8x128xf32> -> vector<8x128xf32>
    %18 = arith.addf %12, %17 : vector<8x128xf32>
    %c0_21 = arith.constant 0 : index
    %c0_22 = arith.constant 0 : index
    %c4 = arith.constant 4 : index
    %c0_23 = arith.constant 0 : index
    %19 = vector.load %arg1[%c0_21, %c0_22, %c4, %c0_23] : memref<1x1x20x32xbf16, #tpu.memory_space<vmem>>, vector<1x1x8x32xbf16>
    %20 = vector.shape_cast %19 : vector<1x1x8x32xbf16> to vector<8x32xbf16>
    %c3 = arith.constant 3 : index
    %c0_24 = arith.constant 0 : index
    %c0_25 = arith.constant 0 : index
    %21 = vector.load %arg2[%c3, %c0_24, %c0_25] : memref<9x32x128xbf16, #tpu.memory_space<vmem>>, vector<1x32x128xbf16>
    %22 = vector.shape_cast %21 : vector<1x32x128xbf16> to vector<32x128xbf16>
    %cst_26 = arith.constant dense<0.000000e+00> : vector<8x128xf32>
    %23 = tpu.matmul %20, %22, %cst_26 {dimension_numbers = #tpu.dot_dimension_numbers<[1], [0], [0], [1], [0, 0, 1, 1], [], []>} : vector<8x32xbf16>, vector<32x128xbf16>, vector<8x128xf32> -> vector<8x128xf32>
    %24 = arith.addf %18, %23 : vector<8x128xf32>
    %c0_27 = arith.constant 0 : index
    %c0_28 = arith.constant 0 : index
    %c5 = arith.constant 5 : index
    %c0_29 = arith.constant 0 : index
    %25 = vector.load %arg1[%c0_27, %c0_28, %c5, %c0_29] : memref<1x1x20x32xbf16, #tpu.memory_space<vmem>>, vector<1x1x8x32xbf16>
    %26 = vector.shape_cast %25 : vector<1x1x8x32xbf16> to vector<8x32xbf16>
    %c4_30 = arith.constant 4 : index
    %c0_31 = arith.constant 0 : index
    %c0_32 = arith.constant 0 : index
    %27 = vector.load %arg2[%c4_30, %c0_31, %c0_32] : memref<9x32x128xbf16, #tpu.memory_space<vmem>>, vector<1x32x128xbf16>
    %28 = vector.shape_cast %27 : vector<1x32x128xbf16> to vector<32x128xbf16>
    %cst_33 = arith.constant dense<0.000000e+00> : vector<8x128xf32>
    %29 = tpu.matmul %26, %28, %cst_33 {dimension_numbers = #tpu.dot_dimension_numbers<[1], [0], [0], [1], [0, 0, 1, 1], [], []>} : vector<8x32xbf16>, vector<32x128xbf16>, vector<8x128xf32> -> vector<8x128xf32>
    %30 = arith.addf %24, %29 : vector<8x128xf32>
    %c0_34 = arith.constant 0 : index
    %c0_35 = arith.constant 0 : index
    %c6 = arith.constant 6 : index
    %c0_36 = arith.constant 0 : index
    %31 = vector.load %arg1[%c0_34, %c0_35, %c6, %c0_36] : memref<1x1x20x32xbf16, #tpu.memory_space<vmem>>, vector<1x1x8x32xbf16>
    %32 = vector.shape_cast %31 : vector<1x1x8x32xbf16> to vector<8x32xbf16>
    %c5_37 = arith.constant 5 : index
    %c0_38 = arith.constant 0 : index
    %c0_39 = arith.constant 0 : index
    %33 = vector.load %arg2[%c5_37, %c0_38, %c0_39] : memref<9x32x128xbf16, #tpu.memory_space<vmem>>, vector<1x32x128xbf16>
    %34 = vector.shape_cast %33 : vector<1x32x128xbf16> to vector<32x128xbf16>
    %cst_40 = arith.constant dense<0.000000e+00> : vector<8x128xf32>
    %35 = tpu.matmul %32, %34, %cst_40 {dimension_numbers = #tpu.dot_dimension_numbers<[1], [0], [0], [1], [0, 0, 1, 1], [], []>} : vector<8x32xbf16>, vector<32x128xbf16>, vector<8x128xf32> -> vector<8x128xf32>
    %36 = arith.addf %30, %35 : vector<8x128xf32>
    %c0_41 = arith.constant 0 : index
    %c0_42 = arith.constant 0 : index
    %c8 = arith.constant 8 : index
    %c0_43 = arith.constant 0 : index
    %37 = vector.load %arg1[%c0_41, %c0_42, %c8, %c0_43] : memref<1x1x20x32xbf16, #tpu.memory_space<vmem>>, vector<1x1x8x32xbf16>
    %38 = vector.shape_cast %37 : vector<1x1x8x32xbf16> to vector<8x32xbf16>
    %c6_44 = arith.constant 6 : index
    %c0_45 = arith.constant 0 : index
    %c0_46 = arith.constant 0 : index
    %39 = vector.load %arg2[%c6_44, %c0_45, %c0_46] : memref<9x32x128xbf16, #tpu.memory_space<vmem>>, vector<1x32x128xbf16>
    %40 = vector.shape_cast %39 : vector<1x32x128xbf16> to vector<32x128xbf16>
    %cst_47 = arith.constant dense<0.000000e+00> : vector<8x128xf32>
    %41 = tpu.matmul %38, %40, %cst_47 {dimension_numbers = #tpu.dot_dimension_numbers<[1], [0], [0], [1], [0, 0, 1, 1], [], []>} : vector<8x32xbf16>, vector<32x128xbf16>, vector<8x128xf32> -> vector<8x128xf32>
    %42 = arith.addf %36, %41 : vector<8x128xf32>
    %c0_48 = arith.constant 0 : index
    %c0_49 = arith.constant 0 : index
    %c9 = arith.constant 9 : index
    %c0_50 = arith.constant 0 : index
    %43 = vector.load %arg1[%c0_48, %c0_49, %c9, %c0_50] : memref<1x1x20x32xbf16, #tpu.memory_space<vmem>>, vector<1x1x8x32xbf16>
    %44 = vector.shape_cast %43 : vector<1x1x8x32xbf16> to vector<8x32xbf16>
    %c7 = arith.constant 7 : index
    %c0_51 = arith.constant 0 : index
    %c0_52 = arith.constant 0 : index
    %45 = vector.load %arg2[%c7, %c0_51, %c0_52] : memref<9x32x128xbf16, #tpu.memory_space<vmem>>, vector<1x32x128xbf16>
    %46 = vector.shape_cast %45 : vector<1x32x128xbf16> to vector<32x128xbf16>
    %cst_53 = arith.constant dense<0.000000e+00> : vector<8x128xf32>
    %47 = tpu.matmul %44, %46, %cst_53 {dimension_numbers = #tpu.dot_dimension_numbers<[1], [0], [0], [1], [0, 0, 1, 1], [], []>} : vector<8x32xbf16>, vector<32x128xbf16>, vector<8x128xf32> -> vector<8x128xf32>
    %48 = arith.addf %42, %47 : vector<8x128xf32>
    %c0_54 = arith.constant 0 : index
    %c0_55 = arith.constant 0 : index
    %c10 = arith.constant 10 : index
    %c0_56 = arith.constant 0 : index
    %49 = vector.load %arg1[%c0_54, %c0_55, %c10, %c0_56] : memref<1x1x20x32xbf16, #tpu.memory_space<vmem>>, vector<1x1x8x32xbf16>
    %50 = vector.shape_cast %49 : vector<1x1x8x32xbf16> to vector<8x32xbf16>
    %c8_57 = arith.constant 8 : index
    %c0_58 = arith.constant 0 : index
    %c0_59 = arith.constant 0 : index
    %51 = vector.load %arg2[%c8_57, %c0_58, %c0_59] : memref<9x32x128xbf16, #tpu.memory_space<vmem>>, vector<1x32x128xbf16>
    %52 = vector.shape_cast %51 : vector<1x32x128xbf16> to vector<32x128xbf16>
    %cst_60 = arith.constant dense<0.000000e+00> : vector<8x128xf32>
    %53 = tpu.matmul %50, %52, %cst_60 {dimension_numbers = #tpu.dot_dimension_numbers<[1], [0], [0], [1], [0, 0, 1, 1], [], []>} : vector<8x32xbf16>, vector<32x128xbf16>, vector<8x128xf32> -> vector<8x128xf32>
    %54 = arith.addf %48, %53 : vector<8x128xf32>
    %55 = arith.truncf %54 : vector<8x128xf32> to vector<8x128xbf16>
    %c0_61 = arith.constant 0 : index
    %c0_62 = arith.constant 0 : index
    %c0_63 = arith.constant 0 : index
    %56 = vector.load %arg7[%c0_61, %c0_62, %c0_63] : memref<1x8x128xbf16, #tpu.memory_space<vmem>>, vector<1x8x128xbf16>
    %57 = vector.shape_cast %56 : vector<1x8x128xbf16> to vector<8x128xbf16>
    %58 = vector.shape_cast %55 : vector<8x128xbf16> to vector<1x8x128xbf16>
    tpu.vector_store %arg7[%c0_61, %c0_62, %c0_63], %58 {strides = array<i32>} : memref<1x8x128xbf16, #tpu.memory_space<vmem>>, vector<1x8x128xbf16>,
    return
  }
  func.func @transform_0(%arg0: i32) -> (i32, i32, i32, i32) {
    %c0_i32 = arith.constant 0 : i32
    %c0_i32_0 = arith.constant 0 : i32
    %c0_i32_1 = arith.constant 0 : i32
    %c0_i32_2 = arith.constant 0 : i32
    return %arg0, %c0_i32, %c0_i32_0, %c0_i32_1 : i32, i32, i32, i32
  }
  func.func @transform_1(%arg0: i32) -> (i32, i32, i32) {
    %c0_i32 = arith.constant 0 : i32
    %c0_i32_0 = arith.constant 0 : i32
    %c0_i32_1 = arith.constant 0 : i32
    %c0_i32_2 = arith.constant 0 : i32
    return %c0_i32, %c0_i32_0, %c0_i32_1 : i32, i32, i32
  }
  func.func @transform_2(%arg0: i32) -> (i32, i32) {
    %c0_i32 = arith.constant 0 : i32
    %c0_i32_0 = arith.constant 0 : i32
    %c0_i32_1 = arith.constant 0 : i32
    return %c0_i32, %c0_i32_0 : i32, i32
  }
  func.func @transform_3(%arg0: i32) -> (i32, i32) {
    %c0_i32 = arith.constant 0 : i32
    %c0_i32_0 = arith.constant 0 : i32
    %c0_i32_1 = arith.constant 0 : i32
    return %c0_i32, %c0_i32_0 : i32, i32
  }
  func.func @transform_4(%arg0: i32) -> (i32, i32) {
    %c0_i32 = arith.constant 0 : i32
    %c0_i32_0 = arith.constant 0 : i32
    %c0_i32_1 = arith.constant 0 : i32
    return %c0_i32, %c0_i32_0 : i32, i32
  }
  func.func @transform_5(%arg0: i32) -> (i32, i32) {
    %c0_i32 = arith.constant 0 : i32
    %c0_i32_0 = arith.constant 0 : i32
    %c0_i32_1 = arith.constant 0 : i32
    return %c0_i32, %c0_i32_0 : i32, i32
  }
  func.func @transform_6(%arg0: i32) -> (i32, i32, i32) {
    %c0_i32 = arith.constant 0 : i32
    %c0_i32_0 = arith.constant 0 : i32
    %c0_i32_1 = arith.constant 0 : i32
    return %arg0, %c0_i32, %c0_i32_0 : i32, i32, i32
  }
}

module attributes {stable_mosaic.version = 11 : i64} {
  func.func @_conv_bn_kernel(%arg0: i32, %arg1: memref<1x1x4x24xbf16, #tpu.memory_space<vmem>>, %arg2: memref<1x24x128xbf16, #tpu.memory_space<vmem>>, %arg3: memref<1x24xf32, #tpu.memory_space<vmem>>, %arg4: memref<1x24xf32, #tpu.memory_space<vmem>>, %arg5: memref<1x128xf32, #tpu.memory_space<vmem>>, %arg6: memref<1x128xf32, #tpu.memory_space<vmem>>, %arg7: memref<1x4x128xbf16, #tpu.memory_space<vmem>>) attributes {dimension_semantics = [#tpu.dimension_semantics<parallel>], iteration_bounds = array<i64: 2>, scalar_prefetch = 0 : i64, scratch_operands = 0 : i64, tpu.core_type = #tpu.core_type<tc>, window_params = [{transform_indices = @transform_0, window_bounds = array<i64: 1, 1, 4, 24>}, {pipeline_mode = #tpu.pipeline_mode<synchronous>, transform_indices = @transform_1, window_bounds = array<i64: 1, 24, 128>}, {pipeline_mode = #tpu.pipeline_mode<synchronous>, transform_indices = @transform_2, window_bounds = array<i64: 1, 24>}, {pipeline_mode = #tpu.pipeline_mode<synchronous>, transform_indices = @transform_3, window_bounds = array<i64: 1, 24>}, {pipeline_mode = #tpu.pipeline_mode<synchronous>, transform_indices = @transform_4, window_bounds = array<i64: 1, 128>}, {pipeline_mode = #tpu.pipeline_mode<synchronous>, transform_indices = @transform_5, window_bounds = array<i64: 1, 128>}, {transform_indices = @transform_6, window_bounds = array<i64: 1, 4, 128>}]} {
    %cst = arith.constant 0.000000e+00 : f32
    %0 = vector.broadcast %cst : f32 to vector<4x128xf32>
    %c0 = arith.constant 0 : index
    %c0_0 = arith.constant 0 : index
    %c0_1 = arith.constant 0 : index
    %c0_2 = arith.constant 0 : index
    %1 = vector.load %arg1[%c0, %c0_0, %c0_1, %c0_2] : memref<1x1x4x24xbf16, #tpu.memory_space<vmem>>, vector<1x1x4x24xbf16>
    %2 = vector.shape_cast %1 : vector<1x1x4x24xbf16> to vector<4x24xbf16>
    %3 = arith.extf %2 : vector<4x24xbf16> to vector<4x24xf32>
    %c0_3 = arith.constant 0 : index
    %c0_4 = arith.constant 0 : index
    %4 = vector.load %arg3[%c0_3, %c0_4] : memref<1x24xf32, #tpu.memory_space<vmem>>, vector<1x24xf32>
    %5 = vector.broadcast %4 : vector<1x24xf32> to vector<4x24xf32>
    %6 = arith.mulf %3, %5 : vector<4x24xf32>
    %c0_5 = arith.constant 0 : index
    %c0_6 = arith.constant 0 : index
    %7 = vector.load %arg4[%c0_5, %c0_6] : memref<1x24xf32, #tpu.memory_space<vmem>>, vector<1x24xf32>
    %8 = vector.broadcast %7 : vector<1x24xf32> to vector<4x24xf32>
    %9 = arith.addf %6, %8 : vector<4x24xf32>
    %cst_7 = arith.constant 0.000000e+00 : f32
    %10 = vector.broadcast %cst_7 : f32 to vector<4x24xf32>
    %11 = arith.maximumf %9, %10 : vector<4x24xf32>
    %12 = arith.truncf %11 : vector<4x24xf32> to vector<4x24xbf16>
    %c0_8 = arith.constant 0 : index
    %c0_9 = arith.constant 0 : index
    %c0_10 = arith.constant 0 : index
    %13 = vector.load %arg2[%c0_8, %c0_9, %c0_10] : memref<1x24x128xbf16, #tpu.memory_space<vmem>>, vector<1x24x128xbf16>
    %14 = vector.shape_cast %13 : vector<1x24x128xbf16> to vector<24x128xbf16>
    %cst_11 = arith.constant dense<0.000000e+00> : vector<4x128xf32>
    %15 = tpu.matmul %12, %14, %cst_11 {dimension_numbers = #tpu.dot_dimension_numbers<[1], [0], [0], [1], [0, 0, 1, 1], [], []>} : vector<4x24xbf16>, vector<24x128xbf16>, vector<4x128xf32> -> vector<4x128xf32>
    %16 = arith.addf %0, %15 : vector<4x128xf32>
    %c0_12 = arith.constant 0 : index
    %c0_13 = arith.constant 0 : index
    %17 = vector.load %arg5[%c0_12, %c0_13] : memref<1x128xf32, #tpu.memory_space<vmem>>, vector<1x128xf32>
    %18 = vector.broadcast %17 : vector<1x128xf32> to vector<4x128xf32>
    %19 = arith.mulf %16, %18 : vector<4x128xf32>
    %c0_14 = arith.constant 0 : index
    %c0_15 = arith.constant 0 : index
    %20 = vector.load %arg6[%c0_14, %c0_15] : memref<1x128xf32, #tpu.memory_space<vmem>>, vector<1x128xf32>
    %21 = vector.broadcast %20 : vector<1x128xf32> to vector<4x128xf32>
    %22 = arith.addf %19, %21 : vector<4x128xf32>
    %cst_16 = arith.constant 0.000000e+00 : f32
    %23 = vector.broadcast %cst_16 : f32 to vector<4x128xf32>
    %24 = arith.maximumf %22, %23 : vector<4x128xf32>
    %25 = arith.truncf %24 : vector<4x128xf32> to vector<4x128xbf16>
    %c0_17 = arith.constant 0 : index
    %c0_18 = arith.constant 0 : index
    %c0_19 = arith.constant 0 : index
    %26 = vector.load %arg7[%c0_17, %c0_18, %c0_19] : memref<1x4x128xbf16, #tpu.memory_space<vmem>>, vector<1x4x128xbf16>
    %27 = vector.shape_cast %26 : vector<1x4x128xbf16> to vector<4x128xbf16>
    %28 = vector.shape_cast %25 : vector<4x128xbf16> to vector<1x4x128xbf16>
    tpu.vector_store %arg7[%c0_17, %c0_18, %c0_19], %28 {strides = array<i32>} : memref<1x4x128xbf16, #tpu.memory_space<vmem>>, vector<1x4x128xbf16>,
    return
  }
  func.func @transform_0(%arg0: i32) -> (i32, i32, i32, i32) {
    %c0_i32 = arith.constant 0 : i32
    %c0_i32_0 = arith.constant 0 : i32
    %c0_i32_1 = arith.constant 0 : i32
    %c0_i32_2 = arith.constant 0 : i32
    return %arg0, %c0_i32, %c0_i32_0, %c0_i32_1 : i32, i32, i32, i32
  }
  func.func @transform_1(%arg0: i32) -> (i32, i32, i32) {
    %c0_i32 = arith.constant 0 : i32
    %c0_i32_0 = arith.constant 0 : i32
    %c0_i32_1 = arith.constant 0 : i32
    %c0_i32_2 = arith.constant 0 : i32
    return %c0_i32, %c0_i32_0, %c0_i32_1 : i32, i32, i32
  }
  func.func @transform_2(%arg0: i32) -> (i32, i32) {
    %c0_i32 = arith.constant 0 : i32
    %c0_i32_0 = arith.constant 0 : i32
    %c0_i32_1 = arith.constant 0 : i32
    return %c0_i32, %c0_i32_0 : i32, i32
  }
  func.func @transform_3(%arg0: i32) -> (i32, i32) {
    %c0_i32 = arith.constant 0 : i32
    %c0_i32_0 = arith.constant 0 : i32
    %c0_i32_1 = arith.constant 0 : i32
    return %c0_i32, %c0_i32_0 : i32, i32
  }
  func.func @transform_4(%arg0: i32) -> (i32, i32) {
    %c0_i32 = arith.constant 0 : i32
    %c0_i32_0 = arith.constant 0 : i32
    %c0_i32_1 = arith.constant 0 : i32
    return %c0_i32, %c0_i32_0 : i32, i32
  }
  func.func @transform_5(%arg0: i32) -> (i32, i32) {
    %c0_i32 = arith.constant 0 : i32
    %c0_i32_0 = arith.constant 0 : i32
    %c0_i32_1 = arith.constant 0 : i32
    return %c0_i32, %c0_i32_0 : i32, i32
  }
  func.func @transform_6(%arg0: i32) -> (i32, i32, i32) {
    %c0_i32 = arith.constant 0 : i32
    %c0_i32_0 = arith.constant 0 : i32
    %c0_i32_1 = arith.constant 0 : i32
    return %arg0, %c0_i32, %c0_i32_0 : i32, i32, i32
  }
}

module attributes {stable_mosaic.version = 11 : i64} {
  func.func @_bn_gap_kernel(%arg0: i32, %arg1: memref<2x4x32xbf16, #tpu.memory_space<vmem>>, %arg2: memref<1x32xf32, #tpu.memory_space<vmem>>, %arg3: memref<1x32xf32, #tpu.memory_space<vmem>>, %arg4: memref<2x32xf32, #tpu.memory_space<vmem>>, %arg5: memref<2x32xf32, #tpu.memory_space<vmem>>) attributes {dimension_semantics = [#tpu.dimension_semantics<arbitrary>], iteration_bounds = array<i64: 1>, scalar_prefetch = 0 : i64, scratch_operands = 1 : i64, tpu.core_type = #tpu.core_type<tc>, window_params = [{transform_indices = @transform_0, window_bounds = array<i64: 2, 4, 32>}, {pipeline_mode = #tpu.pipeline_mode<synchronous>, transform_indices = @transform_1, window_bounds = array<i64: 1, 32>}, {pipeline_mode = #tpu.pipeline_mode<synchronous>, transform_indices = @transform_2, window_bounds = array<i64: 1, 32>}, {pipeline_mode = #tpu.pipeline_mode<synchronous>, transform_indices = @transform_3, window_bounds = array<i64: 2, 32>}]} {
    %c0_i32 = arith.constant 0 : i32
    %0 = arith.cmpi eq, %arg0, %c0_i32 : i32
    %1 = arith.extui %0 : i1 to i32
    %c0_i32_0 = arith.constant 0 : i32
    %2 = arith.cmpi ne, %1, %c0_i32_0 : i32
    scf.if %2 {
      %cst_9 = arith.constant 0.000000e+00 : f32
      %12 = vector.broadcast %cst_9 : f32 to vector<2x32xf32>
      %c0_10 = arith.constant 0 : index
      %c0_11 = arith.constant 0 : index
      %13 = vector.load %arg5[%c0_10, %c0_11] : memref<2x32xf32, #tpu.memory_space<vmem>>, vector<2x32xf32>
      tpu.vector_store %arg5[%c0_10, %c0_11], %12 {strides = array<i32>} : memref<2x32xf32, #tpu.memory_space<vmem>>, vector<2x32xf32>,
    } else {
    }
    %c0 = arith.constant 0 : index
    %c0_1 = arith.constant 0 : index
    %3 = vector.load %arg5[%c0, %c0_1] : memref<2x32xf32, #tpu.memory_space<vmem>>, vector<2x32xf32>
    %c0_2 = arith.constant 0 : index
    %c0_3 = arith.constant 0 : index
    %c0_4 = arith.constant 0 : index
    %4 = vector.load %arg1[%c0_2, %c0_3, %c0_4] : memref<2x4x32xbf16, #tpu.memory_space<vmem>>, vector<2x4x32xbf16>
    %5 = arith.extf %4 : vector<2x4x32xbf16> to vector<2x4x32xf32>
    %cst = arith.constant dense<0.000000e+00> : vector<2x32xf32>
    %6 = vector.multi_reduction <add>, %5, %cst [1] : vector<2x4x32xf32> to vector<2x32xf32>
    %7 = arith.addf %3, %6 : vector<2x32xf32>
    %c0_5 = arith.constant 0 : index
    %c0_6 = arith.constant 0 : index
    %8 = vector.load %arg5[%c0_5, %c0_6] : memref<2x32xf32, #tpu.memory_space<vmem>>, vector<2x32xf32>
    tpu.vector_store %arg5[%c0_5, %c0_6], %7 {strides = array<i32>} : memref<2x32xf32, #tpu.memory_space<vmem>>, vector<2x32xf32>,
    %c0_i32_7 = arith.constant 0 : i32
    %9 = arith.cmpi eq, %arg0, %c0_i32_7 : i32
    %10 = arith.extui %9 : i1 to i32
    %c0_i32_8 = arith.constant 0 : i32
    %11 = arith.cmpi ne, %10, %c0_i32_8 : i32
    scf.if %11 {
      %c0_9 = arith.constant 0 : index
      %c0_10 = arith.constant 0 : index
      %12 = vector.load %arg5[%c0_9, %c0_10] : memref<2x32xf32, #tpu.memory_space<vmem>>, vector<2x32xf32>
      %cst_11 = arith.constant 2.500000e-01 : f32
      %13 = vector.broadcast %cst_11 : f32 to vector<2x32xf32>
      %14 = arith.mulf %12, %13 : vector<2x32xf32>
      %c0_12 = arith.constant 0 : index
      %c0_13 = arith.constant 0 : index
      %15 = vector.load %arg2[%c0_12, %c0_13] : memref<1x32xf32, #tpu.memory_space<vmem>>, vector<1x32xf32>
      %16 = vector.broadcast %15 : vector<1x32xf32> to vector<2x32xf32>
      %17 = arith.mulf %14, %16 : vector<2x32xf32>
      %c0_14 = arith.constant 0 : index
      %c0_15 = arith.constant 0 : index
      %18 = vector.load %arg3[%c0_14, %c0_15] : memref<1x32xf32, #tpu.memory_space<vmem>>, vector<1x32xf32>
      %19 = vector.broadcast %18 : vector<1x32xf32> to vector<2x32xf32>
      %20 = arith.addf %17, %19 : vector<2x32xf32>
      %c0_16 = arith.constant 0 : index
      %c0_17 = arith.constant 0 : index
      %21 = vector.load %arg4[%c0_16, %c0_17] : memref<2x32xf32, #tpu.memory_space<vmem>>, vector<2x32xf32>
      tpu.vector_store %arg4[%c0_16, %c0_17], %20 {strides = array<i32>} : memref<2x32xf32, #tpu.memory_space<vmem>>, vector<2x32xf32>,
    } else {
    }
    return
  }
  func.func @transform_0(%arg0: i32) -> (i32, i32, i32) {
    %c0_i32 = arith.constant 0 : i32
    %c0_i32_0 = arith.constant 0 : i32
    %c0_i32_1 = arith.constant 0 : i32
    return %c0_i32, %arg0, %c0_i32_0 : i32, i32, i32
  }
  func.func @transform_1(%arg0: i32) -> (i32, i32) {
    %c0_i32 = arith.constant 0 : i32
    %c0_i32_0 = arith.constant 0 : i32
    %c0_i32_1 = arith.constant 0 : i32
    return %c0_i32, %c0_i32_0 : i32, i32
  }
  func.func @transform_2(%arg0: i32) -> (i32, i32) {
    %c0_i32 = arith.constant 0 : i32
    %c0_i32_0 = arith.constant 0 : i32
    %c0_i32_1 = arith.constant 0 : i32
    return %c0_i32, %c0_i32_0 : i32, i32
  }
  func.func @transform_3(%arg0: i32) -> (i32, i32) {
    %c0_i32 = arith.constant 0 : i32
    %c0_i32_0 = arith.constant 0 : i32
    %c0_i32_1 = arith.constant 0 : i32
    return %c0_i32, %c0_i32_0 : i32, i32
  }
}

</mosaic_0001>

<llo_original>
// kernel: _lambda_.14
$region0: #{_lambda_.14}
  #allocation0 [shape = 'u32[]', space=smem, size = 0x4, offset = 0x4, fixed_abs, tag = 'smem constant byte address 0x4 - core index']
  #allocation1 [shape = 'u32[72,128]{1,0:T(1,128)}', space=vmem, size = 0x9000, scoped, tag = 'internal scratch']
  %s0 = inlined_call_operand.vmem [shape: bf16[2,4,30,16], index: 0, kind: input, shape index: {}]
  %s1 = inlined_call_operand.vmem [shape: bf16[2,20,16], index: 1, kind: output, shape index: {}]
  %s2 = sld [smem:[#allocation0]]
  $region37: #{_lambda_.14} parent=0
    _
  %s4 = ssub.s32 1, %s2
  %s5 = scalar_select 0, %s4, %s2
  loop: start=0, step=1, limit=4
  $region2: #{_lambda_.14} parent=0 // loop_pre_header
    _
  $region3: #{_lambda_.14} parent=0 // loop_header
    %s7 = sphi 0, %s11
    %p8 = scmp.ge.s32.totalorder %s7, 4
    %s17 = sphi 0, %s19
    %s20 = sphi 0, %s17
    %s21 = sphi 0, %s20
    %s37 = sphi 0, %s21
    %s43 = sphi 0, %s45
    %s46 = sphi 0, %s43
    %s47 = sphi 0, %s46
    %s63 = sphi 0, %s47
  $region4: #{_lambda_.14} parent=0 // loop_header_branch
    %10 = sbr.rel (%p8) target = $region8
  $region5: #{_lambda_.14} parent=0 // loop_body
    %s12 = ssub.s32 %s7, 1
    %s13 = ssub.s32 %s7, 2
    %s14 = sadd.s32 %s7, 1
    %s15 = ssub.s32 %s7, %s14
    %p16 = scmp.eq.s32.totalorder %s15, 0
    %s18 = sadd.s32 %s17, 1
    %s19 = scalar_select %p16, %s17, %s18
    %p22 = pneg %p16
    %p23 = scmp.eq.s32.totalorder %s7, 1
    %p24 = por %p22, %p23
    %p25 = scmp.ne.s32.totalorder %s17, %s20
    %p26 = scmp.eq.s32.totalorder %s7, 0
    %p27 = por %p25, %p26
    %p28 = scmp.ne.s32.totalorder %s17, %s20
    %p29 = scmp.eq.s32.totalorder %s12, 1
    %p30 = por %p28, %p29
    %p31 = scmp.ne.s32.totalorder %s20, %s21
    %p32 = scmp.eq.s32.totalorder %s12, 0
    %p33 = por %p31, %p32
    %p34 = scmp.ne.s32.totalorder %s20, %s21
    %p35 = scmp.eq.s32.totalorder %s13, 1
    %p36 = por %p34, %p35
    %p38 = scmp.ne.s32.totalorder %s21, %s37
    %p39 = scmp.eq.s32.totalorder %s13, 0
    %p40 = por %p38, %p39
    %s41 = ssub.s32 %s7, %s14
    %p42 = scmp.eq.s32.totalorder %s41, 0
    %s44 = sadd.s32 %s43, 1
    %s45 = scalar_select %p42, %s43, %s44
    %p48 = pneg %p42
    %p49 = scmp.eq.s32.totalorder %s7, 1
    %p50 = por %p48, %p49
    %p51 = scmp.ne.s32.totalorder %s43, %s46
    %p52 = scmp.eq.s32.totalorder %s7, 0
    %p53 = por %p51, %p52
    %p54 = scmp.ne.s32.totalorder %s43, %s46
    %p55 = scmp.eq.s32.totalorder %s12, 1
    %p56 = por %p54, %p55
    %p57 = scmp.ne.s32.totalorder %s46, %s47
    %p58 = scmp.eq.s32.totalorder %s12, 0
    %p59 = por %p57, %p58
    %p60 = scmp.ne.s32.totalorder %s46, %s47
    %p61 = scmp.eq.s32.totalorder %s13, 1
    %p62 = por %p60, %p61
    %p64 = scmp.ne.s32.totalorder %s47, %s63
    %p65 = scmp.eq.s32.totalorder %s13, 0
    %p66 = por %p64, %p65
    %p67 = scmp.le.s32.totalorder 1, %s7
    %p68 = scmp.lt.s32.totalorder %s7, 3
    %p69 = pnand %p67, %p68
    %p70 = pneg %p69
    // Predicated region
    $region9: #{_lambda_.14} parent=5 // pred_check
      _
    $region10: #{_lambda_.14} parent=5 // pred_check_branch
      %72 = sbr.rel (%p69) target = $region12
    $region11: #{_lambda_.14} parent=5 // pred_region
      %s73 = ssub.s32 %s7, 1
    $region12: #{_lambda_.14} parent=5 // pred_fallthru
      _
    %p74 = scmp.lt.s32.totalorder %s7, 2
    // Predicated region
    $region13: #{_lambda_.14} parent=5 // pred_check
      %p75 = pneg %p74
    $region14: #{_lambda_.14} parent=5 // pred_check_branch
      %77 = sbr.rel (%p75) target = $region16
    $region15: #{_lambda_.14} parent=5 // pred_region
      // Predicated region
      $region17: #{_lambda_.14} parent=15 // pred_check
        %p78 = pneg %p27
      $region18: #{_lambda_.14} parent=15 // pred_check_branch
        %80 = sbr.rel (%p78) target = $region20
      $region19: #{_lambda_.14} parent=15 // pred_region
        %p81 = scmp.lt.s32.totalorder %s7, 1
        %s82 = scalar_select %p81, %s7, 1
        %s83 = smul.addr %s82, 16
        %s84 = smul.addr %s83, 4
        %s85 = scalar_lea.vmem %s0, %s84
      $region20: #{_lambda_.14} parent=15 // pred_fallthru
        _
    $region16: #{_lambda_.14} parent=5 // pred_fallthru
      _
    %p86 = scmp.le.s32.totalorder 1, %s7
    %p87 = scmp.lt.s32.totalorder %s7, 3
    %p88 = pnand %p86, %p87
    %p89 = pneg %p88
    // Predicated region
    $region21: #{_lambda_.14} parent=5 // pred_check
      _
    $region22: #{_lambda_.14} parent=5 // pred_check_branch
      %91 = sbr.rel (%p88) target = $region24
    $region23: #{_lambda_.14} parent=5 // pred_region
      %s92 = ssub.s32 %s7, 1
      %p93 = scmp.lt.s32.totalorder %s12, 1
      %s94 = scalar_select %p93, %s12, 1
      %s95 = smul.addr %s94, 16
      %s96 = smul.addr %s95, 4
      %s97 = scalar_lea.vmem %s0, %s96
      %p98 = pneg %p33
      %p99 = pneg %p30
      %p100 = pneg %p59
      %p101 = pneg %p56
      %p102 = scmp.lt.s32.totalorder %s12, 1
      %s103 = scalar_select %p102, %s12, 1
      %s104 = smul.addr %s103, 3
      %s105 = smul.addr %s104, 4
      %s106 = scalar_lea.vmem %s1, %s105
      %p107 = scmp.lt.s32.totalorder %s12, 1
      %s108 = scalar_select %p107, %s12, 1
      %s109 = smul.addr %s108, 16
      %s110 = smul.addr %s109, 4
      %s111 = scalar_lea.vmem %s0, %s110
      %p112 = scmp.lt.s32.totalorder %s12, 1
      %s113 = scalar_select %p112, %s12, 1
      %s114 = smul.addr %s113, 3
      %s115 = smul.addr %s114, 4
      %s116 = scalar_lea.vmem %s1, %s115
      %v117 = vld [vmem:[%s111] sm:$0xf]
      %v118 = vld [vmem:[%s111 + $0x4] sm:$0xf]
      %v119 = vld [vmem:[%s111 + $0x8] sm:$0x3]
      %s120 = scalar_lea.vmem %s111, 16
      %v121 = vld [vmem:[%s120] sm:$0xf]
      %v122 = vld [vmem:[%s120 + $0x4] sm:$0xf]
      %v123 = vld [vmem:[%s120 + $0x8] sm:$0x3]
      %v124 = vunpack.c.l.bf16 %v117
      %v125 = vunpack.c.l.bf16 %v118
      %v126 = vunpack.c.l.bf16 %v119
      %v127 = vunpack.c.l.bf16 %v121
      %v128 = vunpack.c.l.bf16 %v122
      %v129 = vunpack.c.l.bf16 %v123
      %v130 = vmax.f32 %v124, %v127
      %v131 = vmax.f32 %v125, %v128
      %v132 = vmax.f32 %v126, %v129
      %v133 = vpack.c.bf16 %v130, %v130
      %v134 = vpack.c.bf16 %v131, %v131
      %v135 = vpack.c.bf16 %v132, %v132
      %v136 = vld [vmem:[%s111 + $0x8] sm:$0x7]
      %v137 = vunpack.c.l.bf16 %v133
      %v138 = vunpack.c.l.bf16 %v134
      %v139 = vunpack.c.l.bf16 %v135
      %v140 = vunpack.c.l.bf16 %v136
      %vm144 = vcmask 1046528
      %v145 = vrot.slane %v124, 1
      %v146 = vrot.slane %v125, 1
      %v147 = vsel %vm144, %v145, %v146
      %v148 = vrot.slane %v140, 1
      %v149 = vsel %vm144, %v146, %v148
      %v153 = vmax.f32 %v137, %v147
      %v154 = vmax.f32 %v138, %v149
      %v155 = vmax.f32 %v139, %v148
      %v156 = vpack.c.bf16 %v153, %v153
      %v157 = vpack.c.bf16 %v154, %v154
      %v158 = vpack.c.bf16 %v155, %v155
      %s159 = scalar_lea.vmem %s111, 32
      %v160 = vld [vmem:[%s159] sm:$0xf]
      %v161 = vld [vmem:[%s159 + $0x4] sm:$0xf]
      %v162 = vld [vmem:[%s159 + $0x8] sm:$0x3]
      %v163 = vunpack.c.l.bf16 %v156
      %v164 = vunpack.c.l.bf16 %v157
      %v165 = vunpack.c.l.bf16 %v158
      %v166 = vunpack.c.l.bf16 %v160
      %v167 = vunpack.c.l.bf16 %v161
      %v168 = vunpack.c.l.bf16 %v162
      %v169 = vmax.f32 %v163, %v166
      %v170 = vmax.f32 %v164, %v167
      %v171 = vmax.f32 %v165, %v168
      %v172 = vpack.c.bf16 %v169, %v169
      %v173 = vpack.c.bf16 %v170, %v170
      %v174 = vpack.c.bf16 %v171, %v171
      %s175 = scalar_lea.vmem %s111, 48
      %v176 = vld [vmem:[%s175] sm:$0xf]
      %v177 = vld [vmem:[%s175 + $0x4] sm:$0xf]
      %v178 = vld [vmem:[%s175 + $0x8] sm:$0x3]
      %v179 = vunpack.c.l.bf16 %v172
      %v180 = vunpack.c.l.bf16 %v173
      %v181 = vunpack.c.l.bf16 %v174
      %v182 = vunpack.c.l.bf16 %v176
      %v183 = vunpack.c.l.bf16 %v177
      %v184 = vunpack.c.l.bf16 %v178
      %v185 = vmax.f32 %v179, %v182
      %v186 = vmax.f32 %v180, %v183
      %v187 = vmax.f32 %v181, %v184
      %v188 = vpack.c.bf16 %v185, %v185
      %v189 = vpack.c.bf16 %v186, %v186
      %v190 = vpack.c.bf16 %v187, %v187
      %v191 = vld [vmem:[%s159 + $0x8] sm:$0x7]
      %v192 = vunpack.c.l.bf16 %v188
      %v193 = vunpack.c.l.bf16 %v189
      %v194 = vunpack.c.l.bf16 %v190
      %v195 = vunpack.c.l.bf16 %v191
      %v199 = vrot.slane %v166, 1
      %v200 = vrot.slane %v167, 1
      %v201 = vsel %vm144, %v199, %v200
      %v202 = vrot.slane %v195, 1
      %v203 = vsel %vm144, %v200, %v202
      %v207 = vmax.f32 %v192, %v201
      %v208 = vmax.f32 %v193, %v203
      %v209 = vmax.f32 %v194, %v202
      %v210 = vpack.c.bf16 %v207, %v207
      %v211 = vpack.c.bf16 %v208, %v208
      %v212 = vpack.c.bf16 %v209, %v209
      %v213 = vld [vmem:[%s111] sm:$0xc]
      %v214 = vld [vmem:[%s111 + $0x8] sm:$0xf]
      %v215 = vld [vmem:[%s111 + $0xc] sm:$0x1]
      %v216 = vunpack.c.l.bf16 %v210
      %v217 = vunpack.c.l.bf16 %v211
      %v218 = vunpack.c.l.bf16 %v212
      %v219 = vunpack.c.l.bf16 %v213
      %v220 = vunpack.c.l.bf16 %v214
      %v221 = vunpack.c.l.bf16 %v215
      %vm225 = vcmask 1042432
      %v226 = vrot.slane %v219, 5
      %v227 = vrot.slane %v125, 5
      %v228 = vsel %vm225, %v226, %v227
      %v229 = vrot.slane %v220, 5
      %v230 = vsel %vm225, %v227, %v229
      %v231 = vrot.slane %v221, 5
      %v232 = vsel %vm225, %v229, %v231
      %v236 = vmax.f32 %v216, %v228
      %v237 = vmax.f32 %v217, %v230
      %v238 = vmax.f32 %v218, %v232
      %v239 = vpack.c.bf16 %v236, %v236
      %v240 = vpack.c.bf16 %v237, %v237
      %v241 = vpack.c.bf16 %v238, %v238
      %v242 = vld [vmem:[%s120] sm:$0xc]
      %v243 = vld [vmem:[%s120 + $0x8] sm:$0xf]
      %v244 = vld [vmem:[%s120 + $0xc] sm:$0x1]
      %v245 = vunpack.c.l.bf16 %v239
      %v246 = vunpack.c.l.bf16 %v240
      %v247 = vunpack.c.l.bf16 %v241
      %v248 = vunpack.c.l.bf16 %v242
      %v249 = vunpack.c.l.bf16 %v243
      %v250 = vunpack.c.l.bf16 %v244
      %v255 = vrot.slane %v248, 5
      %v256 = vrot.slane %v128, 5
      %v257 = vsel %vm225, %v255, %v256
      %v258 = vrot.slane %v249, 5
      %v259 = vsel %vm225, %v256, %v258
      %v260 = vrot.slane %v250, 5
      %v261 = vsel %vm225, %v258, %v260
      %v265 = vmax.f32 %v245, %v257
      %v266 = vmax.f32 %v246, %v259
      %v267 = vmax.f32 %v247, %v261
      %v268 = vpack.c.bf16 %v265, %v265
      %v269 = vpack.c.bf16 %v266, %v266
      %v270 = vpack.c.bf16 %v267, %v267
      %v271 = vld [vmem:[%s111] sm:$0x8]
      %v272 = vunpack.c.l.bf16 %v268
      %v273 = vunpack.c.l.bf16 %v269
      %v274 = vunpack.c.l.bf16 %v270
      %v275 = vunpack.c.l.bf16 %v271
      %vm277 = vcmask 1041408
      %v278 = vrot.slane %v275, 6
      %v279 = vrot.slane %v125, 6
      %v280 = vsel %vm277, %v278, %v279
      %v281 = vrot.slane %v220, 6
      %v282 = vsel %vm277, %v279, %v281
      %v283 = vrot.slane %v221, 6
      %v284 = vsel %vm277, %v281, %v283
      %v288 = vmax.f32 %v272, %v280
      %v289 = vmax.f32 %v273, %v282
      %v290 = vmax.f32 %v274, %v284
      %v291 = vpack.c.bf16 %v288, %v288
      %v292 = vpack.c.bf16 %v289, %v289
      %v293 = vpack.c.bf16 %v290, %v290
      %vm294 = vcmask 125952
      %295 = vst.msk [vmem:[%s116] sm:$0xf] %vm294, %v291
      %296 = vst.msk [vmem:[%s116 + $0x4] sm:$0xf] %vm294, %v292
      %vm297 = vcmask 123904
      %298 = vst.msk [vmem:[%s116 + $0x8] sm:$0x3] %vm297, %v293
      %p299 = scmp.lt.s32.totalorder %s12, 1
      %s300 = scalar_select %p299, %s12, 1
      %s301 = smul.addr %s300, 3
      %s302 = smul.addr %s301, 4
      %s303 = scalar_lea.vmem %s1, %s302
      // Predicated region
      $region25: #{_lambda_.14} parent=23 // pred_check
        %p304 = pneg %p56
      $region26: #{_lambda_.14} parent=23 // pred_check_branch
        %306 = sbr.rel (%p304) target = $region28
      $region27: #{_lambda_.14} parent=23 // pred_region
        _
      $region28: #{_lambda_.14} parent=23 // pred_fallthru
        _
    $region24: #{_lambda_.14} parent=5 // pred_fallthru
      _
    %p307 = scmp.le.s32.totalorder 2, %s7
    // Predicated region
    $region29: #{_lambda_.14} parent=5 // pred_check
      %p308 = pneg %p307
    $region30: #{_lambda_.14} parent=5 // pred_check_branch
      %310 = sbr.rel (%p308) target = $region32
    $region31: #{_lambda_.14} parent=5 // pred_region
      %s311 = ssub.s32 %s7, 2
      // Predicated region
      $region33: #{_lambda_.14} parent=31 // pred_check
        %p312 = pneg %p62
      $region34: #{_lambda_.14} parent=31 // pred_check_branch
        %314 = sbr.rel (%p312) target = $region36
      $region35: #{_lambda_.14} parent=31 // pred_region
        %p315 = scmp.lt.s32.totalorder %s13, 1
        %s316 = scalar_select %p315, %s13, 1
        %s317 = smul.addr %s316, 3
        %s318 = smul.addr %s317, 4
        %s319 = scalar_lea.vmem %s1, %s318
      $region36: #{_lambda_.14} parent=31 // pred_fallthru
        _
    $region32: #{_lambda_.14} parent=5 // pred_fallthru
      _
  $region6: #{_lambda_.14} parent=0 // loop_footer
    %s11 = sadd.s32 1, %s7
  $region7: #{_lambda_.14} parent=0 // loop_footer_branch
    %6 = sbr.rel target = $region3
  $region8: #{_lambda_.14} parent=0 // loop_exit
    _

// kernel: _lambda_.15
$region0: #{_lambda_.15}
  #allocation0 [shape = 'u32[]', space=smem, size = 0x4, offset = 0x4, fixed_abs, tag = 'smem constant byte address 0x4 - core index']
  #allocation1 [shape = 'u32[72,128]{1,0:T(1,128)}', space=vmem, size = 0x9000, scoped, tag = 'internal scratch']
  %s0 = inlined_call_operand.vmem [shape: bf16[2,1,16,16], index: 0, kind: input, shape index: {}]
  %s1 = inlined_call_operand.vmem [shape: bf16[1,16,128], index: 1, kind: input, shape index: {}]
  %s2 = inlined_call_operand.vmem [shape: f32[1,16], index: 2, kind: input, shape index: {}]
  %s3 = inlined_call_operand.vmem [shape: f32[1,16], index: 3, kind: input, shape index: {}]
  %s4 = inlined_call_operand.vmem [shape: f32[1,128], index: 4, kind: input, shape index: {}]
  %s5 = inlined_call_operand.vmem [shape: f32[1,128], index: 5, kind: input, shape index: {}]
  %s6 = inlined_call_operand.vmem [shape: bf16[2,16,128], index: 6, kind: output, shape index: {}]
  %s7 = sld [smem:[#allocation0]]
  $region57: #{_lambda_.15} parent=0
    _
  %s9 = ssub.s32 1, %s7
  %s10 = scalar_select 0, %s9, %s7
  loop: start=0, step=1, limit=4
  $region2: #{_lambda_.15} parent=0 // loop_pre_header
    _
  $region3: #{_lambda_.15} parent=0 // loop_header
    %s12 = sphi 0, %s16
    %p13 = scmp.ge.s32.totalorder %s12, 4
    %s22 = sphi 0, %s24
    %s25 = sphi 0, %s22
    %s26 = sphi 0, %s25
    %s42 = sphi 0, %s26
    %s46 = sphi 0, %s46
    %s48 = sphi 0, %s46
    %s49 = sphi 0, %s48
    %s63 = sphi 0, %s49
    %s67 = sphi 0, %s67
    %s69 = sphi 0, %s67
    %s70 = sphi 0, %s69
    %s84 = sphi 0, %s70
    %s88 = sphi 0, %s88
    %s90 = sphi 0, %s88
    %s91 = sphi 0, %s90
    %s105 = sphi 0, %s91
    %s109 = sphi 0, %s109
    %s111 = sphi 0, %s109
    %s112 = sphi 0, %s111
    %s126 = sphi 0, %s112
    %s130 = sphi 0, %s130
    %s132 = sphi 0, %s130
    %s133 = sphi 0, %s132
    %s147 = sphi 0, %s133
    %s153 = sphi 0, %s155
    %s156 = sphi 0, %s153
    %s157 = sphi 0, %s156
    %s173 = sphi 0, %s157
  $region4: #{_lambda_.15} parent=0 // loop_header_branch
    %15 = sbr.rel (%p13) target = $region8
  $region5: #{_lambda_.15} parent=0 // loop_body
    %s17 = ssub.s32 %s12, 1
    %s18 = ssub.s32 %s12, 2
    %s19 = sadd.s32 %s12, 1
    %s20 = ssub.s32 %s12, %s19
    %p21 = scmp.eq.s32.totalorder %s20, 0
    %s23 = sadd.s32 %s22, 1
    %s24 = scalar_select %p21, %s22, %s23
    %p27 = pneg %p21
    %p28 = scmp.eq.s32.totalorder %s12, 1
    %p29 = por %p27, %p28
    %p30 = scmp.ne.s32.totalorder %s22, %s25
    %p31 = scmp.eq.s32.totalorder %s12, 0
    %p32 = por %p30, %p31
    %p33 = scmp.ne.s32.totalorder %s22, %s25
    %p34 = scmp.eq.s32.totalorder %s17, 1
    %p35 = por %p33, %p34
    %p36 = scmp.ne.s32.totalorder %s25, %s26
    %p37 = scmp.eq.s32.totalorder %s17, 0
    %p38 = por %p36, %p37
    %p39 = scmp.ne.s32.totalorder %s25, %s26
    %p40 = scmp.eq.s32.totalorder %s18, 1
    %p41 = por %p39, %p40
    %p43 = scmp.ne.s32.totalorder %s26, %s42
    %p44 = scmp.eq.s32.totalorder %s18, 0
    %p45 = por %p43, %p44
    %s47 = sadd.s32 %s46, 1
    %p50 = scmp.eq.s32.totalorder %s12, 1
    %p51 = scmp.ne.s32.totalorder %s46, %s48
    %p52 = scmp.eq.s32.totalorder %s12, 0
    %p53 = por %p51, %p52
    %p54 = scmp.ne.s32.totalorder %s46, %s48
    %p55 = scmp.eq.s32.totalorder %s17, 1
    %p56 = por %p54, %p55
    %p57 = scmp.ne.s32.totalorder %s48, %s49
    %p58 = scmp.eq.s32.totalorder %s17, 0
    %p59 = por %p57, %p58
    %p60 = scmp.ne.s32.totalorder %s48, %s49
    %p61 = scmp.eq.s32.totalorder %s18, 1
    %p62 = por %p60, %p61
    %p64 = scmp.ne.s32.totalorder %s49, %s63
    %p65 = scmp.eq.s32.totalorder %s18, 0
    %p66 = por %p64, %p65
    %s68 = sadd.s32 %s67, 1
    %p71 = scmp.eq.s32.totalorder %s12, 1
    %p72 = scmp.ne.s32.totalorder %s67, %s69
    %p73 = scmp.eq.s32.totalorder %s12, 0
    %p74 = por %p72, %p73
    %p75 = scmp.ne.s32.totalorder %s67, %s69
    %p76 = scmp.eq.s32.totalorder %s17, 1
    %p77 = por %p75, %p76
    %p78 = scmp.ne.s32.totalorder %s69, %s70
    %p79 = scmp.eq.s32.totalorder %s17, 0
    %p80 = por %p78, %p79
    %p81 = scmp.ne.s32.totalorder %s69, %s70
    %p82 = scmp.eq.s32.totalorder %s18, 1
    %p83 = por %p81, %p82
    %p85 = scmp.ne.s32.totalorder %s70, %s84
    %p86 = scmp.eq.s32.totalorder %s18, 0
    %p87 = por %p85, %p86
    %s89 = sadd.s32 %s88, 1
    %p92 = scmp.eq.s32.totalorder %s12, 1
    %p93 = scmp.ne.s32.totalorder %s88, %s90
    %p94 = scmp.eq.s32.totalorder %s12, 0
    %p95 = por %p93, %p94
    %p96 = scmp.ne.s32.totalorder %s88, %s90
    %p97 = scmp.eq.s32.totalorder %s17, 1
    %p98 = por %p96, %p97
    %p99 = scmp.ne.s32.totalorder %s90, %s91
    %p100 = scmp.eq.s32.totalorder %s17, 0
    %p101 = por %p99, %p100
    %p102 = scmp.ne.s32.totalorder %s90, %s91
    %p103 = scmp.eq.s32.totalorder %s18, 1
    %p104 = por %p102, %p103
    %p106 = scmp.ne.s32.totalorder %s91, %s105
    %p107 = scmp.eq.s32.totalorder %s18, 0
    %p108 = por %p106, %p107
    %s110 = sadd.s32 %s109, 1
    %p113 = scmp.eq.s32.totalorder %s12, 1
    %p114 = scmp.ne.s32.totalorder %s109, %s111
    %p115 = scmp.eq.s32.totalorder %s12, 0
    %p116 = por %p114, %p115
    %p117 = scmp.ne.s32.totalorder %s109, %s111
    %p118 = scmp.eq.s32.totalorder %s17, 1
    %p119 = por %p117, %p118
    %p120 = scmp.ne.s32.totalorder %s111, %s112
    %p121 = scmp.eq.s32.totalorder %s17, 0
    %p122 = por %p120, %p121
    %p123 = scmp.ne.s32.totalorder %s111, %s112
    %p124 = scmp.eq.s32.totalorder %s18, 1
    %p125 = por %p123, %p124
    %p127 = scmp.ne.s32.totalorder %s112, %s126
    %p128 = scmp.eq.s32.totalorder %s18, 0
    %p129 = por %p127, %p128
    %s131 = sadd.s32 %s130, 1
    %p134 = scmp.eq.s32.totalorder %s12, 1
    %p135 = scmp.ne.s32.totalorder %s130, %s132
    %p136 = scmp.eq.s32.totalorder %s12, 0
    %p137 = por %p135, %p136
    %p138 = scmp.ne.s32.totalorder %s130, %s132
    %p139 = scmp.eq.s32.totalorder %s17, 1
    %p140 = por %p138, %p139
    %p141 = scmp.ne.s32.totalorder %s132, %s133
    %p142 = scmp.eq.s32.totalorder %s17, 0
    %p143 = por %p141, %p142
    %p144 = scmp.ne.s32.totalorder %s132, %s133
    %p145 = scmp.eq.s32.totalorder %s18, 1
    %p146 = por %p144, %p145
    %p148 = scmp.ne.s32.totalorder %s133, %s147
    %p149 = scmp.eq.s32.totalorder %s18, 0
    %p150 = por %p148, %p149
    %s151 = ssub.s32 %s12, %s19
    %p152 = scmp.eq.s32.totalorder %s151, 0
    %s154 = sadd.s32 %s153, 1
    %s155 = scalar_select %p152, %s153, %s154
    %p158 = pneg %p152
    %p159 = scmp.eq.s32.totalorder %s12, 1
    %p160 = por %p158, %p159
    %p161 = scmp.ne.s32.totalorder %s153, %s156
    %p162 = scmp.eq.s32.totalorder %s12, 0
    %p163 = por %p161, %p162
    %p164 = scmp.ne.s32.totalorder %s153, %s156
    %p165 = scmp.eq.s32.totalorder %s17, 1
    %p166 = por %p164, %p165
    %p167 = scmp.ne.s32.totalorder %s156, %s157
    %p168 = scmp.eq.s32.totalorder %s17, 0
    %p169 = por %p167, %p168
    %p170 = scmp.ne.s32.totalorder %s156, %s157
    %p171 = scmp.eq.s32.totalorder %s18, 1
    %p172 = por %p170, %p171
    %p174 = scmp.ne.s32.totalorder %s157, %s173
    %p175 = scmp.eq.s32.totalorder %s18, 0
    %p176 = por %p174, %p175
    %p177 = scmp.le.s32.totalorder 1, %s12
    %p178 = scmp.lt.s32.totalorder %s12, 3
    %p179 = pnand %p177, %p178
    %p180 = pneg %p179
    // Predicated region
    $region9: #{_lambda_.15} parent=5 // pred_check
      _
    $region10: #{_lambda_.15} parent=5 // pred_check_branch
      %182 = sbr.rel (%p179) target = $region12
    $region11: #{_lambda_.15} parent=5 // pred_region
      %s183 = ssub.s32 %s12, 1
      // Predicated region
      $region13: #{_lambda_.15} parent=11 // pred_check
        %p184 = pneg %p59
      $region14: #{_lambda_.15} parent=11 // pred_check_branch
        %186 = sbr.rel (%p184) target = $region16
      $region15: #{_lambda_.15} parent=11 // pred_region
        _
      $region16: #{_lambda_.15} parent=11 // pred_fallthru
        _
      // Predicated region
      $region17: #{_lambda_.15} parent=11 // pred_check
        %p187 = pneg %p80
      $region18: #{_lambda_.15} parent=11 // pred_check_branch
        %189 = sbr.rel (%p187) target = $region20
      $region19: #{_lambda_.15} parent=11 // pred_region
        _
      $region20: #{_lambda_.15} parent=11 // pred_fallthru
        _
      // Predicated region
      $region21: #{_lambda_.15} parent=11 // pred_check
        %p190 = pneg %p101
      $region22: #{_lambda_.15} parent=11 // pred_check_branch
        %192 = sbr.rel (%p190) target = $region24
      $region23: #{_lambda_.15} parent=11 // pred_region
        _
      $region24: #{_lambda_.15} parent=11 // pred_fallthru
        _
      // Predicated region
      $region25: #{_lambda_.15} parent=11 // pred_check
        %p193 = pneg %p122
      $region26: #{_lambda_.15} parent=11 // pred_check_branch
        %195 = sbr.rel (%p193) target = $region28
      $region27: #{_lambda_.15} parent=11 // pred_region
        _
      $region28: #{_lambda_.15} parent=11 // pred_fallthru
        _
      // Predicated region
      $region29: #{_lambda_.15} parent=11 // pred_check
        %p196 = pneg %p143
      $region30: #{_lambda_.15} parent=11 // pred_check_branch
        %198 = sbr.rel (%p196) target = $region32
      $region31: #{_lambda_.15} parent=11 // pred_region
        _
      $region32: #{_lambda_.15} parent=11 // pred_fallthru
        _
    $region12: #{_lambda_.15} parent=5 // pred_fallthru
      _
    %p199 = scmp.lt.s32.totalorder %s12, 2
    // Predicated region
    $region33: #{_lambda_.15} parent=5 // pred_check
      %p200 = pneg %p199
    $region34: #{_lambda_.15} parent=5 // pred_check_branch
      %202 = sbr.rel (%p200) target = $region36
    $region35: #{_lambda_.15} parent=5 // pred_region
      // Predicated region
      $region37: #{_lambda_.15} parent=35 // pred_check
        %p203 = pneg %p32
      $region38: #{_lambda_.15} parent=35 // pred_check_branch
        %205 = sbr.rel (%p203) target = $region40
      $region39: #{_lambda_.15} parent=35 // pred_region
        %p206 = scmp.lt.s32.totalorder %s12, 1
        %s207 = scalar_select %p206, %s12, 1
        %s208 = smul.addr %s207, 2
        %s209 = smul.addr %s208, 4
        %s210 = scalar_lea.vmem %s0, %s209
      $region40: #{_lambda_.15} parent=35 // pred_fallthru
        _
    $region36: #{_lambda_.15} parent=5 // pred_fallthru
      _
    %p211 = scmp.le.s32.totalorder 1, %s12
    %p212 = scmp.lt.s32.totalorder %s12, 3
    %p213 = pnand %p211, %p212
    %p214 = pneg %p213
    // Predicated region
    $region41: #{_lambda_.15} parent=5 // pred_check
      _
    $region42: #{_lambda_.15} parent=5 // pred_check_branch
      %216 = sbr.rel (%p213) target = $region44
    $region43: #{_lambda_.15} parent=5 // pred_region
      %s217 = ssub.s32 %s12, 1
      %p218 = scmp.lt.s32.totalorder %s17, 1
      %s219 = scalar_select %p218, %s17, 1
      %s220 = smul.addr %s219, 2
      %s221 = smul.addr %s220, 4
      %s222 = scalar_lea.vmem %s0, %s221
      %p223 = pneg %p38
      %p224 = pneg %p35
      %p225 = pneg %p59
      %p226 = pneg %p56
      %p227 = pneg %p80
      %p228 = pneg %p77
      %p229 = pneg %p101
      %p230 = pneg %p98
      %p231 = pneg %p122
      %p232 = pneg %p119
      %p233 = pneg %p143
      %p234 = pneg %p140
      %p235 = pneg %p169
      %p236 = pneg %p166
      %p237 = scmp.lt.s32.totalorder %s17, 1
      %s238 = scalar_select %p237, %s17, 1
      %s239 = smul.addr %s238, 2
      %s240 = smul.addr %s239, 4
      %s241 = scalar_lea.vmem %s6, %s240
      %p242 = scmp.lt.s32.totalorder %s17, 1
      %s243 = scalar_select %p242, %s17, 1
      %s244 = smul.addr %s243, 2
      %s245 = smul.addr %s244, 4
      %s246 = scalar_lea.vmem %s0, %s245
      %p247 = scmp.lt.s32.totalorder %s17, 1
      %s248 = scalar_select %p247, %s17, 1
      %s249 = smul.addr %s248, 2
      %s250 = smul.addr %s249, 4
      %s251 = scalar_lea.vmem %s6, %s250
      %v253 = vld [vmem:[%s246] sm:$0xf]
      %v254 = vld [vmem:[%s246 + $0x4] sm:$0xf]
      %v255 = vunpack.c.l.bf16 %v253
      %v256 = vunpack.c.l.bf16 %v254
      %v257 = vld [vmem:[%s2] sm:$0x1]
      %v259 = vperm.slane %v257, 0
      %v261 = vmul.f32 %v255, %v259
      %v262 = vmul.f32 %v256, %v259
      %v263 = vld [vmem:[%s3] sm:$0x1]
      %v265 = vperm.slane %v263, 0
      %v267 = vadd.f32 %v261, %v265
      %v268 = vadd.f32 %v262, %v265
      %v269 = vmax.f32 %v267, 0.0
      %v270 = vmax.f32 %v268, 0.0
      %v271 = vpack.c.bf16 %v270, %v269
      %v272 = vld [vmem:[%s1] sm:$0xf]
      %v273 = vld [vmem:[%s1 + $0x4] sm:$0xf]
      %v276 = vunpack.c.l.b16 %v272
      %v277 = vunpack.c.l.b16 %v273
      %v278 = vpack.c.b16 %v277, %v276
      %vm280 = vcmask 130048
      %v282 = vsel %vm280, %v271, 0
      %284 = vmatpush.bf16.msra.mxu0 0
      %285 = vmatpush.bf16.msra.mxu0 0
      %286 = vmatpush.bf16.msra.mxu0 0
      %287 = vmatpush.bf16.msra.mxu0 0
      %288 = vmatpush.bf16.msra.mxu0 0
      %289 = vmatpush.bf16.msra.mxu0 0
      %290 = vmatpush.bf16.msra.mxu0 0
      %291 = vmatpush.bf16.msra.mxu0 %v278
      %292 = vmatmul.bf16.gmra.mxu0 %v282
      %v293 = vpop.f32.mrf.mxu0
      %v294 = vadd.f32 0.0, %v293
      %v295 = vpop.f32.mrf.mxu0
      %v296 = vadd.f32 0.0, %v295
      %297 = vdwg.mxu0
      %v298 = vld [vmem:[%s4] sm:$0x1]
      %v300 = vperm.slane %v298, 0
      %v302 = vmul.f32 %v294, %v300
      %v303 = vmul.f32 %v296, %v300
      %v304 = vld [vmem:[%s5] sm:$0x1]
      %v306 = vperm.slane %v304, 0
      %v308 = vadd.f32 %v302, %v306
      %v309 = vadd.f32 %v303, %v306
      %v310 = vmax.f32 %v308, 0.0
      %v311 = vmax.f32 %v309, 0.0
      %v312 = vpack.c.bf16 %v310, %v310
      %v313 = vpack.c.bf16 %v311, %v311
      %314 = vst [vmem:[%s251] sm:$0xf] %v312
      %315 = vst [vmem:[%s251 + $0x4] sm:$0xf] %v313
      %p316 = scmp.lt.s32.totalorder %s17, 1
      %s317 = scalar_select %p316, %s17, 1
      %s318 = smul.addr %s317, 2
      %s319 = smul.addr %s318, 4
      %s320 = scalar_lea.vmem %s6, %s319
      // Predicated region
      $region45: #{_lambda_.15} parent=43 // pred_check
        %p321 = pneg %p166
      $region46: #{_lambda_.15} parent=43 // pred_check_branch
        %323 = sbr.rel (%p321) target = $region48
      $region47: #{_lambda_.15} parent=43 // pred_region
        _
      $region48: #{_lambda_.15} parent=43 // pred_fallthru
        _
    $region44: #{_lambda_.15} parent=5 // pred_fallthru
      _
    %p324 = scmp.le.s32.totalorder 2, %s12
    // Predicated region
    $region49: #{_lambda_.15} parent=5 // pred_check
      %p325 = pneg %p324
    $region50: #{_lambda_.15} parent=5 // pred_check_branch
      %327 = sbr.rel (%p325) target = $region52
    $region51: #{_lambda_.15} parent=5 // pred_region
      %s328 = ssub.s32 %s12, 2
      // Predicated region
      $region53: #{_lambda_.15} parent=51 // pred_check
        %p329 = pneg %p172
      $region54: #{_lambda_.15} parent=51 // pred_check_branch
        %331 = sbr.rel (%p329) target = $region56
      $region55: #{_lambda_.15} parent=51 // pred_region
        %p332 = scmp.lt.s32.totalorder %s18, 1
        %s333 = scalar_select %p332, %s18, 1
        %s334 = smul.addr %s333, 2
        %s335 = smul.addr %s334, 4
        %s336 = scalar_lea.vmem %s6, %s335
      $region56: #{_lambda_.15} parent=51 // pred_fallthru
        _
    $region52: #{_lambda_.15} parent=5 // pred_fallthru
      _
  $region6: #{_lambda_.15} parent=0 // loop_footer
    %s16 = sadd.s32 1, %s12
  $region7: #{_lambda_.15} parent=0 // loop_footer_branch
    %11 = sbr.rel target = $region3
  $region8: #{_lambda_.15} parent=0 // loop_exit
    _

// kernel: _lambda_.16
$region0: #{_lambda_.16}
  #allocation0 [shape = 'u32[]', space=smem, size = 0x4, offset = 0x4, fixed_abs, tag = 'smem constant byte address 0x4 - core index']
  #allocation1 [shape = 'u32[72,128]{1,0:T(1,128)}', space=vmem, size = 0x9000, scoped, tag = 'internal scratch']
  %s0 = inlined_call_operand.vmem [shape: bf16[2,1,42,32], index: 0, kind: input, shape index: {}]
  %s1 = inlined_call_operand.vmem [shape: bf16[9,32,128], index: 1, kind: input, shape index: {}]
  %s2 = inlined_call_operand.vmem [shape: f32[1,32], index: 2, kind: input, shape index: {}]
  %s3 = inlined_call_operand.vmem [shape: f32[1,32], index: 3, kind: input, shape index: {}]
  %s4 = inlined_call_operand.vmem [shape: f32[1,128], index: 4, kind: input, shape index: {}]
  %s5 = inlined_call_operand.vmem [shape: f32[1,128], index: 5, kind: input, shape index: {}]
  %s6 = inlined_call_operand.vmem [shape: bf16[2,24,128], index: 6, kind: output, shape index: {}]
  %s7 = sld [smem:[#allocation0]]
  $region57: #{_lambda_.16} parent=0
    _
  %s9 = ssub.s32 1, %s7
  %s10 = scalar_select 0, %s9, %s7
  loop: start=0, step=1, limit=4
  $region2: #{_lambda_.16} parent=0 // loop_pre_header
    _
  $region3: #{_lambda_.16} parent=0 // loop_header
    %s12 = sphi 0, %s16
    %p13 = scmp.ge.s32.totalorder %s12, 4
    %s22 = sphi 0, %s24
    %s25 = sphi 0, %s22
    %s26 = sphi 0, %s25
    %s42 = sphi 0, %s26
    %s46 = sphi 0, %s46
    %s48 = sphi 0, %s46
    %s49 = sphi 0, %s48
    %s63 = sphi 0, %s49
    %s67 = sphi 0, %s67
    %s69 = sphi 0, %s67
    %s70 = sphi 0, %s69
    %s84 = sphi 0, %s70
    %s88 = sphi 0, %s88
    %s90 = sphi 0, %s88
    %s91 = sphi 0, %s90
    %s105 = sphi 0, %s91
    %s109 = sphi 0, %s109
    %s111 = sphi 0, %s109
    %s112 = sphi 0, %s111
    %s126 = sphi 0, %s112
    %s130 = sphi 0, %s130
    %s132 = sphi 0, %s130
    %s133 = sphi 0, %s132
    %s147 = sphi 0, %s133
    %s153 = sphi 0, %s155
    %s156 = sphi 0, %s153
    %s157 = sphi 0, %s156
    %s173 = sphi 0, %s157
  $region4: #{_lambda_.16} parent=0 // loop_header_branch
    %15 = sbr.rel (%p13) target = $region8
  $region5: #{_lambda_.16} parent=0 // loop_body
    %s17 = ssub.s32 %s12, 1
    %s18 = ssub.s32 %s12, 2
    %s19 = sadd.s32 %s12, 1
    %s20 = ssub.s32 %s12, %s19
    %p21 = scmp.eq.s32.totalorder %s20, 0
    %s23 = sadd.s32 %s22, 1
    %s24 = scalar_select %p21, %s22, %s23
    %p27 = pneg %p21
    %p28 = scmp.eq.s32.totalorder %s12, 1
    %p29 = por %p27, %p28
    %p30 = scmp.ne.s32.totalorder %s22, %s25
    %p31 = scmp.eq.s32.totalorder %s12, 0
    %p32 = por %p30, %p31
    %p33 = scmp.ne.s32.totalorder %s22, %s25
    %p34 = scmp.eq.s32.totalorder %s17, 1
    %p35 = por %p33, %p34
    %p36 = scmp.ne.s32.totalorder %s25, %s26
    %p37 = scmp.eq.s32.totalorder %s17, 0
    %p38 = por %p36, %p37
    %p39 = scmp.ne.s32.totalorder %s25, %s26
    %p40 = scmp.eq.s32.totalorder %s18, 1
    %p41 = por %p39, %p40
    %p43 = scmp.ne.s32.totalorder %s26, %s42
    %p44 = scmp.eq.s32.totalorder %s18, 0
    %p45 = por %p43, %p44
    %s47 = sadd.s32 %s46, 1
    %p50 = scmp.eq.s32.totalorder %s12, 1
    %p51 = scmp.ne.s32.totalorder %s46, %s48
    %p52 = scmp.eq.s32.totalorder %s12, 0
    %p53 = por %p51, %p52
    %p54 = scmp.ne.s32.totalorder %s46, %s48
    %p55 = scmp.eq.s32.totalorder %s17, 1
    %p56 = por %p54, %p55
    %p57 = scmp.ne.s32.totalorder %s48, %s49
    %p58 = scmp.eq.s32.totalorder %s17, 0
    %p59 = por %p57, %p58
    %p60 = scmp.ne.s32.totalorder %s48, %s49
    %p61 = scmp.eq.s32.totalorder %s18, 1
    %p62 = por %p60, %p61
    %p64 = scmp.ne.s32.totalorder %s49, %s63
    %p65 = scmp.eq.s32.totalorder %s18, 0
    %p66 = por %p64, %p65
    %s68 = sadd.s32 %s67, 1
    %p71 = scmp.eq.s32.totalorder %s12, 1
    %p72 = scmp.ne.s32.totalorder %s67, %s69
    %p73 = scmp.eq.s32.totalorder %s12, 0
    %p74 = por %p72, %p73
    %p75 = scmp.ne.s32.totalorder %s67, %s69
    %p76 = scmp.eq.s32.totalorder %s17, 1
    %p77 = por %p75, %p76
    %p78 = scmp.ne.s32.totalorder %s69, %s70
    %p79 = scmp.eq.s32.totalorder %s17, 0
    %p80 = por %p78, %p79
    %p81 = scmp.ne.s32.totalorder %s69, %s70
    %p82 = scmp.eq.s32.totalorder %s18, 1
    %p83 = por %p81, %p82
    %p85 = scmp.ne.s32.totalorder %s70, %s84
    %p86 = scmp.eq.s32.totalorder %s18, 0
    %p87 = por %p85, %p86
    %s89 = sadd.s32 %s88, 1
    %p92 = scmp.eq.s32.totalorder %s12, 1
    %p93 = scmp.ne.s32.totalorder %s88, %s90
    %p94 = scmp.eq.s32.totalorder %s12, 0
    %p95 = por %p93, %p94
    %p96 = scmp.ne.s32.totalorder %s88, %s90
    %p97 = scmp.eq.s32.totalorder %s17, 1
    %p98 = por %p96, %p97
    %p99 = scmp.ne.s32.totalorder %s90, %s91
    %p100 = scmp.eq.s32.totalorder %s17, 0
    %p101 = por %p99, %p100
    %p102 = scmp.ne.s32.totalorder %s90, %s91
    %p103 = scmp.eq.s32.totalorder %s18, 1
    %p104 = por %p102, %p103
    %p106 = scmp.ne.s32.totalorder %s91, %s105
    %p107 = scmp.eq.s32.totalorder %s18, 0
    %p108 = por %p106, %p107
    %s110 = sadd.s32 %s109, 1
    %p113 = scmp.eq.s32.totalorder %s12, 1
    %p114 = scmp.ne.s32.totalorder %s109, %s111
    %p115 = scmp.eq.s32.totalorder %s12, 0
    %p116 = por %p114, %p115
    %p117 = scmp.ne.s32.totalorder %s109, %s111
    %p118 = scmp.eq.s32.totalorder %s17, 1
    %p119 = por %p117, %p118
    %p120 = scmp.ne.s32.totalorder %s111, %s112
    %p121 = scmp.eq.s32.totalorder %s17, 0
    %p122 = por %p120, %p121
    %p123 = scmp.ne.s32.totalorder %s111, %s112
    %p124 = scmp.eq.s32.totalorder %s18, 1
    %p125 = por %p123, %p124
    %p127 = scmp.ne.s32.totalorder %s112, %s126
    %p128 = scmp.eq.s32.totalorder %s18, 0
    %p129 = por %p127, %p128
    %s131 = sadd.s32 %s130, 1
    %p134 = scmp.eq.s32.totalorder %s12, 1
    %p135 = scmp.ne.s32.totalorder %s130, %s132
    %p136 = scmp.eq.s32.totalorder %s12, 0
    %p137 = por %p135, %p136
    %p138 = scmp.ne.s32.totalorder %s130, %s132
    %p139 = scmp.eq.s32.totalorder %s17, 1
    %p140 = por %p138, %p139
    %p141 = scmp.ne.s32.totalorder %s132, %s133
    %p142 = scmp.eq.s32.totalorder %s17, 0
    %p143 = por %p141, %p142
    %p144 = scmp.ne.s32.totalorder %s132, %s133
    %p145 = scmp.eq.s32.totalorder %s18, 1
    %p146 = por %p144, %p145
    %p148 = scmp.ne.s32.totalorder %s133, %s147
    %p149 = scmp.eq.s32.totalorder %s18, 0
    %p150 = por %p148, %p149
    %s151 = ssub.s32 %s12, %s19
    %p152 = scmp.eq.s32.totalorder %s151, 0
    %s154 = sadd.s32 %s153, 1
    %s155 = scalar_select %p152, %s153, %s154
    %p158 = pneg %p152
    %p159 = scmp.eq.s32.totalorder %s12, 1
    %p160 = por %p158, %p159
    %p161 = scmp.ne.s32.totalorder %s153, %s156
    %p162 = scmp.eq.s32.totalorder %s12, 0
    %p163 = por %p161, %p162
    %p164 = scmp.ne.s32.totalorder %s153, %s156
    %p165 = scmp.eq.s32.totalorder %s17, 1
    %p166 = por %p164, %p165
    %p167 = scmp.ne.s32.totalorder %s156, %s157
    %p168 = scmp.eq.s32.totalorder %s17, 0
    %p169 = por %p167, %p168
    %p170 = scmp.ne.s32.totalorder %s156, %s157
    %p171 = scmp.eq.s32.totalorder %s18, 1
    %p172 = por %p170, %p171
    %p174 = scmp.ne.s32.totalorder %s157, %s173
    %p175 = scmp.eq.s32.totalorder %s18, 0
    %p176 = por %p174, %p175
    %p177 = scmp.le.s32.totalorder 1, %s12
    %p178 = scmp.lt.s32.totalorder %s12, 3
    %p179 = pnand %p177, %p178
    %p180 = pneg %p179
    // Predicated region
    $region9: #{_lambda_.16} parent=5 // pred_check
      _
    $region10: #{_lambda_.16} parent=5 // pred_check_branch
      %182 = sbr.rel (%p179) target = $region12
    $region11: #{_lambda_.16} parent=5 // pred_region
      %s183 = ssub.s32 %s12, 1
      // Predicated region
      $region13: #{_lambda_.16} parent=11 // pred_check
        %p184 = pneg %p59
      $region14: #{_lambda_.16} parent=11 // pred_check_branch
        %186 = sbr.rel (%p184) target = $region16
      $region15: #{_lambda_.16} parent=11 // pred_region
        _
      $region16: #{_lambda_.16} parent=11 // pred_fallthru
        _
      // Predicated region
      $region17: #{_lambda_.16} parent=11 // pred_check
        %p187 = pneg %p80
      $region18: #{_lambda_.16} parent=11 // pred_check_branch
        %189 = sbr.rel (%p187) target = $region20
      $region19: #{_lambda_.16} parent=11 // pred_region
        _
      $region20: #{_lambda_.16} parent=11 // pred_fallthru
        _
      // Predicated region
      $region21: #{_lambda_.16} parent=11 // pred_check
        %p190 = pneg %p101
      $region22: #{_lambda_.16} parent=11 // pred_check_branch
        %192 = sbr.rel (%p190) target = $region24
      $region23: #{_lambda_.16} parent=11 // pred_region
        _
      $region24: #{_lambda_.16} parent=11 // pred_fallthru
        _
      // Predicated region
      $region25: #{_lambda_.16} parent=11 // pred_check
        %p193 = pneg %p122
      $region26: #{_lambda_.16} parent=11 // pred_check_branch
        %195 = sbr.rel (%p193) target = $region28
      $region27: #{_lambda_.16} parent=11 // pred_region
        _
      $region28: #{_lambda_.16} parent=11 // pred_fallthru
        _
      // Predicated region
      $region29: #{_lambda_.16} parent=11 // pred_check
        %p196 = pneg %p143
      $region30: #{_lambda_.16} parent=11 // pred_check_branch
        %198 = sbr.rel (%p196) target = $region32
      $region31: #{_lambda_.16} parent=11 // pred_region
        _
      $region32: #{_lambda_.16} parent=11 // pred_fallthru
        _
    $region12: #{_lambda_.16} parent=5 // pred_fallthru
      _
    %p199 = scmp.lt.s32.totalorder %s12, 2
    // Predicated region
    $region33: #{_lambda_.16} parent=5 // pred_check
      %p200 = pneg %p199
    $region34: #{_lambda_.16} parent=5 // pred_check_branch
      %202 = sbr.rel (%p200) target = $region36
    $region35: #{_lambda_.16} parent=5 // pred_region
      // Predicated region
      $region37: #{_lambda_.16} parent=35 // pred_check
        %p203 = pneg %p32
      $region38: #{_lambda_.16} parent=35 // pred_check_branch
        %205 = sbr.rel (%p203) target = $region40
      $region39: #{_lambda_.16} parent=35 // pred_region
        %p206 = scmp.lt.s32.totalorder %s12, 1
        %s207 = scalar_select %p206, %s12, 1
        %s208 = smul.addr %s207, 6
        %s209 = smul.addr %s208, 4
        %s210 = scalar_lea.vmem %s0, %s209
      $region40: #{_lambda_.16} parent=35 // pred_fallthru
        _
    $region36: #{_lambda_.16} parent=5 // pred_fallthru
      _
    %p211 = scmp.le.s32.totalorder 1, %s12
    %p212 = scmp.lt.s32.totalorder %s12, 3
    %p213 = pnand %p211, %p212
    %p214 = pneg %p213
    // Predicated region
    $region41: #{_lambda_.16} parent=5 // pred_check
      _
    $region42: #{_lambda_.16} parent=5 // pred_check_branch
      %216 = sbr.rel (%p213) target = $region44
    $region43: #{_lambda_.16} parent=5 // pred_region
      %s217 = ssub.s32 %s12, 1
      %p218 = scmp.lt.s32.totalorder %s17, 1
      %s219 = scalar_select %p218, %s17, 1
      %s220 = smul.addr %s219, 6
      %s221 = smul.addr %s220, 4
      %s222 = scalar_lea.vmem %s0, %s221
      %p223 = pneg %p38
      %p224 = pneg %p35
      %p225 = pneg %p59
      %p226 = pneg %p56
      %p227 = pneg %p80
      %p228 = pneg %p77
      %p229 = pneg %p101
      %p230 = pneg %p98
      %p231 = pneg %p122
      %p232 = pneg %p119
      %p233 = pneg %p143
      %p234 = pneg %p140
      %p235 = pneg %p169
      %p236 = pneg %p166
      %p237 = scmp.lt.s32.totalorder %s17, 1
      %s238 = scalar_select %p237, %s17, 1
      %s239 = smul.addr %s238, 3
      %s240 = smul.addr %s239, 4
      %s241 = scalar_lea.vmem %s6, %s240
      %p242 = scmp.lt.s32.totalorder %s17, 1
      %s243 = scalar_select %p242, %s17, 1
      %s244 = smul.addr %s243, 6
      %s245 = smul.addr %s244, 4
      %s246 = scalar_lea.vmem %s0, %s245
      %p247 = scmp.lt.s32.totalorder %s17, 1
      %s248 = scalar_select %p247, %s17, 1
      %s249 = smul.addr %s248, 3
      %s250 = smul.addr %s249, 4
      %s251 = scalar_lea.vmem %s6, %s250
      %v253 = vld [vmem:[%s246] sm:$0xf]
      %v254 = vld [vmem:[%s246 + $0x4] sm:$0xf]
      %v255 = vld [vmem:[%s246 + $0x8] sm:$0xf]
      %v256 = vld [vmem:[%s1] sm:$0xf]
      %v257 = vld [vmem:[%s1 + $0x4] sm:$0xf]
      %v258 = vld [vmem:[%s1 + $0x8] sm:$0xf]
      %v259 = vld [vmem:[%s1 + $0xc] sm:$0xf]
      %v260 = vld [vmem:[%s246 + $0xc] sm:$0x1]
      %s261 = scalar_lea.vmem %s1, 16
      %v262 = vld [vmem:[%s261] sm:$0xf]
      %v263 = vld [vmem:[%s261 + $0x4] sm:$0xf]
      %v264 = vld [vmem:[%s261 + $0x8] sm:$0xf]
      %v265 = vld [vmem:[%s261 + $0xc] sm:$0xf]
      %v270 = vunpack.c.l.b16 %v253
      %v271 = vunpack.c.l.b16 %v254
      %v272 = vunpack.c.l.b16 %v255
      %v273 = vunpack.c.l.b16 %v260
      %v274 = vpack.c.b16 %v271, %v270
      %v275 = vpack.c.b16 %v273, %v272
      %vm276 = vsmask.f32 7424
      %v278 = vshrl.u32 %v274, 16
      %v280 = vshll.u32 %v274, 16
      %v282 = vrot.slane %v280, 1
      %v283 = vor.u32 %v278, %v282
      %v285 = vshll.u32 %v275, 16
      %v287 = vrot.slane %v285, 1
      %v288 = vsel %vm276, %v283, %v287
      %v289 = vshrl.u32 %v275, 16
      %v291 = vor.u32 %v289, %v287
      %v296 = vunpack.c.l.b16 %v262
      %v297 = vunpack.c.l.b16 %v263
      %v298 = vunpack.c.l.b16 %v264
      %v299 = vunpack.c.l.b16 %v265
      %v300 = vpack.c.b16 %v297, %v296
      %v301 = vpack.c.b16 %v299, %v298
      %vm304 = vcmask 261120
      %v306 = vsel %vm304, %v288, 0
      %v309 = vsel %vm304, %v291, 0
      %311 = vmatpush.bf16.msra.mxu0 0
      %312 = vmatpush.bf16.msra.mxu0 0
      %313 = vmatpush.bf16.msra.mxu0 0
      %314 = vmatpush.bf16.msra.mxu0 0
      %315 = vmatpush.bf16.msra.mxu0 0
      %316 = vmatpush.bf16.msra.mxu0 0
      %317 = vmatpush.bf16.msra.mxu0 %v301
      %318 = vmatpush.bf16.msra.mxu0 %v300
      %319 = vmatmul.bf16.gmra.mxu0 %v306
      %v320 = vpop.f32.mrf.mxu0
      %v321 = vadd.f32 0.0, %v320
      %v322 = vpop.f32.mrf.mxu0
      %v323 = vadd.f32 0.0, %v322
      %324 = vmatmul.bf16.gmra.mxu0 %v309
      %v325 = vpop.f32.mrf.mxu0
      %v326 = vadd.f32 0.0, %v325
      %v327 = vpop.f32.mrf.mxu0
      %328 = vdwg.mxu0
      %v329 = vpack.c.b16 %v272, %v272
      %v334 = vunpack.c.l.b16 %v256
      %v335 = vunpack.c.l.b16 %v257
      %v336 = vunpack.c.l.b16 %v258
      %v337 = vunpack.c.l.b16 %v259
      %v338 = vpack.c.b16 %v335, %v334
      %v339 = vpack.c.b16 %v337, %v336
      %v342 = vsel %vm304, %v274, 0
      %v345 = vsel %vm304, %v329, 0
      %347 = vmatpush.bf16.msra.mxu0 0
      %348 = vmatpush.bf16.msra.mxu0 0
      %349 = vmatpush.bf16.msra.mxu0 0
      %350 = vmatpush.bf16.msra.mxu0 0
      %351 = vmatpush.bf16.msra.mxu0 0
      %352 = vmatpush.bf16.msra.mxu0 0
      %353 = vmatpush.bf16.msra.mxu0 %v339
      %354 = vmatpush.bf16.msra.mxu0 %v338
      %355 = vmatmul.bf16.gmra.mxu0 %v342
      %v356 = vpop.f32.mrf.mxu0
      %v357 = vadd.f32 %v321, %v356
      %v358 = vpop.f32.mrf.mxu0
      %v359 = vadd.f32 %v323, %v358
      %360 = vmatmul.bf16.gmra.mxu0 %v345
      %v361 = vpop.f32.mrf.mxu0
      %v362 = vadd.f32 %v326, %v361
      %v363 = vpop.f32.mrf.mxu0
      %364 = vdwg.mxu0
      %v365 = vld [vmem:[%s246] sm:$0xe]
      %s366 = scalar_lea.vmem %s1, 32
      %v367 = vld [vmem:[%s366] sm:$0xf]
      %v368 = vld [vmem:[%s366 + $0x4] sm:$0xf]
      %v369 = vld [vmem:[%s366 + $0x8] sm:$0xf]
      %v370 = vld [vmem:[%s366 + $0xc] sm:$0xf]
      %v372 = vunpack.c.l.b16 %v365
      %v373 = vpack.c.b16 %v271, %v372
      %vm374 = vcmask 1046528
      %v375 = vrot.slane %v373, 1
      %v376 = vrot.slane %v275, 1
      %v377 = vsel %vm374, %v375, %v376
      %v382 = vunpack.c.l.b16 %v367
      %v383 = vunpack.c.l.b16 %v368
      %v384 = vunpack.c.l.b16 %v369
      %v385 = vunpack.c.l.b16 %v370
      %v386 = vpack.c.b16 %v383, %v382
      %v387 = vpack.c.b16 %v385, %v384
      %v391 = vsel %vm304, %v377, 0
      %v394 = vsel %vm304, %v376, 0
      %396 = vmatpush.bf16.msra.mxu0 0
      %397 = vmatpush.bf16.msra.mxu0 0
      %398 = vmatpush.bf16.msra.mxu0 0
      %399 = vmatpush.bf16.msra.mxu0 0
      %400 = vmatpush.bf16.msra.mxu0 0
      %401 = vmatpush.bf16.msra.mxu0 0
      %402 = vmatpush.bf16.msra.mxu0 %v387
      %403 = vmatpush.bf16.msra.mxu0 %v386
      %404 = vmatmul.bf16.gmra.mxu0 %v391
      %v405 = vpop.f32.mrf.mxu0
      %v406 = vadd.f32 0.0, %v405
      %v407 = vpop.f32.mrf.mxu0
      %v408 = vadd.f32 0.0, %v407
      %409 = vmatmul.bf16.gmra.mxu0 %v394
      %v410 = vpop.f32.mrf.mxu0
      %v411 = vadd.f32 0.0, %v410
      %v412 = vpop.f32.mrf.mxu0
      %413 = vdwg.mxu0
      %v414 = vadd.f32 %v357, %v406
      %v415 = vadd.f32 %v359, %v408
      %v416 = vadd.f32 %v362, %v411
      %v417 = vld [vmem:[%s246] sm:$0x8]
      %v418 = vld [vmem:[%s246 + $0xc] sm:$0x7]
      %s419 = scalar_lea.vmem %s1, 48
      %v420 = vld [vmem:[%s419] sm:$0xf]
      %v421 = vld [vmem:[%s419 + $0x4] sm:$0xf]
      %v422 = vld [vmem:[%s419 + $0x8] sm:$0xf]
      %v423 = vld [vmem:[%s419 + $0xc] sm:$0xf]
      %v426 = vunpack.c.l.b16 %v417
      %v427 = vunpack.c.l.b16 %v418
      %v428 = vpack.c.b16 %v271, %v426
      %v429 = vpack.c.b16 %v427, %v272
      %vm430 = vcmask 1044480
      %v431 = vrot.slane %v428, 3
      %v432 = vrot.slane %v429, 3
      %v433 = vsel %vm430, %v431, %v432
      %v438 = vunpack.c.l.b16 %v420
      %v439 = vunpack.c.l.b16 %v421
      %v440 = vunpack.c.l.b16 %v422
      %v441 = vunpack.c.l.b16 %v423
      %v442 = vpack.c.b16 %v439, %v438
      %v443 = vpack.c.b16 %v441, %v440
      %v447 = vsel %vm304, %v433, 0
      %v450 = vsel %vm304, %v432, 0
      %452 = vmatpush.bf16.msra.mxu0 0
      %453 = vmatpush.bf16.msra.mxu0 0
      %454 = vmatpush.bf16.msra.mxu0 0
      %455 = vmatpush.bf16.msra.mxu0 0
      %456 = vmatpush.bf16.msra.mxu0 0
      %457 = vmatpush.bf16.msra.mxu0 0
      %458 = vmatpush.bf16.msra.mxu0 %v443
      %459 = vmatpush.bf16.msra.mxu0 %v442
      %460 = vmatmul.bf16.gmra.mxu0 %v447
      %v461 = vpop.f32.mrf.mxu0
      %v462 = vadd.f32 0.0, %v461
      %v463 = vpop.f32.mrf.mxu0
      %v464 = vadd.f32 0.0, %v463
      %465 = vmatmul.bf16.gmra.mxu0 %v450
      %v466 = vpop.f32.mrf.mxu0
      %v467 = vadd.f32 0.0, %v466
      %v468 = vpop.f32.mrf.mxu0
      %469 = vdwg.mxu0
      %v470 = vadd.f32 %v414, %v462
      %v471 = vadd.f32 %v415, %v464
      %v472 = vadd.f32 %v416, %v467
      %v473 = vld [vmem:[%s246 + $0xc] sm:$0xf]
      %s474 = scalar_lea.vmem %s1, 64
      %v475 = vld [vmem:[%s474] sm:$0xf]
      %v476 = vld [vmem:[%s474 + $0x4] sm:$0xf]
      %v477 = vld [vmem:[%s474 + $0x8] sm:$0xf]
      %v478 = vld [vmem:[%s474 + $0xc] sm:$0xf]
      %v480 = vunpack.c.l.b16 %v473
      %v481 = vpack.c.b16 %v480, %v272
      %vm482 = vsmask.f32 4352
      %v484 = vshrl.u32 %v428, 16
      %v486 = vrot.slane %v484, 3
      %v487 = vshll.u32 %v428, 16
      %v489 = vrot.slane %v487, 4
      %v490 = vor.u32 %v486, %v489
      %v492 = vshrl.u32 %v481, 16
      %v494 = vrot.slane %v492, 3
      %v495 = vshll.u32 %v481, 16
      %v497 = vrot.slane %v495, 4
      %v498 = vor.u32 %v494, %v497
      %v499 = vsel %vm482, %v490, %v498
      %v504 = vunpack.c.l.b16 %v475
      %v505 = vunpack.c.l.b16 %v476
      %v506 = vunpack.c.l.b16 %v477
      %v507 = vunpack.c.l.b16 %v478
      %v508 = vpack.c.b16 %v505, %v504
      %v509 = vpack.c.b16 %v507, %v506
      %v513 = vsel %vm304, %v499, 0
      %v516 = vsel %vm304, %v498, 0
      %518 = vmatpush.bf16.msra.mxu0 0
      %519 = vmatpush.bf16.msra.mxu0 0
      %520 = vmatpush.bf16.msra.mxu0 0
      %521 = vmatpush.bf16.msra.mxu0 0
      %522 = vmatpush.bf16.msra.mxu0 0
      %523 = vmatpush.bf16.msra.mxu0 0
      %524 = vmatpush.bf16.msra.mxu0 %v509
      %525 = vmatpush.bf16.msra.mxu0 %v508
      %526 = vmatmul.bf16.gmra.mxu0 %v513
      %v527 = vpop.f32.mrf.mxu0
      %v528 = vadd.f32 0.0, %v527
      %v529 = vpop.f32.mrf.mxu0
      %v530 = vadd.f32 0.0, %v529
      %531 = vmatmul.bf16.gmra.mxu0 %v516
      %v532 = vpop.f32.mrf.mxu0
      %v533 = vadd.f32 0.0, %v532
      %v534 = vpop.f32.mrf.mxu0
      %535 = vdwg.mxu0
      %v536 = vadd.f32 %v470, %v528
      %v537 = vadd.f32 %v471, %v530
      %v538 = vadd.f32 %v472, %v533
      %s539 = scalar_lea.vmem %s1, 80
      %v540 = vld [vmem:[%s539] sm:$0xf]
      %v541 = vld [vmem:[%s539 + $0x4] sm:$0xf]
      %v542 = vld [vmem:[%s539 + $0x8] sm:$0xf]
      %v543 = vld [vmem:[%s539 + $0xc] sm:$0xf]
      %v544 = vpack.c.b16 %v272, %v271
      %v545 = vpack.c.b16 %v480, %v480
      %v550 = vunpack.c.l.b16 %v540
      %v551 = vunpack.c.l.b16 %v541
      %v552 = vunpack.c.l.b16 %v542
      %v553 = vunpack.c.l.b16 %v543
      %v554 = vpack.c.b16 %v551, %v550
      %v555 = vpack.c.b16 %v553, %v552
      %v559 = vsel %vm304, %v544, 0
      %v562 = vsel %vm304, %v545, 0
      %564 = vmatpush.bf16.msra.mxu0 0
      %565 = vmatpush.bf16.msra.mxu0 0
      %566 = vmatpush.bf16.msra.mxu0 0
      %567 = vmatpush.bf16.msra.mxu0 0
      %568 = vmatpush.bf16.msra.mxu0 0
      %569 = vmatpush.bf16.msra.mxu0 0
      %570 = vmatpush.bf16.msra.mxu0 %v555
      %571 = vmatpush.bf16.msra.mxu0 %v554
      %572 = vmatmul.bf16.gmra.mxu0 %v559
      %v573 = vpop.f32.mrf.mxu0
      %v574 = vadd.f32 0.0, %v573
      %v575 = vpop.f32.mrf.mxu0
      %v576 = vadd.f32 0.0, %v575
      %577 = vmatmul.bf16.gmra.mxu0 %v562
      %v578 = vpop.f32.mrf.mxu0
      %v579 = vadd.f32 0.0, %v578
      %v580 = vpop.f32.mrf.mxu0
      %581 = vdwg.mxu0
      %v582 = vadd.f32 %v536, %v574
      %v583 = vadd.f32 %v537, %v576
      %v584 = vadd.f32 %v538, %v579
      %v585 = vld [vmem:[%s246 + $0x4] sm:$0xc]
      %v586 = vld [vmem:[%s246 + $0x8] sm:$0xf]
      %v587 = vld [vmem:[%s246 + $0xc] sm:$0xf]
      %v588 = vld [vmem:[%s246 + $0x10] sm:$0x3]
      %s589 = scalar_lea.vmem %s1, 96
      %v590 = vld [vmem:[%s589] sm:$0xf]
      %v591 = vld [vmem:[%s589 + $0x4] sm:$0xf]
      %v592 = vld [vmem:[%s589 + $0x8] sm:$0xf]
      %v593 = vld [vmem:[%s589 + $0xc] sm:$0xf]
      %v598 = vunpack.c.l.b16 %v585
      %v599 = vunpack.c.l.b16 %v586
      %v600 = vunpack.c.l.b16 %v587
      %v601 = vunpack.c.l.b16 %v588
      %v602 = vpack.c.b16 %v599, %v598
      %v603 = vpack.c.b16 %v601, %v600
      %vm604 = vcmask 1045504
      %v605 = vrot.slane %v602, 2
      %v606 = vrot.slane %v603, 2
      %v607 = vsel %vm604, %v605, %v606
      %v612 = vunpack.c.l.b16 %v590
      %v613 = vunpack.c.l.b16 %v591
      %v614 = vunpack.c.l.b16 %v592
      %v615 = vunpack.c.l.b16 %v593
      %v616 = vpack.c.b16 %v613, %v612
      %v617 = vpack.c.b16 %v615, %v614
      %v621 = vsel %vm304, %v607, 0
      %v624 = vsel %vm304, %v606, 0
      %626 = vmatpush.bf16.msra.mxu0 0
      %627 = vmatpush.bf16.msra.mxu0 0
      %628 = vmatpush.bf16.msra.mxu0 0
      %629 = vmatpush.bf16.msra.mxu0 0
      %630 = vmatpush.bf16.msra.mxu0 0
      %631 = vmatpush.bf16.msra.mxu0 0
      %632 = vmatpush.bf16.msra.mxu0 %v617
      %633 = vmatpush.bf16.msra.mxu0 %v616
      %634 = vmatmul.bf16.gmra.mxu0 %v621
      %v635 = vpop.f32.mrf.mxu0
      %v636 = vadd.f32 0.0, %v635
      %v637 = vpop.f32.mrf.mxu0
      %v638 = vadd.f32 0.0, %v637
      %639 = vmatmul.bf16.gmra.mxu0 %v624
      %v640 = vpop.f32.mrf.mxu0
      %v641 = vadd.f32 0.0, %v640
      %v642 = vpop.f32.mrf.mxu0
      %643 = vdwg.mxu0
      %v644 = vadd.f32 %v582, %v636
      %v645 = vadd.f32 %v583, %v638
      %v646 = vadd.f32 %v584, %v641
      %v647 = vld [vmem:[%s246 + $0x10] sm:$0x7]
      %s648 = scalar_lea.vmem %s1, 112
      %v649 = vld [vmem:[%s648] sm:$0xf]
      %v650 = vld [vmem:[%s648 + $0x4] sm:$0xf]
      %v651 = vld [vmem:[%s648 + $0x8] sm:$0xf]
      %v652 = vld [vmem:[%s648 + $0xc] sm:$0xf]
      %v654 = vunpack.c.l.b16 %v647
      %v655 = vpack.c.b16 %v654, %v600
      %vm656 = vsmask.f32 5376
      %v658 = vshrl.u32 %v602, 16
      %v660 = vrot.slane %v658, 2
      %v661 = vshll.u32 %v602, 16
      %v663 = vrot.slane %v661, 3
      %v664 = vor.u32 %v660, %v663
      %v666 = vshrl.u32 %v655, 16
      %v668 = vrot.slane %v666, 2
      %v669 = vshll.u32 %v655, 16
      %v671 = vrot.slane %v669, 3
      %v672 = vor.u32 %v668, %v671
      %v673 = vsel %vm656, %v664, %v672
      %v678 = vunpack.c.l.b16 %v649
      %v679 = vunpack.c.l.b16 %v650
      %v680 = vunpack.c.l.b16 %v651
      %v681 = vunpack.c.l.b16 %v652
      %v682 = vpack.c.b16 %v679, %v678
      %v683 = vpack.c.b16 %v681, %v680
      %v687 = vsel %vm304, %v673, 0
      %v690 = vsel %vm304, %v672, 0
      %692 = vmatpush.bf16.msra.mxu0 0
      %693 = vmatpush.bf16.msra.mxu0 0
      %694 = vmatpush.bf16.msra.mxu0 0
      %695 = vmatpush.bf16.msra.mxu0 0
      %696 = vmatpush.bf16.msra.mxu0 0
      %697 = vmatpush.bf16.msra.mxu0 0
      %698 = vmatpush.bf16.msra.mxu0 %v683
      %699 = vmatpush.bf16.msra.mxu0 %v682
      %700 = vmatmul.bf16.gmra.mxu0 %v687
      %v701 = vpop.f32.mrf.mxu0
      %v702 = vadd.f32 0.0, %v701
      %v703 = vpop.f32.mrf.mxu0
      %v704 = vadd.f32 0.0, %v703
      %705 = vmatmul.bf16.gmra.mxu0 %v690
      %v706 = vpop.f32.mrf.mxu0
      %v707 = vadd.f32 0.0, %v706
      %v708 = vpop.f32.mrf.mxu0
      %709 = vdwg.mxu0
      %v710 = vadd.f32 %v644, %v702
      %v711 = vadd.f32 %v645, %v704
      %v712 = vadd.f32 %v646, %v707
      %v713 = vld [vmem:[%s246 + $0x4] sm:$0x8]
      %s714 = scalar_lea.vmem %s1, 128
      %v715 = vld [vmem:[%s714] sm:$0xf]
      %v716 = vld [vmem:[%s714 + $0x4] sm:$0xf]
      %v717 = vld [vmem:[%s714 + $0x8] sm:$0xf]
      %v718 = vld [vmem:[%s714 + $0xc] sm:$0xf]
      %v720 = vunpack.c.l.b16 %v713
      %v721 = vpack.c.b16 %v599, %v720
      %v722 = vrot.slane %v721, 3
      %v723 = vrot.slane %v655, 3
      %v724 = vsel %vm430, %v722, %v723
      %v729 = vunpack.c.l.b16 %v715
      %v730 = vunpack.c.l.b16 %v716
      %v731 = vunpack.c.l.b16 %v717
      %v732 = vunpack.c.l.b16 %v718
      %v733 = vpack.c.b16 %v730, %v729
      %v734 = vpack.c.b16 %v732, %v731
      %v738 = vsel %vm304, %v724, 0
      %v741 = vsel %vm304, %v723, 0
      %743 = vmatpush.bf16.msra.mxu0 0
      %744 = vmatpush.bf16.msra.mxu0 0
      %745 = vmatpush.bf16.msra.mxu0 0
      %746 = vmatpush.bf16.msra.mxu0 0
      %747 = vmatpush.bf16.msra.mxu0 0
      %748 = vmatpush.bf16.msra.mxu0 0
      %749 = vmatpush.bf16.msra.mxu0 %v734
      %750 = vmatpush.bf16.msra.mxu0 %v733
      %751 = vmatmul.bf16.gmra.mxu0 %v738
      %v752 = vpop.f32.mrf.mxu0
      %v753 = vadd.f32 0.0, %v752
      %v754 = vpop.f32.mrf.mxu0
      %v755 = vadd.f32 0.0, %v754
      %756 = vmatmul.bf16.gmra.mxu0 %v741
      %v757 = vpop.f32.mrf.mxu0
      %v758 = vadd.f32 0.0, %v757
      %v759 = vpop.f32.mrf.mxu0
      %760 = vdwg.mxu0
      %v761 = vadd.f32 %v710, %v753
      %v762 = vadd.f32 %v711, %v755
      %v763 = vadd.f32 %v712, %v758
      %v764 = vpack.c.bf16 %v761, %v761
      %v765 = vpack.c.bf16 %v762, %v762
      %v766 = vpack.c.bf16 %v763, %v763
      %767 = vst [vmem:[%s251] sm:$0xf] %v764
      %768 = vst [vmem:[%s251 + $0x4] sm:$0xf] %v765
      %769 = vst [vmem:[%s251 + $0x8] sm:$0xf] %v766
      %p770 = scmp.lt.s32.totalorder %s17, 1
      %s771 = scalar_select %p770, %s17, 1
      %s772 = smul.addr %s771, 3
      %s773 = smul.addr %s772, 4
      %s774 = scalar_lea.vmem %s6, %s773
      // Predicated region
      $region45: #{_lambda_.16} parent=43 // pred_check
        %p775 = pneg %p166
      $region46: #{_lambda_.16} parent=43 // pred_check_branch
        %777 = sbr.rel (%p775) target = $region48
      $region47: #{_lambda_.16} parent=43 // pred_region
        _
      $region48: #{_lambda_.16} parent=43 // pred_fallthru
        _
    $region44: #{_lambda_.16} parent=5 // pred_fallthru
      _
    %p778 = scmp.le.s32.totalorder 2, %s12
    // Predicated region
    $region49: #{_lambda_.16} parent=5 // pred_check
      %p779 = pneg %p778
    $region50: #{_lambda_.16} parent=5 // pred_check_branch
      %781 = sbr.rel (%p779) target = $region52
    $region51: #{_lambda_.16} parent=5 // pred_region
      %s782 = ssub.s32 %s12, 2
      // Predicated region
      $region53: #{_lambda_.16} parent=51 // pred_check
        %p783 = pneg %p172
      $region54: #{_lambda_.16} parent=51 // pred_check_branch
        %785 = sbr.rel (%p783) target = $region56
      $region55: #{_lambda_.16} parent=51 // pred_region
        %p786 = scmp.lt.s32.totalorder %s18, 1
        %s787 = scalar_select %p786, %s18, 1
        %s788 = smul.addr %s787, 3
        %s789 = smul.addr %s788, 4
        %s790 = scalar_lea.vmem %s6, %s789
      $region56: #{_lambda_.16} parent=51 // pred_fallthru
        _
    $region52: #{_lambda_.16} parent=5 // pred_fallthru
      _
  $region6: #{_lambda_.16} parent=0 // loop_footer
    %s16 = sadd.s32 1, %s12
  $region7: #{_lambda_.16} parent=0 // loop_footer_branch
    %11 = sbr.rel target = $region3
  $region8: #{_lambda_.16} parent=0 // loop_exit
    _

// kernel: _lambda_.17
$region0: #{_lambda_.17}
  #allocation0 [shape = 'u32[]', space=smem, size = 0x4, offset = 0x4, fixed_abs, tag = 'smem constant byte address 0x4 - core index']
  #allocation1 [shape = 'u32[72,128]{1,0:T(1,128)}', space=vmem, size = 0x9000, scoped, tag = 'internal scratch']
  %s0 = inlined_call_operand.vmem [shape: bf16[2,1,16,24], index: 0, kind: input, shape index: {}]
  %s1 = inlined_call_operand.vmem [shape: bf16[1,24,128], index: 1, kind: input, shape index: {}]
  %s2 = inlined_call_operand.vmem [shape: f32[1,24], index: 2, kind: input, shape index: {}]
  %s3 = inlined_call_operand.vmem [shape: f32[1,24], index: 3, kind: input, shape index: {}]
  %s4 = inlined_call_operand.vmem [shape: f32[1,128], index: 4, kind: input, shape index: {}]
  %s5 = inlined_call_operand.vmem [shape: f32[1,128], index: 5, kind: input, shape index: {}]
  %s6 = inlined_call_operand.vmem [shape: bf16[2,16,128], index: 6, kind: output, shape index: {}]
  %s7 = sld [smem:[#allocation0]]
  $region57: #{_lambda_.17} parent=0
    _
  %s9 = ssub.s32 1, %s7
  %s10 = scalar_select 0, %s9, %s7
  loop: start=0, step=1, limit=4
  $region2: #{_lambda_.17} parent=0 // loop_pre_header
    _
  $region3: #{_lambda_.17} parent=0 // loop_header
    %s12 = sphi 0, %s16
    %p13 = scmp.ge.s32.totalorder %s12, 4
    %s22 = sphi 0, %s24
    %s25 = sphi 0, %s22
    %s26 = sphi 0, %s25
    %s42 = sphi 0, %s26
    %s46 = sphi 0, %s46
    %s48 = sphi 0, %s46
    %s49 = sphi 0, %s48
    %s63 = sphi 0, %s49
    %s67 = sphi 0, %s67
    %s69 = sphi 0, %s67
    %s70 = sphi 0, %s69
    %s84 = sphi 0, %s70
    %s88 = sphi 0, %s88
    %s90 = sphi 0, %s88
    %s91 = sphi 0, %s90
    %s105 = sphi 0, %s91
    %s109 = sphi 0, %s109
    %s111 = sphi 0, %s109
    %s112 = sphi 0, %s111
    %s126 = sphi 0, %s112
    %s130 = sphi 0, %s130
    %s132 = sphi 0, %s130
    %s133 = sphi 0, %s132
    %s147 = sphi 0, %s133
    %s153 = sphi 0, %s155
    %s156 = sphi 0, %s153
    %s157 = sphi 0, %s156
    %s173 = sphi 0, %s157
  $region4: #{_lambda_.17} parent=0 // loop_header_branch
    %15 = sbr.rel (%p13) target = $region8
  $region5: #{_lambda_.17} parent=0 // loop_body
    %s17 = ssub.s32 %s12, 1
    %s18 = ssub.s32 %s12, 2
    %s19 = sadd.s32 %s12, 1
    %s20 = ssub.s32 %s12, %s19
    %p21 = scmp.eq.s32.totalorder %s20, 0
    %s23 = sadd.s32 %s22, 1
    %s24 = scalar_select %p21, %s22, %s23
    %p27 = pneg %p21
    %p28 = scmp.eq.s32.totalorder %s12, 1
    %p29 = por %p27, %p28
    %p30 = scmp.ne.s32.totalorder %s22, %s25
    %p31 = scmp.eq.s32.totalorder %s12, 0
    %p32 = por %p30, %p31
    %p33 = scmp.ne.s32.totalorder %s22, %s25
    %p34 = scmp.eq.s32.totalorder %s17, 1
    %p35 = por %p33, %p34
    %p36 = scmp.ne.s32.totalorder %s25, %s26
    %p37 = scmp.eq.s32.totalorder %s17, 0
    %p38 = por %p36, %p37
    %p39 = scmp.ne.s32.totalorder %s25, %s26
    %p40 = scmp.eq.s32.totalorder %s18, 1
    %p41 = por %p39, %p40
    %p43 = scmp.ne.s32.totalorder %s26, %s42
    %p44 = scmp.eq.s32.totalorder %s18, 0
    %p45 = por %p43, %p44
    %s47 = sadd.s32 %s46, 1
    %p50 = scmp.eq.s32.totalorder %s12, 1
    %p51 = scmp.ne.s32.totalorder %s46, %s48
    %p52 = scmp.eq.s32.totalorder %s12, 0
    %p53 = por %p51, %p52
    %p54 = scmp.ne.s32.totalorder %s46, %s48
    %p55 = scmp.eq.s32.totalorder %s17, 1
    %p56 = por %p54, %p55
    %p57 = scmp.ne.s32.totalorder %s48, %s49
    %p58 = scmp.eq.s32.totalorder %s17, 0
    %p59 = por %p57, %p58
    %p60 = scmp.ne.s32.totalorder %s48, %s49
    %p61 = scmp.eq.s32.totalorder %s18, 1
    %p62 = por %p60, %p61
    %p64 = scmp.ne.s32.totalorder %s49, %s63
    %p65 = scmp.eq.s32.totalorder %s18, 0
    %p66 = por %p64, %p65
    %s68 = sadd.s32 %s67, 1
    %p71 = scmp.eq.s32.totalorder %s12, 1
    %p72 = scmp.ne.s32.totalorder %s67, %s69
    %p73 = scmp.eq.s32.totalorder %s12, 0
    %p74 = por %p72, %p73
    %p75 = scmp.ne.s32.totalorder %s67, %s69
    %p76 = scmp.eq.s32.totalorder %s17, 1
    %p77 = por %p75, %p76
    %p78 = scmp.ne.s32.totalorder %s69, %s70
    %p79 = scmp.eq.s32.totalorder %s17, 0
    %p80 = por %p78, %p79
    %p81 = scmp.ne.s32.totalorder %s69, %s70
    %p82 = scmp.eq.s32.totalorder %s18, 1
    %p83 = por %p81, %p82
    %p85 = scmp.ne.s32.totalorder %s70, %s84
    %p86 = scmp.eq.s32.totalorder %s18, 0
    %p87 = por %p85, %p86
    %s89 = sadd.s32 %s88, 1
    %p92 = scmp.eq.s32.totalorder %s12, 1
    %p93 = scmp.ne.s32.totalorder %s88, %s90
    %p94 = scmp.eq.s32.totalorder %s12, 0
    %p95 = por %p93, %p94
    %p96 = scmp.ne.s32.totalorder %s88, %s90
    %p97 = scmp.eq.s32.totalorder %s17, 1
    %p98 = por %p96, %p97
    %p99 = scmp.ne.s32.totalorder %s90, %s91
    %p100 = scmp.eq.s32.totalorder %s17, 0
    %p101 = por %p99, %p100
    %p102 = scmp.ne.s32.totalorder %s90, %s91
    %p103 = scmp.eq.s32.totalorder %s18, 1
    %p104 = por %p102, %p103
    %p106 = scmp.ne.s32.totalorder %s91, %s105
    %p107 = scmp.eq.s32.totalorder %s18, 0
    %p108 = por %p106, %p107
    %s110 = sadd.s32 %s109, 1
    %p113 = scmp.eq.s32.totalorder %s12, 1
    %p114 = scmp.ne.s32.totalorder %s109, %s111
    %p115 = scmp.eq.s32.totalorder %s12, 0
    %p116 = por %p114, %p115
    %p117 = scmp.ne.s32.totalorder %s109, %s111
    %p118 = scmp.eq.s32.totalorder %s17, 1
    %p119 = por %p117, %p118
    %p120 = scmp.ne.s32.totalorder %s111, %s112
    %p121 = scmp.eq.s32.totalorder %s17, 0
    %p122 = por %p120, %p121
    %p123 = scmp.ne.s32.totalorder %s111, %s112
    %p124 = scmp.eq.s32.totalorder %s18, 1
    %p125 = por %p123, %p124
    %p127 = scmp.ne.s32.totalorder %s112, %s126
    %p128 = scmp.eq.s32.totalorder %s18, 0
    %p129 = por %p127, %p128
    %s131 = sadd.s32 %s130, 1
    %p134 = scmp.eq.s32.totalorder %s12, 1
    %p135 = scmp.ne.s32.totalorder %s130, %s132
    %p136 = scmp.eq.s32.totalorder %s12, 0
    %p137 = por %p135, %p136
    %p138 = scmp.ne.s32.totalorder %s130, %s132
    %p139 = scmp.eq.s32.totalorder %s17, 1
    %p140 = por %p138, %p139
    %p141 = scmp.ne.s32.totalorder %s132, %s133
    %p142 = scmp.eq.s32.totalorder %s17, 0
    %p143 = por %p141, %p142
    %p144 = scmp.ne.s32.totalorder %s132, %s133
    %p145 = scmp.eq.s32.totalorder %s18, 1
    %p146 = por %p144, %p145
    %p148 = scmp.ne.s32.totalorder %s133, %s147
    %p149 = scmp.eq.s32.totalorder %s18, 0
    %p150 = por %p148, %p149
    %s151 = ssub.s32 %s12, %s19
    %p152 = scmp.eq.s32.totalorder %s151, 0
    %s154 = sadd.s32 %s153, 1
    %s155 = scalar_select %p152, %s153, %s154
    %p158 = pneg %p152
    %p159 = scmp.eq.s32.totalorder %s12, 1
    %p160 = por %p158, %p159
    %p161 = scmp.ne.s32.totalorder %s153, %s156
    %p162 = scmp.eq.s32.totalorder %s12, 0
    %p163 = por %p161, %p162
    %p164 = scmp.ne.s32.totalorder %s153, %s156
    %p165 = scmp.eq.s32.totalorder %s17, 1
    %p166 = por %p164, %p165
    %p167 = scmp.ne.s32.totalorder %s156, %s157
    %p168 = scmp.eq.s32.totalorder %s17, 0
    %p169 = por %p167, %p168
    %p170 = scmp.ne.s32.totalorder %s156, %s157
    %p171 = scmp.eq.s32.totalorder %s18, 1
    %p172 = por %p170, %p171
    %p174 = scmp.ne.s32.totalorder %s157, %s173
    %p175 = scmp.eq.s32.totalorder %s18, 0
    %p176 = por %p174, %p175
    %p177 = scmp.le.s32.totalorder 1, %s12
    %p178 = scmp.lt.s32.totalorder %s12, 3
    %p179 = pnand %p177, %p178
    %p180 = pneg %p179
    // Predicated region
    $region9: #{_lambda_.17} parent=5 // pred_check
      _
    $region10: #{_lambda_.17} parent=5 // pred_check_branch
      %182 = sbr.rel (%p179) target = $region12
    $region11: #{_lambda_.17} parent=5 // pred_region
      %s183 = ssub.s32 %s12, 1
      // Predicated region
      $region13: #{_lambda_.17} parent=11 // pred_check
        %p184 = pneg %p59
      $region14: #{_lambda_.17} parent=11 // pred_check_branch
        %186 = sbr.rel (%p184) target = $region16
      $region15: #{_lambda_.17} parent=11 // pred_region
        _
      $region16: #{_lambda_.17} parent=11 // pred_fallthru
        _
      // Predicated region
      $region17: #{_lambda_.17} parent=11 // pred_check
        %p187 = pneg %p80
      $region18: #{_lambda_.17} parent=11 // pred_check_branch
        %189 = sbr.rel (%p187) target = $region20
      $region19: #{_lambda_.17} parent=11 // pred_region
        _
      $region20: #{_lambda_.17} parent=11 // pred_fallthru
        _
      // Predicated region
      $region21: #{_lambda_.17} parent=11 // pred_check
        %p190 = pneg %p101
      $region22: #{_lambda_.17} parent=11 // pred_check_branch
        %192 = sbr.rel (%p190) target = $region24
      $region23: #{_lambda_.17} parent=11 // pred_region
        _
      $region24: #{_lambda_.17} parent=11 // pred_fallthru
        _
      // Predicated region
      $region25: #{_lambda_.17} parent=11 // pred_check
        %p193 = pneg %p122
      $region26: #{_lambda_.17} parent=11 // pred_check_branch
        %195 = sbr.rel (%p193) target = $region28
      $region27: #{_lambda_.17} parent=11 // pred_region
        _
      $region28: #{_lambda_.17} parent=11 // pred_fallthru
        _
      // Predicated region
      $region29: #{_lambda_.17} parent=11 // pred_check
        %p196 = pneg %p143
      $region30: #{_lambda_.17} parent=11 // pred_check_branch
        %198 = sbr.rel (%p196) target = $region32
      $region31: #{_lambda_.17} parent=11 // pred_region
        _
      $region32: #{_lambda_.17} parent=11 // pred_fallthru
        _
    $region12: #{_lambda_.17} parent=5 // pred_fallthru
      _
    %p199 = scmp.lt.s32.totalorder %s12, 2
    // Predicated region
    $region33: #{_lambda_.17} parent=5 // pred_check
      %p200 = pneg %p199
    $region34: #{_lambda_.17} parent=5 // pred_check_branch
      %202 = sbr.rel (%p200) target = $region36
    $region35: #{_lambda_.17} parent=5 // pred_region
      // Predicated region
      $region37: #{_lambda_.17} parent=35 // pred_check
        %p203 = pneg %p32
      $region38: #{_lambda_.17} parent=35 // pred_check_branch
        %205 = sbr.rel (%p203) target = $region40
      $region39: #{_lambda_.17} parent=35 // pred_region
        %p206 = scmp.lt.s32.totalorder %s12, 1
        %s207 = scalar_select %p206, %s12, 1
        %s208 = smul.addr %s207, 2
        %s209 = smul.addr %s208, 4
        %s210 = scalar_lea.vmem %s0, %s209
      $region40: #{_lambda_.17} parent=35 // pred_fallthru
        _
    $region36: #{_lambda_.17} parent=5 // pred_fallthru
      _
    %p211 = scmp.le.s32.totalorder 1, %s12
    %p212 = scmp.lt.s32.totalorder %s12, 3
    %p213 = pnand %p211, %p212
    %p214 = pneg %p213
    // Predicated region
    $region41: #{_lambda_.17} parent=5 // pred_check
      _
    $region42: #{_lambda_.17} parent=5 // pred_check_branch
      %216 = sbr.rel (%p213) target = $region44
    $region43: #{_lambda_.17} parent=5 // pred_region
      %s217 = ssub.s32 %s12, 1
      %p218 = scmp.lt.s32.totalorder %s17, 1
      %s219 = scalar_select %p218, %s17, 1
      %s220 = smul.addr %s219, 2
      %s221 = smul.addr %s220, 4
      %s222 = scalar_lea.vmem %s0, %s221
      %p223 = pneg %p38
      %p224 = pneg %p35
      %p225 = pneg %p59
      %p226 = pneg %p56
      %p227 = pneg %p80
      %p228 = pneg %p77
      %p229 = pneg %p101
      %p230 = pneg %p98
      %p231 = pneg %p122
      %p232 = pneg %p119
      %p233 = pneg %p143
      %p234 = pneg %p140
      %p235 = pneg %p169
      %p236 = pneg %p166
      %p237 = scmp.lt.s32.totalorder %s17, 1
      %s238 = scalar_select %p237, %s17, 1
      %s239 = smul.addr %s238, 2
      %s240 = smul.addr %s239, 4
      %s241 = scalar_lea.vmem %s6, %s240
      %p242 = scmp.lt.s32.totalorder %s17, 1
      %s243 = scalar_select %p242, %s17, 1
      %s244 = smul.addr %s243, 2
      %s245 = smul.addr %s244, 4
      %s246 = scalar_lea.vmem %s0, %s245
      %p247 = scmp.lt.s32.totalorder %s17, 1
      %s248 = scalar_select %p247, %s17, 1
      %s249 = smul.addr %s248, 2
      %s250 = smul.addr %s249, 4
      %s251 = scalar_lea.vmem %s6, %s250
      %v253 = vld [vmem:[%s246] sm:$0xf]
      %v254 = vld [vmem:[%s246 + $0x4] sm:$0xf]
      %v255 = vunpack.c.l.bf16 %v253
      %v256 = vunpack.c.l.bf16 %v254
      %v257 = vld [vmem:[%s2] sm:$0x1]
      %v259 = vperm.slane %v257, 0
      %v261 = vmul.f32 %v255, %v259
      %v262 = vmul.f32 %v256, %v259
      %v263 = vld [vmem:[%s3] sm:$0x1]
      %v265 = vperm.slane %v263, 0
      %v267 = vadd.f32 %v261, %v265
      %v268 = vadd.f32 %v262, %v265
      %v269 = vmax.f32 %v267, 0.0
      %v270 = vmax.f32 %v268, 0.0
      %v271 = vpack.c.bf16 %v270, %v269
      %v272 = vld [vmem:[%s1] sm:$0xf]
      %v273 = vld [vmem:[%s1 + $0x4] sm:$0xf]
      %v274 = vld [vmem:[%s1 + $0x8] sm:$0xf]
      %v278 = vunpack.c.l.b16 %v272
      %v279 = vunpack.c.l.b16 %v273
      %v280 = vunpack.c.l.b16 %v274
      %v281 = vpack.c.b16 %v279, %v278
      %v282 = vpack.c.b16 %v280, %v280
      %vm284 = vcmask 195584
      %v286 = vsel %vm284, %v271, 0
      %vm288 = vcmask 1043456
      %v290 = vsel %vm288, %v282, 0
      %292 = vmatpush.bf16.msra.mxu0 0
      %293 = vmatpush.bf16.msra.mxu0 0
      %294 = vmatpush.bf16.msra.mxu0 0
      %295 = vmatpush.bf16.msra.mxu0 0
      %296 = vmatpush.bf16.msra.mxu0 0
      %297 = vmatpush.bf16.msra.mxu0 0
      %298 = vmatpush.bf16.msra.mxu0 %v290
      %299 = vmatpush.bf16.msra.mxu0 %v281
      %300 = vmatmul.bf16.gmra.mxu0 %v286
      %v301 = vpop.f32.mrf.mxu0
      %v302 = vadd.f32 0.0, %v301
      %v303 = vpop.f32.mrf.mxu0
      %v304 = vadd.f32 0.0, %v303
      %305 = vdwg.mxu0
      %v306 = vld [vmem:[%s4] sm:$0x1]
      %v308 = vperm.slane %v306, 0
      %v310 = vmul.f32 %v302, %v308
      %v311 = vmul.f32 %v304, %v308
      %v312 = vld [vmem:[%s5] sm:$0x1]
      %v314 = vperm.slane %v312, 0
      %v316 = vadd.f32 %v310, %v314
      %v317 = vadd.f32 %v311, %v314
      %v318 = vmax.f32 %v316, 0.0
      %v319 = vmax.f32 %v317, 0.0
      %v320 = vpack.c.bf16 %v318, %v318
      %v321 = vpack.c.bf16 %v319, %v319
      %322 = vst [vmem:[%s251] sm:$0xf] %v320
      %323 = vst [vmem:[%s251 + $0x4] sm:$0xf] %v321
      %p324 = scmp.lt.s32.totalorder %s17, 1
      %s325 = scalar_select %p324, %s17, 1
      %s326 = smul.addr %s325, 2
      %s327 = smul.addr %s326, 4
      %s328 = scalar_lea.vmem %s6, %s327
      // Predicated region
      $region45: #{_lambda_.17} parent=43 // pred_check
        %p329 = pneg %p166
      $region46: #{_lambda_.17} parent=43 // pred_check_branch
        %331 = sbr.rel (%p329) target = $region48
      $region47: #{_lambda_.17} parent=43 // pred_region
        _
      $region48: #{_lambda_.17} parent=43 // pred_fallthru
        _
    $region44: #{_lambda_.17} parent=5 // pred_fallthru
      _
    %p332 = scmp.le.s32.totalorder 2, %s12
    // Predicated region
    $region49: #{_lambda_.17} parent=5 // pred_check
      %p333 = pneg %p332
    $region50: #{_lambda_.17} parent=5 // pred_check_branch
      %335 = sbr.rel (%p333) target = $region52
    $region51: #{_lambda_.17} parent=5 // pred_region
      %s336 = ssub.s32 %s12, 2
      // Predicated region
      $region53: #{_lambda_.17} parent=51 // pred_check
        %p337 = pneg %p172
      $region54: #{_lambda_.17} parent=51 // pred_check_branch
        %339 = sbr.rel (%p337) target = $region56
      $region55: #{_lambda_.17} parent=51 // pred_region
        %p340 = scmp.lt.s32.totalorder %s18, 1
        %s341 = scalar_select %p340, %s18, 1
        %s342 = smul.addr %s341, 2
        %s343 = smul.addr %s342, 4
        %s344 = scalar_lea.vmem %s6, %s343
      $region56: #{_lambda_.17} parent=51 // pred_fallthru
        _
    $region52: #{_lambda_.17} parent=5 // pred_fallthru
      _
  $region6: #{_lambda_.17} parent=0 // loop_footer
    %s16 = sadd.s32 1, %s12
  $region7: #{_lambda_.17} parent=0 // loop_footer_branch
    %11 = sbr.rel target = $region3
  $region8: #{_lambda_.17} parent=0 // loop_exit
    _

// kernel: _lambda_.19
$region0: #{_lambda_.19}
  #allocation0 [shape = 'u32[]', space=smem, size = 0x4, offset = 0x4, fixed_abs, tag = 'smem constant byte address 0x4 - core index']
  #allocation1 [shape = 'u32[72,128]{1,0:T(1,128)}', space=vmem, size = 0x9000, scoped, tag = 'internal scratch']
  %s0 = inlined_call_operand.vmem [shape: bf16[2,1,16,32], index: 0, kind: input, shape index: {}]
  %s1 = inlined_call_operand.vmem [shape: bf16[1,32,128], index: 1, kind: input, shape index: {}]
  %s2 = inlined_call_operand.vmem [shape: f32[1,32], index: 2, kind: input, shape index: {}]
  %s3 = inlined_call_operand.vmem [shape: f32[1,32], index: 3, kind: input, shape index: {}]
  %s4 = inlined_call_operand.vmem [shape: f32[1,128], index: 4, kind: input, shape index: {}]
  %s5 = inlined_call_operand.vmem [shape: f32[1,128], index: 5, kind: input, shape index: {}]
  %s6 = inlined_call_operand.vmem [shape: bf16[2,16,128], index: 6, kind: output, shape index: {}]
  %s7 = sld [smem:[#allocation0]]
  $region57: #{_lambda_.19} parent=0
    _
  %s9 = ssub.s32 1, %s7
  %s10 = scalar_select 0, %s9, %s7
  loop: start=0, step=1, limit=4
  $region2: #{_lambda_.19} parent=0 // loop_pre_header
    _
  $region3: #{_lambda_.19} parent=0 // loop_header
    %s12 = sphi 0, %s16
    %p13 = scmp.ge.s32.totalorder %s12, 4
    %s22 = sphi 0, %s24
    %s25 = sphi 0, %s22
    %s26 = sphi 0, %s25
    %s42 = sphi 0, %s26
    %s46 = sphi 0, %s46
    %s48 = sphi 0, %s46
    %s49 = sphi 0, %s48
    %s63 = sphi 0, %s49
    %s67 = sphi 0, %s67
    %s69 = sphi 0, %s67
    %s70 = sphi 0, %s69
    %s84 = sphi 0, %s70
    %s88 = sphi 0, %s88
    %s90 = sphi 0, %s88
    %s91 = sphi 0, %s90
    %s105 = sphi 0, %s91
    %s109 = sphi 0, %s109
    %s111 = sphi 0, %s109
    %s112 = sphi 0, %s111
    %s126 = sphi 0, %s112
    %s130 = sphi 0, %s130
    %s132 = sphi 0, %s130
    %s133 = sphi 0, %s132
    %s147 = sphi 0, %s133
    %s153 = sphi 0, %s155
    %s156 = sphi 0, %s153
    %s157 = sphi 0, %s156
    %s173 = sphi 0, %s157
  $region4: #{_lambda_.19} parent=0 // loop_header_branch
    %15 = sbr.rel (%p13) target = $region8
  $region5: #{_lambda_.19} parent=0 // loop_body
    %s17 = ssub.s32 %s12, 1
    %s18 = ssub.s32 %s12, 2
    %s19 = sadd.s32 %s12, 1
    %s20 = ssub.s32 %s12, %s19
    %p21 = scmp.eq.s32.totalorder %s20, 0
    %s23 = sadd.s32 %s22, 1
    %s24 = scalar_select %p21, %s22, %s23
    %p27 = pneg %p21
    %p28 = scmp.eq.s32.totalorder %s12, 1
    %p29 = por %p27, %p28
    %p30 = scmp.ne.s32.totalorder %s22, %s25
    %p31 = scmp.eq.s32.totalorder %s12, 0
    %p32 = por %p30, %p31
    %p33 = scmp.ne.s32.totalorder %s22, %s25
    %p34 = scmp.eq.s32.totalorder %s17, 1
    %p35 = por %p33, %p34
    %p36 = scmp.ne.s32.totalorder %s25, %s26
    %p37 = scmp.eq.s32.totalorder %s17, 0
    %p38 = por %p36, %p37
    %p39 = scmp.ne.s32.totalorder %s25, %s26
    %p40 = scmp.eq.s32.totalorder %s18, 1
    %p41 = por %p39, %p40
    %p43 = scmp.ne.s32.totalorder %s26, %s42
    %p44 = scmp.eq.s32.totalorder %s18, 0
    %p45 = por %p43, %p44
    %s47 = sadd.s32 %s46, 1
    %p50 = scmp.eq.s32.totalorder %s12, 1
    %p51 = scmp.ne.s32.totalorder %s46, %s48
    %p52 = scmp.eq.s32.totalorder %s12, 0
    %p53 = por %p51, %p52
    %p54 = scmp.ne.s32.totalorder %s46, %s48
    %p55 = scmp.eq.s32.totalorder %s17, 1
    %p56 = por %p54, %p55
    %p57 = scmp.ne.s32.totalorder %s48, %s49
    %p58 = scmp.eq.s32.totalorder %s17, 0
    %p59 = por %p57, %p58
    %p60 = scmp.ne.s32.totalorder %s48, %s49
    %p61 = scmp.eq.s32.totalorder %s18, 1
    %p62 = por %p60, %p61
    %p64 = scmp.ne.s32.totalorder %s49, %s63
    %p65 = scmp.eq.s32.totalorder %s18, 0
    %p66 = por %p64, %p65
    %s68 = sadd.s32 %s67, 1
    %p71 = scmp.eq.s32.totalorder %s12, 1
    %p72 = scmp.ne.s32.totalorder %s67, %s69
    %p73 = scmp.eq.s32.totalorder %s12, 0
    %p74 = por %p72, %p73
    %p75 = scmp.ne.s32.totalorder %s67, %s69
    %p76 = scmp.eq.s32.totalorder %s17, 1
    %p77 = por %p75, %p76
    %p78 = scmp.ne.s32.totalorder %s69, %s70
    %p79 = scmp.eq.s32.totalorder %s17, 0
    %p80 = por %p78, %p79
    %p81 = scmp.ne.s32.totalorder %s69, %s70
    %p82 = scmp.eq.s32.totalorder %s18, 1
    %p83 = por %p81, %p82
    %p85 = scmp.ne.s32.totalorder %s70, %s84
    %p86 = scmp.eq.s32.totalorder %s18, 0
    %p87 = por %p85, %p86
    %s89 = sadd.s32 %s88, 1
    %p92 = scmp.eq.s32.totalorder %s12, 1
    %p93 = scmp.ne.s32.totalorder %s88, %s90
    %p94 = scmp.eq.s32.totalorder %s12, 0
    %p95 = por %p93, %p94
    %p96 = scmp.ne.s32.totalorder %s88, %s90
    %p97 = scmp.eq.s32.totalorder %s17, 1
    %p98 = por %p96, %p97
    %p99 = scmp.ne.s32.totalorder %s90, %s91
    %p100 = scmp.eq.s32.totalorder %s17, 0
    %p101 = por %p99, %p100
    %p102 = scmp.ne.s32.totalorder %s90, %s91
    %p103 = scmp.eq.s32.totalorder %s18, 1
    %p104 = por %p102, %p103
    %p106 = scmp.ne.s32.totalorder %s91, %s105
    %p107 = scmp.eq.s32.totalorder %s18, 0
    %p108 = por %p106, %p107
    %s110 = sadd.s32 %s109, 1
    %p113 = scmp.eq.s32.totalorder %s12, 1
    %p114 = scmp.ne.s32.totalorder %s109, %s111
    %p115 = scmp.eq.s32.totalorder %s12, 0
    %p116 = por %p114, %p115
    %p117 = scmp.ne.s32.totalorder %s109, %s111
    %p118 = scmp.eq.s32.totalorder %s17, 1
    %p119 = por %p117, %p118
    %p120 = scmp.ne.s32.totalorder %s111, %s112
    %p121 = scmp.eq.s32.totalorder %s17, 0
    %p122 = por %p120, %p121
    %p123 = scmp.ne.s32.totalorder %s111, %s112
    %p124 = scmp.eq.s32.totalorder %s18, 1
    %p125 = por %p123, %p124
    %p127 = scmp.ne.s32.totalorder %s112, %s126
    %p128 = scmp.eq.s32.totalorder %s18, 0
    %p129 = por %p127, %p128
    %s131 = sadd.s32 %s130, 1
    %p134 = scmp.eq.s32.totalorder %s12, 1
    %p135 = scmp.ne.s32.totalorder %s130, %s132
    %p136 = scmp.eq.s32.totalorder %s12, 0
    %p137 = por %p135, %p136
    %p138 = scmp.ne.s32.totalorder %s130, %s132
    %p139 = scmp.eq.s32.totalorder %s17, 1
    %p140 = por %p138, %p139
    %p141 = scmp.ne.s32.totalorder %s132, %s133
    %p142 = scmp.eq.s32.totalorder %s17, 0
    %p143 = por %p141, %p142
    %p144 = scmp.ne.s32.totalorder %s132, %s133
    %p145 = scmp.eq.s32.totalorder %s18, 1
    %p146 = por %p144, %p145
    %p148 = scmp.ne.s32.totalorder %s133, %s147
    %p149 = scmp.eq.s32.totalorder %s18, 0
    %p150 = por %p148, %p149
    %s151 = ssub.s32 %s12, %s19
    %p152 = scmp.eq.s32.totalorder %s151, 0
    %s154 = sadd.s32 %s153, 1
    %s155 = scalar_select %p152, %s153, %s154
    %p158 = pneg %p152
    %p159 = scmp.eq.s32.totalorder %s12, 1
    %p160 = por %p158, %p159
    %p161 = scmp.ne.s32.totalorder %s153, %s156
    %p162 = scmp.eq.s32.totalorder %s12, 0
    %p163 = por %p161, %p162
    %p164 = scmp.ne.s32.totalorder %s153, %s156
    %p165 = scmp.eq.s32.totalorder %s17, 1
    %p166 = por %p164, %p165
    %p167 = scmp.ne.s32.totalorder %s156, %s157
    %p168 = scmp.eq.s32.totalorder %s17, 0
    %p169 = por %p167, %p168
    %p170 = scmp.ne.s32.totalorder %s156, %s157
    %p171 = scmp.eq.s32.totalorder %s18, 1
    %p172 = por %p170, %p171
    %p174 = scmp.ne.s32.totalorder %s157, %s173
    %p175 = scmp.eq.s32.totalorder %s18, 0
    %p176 = por %p174, %p175
    %p177 = scmp.le.s32.totalorder 1, %s12
    %p178 = scmp.lt.s32.totalorder %s12, 3
    %p179 = pnand %p177, %p178
    %p180 = pneg %p179
    // Predicated region
    $region9: #{_lambda_.19} parent=5 // pred_check
      _
    $region10: #{_lambda_.19} parent=5 // pred_check_branch
      %182 = sbr.rel (%p179) target = $region12
    $region11: #{_lambda_.19} parent=5 // pred_region
      %s183 = ssub.s32 %s12, 1
      // Predicated region
      $region13: #{_lambda_.19} parent=11 // pred_check
        %p184 = pneg %p59
      $region14: #{_lambda_.19} parent=11 // pred_check_branch
        %186 = sbr.rel (%p184) target = $region16
      $region15: #{_lambda_.19} parent=11 // pred_region
        _
      $region16: #{_lambda_.19} parent=11 // pred_fallthru
        _
      // Predicated region
      $region17: #{_lambda_.19} parent=11 // pred_check
        %p187 = pneg %p80
      $region18: #{_lambda_.19} parent=11 // pred_check_branch
        %189 = sbr.rel (%p187) target = $region20
      $region19: #{_lambda_.19} parent=11 // pred_region
        _
      $region20: #{_lambda_.19} parent=11 // pred_fallthru
        _
      // Predicated region
      $region21: #{_lambda_.19} parent=11 // pred_check
        %p190 = pneg %p101
      $region22: #{_lambda_.19} parent=11 // pred_check_branch
        %192 = sbr.rel (%p190) target = $region24
      $region23: #{_lambda_.19} parent=11 // pred_region
        _
      $region24: #{_lambda_.19} parent=11 // pred_fallthru
        _
      // Predicated region
      $region25: #{_lambda_.19} parent=11 // pred_check
        %p193 = pneg %p122
      $region26: #{_lambda_.19} parent=11 // pred_check_branch
        %195 = sbr.rel (%p193) target = $region28
      $region27: #{_lambda_.19} parent=11 // pred_region
        _
      $region28: #{_lambda_.19} parent=11 // pred_fallthru
        _
      // Predicated region
      $region29: #{_lambda_.19} parent=11 // pred_check
        %p196 = pneg %p143
      $region30: #{_lambda_.19} parent=11 // pred_check_branch
        %198 = sbr.rel (%p196) target = $region32
      $region31: #{_lambda_.19} parent=11 // pred_region
        _
      $region32: #{_lambda_.19} parent=11 // pred_fallthru
        _
    $region12: #{_lambda_.19} parent=5 // pred_fallthru
      _
    %p199 = scmp.lt.s32.totalorder %s12, 2
    // Predicated region
    $region33: #{_lambda_.19} parent=5 // pred_check
      %p200 = pneg %p199
    $region34: #{_lambda_.19} parent=5 // pred_check_branch
      %202 = sbr.rel (%p200) target = $region36
    $region35: #{_lambda_.19} parent=5 // pred_region
      // Predicated region
      $region37: #{_lambda_.19} parent=35 // pred_check
        %p203 = pneg %p32
      $region38: #{_lambda_.19} parent=35 // pred_check_branch
        %205 = sbr.rel (%p203) target = $region40
      $region39: #{_lambda_.19} parent=35 // pred_region
        %p206 = scmp.lt.s32.totalorder %s12, 1
        %s207 = scalar_select %p206, %s12, 1
        %s208 = smul.addr %s207, 2
        %s209 = smul.addr %s208, 4
        %s210 = scalar_lea.vmem %s0, %s209
      $region40: #{_lambda_.19} parent=35 // pred_fallthru
        _
    $region36: #{_lambda_.19} parent=5 // pred_fallthru
      _
    %p211 = scmp.le.s32.totalorder 1, %s12
    %p212 = scmp.lt.s32.totalorder %s12, 3
    %p213 = pnand %p211, %p212
    %p214 = pneg %p213
    // Predicated region
    $region41: #{_lambda_.19} parent=5 // pred_check
      _
    $region42: #{_lambda_.19} parent=5 // pred_check_branch
      %216 = sbr.rel (%p213) target = $region44
    $region43: #{_lambda_.19} parent=5 // pred_region
      %s217 = ssub.s32 %s12, 1
      %p218 = scmp.lt.s32.totalorder %s17, 1
      %s219 = scalar_select %p218, %s17, 1
      %s220 = smul.addr %s219, 2
      %s221 = smul.addr %s220, 4
      %s222 = scalar_lea.vmem %s0, %s221
      %p223 = pneg %p38
      %p224 = pneg %p35
      %p225 = pneg %p59
      %p226 = pneg %p56
      %p227 = pneg %p80
      %p228 = pneg %p77
      %p229 = pneg %p101
      %p230 = pneg %p98
      %p231 = pneg %p122
      %p232 = pneg %p119
      %p233 = pneg %p143
      %p234 = pneg %p140
      %p235 = pneg %p169
      %p236 = pneg %p166
      %p237 = scmp.lt.s32.totalorder %s17, 1
      %s238 = scalar_select %p237, %s17, 1
      %s239 = smul.addr %s238, 2
      %s240 = smul.addr %s239, 4
      %s241 = scalar_lea.vmem %s6, %s240
      %p242 = scmp.lt.s32.totalorder %s17, 1
      %s243 = scalar_select %p242, %s17, 1
      %s244 = smul.addr %s243, 2
      %s245 = smul.addr %s244, 4
      %s246 = scalar_lea.vmem %s0, %s245
      %p247 = scmp.lt.s32.totalorder %s17, 1
      %s248 = scalar_select %p247, %s17, 1
      %s249 = smul.addr %s248, 2
      %s250 = smul.addr %s249, 4
      %s251 = scalar_lea.vmem %s6, %s250
      %v253 = vld [vmem:[%s246] sm:$0xf]
      %v254 = vld [vmem:[%s246 + $0x4] sm:$0xf]
      %v255 = vunpack.c.l.bf16 %v253
      %v256 = vunpack.c.l.bf16 %v254
      %v257 = vld [vmem:[%s2] sm:$0x1]
      %v259 = vperm.slane %v257, 0
      %v261 = vmul.f32 %v255, %v259
      %v262 = vmul.f32 %v256, %v259
      %v263 = vld [vmem:[%s3] sm:$0x1]
      %v265 = vperm.slane %v263, 0
      %v267 = vadd.f32 %v261, %v265
      %v268 = vadd.f32 %v262, %v265
      %v269 = vmax.f32 %v267, 0.0
      %v270 = vmax.f32 %v268, 0.0
      %v271 = vpack.c.bf16 %v270, %v269
      %v272 = vld [vmem:[%s1] sm:$0xf]
      %v273 = vld [vmem:[%s1 + $0x4] sm:$0xf]
      %v274 = vld [vmem:[%s1 + $0x8] sm:$0xf]
      %v275 = vld [vmem:[%s1 + $0xc] sm:$0xf]
      %v280 = vunpack.c.l.b16 %v272
      %v281 = vunpack.c.l.b16 %v273
      %v282 = vunpack.c.l.b16 %v274
      %v283 = vunpack.c.l.b16 %v275
      %v284 = vpack.c.b16 %v281, %v280
      %v285 = vpack.c.b16 %v283, %v282
      %vm288 = vcmask 261120
      %v290 = vsel %vm288, %v271, 0
      %292 = vmatpush.bf16.msra.mxu0 0
      %293 = vmatpush.bf16.msra.mxu0 0
      %294 = vmatpush.bf16.msra.mxu0 0
      %295 = vmatpush.bf16.msra.mxu0 0
      %296 = vmatpush.bf16.msra.mxu0 0
      %297 = vmatpush.bf16.msra.mxu0 0
      %298 = vmatpush.bf16.msra.mxu0 %v285
      %299 = vmatpush.bf16.msra.mxu0 %v284
      %300 = vmatmul.bf16.gmra.mxu0 %v290
      %v301 = vpop.f32.mrf.mxu0
      %v302 = vadd.f32 0.0, %v301
      %v303 = vpop.f32.mrf.mxu0
      %v304 = vadd.f32 0.0, %v303
      %305 = vdwg.mxu0
      %v306 = vpack.c.bf16 %v302, %v302
      %v307 = vpack.c.bf16 %v304, %v304
      %308 = vst [vmem:[%s251] sm:$0xf] %v306
      %309 = vst [vmem:[%s251 + $0x4] sm:$0xf] %v307
      %p310 = scmp.lt.s32.totalorder %s17, 1
      %s311 = scalar_select %p310, %s17, 1
      %s312 = smul.addr %s311, 2
      %s313 = smul.addr %s312, 4
      %s314 = scalar_lea.vmem %s6, %s313
      // Predicated region
      $region45: #{_lambda_.19} parent=43 // pred_check
        %p315 = pneg %p166
      $region46: #{_lambda_.19} parent=43 // pred_check_branch
        %317 = sbr.rel (%p315) target = $region48
      $region47: #{_lambda_.19} parent=43 // pred_region
        _
      $region48: #{_lambda_.19} parent=43 // pred_fallthru
        _
    $region44: #{_lambda_.19} parent=5 // pred_fallthru
      _
    %p318 = scmp.le.s32.totalorder 2, %s12
    // Predicated region
    $region49: #{_lambda_.19} parent=5 // pred_check
      %p319 = pneg %p318
    $region50: #{_lambda_.19} parent=5 // pred_check_branch
      %321 = sbr.rel (%p319) target = $region52
    $region51: #{_lambda_.19} parent=5 // pred_region
      %s322 = ssub.s32 %s12, 2
      // Predicated region
      $region53: #{_lambda_.19} parent=51 // pred_check
        %p323 = pneg %p172
      $region54: #{_lambda_.19} parent=51 // pred_check_branch
        %325 = sbr.rel (%p323) target = $region56
      $region55: #{_lambda_.19} parent=51 // pred_region
        %p326 = scmp.lt.s32.totalorder %s18, 1
        %s327 = scalar_select %p326, %s18, 1
        %s328 = smul.addr %s327, 2
        %s329 = smul.addr %s328, 4
        %s330 = scalar_lea.vmem %s6, %s329
      $region56: #{_lambda_.19} parent=51 // pred_fallthru
        _
    $region52: #{_lambda_.19} parent=5 // pred_fallthru
      _
  $region6: #{_lambda_.19} parent=0 // loop_footer
    %s16 = sadd.s32 1, %s12
  $region7: #{_lambda_.19} parent=0 // loop_footer_branch
    %11 = sbr.rel target = $region3
  $region8: #{_lambda_.19} parent=0 // loop_exit
    _

// kernel: _lambda_.20
$region0: #{_lambda_.20}
  #allocation0 [shape = 'u32[]', space=smem, size = 0x4, offset = 0x4, fixed_abs, tag = 'smem constant byte address 0x4 - core index']
  #allocation1 [shape = 'u32[72,128]{1,0:T(1,128)}', space=vmem, size = 0x9000, scoped, tag = 'internal scratch']
  %s0 = inlined_call_operand.vmem [shape: bf16[2,4,4,16], index: 0, kind: input, shape index: {}]
  %s1 = inlined_call_operand.vmem [shape: bf16[2,4,16], index: 1, kind: output, shape index: {}]
  %s2 = sld [smem:[#allocation0]]
  $region37: #{_lambda_.20} parent=0
    _
  %s4 = ssub.s32 1, %s2
  %s5 = scalar_select 0, %s4, %s2
  loop: start=0, step=1, limit=4
  $region2: #{_lambda_.20} parent=0 // loop_pre_header
    _
  $region3: #{_lambda_.20} parent=0 // loop_header
    %s7 = sphi 0, %s11
    %p8 = scmp.ge.s32.totalorder %s7, 4
    %s17 = sphi 0, %s19
    %s20 = sphi 0, %s17
    %s21 = sphi 0, %s20
    %s37 = sphi 0, %s21
    %s43 = sphi 0, %s45
    %s46 = sphi 0, %s43
    %s47 = sphi 0, %s46
    %s63 = sphi 0, %s47
  $region4: #{_lambda_.20} parent=0 // loop_header_branch
    %10 = sbr.rel (%p8) target = $region8
  $region5: #{_lambda_.20} parent=0 // loop_body
    %s12 = ssub.s32 %s7, 1
    %s13 = ssub.s32 %s7, 2
    %s14 = sadd.s32 %s7, 1
    %s15 = ssub.s32 %s7, %s14
    %p16 = scmp.eq.s32.totalorder %s15, 0
    %s18 = sadd.s32 %s17, 1
    %s19 = scalar_select %p16, %s17, %s18
    %p22 = pneg %p16
    %p23 = scmp.eq.s32.totalorder %s7, 1
    %p24 = por %p22, %p23
    %p25 = scmp.ne.s32.totalorder %s17, %s20
    %p26 = scmp.eq.s32.totalorder %s7, 0
    %p27 = por %p25, %p26
    %p28 = scmp.ne.s32.totalorder %s17, %s20
    %p29 = scmp.eq.s32.totalorder %s12, 1
    %p30 = por %p28, %p29
    %p31 = scmp.ne.s32.totalorder %s20, %s21
    %p32 = scmp.eq.s32.totalorder %s12, 0
    %p33 = por %p31, %p32
    %p34 = scmp.ne.s32.totalorder %s20, %s21
    %p35 = scmp.eq.s32.totalorder %s13, 1
    %p36 = por %p34, %p35
    %p38 = scmp.ne.s32.totalorder %s21, %s37
    %p39 = scmp.eq.s32.totalorder %s13, 0
    %p40 = por %p38, %p39
    %s41 = ssub.s32 %s7, %s14
    %p42 = scmp.eq.s32.totalorder %s41, 0
    %s44 = sadd.s32 %s43, 1
    %s45 = scalar_select %p42, %s43, %s44
    %p48 = pneg %p42
    %p49 = scmp.eq.s32.totalorder %s7, 1
    %p50 = por %p48, %p49
    %p51 = scmp.ne.s32.totalorder %s43, %s46
    %p52 = scmp.eq.s32.totalorder %s7, 0
    %p53 = por %p51, %p52
    %p54 = scmp.ne.s32.totalorder %s43, %s46
    %p55 = scmp.eq.s32.totalorder %s12, 1
    %p56 = por %p54, %p55
    %p57 = scmp.ne.s32.totalorder %s46, %s47
    %p58 = scmp.eq.s32.totalorder %s12, 0
    %p59 = por %p57, %p58
    %p60 = scmp.ne.s32.totalorder %s46, %s47
    %p61 = scmp.eq.s32.totalorder %s13, 1
    %p62 = por %p60, %p61
    %p64 = scmp.ne.s32.totalorder %s47, %s63
    %p65 = scmp.eq.s32.totalorder %s13, 0
    %p66 = por %p64, %p65
    %p67 = scmp.le.s32.totalorder 1, %s7
    %p68 = scmp.lt.s32.totalorder %s7, 3
    %p69 = pnand %p67, %p68
    %p70 = pneg %p69
    // Predicated region
    $region9: #{_lambda_.20} parent=5 // pred_check
      _
    $region10: #{_lambda_.20} parent=5 // pred_check_branch
      %72 = sbr.rel (%p69) target = $region12
    $region11: #{_lambda_.20} parent=5 // pred_region
      %s73 = ssub.s32 %s7, 1
    $region12: #{_lambda_.20} parent=5 // pred_fallthru
      _
    %p74 = scmp.lt.s32.totalorder %s7, 2
    // Predicated region
    $region13: #{_lambda_.20} parent=5 // pred_check
      %p75 = pneg %p74
    $region14: #{_lambda_.20} parent=5 // pred_check_branch
      %77 = sbr.rel (%p75) target = $region16
    $region15: #{_lambda_.20} parent=5 // pred_region
      // Predicated region
      $region17: #{_lambda_.20} parent=15 // pred_check
        %p78 = pneg %p27
      $region18: #{_lambda_.20} parent=15 // pred_check_branch
        %80 = sbr.rel (%p78) target = $region20
      $region19: #{_lambda_.20} parent=15 // pred_region
        %p81 = scmp.lt.s32.totalorder %s7, 1
        %s82 = scalar_select %p81, %s7, 1
        %s83 = smul.addr %s82, 4
        %s84 = smul.addr %s83, 2
        %s85 = scalar_lea.vmem %s0, %s84
      $region20: #{_lambda_.20} parent=15 // pred_fallthru
        _
    $region16: #{_lambda_.20} parent=5 // pred_fallthru
      _
    %p86 = scmp.le.s32.totalorder 1, %s7
    %p87 = scmp.lt.s32.totalorder %s7, 3
    %p88 = pnand %p86, %p87
    %p89 = pneg %p88
    // Predicated region
    $region21: #{_lambda_.20} parent=5 // pred_check
      _
    $region22: #{_lambda_.20} parent=5 // pred_check_branch
      %91 = sbr.rel (%p88) target = $region24
    $region23: #{_lambda_.20} parent=5 // pred_region
      %s92 = ssub.s32 %s7, 1
      %p93 = scmp.lt.s32.totalorder %s12, 1
      %s94 = scalar_select %p93, %s12, 1
      %s95 = smul.addr %s94, 4
      %s96 = smul.addr %s95, 2
      %s97 = scalar_lea.vmem %s0, %s96
      %p98 = pneg %p33
      %p99 = pneg %p30
      %p100 = pneg %p59
      %p101 = pneg %p56
      %p102 = scmp.lt.s32.totalorder %s12, 1
      %s103 = scalar_select %p102, %s12, 1
      %s104 = smul.addr %s103, 2
      %s105 = scalar_lea.vmem %s1, %s104
      %p106 = scmp.lt.s32.totalorder %s12, 1
      %s107 = scalar_select %p106, %s12, 1
      %s108 = smul.addr %s107, 4
      %s109 = smul.addr %s108, 2
      %s110 = scalar_lea.vmem %s0, %s109
      %p111 = scmp.lt.s32.totalorder %s12, 1
      %s112 = scalar_select %p111, %s12, 1
      %s113 = smul.addr %s112, 2
      %s114 = scalar_lea.vmem %s1, %s113
      %v115 = vld [vmem:[%s110] sm:$0x3]
      %v116 = vunpack.c.l.bf16 %v115
      %s117 = scalar_lea.vmem %s110, 2
      %v118 = vld [vmem:[%s117] sm:$0x3]
      %v119 = vunpack.c.l.bf16 %v118
      %v120 = vadd.f32 %v116, %v119
      %s121 = scalar_lea.vmem %s110, 4
      %v122 = vld [vmem:[%s121] sm:$0x3]
      %v123 = vunpack.c.l.bf16 %v122
      %v124 = vadd.f32 %v120, %v123
      %s125 = scalar_lea.vmem %s110, 6
      %v126 = vld [vmem:[%s125] sm:$0x3]
      %v127 = vunpack.c.l.bf16 %v126
      %v128 = vadd.f32 %v124, %v127
      %v129 = vmul.f32 %v128, 0.25
      %v130 = vpack.c.bf16 %v129, %v129
      %vm131 = vcmask 123904
      %132 = vst.msk [vmem:[%s114] sm:$0x3] %vm131, %v130
      %p133 = scmp.lt.s32.totalorder %s12, 1
      %s134 = scalar_select %p133, %s12, 1
      %s135 = smul.addr %s134, 2
      %s136 = scalar_lea.vmem %s1, %s135
      // Predicated region
      $region25: #{_lambda_.20} parent=23 // pred_check
        %p137 = pneg %p56
      $region26: #{_lambda_.20} parent=23 // pred_check_branch
        %139 = sbr.rel (%p137) target = $region28
      $region27: #{_lambda_.20} parent=23 // pred_region
        _
      $region28: #{_lambda_.20} parent=23 // pred_fallthru
        _
    $region24: #{_lambda_.20} parent=5 // pred_fallthru
      _
    %p140 = scmp.le.s32.totalorder 2, %s7
    // Predicated region
    $region29: #{_lambda_.20} parent=5 // pred_check
      %p141 = pneg %p140
    $region30: #{_lambda_.20} parent=5 // pred_check_branch
      %143 = sbr.rel (%p141) target = $region32
    $region31: #{_lambda_.20} parent=5 // pred_region
      %s144 = ssub.s32 %s7, 2
      // Predicated region
      $region33: #{_lambda_.20} parent=31 // pred_check
        %p145 = pneg %p62
      $region34: #{_lambda_.20} parent=31 // pred_check_branch
        %147 = sbr.rel (%p145) target = $region36
      $region35: #{_lambda_.20} parent=31 // pred_region
        %p148 = scmp.lt.s32.totalorder %s13, 1
        %s149 = scalar_select %p148, %s13, 1
        %s150 = smul.addr %s149, 2
        %s151 = scalar_lea.vmem %s1, %s150
      $region36: #{_lambda_.20} parent=31 // pred_fallthru
        _
    $region32: #{_lambda_.20} parent=5 // pred_fallthru
      _
  $region6: #{_lambda_.20} parent=0 // loop_footer
    %s11 = sadd.s32 1, %s7
  $region7: #{_lambda_.20} parent=0 // loop_footer_branch
    %6 = sbr.rel target = $region3
  $region8: #{_lambda_.20} parent=0 // loop_exit
    _

// kernel: _lambda_.21
$region0: #{_lambda_.21}
  #allocation0 [shape = 'u32[]', space=smem, size = 0x4, offset = 0x4, fixed_abs, tag = 'smem constant byte address 0x4 - core index']
  #allocation1 [shape = 'u32[72,128]{1,0:T(1,128)}', space=vmem, size = 0x9000, scoped, tag = 'internal scratch']
  %s0 = inlined_call_operand.vmem [shape: bf16[2,1,4,16], index: 0, kind: input, shape index: {}]
  %s1 = inlined_call_operand.vmem [shape: bf16[1,16,128], index: 1, kind: input, shape index: {}]
  %s2 = inlined_call_operand.vmem [shape: f32[1,16], index: 2, kind: input, shape index: {}]
  %s3 = inlined_call_operand.vmem [shape: f32[1,16], index: 3, kind: input, shape index: {}]
  %s4 = inlined_call_operand.vmem [shape: f32[1,128], index: 4, kind: input, shape index: {}]
  %s5 = inlined_call_operand.vmem [shape: f32[1,128], index: 5, kind: input, shape index: {}]
  %s6 = inlined_call_operand.vmem [shape: bf16[2,4,128], index: 6, kind: output, shape index: {}]
  %s7 = sld [smem:[#allocation0]]
  $region57: #{_lambda_.21} parent=0
    _
  %s9 = ssub.s32 1, %s7
  %s10 = scalar_select 0, %s9, %s7
  loop: start=0, step=1, limit=4
  $region2: #{_lambda_.21} parent=0 // loop_pre_header
    _
  $region3: #{_lambda_.21} parent=0 // loop_header
    %s12 = sphi 0, %s16
    %p13 = scmp.ge.s32.totalorder %s12, 4
    %s22 = sphi 0, %s24
    %s25 = sphi 0, %s22
    %s26 = sphi 0, %s25
    %s42 = sphi 0, %s26
    %s46 = sphi 0, %s46
    %s48 = sphi 0, %s46
    %s49 = sphi 0, %s48
    %s63 = sphi 0, %s49
    %s67 = sphi 0, %s67
    %s69 = sphi 0, %s67
    %s70 = sphi 0, %s69
    %s84 = sphi 0, %s70
    %s88 = sphi 0, %s88
    %s90 = sphi 0, %s88
    %s91 = sphi 0, %s90
    %s105 = sphi 0, %s91
    %s109 = sphi 0, %s109
    %s111 = sphi 0, %s109
    %s112 = sphi 0, %s111
    %s126 = sphi 0, %s112
    %s130 = sphi 0, %s130
    %s132 = sphi 0, %s130
    %s133 = sphi 0, %s132
    %s147 = sphi 0, %s133
    %s153 = sphi 0, %s155
    %s156 = sphi 0, %s153
    %s157 = sphi 0, %s156
    %s173 = sphi 0, %s157
  $region4: #{_lambda_.21} parent=0 // loop_header_branch
    %15 = sbr.rel (%p13) target = $region8
  $region5: #{_lambda_.21} parent=0 // loop_body
    %s17 = ssub.s32 %s12, 1
    %s18 = ssub.s32 %s12, 2
    %s19 = sadd.s32 %s12, 1
    %s20 = ssub.s32 %s12, %s19
    %p21 = scmp.eq.s32.totalorder %s20, 0
    %s23 = sadd.s32 %s22, 1
    %s24 = scalar_select %p21, %s22, %s23
    %p27 = pneg %p21
    %p28 = scmp.eq.s32.totalorder %s12, 1
    %p29 = por %p27, %p28
    %p30 = scmp.ne.s32.totalorder %s22, %s25
    %p31 = scmp.eq.s32.totalorder %s12, 0
    %p32 = por %p30, %p31
    %p33 = scmp.ne.s32.totalorder %s22, %s25
    %p34 = scmp.eq.s32.totalorder %s17, 1
    %p35 = por %p33, %p34
    %p36 = scmp.ne.s32.totalorder %s25, %s26
    %p37 = scmp.eq.s32.totalorder %s17, 0
    %p38 = por %p36, %p37
    %p39 = scmp.ne.s32.totalorder %s25, %s26
    %p40 = scmp.eq.s32.totalorder %s18, 1
    %p41 = por %p39, %p40
    %p43 = scmp.ne.s32.totalorder %s26, %s42
    %p44 = scmp.eq.s32.totalorder %s18, 0
    %p45 = por %p43, %p44
    %s47 = sadd.s32 %s46, 1
    %p50 = scmp.eq.s32.totalorder %s12, 1
    %p51 = scmp.ne.s32.totalorder %s46, %s48
    %p52 = scmp.eq.s32.totalorder %s12, 0
    %p53 = por %p51, %p52
    %p54 = scmp.ne.s32.totalorder %s46, %s48
    %p55 = scmp.eq.s32.totalorder %s17, 1
    %p56 = por %p54, %p55
    %p57 = scmp.ne.s32.totalorder %s48, %s49
    %p58 = scmp.eq.s32.totalorder %s17, 0
    %p59 = por %p57, %p58
    %p60 = scmp.ne.s32.totalorder %s48, %s49
    %p61 = scmp.eq.s32.totalorder %s18, 1
    %p62 = por %p60, %p61
    %p64 = scmp.ne.s32.totalorder %s49, %s63
    %p65 = scmp.eq.s32.totalorder %s18, 0
    %p66 = por %p64, %p65
    %s68 = sadd.s32 %s67, 1
    %p71 = scmp.eq.s32.totalorder %s12, 1
    %p72 = scmp.ne.s32.totalorder %s67, %s69
    %p73 = scmp.eq.s32.totalorder %s12, 0
    %p74 = por %p72, %p73
    %p75 = scmp.ne.s32.totalorder %s67, %s69
    %p76 = scmp.eq.s32.totalorder %s17, 1
    %p77 = por %p75, %p76
    %p78 = scmp.ne.s32.totalorder %s69, %s70
    %p79 = scmp.eq.s32.totalorder %s17, 0
    %p80 = por %p78, %p79
    %p81 = scmp.ne.s32.totalorder %s69, %s70
    %p82 = scmp.eq.s32.totalorder %s18, 1
    %p83 = por %p81, %p82
    %p85 = scmp.ne.s32.totalorder %s70, %s84
    %p86 = scmp.eq.s32.totalorder %s18, 0
    %p87 = por %p85, %p86
    %s89 = sadd.s32 %s88, 1
    %p92 = scmp.eq.s32.totalorder %s12, 1
    %p93 = scmp.ne.s32.totalorder %s88, %s90
    %p94 = scmp.eq.s32.totalorder %s12, 0
    %p95 = por %p93, %p94
    %p96 = scmp.ne.s32.totalorder %s88, %s90
    %p97 = scmp.eq.s32.totalorder %s17, 1
    %p98 = por %p96, %p97
    %p99 = scmp.ne.s32.totalorder %s90, %s91
    %p100 = scmp.eq.s32.totalorder %s17, 0
    %p101 = por %p99, %p100
    %p102 = scmp.ne.s32.totalorder %s90, %s91
    %p103 = scmp.eq.s32.totalorder %s18, 1
    %p104 = por %p102, %p103
    %p106 = scmp.ne.s32.totalorder %s91, %s105
    %p107 = scmp.eq.s32.totalorder %s18, 0
    %p108 = por %p106, %p107
    %s110 = sadd.s32 %s109, 1
    %p113 = scmp.eq.s32.totalorder %s12, 1
    %p114 = scmp.ne.s32.totalorder %s109, %s111
    %p115 = scmp.eq.s32.totalorder %s12, 0
    %p116 = por %p114, %p115
    %p117 = scmp.ne.s32.totalorder %s109, %s111
    %p118 = scmp.eq.s32.totalorder %s17, 1
    %p119 = por %p117, %p118
    %p120 = scmp.ne.s32.totalorder %s111, %s112
    %p121 = scmp.eq.s32.totalorder %s17, 0
    %p122 = por %p120, %p121
    %p123 = scmp.ne.s32.totalorder %s111, %s112
    %p124 = scmp.eq.s32.totalorder %s18, 1
    %p125 = por %p123, %p124
    %p127 = scmp.ne.s32.totalorder %s112, %s126
    %p128 = scmp.eq.s32.totalorder %s18, 0
    %p129 = por %p127, %p128
    %s131 = sadd.s32 %s130, 1
    %p134 = scmp.eq.s32.totalorder %s12, 1
    %p135 = scmp.ne.s32.totalorder %s130, %s132
    %p136 = scmp.eq.s32.totalorder %s12, 0
    %p137 = por %p135, %p136
    %p138 = scmp.ne.s32.totalorder %s130, %s132
    %p139 = scmp.eq.s32.totalorder %s17, 1
    %p140 = por %p138, %p139
    %p141 = scmp.ne.s32.totalorder %s132, %s133
    %p142 = scmp.eq.s32.totalorder %s17, 0
    %p143 = por %p141, %p142
    %p144 = scmp.ne.s32.totalorder %s132, %s133
    %p145 = scmp.eq.s32.totalorder %s18, 1
    %p146 = por %p144, %p145
    %p148 = scmp.ne.s32.totalorder %s133, %s147
    %p149 = scmp.eq.s32.totalorder %s18, 0
    %p150 = por %p148, %p149
    %s151 = ssub.s32 %s12, %s19
    %p152 = scmp.eq.s32.totalorder %s151, 0
    %s154 = sadd.s32 %s153, 1
    %s155 = scalar_select %p152, %s153, %s154
    %p158 = pneg %p152
    %p159 = scmp.eq.s32.totalorder %s12, 1
    %p160 = por %p158, %p159
    %p161 = scmp.ne.s32.totalorder %s153, %s156
    %p162 = scmp.eq.s32.totalorder %s12, 0
    %p163 = por %p161, %p162
    %p164 = scmp.ne.s32.totalorder %s153, %s156
    %p165 = scmp.eq.s32.totalorder %s17, 1
    %p166 = por %p164, %p165
    %p167 = scmp.ne.s32.totalorder %s156, %s157
    %p168 = scmp.eq.s32.totalorder %s17, 0
    %p169 = por %p167, %p168
    %p170 = scmp.ne.s32.totalorder %s156, %s157
    %p171 = scmp.eq.s32.totalorder %s18, 1
    %p172 = por %p170, %p171
    %p174 = scmp.ne.s32.totalorder %s157, %s173
    %p175 = scmp.eq.s32.totalorder %s18, 0
    %p176 = por %p174, %p175
    %p177 = scmp.le.s32.totalorder 1, %s12
    %p178 = scmp.lt.s32.totalorder %s12, 3
    %p179 = pnand %p177, %p178
    %p180 = pneg %p179
    // Predicated region
    $region9: #{_lambda_.21} parent=5 // pred_check
      _
    $region10: #{_lambda_.21} parent=5 // pred_check_branch
      %182 = sbr.rel (%p179) target = $region12
    $region11: #{_lambda_.21} parent=5 // pred_region
      %s183 = ssub.s32 %s12, 1
      // Predicated region
      $region13: #{_lambda_.21} parent=11 // pred_check
        %p184 = pneg %p59
      $region14: #{_lambda_.21} parent=11 // pred_check_branch
        %186 = sbr.rel (%p184) target = $region16
      $region15: #{_lambda_.21} parent=11 // pred_region
        _
      $region16: #{_lambda_.21} parent=11 // pred_fallthru
        _
      // Predicated region
      $region17: #{_lambda_.21} parent=11 // pred_check
        %p187 = pneg %p80
      $region18: #{_lambda_.21} parent=11 // pred_check_branch
        %189 = sbr.rel (%p187) target = $region20
      $region19: #{_lambda_.21} parent=11 // pred_region
        _
      $region20: #{_lambda_.21} parent=11 // pred_fallthru
        _
      // Predicated region
      $region21: #{_lambda_.21} parent=11 // pred_check
        %p190 = pneg %p101
      $region22: #{_lambda_.21} parent=11 // pred_check_branch
        %192 = sbr.rel (%p190) target = $region24
      $region23: #{_lambda_.21} parent=11 // pred_region
        _
      $region24: #{_lambda_.21} parent=11 // pred_fallthru
        _
      // Predicated region
      $region25: #{_lambda_.21} parent=11 // pred_check
        %p193 = pneg %p122
      $region26: #{_lambda_.21} parent=11 // pred_check_branch
        %195 = sbr.rel (%p193) target = $region28
      $region27: #{_lambda_.21} parent=11 // pred_region
        _
      $region28: #{_lambda_.21} parent=11 // pred_fallthru
        _
      // Predicated region
      $region29: #{_lambda_.21} parent=11 // pred_check
        %p196 = pneg %p143
      $region30: #{_lambda_.21} parent=11 // pred_check_branch
        %198 = sbr.rel (%p196) target = $region32
      $region31: #{_lambda_.21} parent=11 // pred_region
        _
      $region32: #{_lambda_.21} parent=11 // pred_fallthru
        _
    $region12: #{_lambda_.21} parent=5 // pred_fallthru
      _
    %p199 = scmp.lt.s32.totalorder %s12, 2
    // Predicated region
    $region33: #{_lambda_.21} parent=5 // pred_check
      %p200 = pneg %p199
    $region34: #{_lambda_.21} parent=5 // pred_check_branch
      %202 = sbr.rel (%p200) target = $region36
    $region35: #{_lambda_.21} parent=5 // pred_region
      // Predicated region
      $region37: #{_lambda_.21} parent=35 // pred_check
        %p203 = pneg %p32
      $region38: #{_lambda_.21} parent=35 // pred_check_branch
        %205 = sbr.rel (%p203) target = $region40
      $region39: #{_lambda_.21} parent=35 // pred_region
        %p206 = scmp.lt.s32.totalorder %s12, 1
        %s207 = scalar_select %p206, %s12, 1
        %s208 = smul.addr %s207, 2
        %s209 = scalar_lea.vmem %s0, %s208
      $region40: #{_lambda_.21} parent=35 // pred_fallthru
        _
    $region36: #{_lambda_.21} parent=5 // pred_fallthru
      _
    %p210 = scmp.le.s32.totalorder 1, %s12
    %p211 = scmp.lt.s32.totalorder %s12, 3
    %p212 = pnand %p210, %p211
    %p213 = pneg %p212
    // Predicated region
    $region41: #{_lambda_.21} parent=5 // pred_check
      _
    $region42: #{_lambda_.21} parent=5 // pred_check_branch
      %215 = sbr.rel (%p212) target = $region44
    $region43: #{_lambda_.21} parent=5 // pred_region
      %s216 = ssub.s32 %s12, 1
      %p217 = scmp.lt.s32.totalorder %s17, 1
      %s218 = scalar_select %p217, %s17, 1
      %s219 = smul.addr %s218, 2
      %s220 = scalar_lea.vmem %s0, %s219
      %p221 = pneg %p38
      %p222 = pneg %p35
      %p223 = pneg %p59
      %p224 = pneg %p56
      %p225 = pneg %p80
      %p226 = pneg %p77
      %p227 = pneg %p101
      %p228 = pneg %p98
      %p229 = pneg %p122
      %p230 = pneg %p119
      %p231 = pneg %p143
      %p232 = pneg %p140
      %p233 = pneg %p169
      %p234 = pneg %p166
      %p235 = scmp.lt.s32.totalorder %s17, 1
      %s236 = scalar_select %p235, %s17, 1
      %s237 = smul.addr %s236, 2
      %s238 = scalar_lea.vmem %s6, %s237
      %p239 = scmp.lt.s32.totalorder %s17, 1
      %s240 = scalar_select %p239, %s17, 1
      %s241 = smul.addr %s240, 2
      %s242 = scalar_lea.vmem %s0, %s241
      %p243 = scmp.lt.s32.totalorder %s17, 1
      %s244 = scalar_select %p243, %s17, 1
      %s245 = smul.addr %s244, 2
      %s246 = scalar_lea.vmem %s6, %s245
      %v248 = vld [vmem:[%s242] sm:$0x3]
      %v249 = vunpack.c.l.bf16 %v248
      %v250 = vld [vmem:[%s2] sm:$0x1]
      %v252 = vperm.slane %v250, 0
      %v254 = vmul.f32 %v249, %v252
      %v255 = vld [vmem:[%s3] sm:$0x1]
      %v257 = vperm.slane %v255, 0
      %v259 = vadd.f32 %v254, %v257
      %v260 = vmax.f32 %v259, 0.0
      %v261 = vpack.c.bf16 %v260, %v260
      %v262 = vld [vmem:[%s1] sm:$0xf]
      %v263 = vld [vmem:[%s1 + $0x4] sm:$0xf]
      %v266 = vunpack.c.l.b16 %v262
      %v267 = vunpack.c.l.b16 %v263
      %v268 = vpack.c.b16 %v267, %v266
      %vm270 = vcmask 130048
      %v272 = vsel %vm270, %v261, 0
      %274 = vmatpush.bf16.msra.mxu0 0
      %275 = vmatpush.bf16.msra.mxu0 0
      %276 = vmatpush.bf16.msra.mxu0 0
      %277 = vmatpush.bf16.msra.mxu0 0
      %278 = vmatpush.bf16.msra.mxu0 0
      %279 = vmatpush.bf16.msra.mxu0 0
      %280 = vmatpush.bf16.msra.mxu0 0
      %281 = vmatpush.bf16.msra.mxu0 %v268
      %282 = vmatmul.bf16.gmra.mxu0 %v272
      %v283 = vpop.f32.mrf.mxu0
      %v284 = vadd.f32 0.0, %v283
      %v285 = vpop.f32.mrf.mxu0
      %286 = vdwg.mxu0
      %v287 = vld [vmem:[%s4] sm:$0x1]
      %v289 = vperm.slane %v287, 0
      %v291 = vmul.f32 %v284, %v289
      %v292 = vld [vmem:[%s5] sm:$0x1]
      %v294 = vperm.slane %v292, 0
      %v296 = vadd.f32 %v291, %v294
      %v297 = vmax.f32 %v296, 0.0
      %v298 = vpack.c.bf16 %v297, %v297
      %299 = vst [vmem:[%s246] sm:$0x3] %v298
      %p300 = scmp.lt.s32.totalorder %s17, 1
      %s301 = scalar_select %p300, %s17, 1
      %s302 = smul.addr %s301, 2
      %s303 = scalar_lea.vmem %s6, %s302
      // Predicated region
      $region45: #{_lambda_.21} parent=43 // pred_check
        %p304 = pneg %p166
      $region46: #{_lambda_.21} parent=43 // pred_check_branch
        %306 = sbr.rel (%p304) target = $region48
      $region47: #{_lambda_.21} parent=43 // pred_region
        _
      $region48: #{_lambda_.21} parent=43 // pred_fallthru
        _
    $region44: #{_lambda_.21} parent=5 // pred_fallthru
      _
    %p307 = scmp.le.s32.totalorder 2, %s12
    // Predicated region
    $region49: #{_lambda_.21} parent=5 // pred_check
      %p308 = pneg %p307
    $region50: #{_lambda_.21} parent=5 // pred_check_branch
      %310 = sbr.rel (%p308) target = $region52
    $region51: #{_lambda_.21} parent=5 // pred_region
      %s311 = ssub.s32 %s12, 2
      // Predicated region
      $region53: #{_lambda_.21} parent=51 // pred_check
        %p312 = pneg %p172
      $region54: #{_lambda_.21} parent=51 // pred_check_branch
        %314 = sbr.rel (%p312) target = $region56
      $region55: #{_lambda_.21} parent=51 // pred_region
        %p315 = scmp.lt.s32.totalorder %s18, 1
        %s316 = scalar_select %p315, %s18, 1
        %s317 = smul.addr %s316, 2
        %s318 = scalar_lea.vmem %s6, %s317
      $region56: #{_lambda_.21} parent=51 // pred_fallthru
        _
    $region52: #{_lambda_.21} parent=5 // pred_fallthru
      _
  $region6: #{_lambda_.21} parent=0 // loop_footer
    %s16 = sadd.s32 1, %s12
  $region7: #{_lambda_.21} parent=0 // loop_footer_branch
    %11 = sbr.rel target = $region3
  $region8: #{_lambda_.21} parent=0 // loop_exit
    _

// kernel: _lambda_.23
$region0: #{_lambda_.23}
  #allocation0 [shape = 'u32[]', space=smem, size = 0x4, offset = 0x4, fixed_abs, tag = 'smem constant byte address 0x4 - core index']
  #allocation1 [shape = 'u32[72,128]{1,0:T(1,128)}', space=vmem, size = 0x9000, scoped, tag = 'internal scratch']
  %s0 = inlined_call_operand.vmem [shape: bf16[2,1,4,24], index: 0, kind: input, shape index: {}]
  %s1 = inlined_call_operand.vmem [shape: bf16[1,24,128], index: 1, kind: input, shape index: {}]
  %s2 = inlined_call_operand.vmem [shape: f32[1,24], index: 2, kind: input, shape index: {}]
  %s3 = inlined_call_operand.vmem [shape: f32[1,24], index: 3, kind: input, shape index: {}]
  %s4 = inlined_call_operand.vmem [shape: f32[1,128], index: 4, kind: input, shape index: {}]
  %s5 = inlined_call_operand.vmem [shape: f32[1,128], index: 5, kind: input, shape index: {}]
  %s6 = inlined_call_operand.vmem [shape: bf16[2,4,128], index: 6, kind: output, shape index: {}]
  %s7 = sld [smem:[#allocation0]]
  $region57: #{_lambda_.23} parent=0
    _
  %s9 = ssub.s32 1, %s7
  %s10 = scalar_select 0, %s9, %s7
  loop: start=0, step=1, limit=4
  $region2: #{_lambda_.23} parent=0 // loop_pre_header
    _
  $region3: #{_lambda_.23} parent=0 // loop_header
    %s12 = sphi 0, %s16
    %p13 = scmp.ge.s32.totalorder %s12, 4
    %s22 = sphi 0, %s24
    %s25 = sphi 0, %s22
    %s26 = sphi 0, %s25
    %s42 = sphi 0, %s26
    %s46 = sphi 0, %s46
    %s48 = sphi 0, %s46
    %s49 = sphi 0, %s48
    %s63 = sphi 0, %s49
    %s67 = sphi 0, %s67
    %s69 = sphi 0, %s67
    %s70 = sphi 0, %s69
    %s84 = sphi 0, %s70
    %s88 = sphi 0, %s88
    %s90 = sphi 0, %s88
    %s91 = sphi 0, %s90
    %s105 = sphi 0, %s91
    %s109 = sphi 0, %s109
    %s111 = sphi 0, %s109
    %s112 = sphi 0, %s111
    %s126 = sphi 0, %s112
    %s130 = sphi 0, %s130
    %s132 = sphi 0, %s130
    %s133 = sphi 0, %s132
    %s147 = sphi 0, %s133
    %s153 = sphi 0, %s155
    %s156 = sphi 0, %s153
    %s157 = sphi 0, %s156
    %s173 = sphi 0, %s157
  $region4: #{_lambda_.23} parent=0 // loop_header_branch
    %15 = sbr.rel (%p13) target = $region8
  $region5: #{_lambda_.23} parent=0 // loop_body
    %s17 = ssub.s32 %s12, 1
    %s18 = ssub.s32 %s12, 2
    %s19 = sadd.s32 %s12, 1
    %s20 = ssub.s32 %s12, %s19
    %p21 = scmp.eq.s32.totalorder %s20, 0
    %s23 = sadd.s32 %s22, 1
    %s24 = scalar_select %p21, %s22, %s23
    %p27 = pneg %p21
    %p28 = scmp.eq.s32.totalorder %s12, 1
    %p29 = por %p27, %p28
    %p30 = scmp.ne.s32.totalorder %s22, %s25
    %p31 = scmp.eq.s32.totalorder %s12, 0
    %p32 = por %p30, %p31
    %p33 = scmp.ne.s32.totalorder %s22, %s25
    %p34 = scmp.eq.s32.totalorder %s17, 1
    %p35 = por %p33, %p34
    %p36 = scmp.ne.s32.totalorder %s25, %s26
    %p37 = scmp.eq.s32.totalorder %s17, 0
    %p38 = por %p36, %p37
    %p39 = scmp.ne.s32.totalorder %s25, %s26
    %p40 = scmp.eq.s32.totalorder %s18, 1
    %p41 = por %p39, %p40
    %p43 = scmp.ne.s32.totalorder %s26, %s42
    %p44 = scmp.eq.s32.totalorder %s18, 0
    %p45 = por %p43, %p44
    %s47 = sadd.s32 %s46, 1
    %p50 = scmp.eq.s32.totalorder %s12, 1
    %p51 = scmp.ne.s32.totalorder %s46, %s48
    %p52 = scmp.eq.s32.totalorder %s12, 0
    %p53 = por %p51, %p52
    %p54 = scmp.ne.s32.totalorder %s46, %s48
    %p55 = scmp.eq.s32.totalorder %s17, 1
    %p56 = por %p54, %p55
    %p57 = scmp.ne.s32.totalorder %s48, %s49
    %p58 = scmp.eq.s32.totalorder %s17, 0
    %p59 = por %p57, %p58
    %p60 = scmp.ne.s32.totalorder %s48, %s49
    %p61 = scmp.eq.s32.totalorder %s18, 1
    %p62 = por %p60, %p61
    %p64 = scmp.ne.s32.totalorder %s49, %s63
    %p65 = scmp.eq.s32.totalorder %s18, 0
    %p66 = por %p64, %p65
    %s68 = sadd.s32 %s67, 1
    %p71 = scmp.eq.s32.totalorder %s12, 1
    %p72 = scmp.ne.s32.totalorder %s67, %s69
    %p73 = scmp.eq.s32.totalorder %s12, 0
    %p74 = por %p72, %p73
    %p75 = scmp.ne.s32.totalorder %s67, %s69
    %p76 = scmp.eq.s32.totalorder %s17, 1
    %p77 = por %p75, %p76
    %p78 = scmp.ne.s32.totalorder %s69, %s70
    %p79 = scmp.eq.s32.totalorder %s17, 0
    %p80 = por %p78, %p79
    %p81 = scmp.ne.s32.totalorder %s69, %s70
    %p82 = scmp.eq.s32.totalorder %s18, 1
    %p83 = por %p81, %p82
    %p85 = scmp.ne.s32.totalorder %s70, %s84
    %p86 = scmp.eq.s32.totalorder %s18, 0
    %p87 = por %p85, %p86
    %s89 = sadd.s32 %s88, 1
    %p92 = scmp.eq.s32.totalorder %s12, 1
    %p93 = scmp.ne.s32.totalorder %s88, %s90
    %p94 = scmp.eq.s32.totalorder %s12, 0
    %p95 = por %p93, %p94
    %p96 = scmp.ne.s32.totalorder %s88, %s90
    %p97 = scmp.eq.s32.totalorder %s17, 1
    %p98 = por %p96, %p97
    %p99 = scmp.ne.s32.totalorder %s90, %s91
    %p100 = scmp.eq.s32.totalorder %s17, 0
    %p101 = por %p99, %p100
    %p102 = scmp.ne.s32.totalorder %s90, %s91
    %p103 = scmp.eq.s32.totalorder %s18, 1
    %p104 = por %p102, %p103
    %p106 = scmp.ne.s32.totalorder %s91, %s105
    %p107 = scmp.eq.s32.totalorder %s18, 0
    %p108 = por %p106, %p107
    %s110 = sadd.s32 %s109, 1
    %p113 = scmp.eq.s32.totalorder %s12, 1
    %p114 = scmp.ne.s32.totalorder %s109, %s111
    %p115 = scmp.eq.s32.totalorder %s12, 0
    %p116 = por %p114, %p115
    %p117 = scmp.ne.s32.totalorder %s109, %s111
    %p118 = scmp.eq.s32.totalorder %s17, 1
    %p119 = por %p117, %p118
    %p120 = scmp.ne.s32.totalorder %s111, %s112
    %p121 = scmp.eq.s32.totalorder %s17, 0
    %p122 = por %p120, %p121
    %p123 = scmp.ne.s32.totalorder %s111, %s112
    %p124 = scmp.eq.s32.totalorder %s18, 1
    %p125 = por %p123, %p124
    %p127 = scmp.ne.s32.totalorder %s112, %s126
    %p128 = scmp.eq.s32.totalorder %s18, 0
    %p129 = por %p127, %p128
    %s131 = sadd.s32 %s130, 1
    %p134 = scmp.eq.s32.totalorder %s12, 1
    %p135 = scmp.ne.s32.totalorder %s130, %s132
    %p136 = scmp.eq.s32.totalorder %s12, 0
    %p137 = por %p135, %p136
    %p138 = scmp.ne.s32.totalorder %s130, %s132
    %p139 = scmp.eq.s32.totalorder %s17, 1
    %p140 = por %p138, %p139
    %p141 = scmp.ne.s32.totalorder %s132, %s133
    %p142 = scmp.eq.s32.totalorder %s17, 0
    %p143 = por %p141, %p142
    %p144 = scmp.ne.s32.totalorder %s132, %s133
    %p145 = scmp.eq.s32.totalorder %s18, 1
    %p146 = por %p144, %p145
    %p148 = scmp.ne.s32.totalorder %s133, %s147
    %p149 = scmp.eq.s32.totalorder %s18, 0
    %p150 = por %p148, %p149
    %s151 = ssub.s32 %s12, %s19
    %p152 = scmp.eq.s32.totalorder %s151, 0
    %s154 = sadd.s32 %s153, 1
    %s155 = scalar_select %p152, %s153, %s154
    %p158 = pneg %p152
    %p159 = scmp.eq.s32.totalorder %s12, 1
    %p160 = por %p158, %p159
    %p161 = scmp.ne.s32.totalorder %s153, %s156
    %p162 = scmp.eq.s32.totalorder %s12, 0
    %p163 = por %p161, %p162
    %p164 = scmp.ne.s32.totalorder %s153, %s156
    %p165 = scmp.eq.s32.totalorder %s17, 1
    %p166 = por %p164, %p165
    %p167 = scmp.ne.s32.totalorder %s156, %s157
    %p168 = scmp.eq.s32.totalorder %s17, 0
    %p169 = por %p167, %p168
    %p170 = scmp.ne.s32.totalorder %s156, %s157
    %p171 = scmp.eq.s32.totalorder %s18, 1
    %p172 = por %p170, %p171
    %p174 = scmp.ne.s32.totalorder %s157, %s173
    %p175 = scmp.eq.s32.totalorder %s18, 0
    %p176 = por %p174, %p175
    %p177 = scmp.le.s32.totalorder 1, %s12
    %p178 = scmp.lt.s32.totalorder %s12, 3
    %p179 = pnand %p177, %p178
    %p180 = pneg %p179
    // Predicated region
    $region9: #{_lambda_.23} parent=5 // pred_check
      _
    $region10: #{_lambda_.23} parent=5 // pred_check_branch
      %182 = sbr.rel (%p179) target = $region12
    $region11: #{_lambda_.23} parent=5 // pred_region
      %s183 = ssub.s32 %s12, 1
      // Predicated region
      $region13: #{_lambda_.23} parent=11 // pred_check
        %p184 = pneg %p59
      $region14: #{_lambda_.23} parent=11 // pred_check_branch
        %186 = sbr.rel (%p184) target = $region16
      $region15: #{_lambda_.23} parent=11 // pred_region
        _
      $region16: #{_lambda_.23} parent=11 // pred_fallthru
        _
      // Predicated region
      $region17: #{_lambda_.23} parent=11 // pred_check
        %p187 = pneg %p80
      $region18: #{_lambda_.23} parent=11 // pred_check_branch
        %189 = sbr.rel (%p187) target = $region20
      $region19: #{_lambda_.23} parent=11 // pred_region
        _
      $region20: #{_lambda_.23} parent=11 // pred_fallthru
        _
      // Predicated region
      $region21: #{_lambda_.23} parent=11 // pred_check
        %p190 = pneg %p101
      $region22: #{_lambda_.23} parent=11 // pred_check_branch
        %192 = sbr.rel (%p190) target = $region24
      $region23: #{_lambda_.23} parent=11 // pred_region
        _
      $region24: #{_lambda_.23} parent=11 // pred_fallthru
        _
      // Predicated region
      $region25: #{_lambda_.23} parent=11 // pred_check
        %p193 = pneg %p122
      $region26: #{_lambda_.23} parent=11 // pred_check_branch
        %195 = sbr.rel (%p193) target = $region28
      $region27: #{_lambda_.23} parent=11 // pred_region
        _
      $region28: #{_lambda_.23} parent=11 // pred_fallthru
        _
      // Predicated region
      $region29: #{_lambda_.23} parent=11 // pred_check
        %p196 = pneg %p143
      $region30: #{_lambda_.23} parent=11 // pred_check_branch
        %198 = sbr.rel (%p196) target = $region32
      $region31: #{_lambda_.23} parent=11 // pred_region
        _
      $region32: #{_lambda_.23} parent=11 // pred_fallthru
        _
    $region12: #{_lambda_.23} parent=5 // pred_fallthru
      _
    %p199 = scmp.lt.s32.totalorder %s12, 2
    // Predicated region
    $region33: #{_lambda_.23} parent=5 // pred_check
      %p200 = pneg %p199
    $region34: #{_lambda_.23} parent=5 // pred_check_branch
      %202 = sbr.rel (%p200) target = $region36
    $region35: #{_lambda_.23} parent=5 // pred_region
      // Predicated region
      $region37: #{_lambda_.23} parent=35 // pred_check
        %p203 = pneg %p32
      $region38: #{_lambda_.23} parent=35 // pred_check_branch
        %205 = sbr.rel (%p203) target = $region40
      $region39: #{_lambda_.23} parent=35 // pred_region
        %p206 = scmp.lt.s32.totalorder %s12, 1
        %s207 = scalar_select %p206, %s12, 1
        %s208 = smul.addr %s207, 2
        %s209 = scalar_lea.vmem %s0, %s208
      $region40: #{_lambda_.23} parent=35 // pred_fallthru
        _
    $region36: #{_lambda_.23} parent=5 // pred_fallthru
      _
    %p210 = scmp.le.s32.totalorder 1, %s12
    %p211 = scmp.lt.s32.totalorder %s12, 3
    %p212 = pnand %p210, %p211
    %p213 = pneg %p212
    // Predicated region
    $region41: #{_lambda_.23} parent=5 // pred_check
      _
    $region42: #{_lambda_.23} parent=5 // pred_check_branch
      %215 = sbr.rel (%p212) target = $region44
    $region43: #{_lambda_.23} parent=5 // pred_region
      %s216 = ssub.s32 %s12, 1
      %p217 = scmp.lt.s32.totalorder %s17, 1
      %s218 = scalar_select %p217, %s17, 1
      %s219 = smul.addr %s218, 2
      %s220 = scalar_lea.vmem %s0, %s219
      %p221 = pneg %p38
      %p222 = pneg %p35
      %p223 = pneg %p59
      %p224 = pneg %p56
      %p225 = pneg %p80
      %p226 = pneg %p77
      %p227 = pneg %p101
      %p228 = pneg %p98
      %p229 = pneg %p122
      %p230 = pneg %p119
      %p231 = pneg %p143
      %p232 = pneg %p140
      %p233 = pneg %p169
      %p234 = pneg %p166
      %p235 = scmp.lt.s32.totalorder %s17, 1
      %s236 = scalar_select %p235, %s17, 1
      %s237 = smul.addr %s236, 2
      %s238 = scalar_lea.vmem %s6, %s237
      %p239 = scmp.lt.s32.totalorder %s17, 1
      %s240 = scalar_select %p239, %s17, 1
      %s241 = smul.addr %s240, 2
      %s242 = scalar_lea.vmem %s0, %s241
      %p243 = scmp.lt.s32.totalorder %s17, 1
      %s244 = scalar_select %p243, %s17, 1
      %s245 = smul.addr %s244, 2
      %s246 = scalar_lea.vmem %s6, %s245
      %v248 = vld [vmem:[%s242] sm:$0x3]
      %v249 = vunpack.c.l.bf16 %v248
      %v250 = vld [vmem:[%s2] sm:$0x1]
      %v252 = vperm.slane %v250, 0
      %v254 = vmul.f32 %v249, %v252
      %v255 = vld [vmem:[%s3] sm:$0x1]
      %v257 = vperm.slane %v255, 0
      %v259 = vadd.f32 %v254, %v257
      %v260 = vmax.f32 %v259, 0.0
      %v261 = vpack.c.bf16 %v260, %v260
      %v262 = vld [vmem:[%s1] sm:$0xf]
      %v263 = vld [vmem:[%s1 + $0x4] sm:$0xf]
      %v264 = vld [vmem:[%s1 + $0x8] sm:$0xf]
      %v268 = vunpack.c.l.b16 %v262
      %v269 = vunpack.c.l.b16 %v263
      %v270 = vunpack.c.l.b16 %v264
      %v271 = vpack.c.b16 %v269, %v268
      %v272 = vpack.c.b16 %v270, %v270
      %vm274 = vcmask 195584
      %v276 = vsel %vm274, %v261, 0
      %vm278 = vcmask 1043456
      %v280 = vsel %vm278, %v272, 0
      %282 = vmatpush.bf16.msra.mxu0 0
      %283 = vmatpush.bf16.msra.mxu0 0
      %284 = vmatpush.bf16.msra.mxu0 0
      %285 = vmatpush.bf16.msra.mxu0 0
      %286 = vmatpush.bf16.msra.mxu0 0
      %287 = vmatpush.bf16.msra.mxu0 0
      %288 = vmatpush.bf16.msra.mxu0 %v280
      %289 = vmatpush.bf16.msra.mxu0 %v271
      %290 = vmatmul.bf16.gmra.mxu0 %v276
      %v291 = vpop.f32.mrf.mxu0
      %v292 = vadd.f32 0.0, %v291
      %v293 = vpop.f32.mrf.mxu0
      %294 = vdwg.mxu0
      %v295 = vld [vmem:[%s4] sm:$0x1]
      %v297 = vperm.slane %v295, 0
      %v299 = vmul.f32 %v292, %v297
      %v300 = vld [vmem:[%s5] sm:$0x1]
      %v302 = vperm.slane %v300, 0
      %v304 = vadd.f32 %v299, %v302
      %v305 = vmax.f32 %v304, 0.0
      %v306 = vpack.c.bf16 %v305, %v305
      %307 = vst [vmem:[%s246] sm:$0x3] %v306
      %p308 = scmp.lt.s32.totalorder %s17, 1
      %s309 = scalar_select %p308, %s17, 1
      %s310 = smul.addr %s309, 2
      %s311 = scalar_lea.vmem %s6, %s310
      // Predicated region
      $region45: #{_lambda_.23} parent=43 // pred_check
        %p312 = pneg %p166
      $region46: #{_lambda_.23} parent=43 // pred_check_branch
        %314 = sbr.rel (%p312) target = $region48
      $region47: #{_lambda_.23} parent=43 // pred_region
        _
      $region48: #{_lambda_.23} parent=43 // pred_fallthru
        _
    $region44: #{_lambda_.23} parent=5 // pred_fallthru
      _
    %p315 = scmp.le.s32.totalorder 2, %s12
    // Predicated region
    $region49: #{_lambda_.23} parent=5 // pred_check
      %p316 = pneg %p315
    $region50: #{_lambda_.23} parent=5 // pred_check_branch
      %318 = sbr.rel (%p316) target = $region52
    $region51: #{_lambda_.23} parent=5 // pred_region
      %s319 = ssub.s32 %s12, 2
      // Predicated region
      $region53: #{_lambda_.23} parent=51 // pred_check
        %p320 = pneg %p172
      $region54: #{_lambda_.23} parent=51 // pred_check_branch
        %322 = sbr.rel (%p320) target = $region56
      $region55: #{_lambda_.23} parent=51 // pred_region
        %p323 = scmp.lt.s32.totalorder %s18, 1
        %s324 = scalar_select %p323, %s18, 1
        %s325 = smul.addr %s324, 2
        %s326 = scalar_lea.vmem %s6, %s325
      $region56: #{_lambda_.23} parent=51 // pred_fallthru
        _
    $region52: #{_lambda_.23} parent=5 // pred_fallthru
      _
  $region6: #{_lambda_.23} parent=0 // loop_footer
    %s16 = sadd.s32 1, %s12
  $region7: #{_lambda_.23} parent=0 // loop_footer_branch
    %11 = sbr.rel target = $region3
  $region8: #{_lambda_.23} parent=0 // loop_exit
    _

// kernel: _lambda_.22
$region0: #{_lambda_.22}
  #allocation0 [shape = 'u32[]', space=smem, size = 0x4, offset = 0x4, fixed_abs, tag = 'smem constant byte address 0x4 - core index']
  #allocation1 [shape = 'u32[72,128]{1,0:T(1,128)}', space=vmem, size = 0x9000, scoped, tag = 'internal scratch']
  %s0 = inlined_call_operand.vmem [shape: bf16[2,1,20,32], index: 0, kind: input, shape index: {}]
  %s1 = inlined_call_operand.vmem [shape: bf16[9,32,128], index: 1, kind: input, shape index: {}]
  %s2 = inlined_call_operand.vmem [shape: f32[1,32], index: 2, kind: input, shape index: {}]
  %s3 = inlined_call_operand.vmem [shape: f32[1,32], index: 3, kind: input, shape index: {}]
  %s4 = inlined_call_operand.vmem [shape: f32[1,128], index: 4, kind: input, shape index: {}]
  %s5 = inlined_call_operand.vmem [shape: f32[1,128], index: 5, kind: input, shape index: {}]
  %s6 = inlined_call_operand.vmem [shape: bf16[2,8,128], index: 6, kind: output, shape index: {}]
  %s7 = sld [smem:[#allocation0]]
  $region57: #{_lambda_.22} parent=0
    _
  %s9 = ssub.s32 1, %s7
  %s10 = scalar_select 0, %s9, %s7
  loop: start=0, step=1, limit=4
  $region2: #{_lambda_.22} parent=0 // loop_pre_header
    _
  $region3: #{_lambda_.22} parent=0 // loop_header
    %s12 = sphi 0, %s16
    %p13 = scmp.ge.s32.totalorder %s12, 4
    %s22 = sphi 0, %s24
    %s25 = sphi 0, %s22
    %s26 = sphi 0, %s25
    %s42 = sphi 0, %s26
    %s46 = sphi 0, %s46
    %s48 = sphi 0, %s46
    %s49 = sphi 0, %s48
    %s63 = sphi 0, %s49
    %s67 = sphi 0, %s67
    %s69 = sphi 0, %s67
    %s70 = sphi 0, %s69
    %s84 = sphi 0, %s70
    %s88 = sphi 0, %s88
    %s90 = sphi 0, %s88
    %s91 = sphi 0, %s90
    %s105 = sphi 0, %s91
    %s109 = sphi 0, %s109
    %s111 = sphi 0, %s109
    %s112 = sphi 0, %s111
    %s126 = sphi 0, %s112
    %s130 = sphi 0, %s130
    %s132 = sphi 0, %s130
    %s133 = sphi 0, %s132
    %s147 = sphi 0, %s133
    %s153 = sphi 0, %s155
    %s156 = sphi 0, %s153
    %s157 = sphi 0, %s156
    %s173 = sphi 0, %s157
  $region4: #{_lambda_.22} parent=0 // loop_header_branch
    %15 = sbr.rel (%p13) target = $region8
  $region5: #{_lambda_.22} parent=0 // loop_body
    %s17 = ssub.s32 %s12, 1
    %s18 = ssub.s32 %s12, 2
    %s19 = sadd.s32 %s12, 1
    %s20 = ssub.s32 %s12, %s19
    %p21 = scmp.eq.s32.totalorder %s20, 0
    %s23 = sadd.s32 %s22, 1
    %s24 = scalar_select %p21, %s22, %s23
    %p27 = pneg %p21
    %p28 = scmp.eq.s32.totalorder %s12, 1
    %p29 = por %p27, %p28
    %p30 = scmp.ne.s32.totalorder %s22, %s25
    %p31 = scmp.eq.s32.totalorder %s12, 0
    %p32 = por %p30, %p31
    %p33 = scmp.ne.s32.totalorder %s22, %s25
    %p34 = scmp.eq.s32.totalorder %s17, 1
    %p35 = por %p33, %p34
    %p36 = scmp.ne.s32.totalorder %s25, %s26
    %p37 = scmp.eq.s32.totalorder %s17, 0
    %p38 = por %p36, %p37
    %p39 = scmp.ne.s32.totalorder %s25, %s26
    %p40 = scmp.eq.s32.totalorder %s18, 1
    %p41 = por %p39, %p40
    %p43 = scmp.ne.s32.totalorder %s26, %s42
    %p44 = scmp.eq.s32.totalorder %s18, 0
    %p45 = por %p43, %p44
    %s47 = sadd.s32 %s46, 1
    %p50 = scmp.eq.s32.totalorder %s12, 1
    %p51 = scmp.ne.s32.totalorder %s46, %s48
    %p52 = scmp.eq.s32.totalorder %s12, 0
    %p53 = por %p51, %p52
    %p54 = scmp.ne.s32.totalorder %s46, %s48
    %p55 = scmp.eq.s32.totalorder %s17, 1
    %p56 = por %p54, %p55
    %p57 = scmp.ne.s32.totalorder %s48, %s49
    %p58 = scmp.eq.s32.totalorder %s17, 0
    %p59 = por %p57, %p58
    %p60 = scmp.ne.s32.totalorder %s48, %s49
    %p61 = scmp.eq.s32.totalorder %s18, 1
    %p62 = por %p60, %p61
    %p64 = scmp.ne.s32.totalorder %s49, %s63
    %p65 = scmp.eq.s32.totalorder %s18, 0
    %p66 = por %p64, %p65
    %s68 = sadd.s32 %s67, 1
    %p71 = scmp.eq.s32.totalorder %s12, 1
    %p72 = scmp.ne.s32.totalorder %s67, %s69
    %p73 = scmp.eq.s32.totalorder %s12, 0
    %p74 = por %p72, %p73
    %p75 = scmp.ne.s32.totalorder %s67, %s69
    %p76 = scmp.eq.s32.totalorder %s17, 1
    %p77 = por %p75, %p76
    %p78 = scmp.ne.s32.totalorder %s69, %s70
    %p79 = scmp.eq.s32.totalorder %s17, 0
    %p80 = por %p78, %p79
    %p81 = scmp.ne.s32.totalorder %s69, %s70
    %p82 = scmp.eq.s32.totalorder %s18, 1
    %p83 = por %p81, %p82
    %p85 = scmp.ne.s32.totalorder %s70, %s84
    %p86 = scmp.eq.s32.totalorder %s18, 0
    %p87 = por %p85, %p86
    %s89 = sadd.s32 %s88, 1
    %p92 = scmp.eq.s32.totalorder %s12, 1
    %p93 = scmp.ne.s32.totalorder %s88, %s90
    %p94 = scmp.eq.s32.totalorder %s12, 0
    %p95 = por %p93, %p94
    %p96 = scmp.ne.s32.totalorder %s88, %s90
    %p97 = scmp.eq.s32.totalorder %s17, 1
    %p98 = por %p96, %p97
    %p99 = scmp.ne.s32.totalorder %s90, %s91
    %p100 = scmp.eq.s32.totalorder %s17, 0
    %p101 = por %p99, %p100
    %p102 = scmp.ne.s32.totalorder %s90, %s91
    %p103 = scmp.eq.s32.totalorder %s18, 1
    %p104 = por %p102, %p103
    %p106 = scmp.ne.s32.totalorder %s91, %s105
    %p107 = scmp.eq.s32.totalorder %s18, 0
    %p108 = por %p106, %p107
    %s110 = sadd.s32 %s109, 1
    %p113 = scmp.eq.s32.totalorder %s12, 1
    %p114 = scmp.ne.s32.totalorder %s109, %s111
    %p115 = scmp.eq.s32.totalorder %s12, 0
    %p116 = por %p114, %p115
    %p117 = scmp.ne.s32.totalorder %s109, %s111
    %p118 = scmp.eq.s32.totalorder %s17, 1
    %p119 = por %p117, %p118
    %p120 = scmp.ne.s32.totalorder %s111, %s112
    %p121 = scmp.eq.s32.totalorder %s17, 0
    %p122 = por %p120, %p121
    %p123 = scmp.ne.s32.totalorder %s111, %s112
    %p124 = scmp.eq.s32.totalorder %s18, 1
    %p125 = por %p123, %p124
    %p127 = scmp.ne.s32.totalorder %s112, %s126
    %p128 = scmp.eq.s32.totalorder %s18, 0
    %p129 = por %p127, %p128
    %s131 = sadd.s32 %s130, 1
    %p134 = scmp.eq.s32.totalorder %s12, 1
    %p135 = scmp.ne.s32.totalorder %s130, %s132
    %p136 = scmp.eq.s32.totalorder %s12, 0
    %p137 = por %p135, %p136
    %p138 = scmp.ne.s32.totalorder %s130, %s132
    %p139 = scmp.eq.s32.totalorder %s17, 1
    %p140 = por %p138, %p139
    %p141 = scmp.ne.s32.totalorder %s132, %s133
    %p142 = scmp.eq.s32.totalorder %s17, 0
    %p143 = por %p141, %p142
    %p144 = scmp.ne.s32.totalorder %s132, %s133
    %p145 = scmp.eq.s32.totalorder %s18, 1
    %p146 = por %p144, %p145
    %p148 = scmp.ne.s32.totalorder %s133, %s147
    %p149 = scmp.eq.s32.totalorder %s18, 0
    %p150 = por %p148, %p149
    %s151 = ssub.s32 %s12, %s19
    %p152 = scmp.eq.s32.totalorder %s151, 0
    %s154 = sadd.s32 %s153, 1
    %s155 = scalar_select %p152, %s153, %s154
    %p158 = pneg %p152
    %p159 = scmp.eq.s32.totalorder %s12, 1
    %p160 = por %p158, %p159
    %p161 = scmp.ne.s32.totalorder %s153, %s156
    %p162 = scmp.eq.s32.totalorder %s12, 0
    %p163 = por %p161, %p162
    %p164 = scmp.ne.s32.totalorder %s153, %s156
    %p165 = scmp.eq.s32.totalorder %s17, 1
    %p166 = por %p164, %p165
    %p167 = scmp.ne.s32.totalorder %s156, %s157
    %p168 = scmp.eq.s32.totalorder %s17, 0
    %p169 = por %p167, %p168
    %p170 = scmp.ne.s32.totalorder %s156, %s157
    %p171 = scmp.eq.s32.totalorder %s18, 1
    %p172 = por %p170, %p171
    %p174 = scmp.ne.s32.totalorder %s157, %s173
    %p175 = scmp.eq.s32.totalorder %s18, 0
    %p176 = por %p174, %p175
    %p177 = scmp.le.s32.totalorder 1, %s12
    %p178 = scmp.lt.s32.totalorder %s12, 3
    %p179 = pnand %p177, %p178
    %p180 = pneg %p179
    // Predicated region
    $region9: #{_lambda_.22} parent=5 // pred_check
      _
    $region10: #{_lambda_.22} parent=5 // pred_check_branch
      %182 = sbr.rel (%p179) target = $region12
    $region11: #{_lambda_.22} parent=5 // pred_region
      %s183 = ssub.s32 %s12, 1
      // Predicated region
      $region13: #{_lambda_.22} parent=11 // pred_check
        %p184 = pneg %p59
      $region14: #{_lambda_.22} parent=11 // pred_check_branch
        %186 = sbr.rel (%p184) target = $region16
      $region15: #{_lambda_.22} parent=11 // pred_region
        _
      $region16: #{_lambda_.22} parent=11 // pred_fallthru
        _
      // Predicated region
      $region17: #{_lambda_.22} parent=11 // pred_check
        %p187 = pneg %p80
      $region18: #{_lambda_.22} parent=11 // pred_check_branch
        %189 = sbr.rel (%p187) target = $region20
      $region19: #{_lambda_.22} parent=11 // pred_region
        _
      $region20: #{_lambda_.22} parent=11 // pred_fallthru
        _
      // Predicated region
      $region21: #{_lambda_.22} parent=11 // pred_check
        %p190 = pneg %p101
      $region22: #{_lambda_.22} parent=11 // pred_check_branch
        %192 = sbr.rel (%p190) target = $region24
      $region23: #{_lambda_.22} parent=11 // pred_region
        _
      $region24: #{_lambda_.22} parent=11 // pred_fallthru
        _
      // Predicated region
      $region25: #{_lambda_.22} parent=11 // pred_check
        %p193 = pneg %p122
      $region26: #{_lambda_.22} parent=11 // pred_check_branch
        %195 = sbr.rel (%p193) target = $region28
      $region27: #{_lambda_.22} parent=11 // pred_region
        _
      $region28: #{_lambda_.22} parent=11 // pred_fallthru
        _
      // Predicated region
      $region29: #{_lambda_.22} parent=11 // pred_check
        %p196 = pneg %p143
      $region30: #{_lambda_.22} parent=11 // pred_check_branch
        %198 = sbr.rel (%p196) target = $region32
      $region31: #{_lambda_.22} parent=11 // pred_region
        _
      $region32: #{_lambda_.22} parent=11 // pred_fallthru
        _
    $region12: #{_lambda_.22} parent=5 // pred_fallthru
      _
    %p199 = scmp.lt.s32.totalorder %s12, 2
    // Predicated region
    $region33: #{_lambda_.22} parent=5 // pred_check
      %p200 = pneg %p199
    $region34: #{_lambda_.22} parent=5 // pred_check_branch
      %202 = sbr.rel (%p200) target = $region36
    $region35: #{_lambda_.22} parent=5 // pred_region
      // Predicated region
      $region37: #{_lambda_.22} parent=35 // pred_check
        %p203 = pneg %p32
      $region38: #{_lambda_.22} parent=35 // pred_check_branch
        %205 = sbr.rel (%p203) target = $region40
      $region39: #{_lambda_.22} parent=35 // pred_region
        %p206 = scmp.lt.s32.totalorder %s12, 1
        %s207 = scalar_select %p206, %s12, 1
        %s208 = smul.addr %s207, 3
        %s209 = smul.addr %s208, 4
        %s210 = scalar_lea.vmem %s0, %s209
      $region40: #{_lambda_.22} parent=35 // pred_fallthru
        _
    $region36: #{_lambda_.22} parent=5 // pred_fallthru
      _
    %p211 = scmp.le.s32.totalorder 1, %s12
    %p212 = scmp.lt.s32.totalorder %s12, 3
    %p213 = pnand %p211, %p212
    %p214 = pneg %p213
    // Predicated region
    $region41: #{_lambda_.22} parent=5 // pred_check
      _
    $region42: #{_lambda_.22} parent=5 // pred_check_branch
      %216 = sbr.rel (%p213) target = $region44
    $region43: #{_lambda_.22} parent=5 // pred_region
      %s217 = ssub.s32 %s12, 1
      %p218 = scmp.lt.s32.totalorder %s17, 1
      %s219 = scalar_select %p218, %s17, 1
      %s220 = smul.addr %s219, 3
      %s221 = smul.addr %s220, 4
      %s222 = scalar_lea.vmem %s0, %s221
      %p223 = pneg %p38
      %p224 = pneg %p35
      %p225 = pneg %p59
      %p226 = pneg %p56
      %p227 = pneg %p80
      %p228 = pneg %p77
      %p229 = pneg %p101
      %p230 = pneg %p98
      %p231 = pneg %p122
      %p232 = pneg %p119
      %p233 = pneg %p143
      %p234 = pneg %p140
      %p235 = pneg %p169
      %p236 = pneg %p166
      %p237 = scmp.lt.s32.totalorder %s17, 1
      %s238 = scalar_select %p237, %s17, 1
      %s239 = smul.addr %s238, 4
      %s240 = scalar_lea.vmem %s6, %s239
      %p241 = scmp.lt.s32.totalorder %s17, 1
      %s242 = scalar_select %p241, %s17, 1
      %s243 = smul.addr %s242, 3
      %s244 = smul.addr %s243, 4
      %s245 = scalar_lea.vmem %s0, %s244
      %p246 = scmp.lt.s32.totalorder %s17, 1
      %s247 = scalar_select %p246, %s17, 1
      %s248 = smul.addr %s247, 4
      %s249 = scalar_lea.vmem %s6, %s248
      %v251 = vld [vmem:[%s245] sm:$0xf]
      %v252 = vld [vmem:[%s1] sm:$0xf]
      %v253 = vld [vmem:[%s1 + $0x4] sm:$0xf]
      %v254 = vld [vmem:[%s1 + $0x8] sm:$0xf]
      %v255 = vld [vmem:[%s1 + $0xc] sm:$0xf]
      %v256 = vld [vmem:[%s245 + $0x4] sm:$0x1]
      %s257 = scalar_lea.vmem %s1, 16
      %v258 = vld [vmem:[%s257] sm:$0xf]
      %v259 = vld [vmem:[%s257 + $0x4] sm:$0xf]
      %v260 = vld [vmem:[%s257 + $0x8] sm:$0xf]
      %v261 = vld [vmem:[%s257 + $0xc] sm:$0xf]
      %v264 = vunpack.c.l.b16 %v251
      %v265 = vunpack.c.l.b16 %v256
      %v266 = vpack.c.b16 %v265, %v264
      %v268 = vshrl.u32 %v266, 16
      %v270 = vshll.u32 %v266, 16
      %v272 = vrot.slane %v270, 1
      %v273 = vor.u32 %v268, %v272
      %v278 = vunpack.c.l.b16 %v258
      %v279 = vunpack.c.l.b16 %v259
      %v280 = vunpack.c.l.b16 %v260
      %v281 = vunpack.c.l.b16 %v261
      %v282 = vpack.c.b16 %v279, %v278
      %v283 = vpack.c.b16 %v281, %v280
      %vm286 = vcmask 261120
      %v288 = vsel %vm286, %v273, 0
      %290 = vmatpush.bf16.msra.mxu0 0
      %291 = vmatpush.bf16.msra.mxu0 0
      %292 = vmatpush.bf16.msra.mxu0 0
      %293 = vmatpush.bf16.msra.mxu0 0
      %294 = vmatpush.bf16.msra.mxu0 0
      %295 = vmatpush.bf16.msra.mxu0 0
      %296 = vmatpush.bf16.msra.mxu0 %v283
      %297 = vmatpush.bf16.msra.mxu0 %v282
      %298 = vmatmul.bf16.gmra.mxu0 %v288
      %v299 = vpop.f32.mrf.mxu0
      %v300 = vadd.f32 0.0, %v299
      %v301 = vpop.f32.mrf.mxu0
      %302 = vdwg.mxu0
      %v307 = vunpack.c.l.b16 %v252
      %v308 = vunpack.c.l.b16 %v253
      %v309 = vunpack.c.l.b16 %v254
      %v310 = vunpack.c.l.b16 %v255
      %v311 = vpack.c.b16 %v308, %v307
      %v312 = vpack.c.b16 %v310, %v309
      %v316 = vsel %vm286, %v251, 0
      %318 = vmatpush.bf16.msra.mxu0 0
      %319 = vmatpush.bf16.msra.mxu0 0
      %320 = vmatpush.bf16.msra.mxu0 0
      %321 = vmatpush.bf16.msra.mxu0 0
      %322 = vmatpush.bf16.msra.mxu0 0
      %323 = vmatpush.bf16.msra.mxu0 0
      %324 = vmatpush.bf16.msra.mxu0 %v312
      %325 = vmatpush.bf16.msra.mxu0 %v311
      %326 = vmatmul.bf16.gmra.mxu0 %v316
      %v327 = vpop.f32.mrf.mxu0
      %v328 = vadd.f32 %v300, %v327
      %v329 = vpop.f32.mrf.mxu0
      %330 = vdwg.mxu0
      %v331 = vld [vmem:[%s245] sm:$0xe]
      %s332 = scalar_lea.vmem %s1, 32
      %v333 = vld [vmem:[%s332] sm:$0xf]
      %v334 = vld [vmem:[%s332 + $0x4] sm:$0xf]
      %v335 = vld [vmem:[%s332 + $0x8] sm:$0xf]
      %v336 = vld [vmem:[%s332 + $0xc] sm:$0xf]
      %v338 = vunpack.c.l.b16 %v331
      %v339 = vpack.c.b16 %v265, %v338
      %v340 = vrot.slane %v339, 1
      %v345 = vunpack.c.l.b16 %v333
      %v346 = vunpack.c.l.b16 %v334
      %v347 = vunpack.c.l.b16 %v335
      %v348 = vunpack.c.l.b16 %v336
      %v349 = vpack.c.b16 %v346, %v345
      %v350 = vpack.c.b16 %v348, %v347
      %v354 = vsel %vm286, %v340, 0
      %356 = vmatpush.bf16.msra.mxu0 0
      %357 = vmatpush.bf16.msra.mxu0 0
      %358 = vmatpush.bf16.msra.mxu0 0
      %359 = vmatpush.bf16.msra.mxu0 0
      %360 = vmatpush.bf16.msra.mxu0 0
      %361 = vmatpush.bf16.msra.mxu0 0
      %362 = vmatpush.bf16.msra.mxu0 %v350
      %363 = vmatpush.bf16.msra.mxu0 %v349
      %364 = vmatmul.bf16.gmra.mxu0 %v354
      %v365 = vpop.f32.mrf.mxu0
      %v366 = vadd.f32 0.0, %v365
      %v367 = vpop.f32.mrf.mxu0
      %368 = vdwg.mxu0
      %v369 = vadd.f32 %v328, %v366
      %v370 = vld [vmem:[%s245] sm:$0xc]
      %v371 = vld [vmem:[%s245 + $0x4] sm:$0x3]
      %s372 = scalar_lea.vmem %s1, 48
      %v373 = vld [vmem:[%s372] sm:$0xf]
      %v374 = vld [vmem:[%s372 + $0x4] sm:$0xf]
      %v375 = vld [vmem:[%s372 + $0x8] sm:$0xf]
      %v376 = vld [vmem:[%s372 + $0xc] sm:$0xf]
      %v379 = vunpack.c.l.b16 %v370
      %v380 = vunpack.c.l.b16 %v371
      %v381 = vpack.c.b16 %v380, %v379
      %v382 = vrot.slane %v381, 2
      %v387 = vunpack.c.l.b16 %v373
      %v388 = vunpack.c.l.b16 %v374
      %v389 = vunpack.c.l.b16 %v375
      %v390 = vunpack.c.l.b16 %v376
      %v391 = vpack.c.b16 %v388, %v387
      %v392 = vpack.c.b16 %v390, %v389
      %v396 = vsel %vm286, %v382, 0
      %398 = vmatpush.bf16.msra.mxu0 0
      %399 = vmatpush.bf16.msra.mxu0 0
      %400 = vmatpush.bf16.msra.mxu0 0
      %401 = vmatpush.bf16.msra.mxu0 0
      %402 = vmatpush.bf16.msra.mxu0 0
      %403 = vmatpush.bf16.msra.mxu0 0
      %404 = vmatpush.bf16.msra.mxu0 %v392
      %405 = vmatpush.bf16.msra.mxu0 %v391
      %406 = vmatmul.bf16.gmra.mxu0 %v396
      %v407 = vpop.f32.mrf.mxu0
      %v408 = vadd.f32 0.0, %v407
      %v409 = vpop.f32.mrf.mxu0
      %410 = vdwg.mxu0
      %v411 = vadd.f32 %v369, %v408
      %v412 = vld [vmem:[%s245 + $0x4] sm:$0x7]
      %s413 = scalar_lea.vmem %s1, 64
      %v414 = vld [vmem:[%s413] sm:$0xf]
      %v415 = vld [vmem:[%s413 + $0x4] sm:$0xf]
      %v416 = vld [vmem:[%s413 + $0x8] sm:$0xf]
      %v417 = vld [vmem:[%s413 + $0xc] sm:$0xf]
      %v419 = vunpack.c.l.b16 %v412
      %v420 = vpack.c.b16 %v419, %v379
      %v422 = vshrl.u32 %v420, 16
      %v424 = vrot.slane %v422, 2
      %v425 = vshll.u32 %v420, 16
      %v427 = vrot.slane %v425, 3
      %v428 = vor.u32 %v424, %v427
      %v433 = vunpack.c.l.b16 %v414
      %v434 = vunpack.c.l.b16 %v415
      %v435 = vunpack.c.l.b16 %v416
      %v436 = vunpack.c.l.b16 %v417
      %v437 = vpack.c.b16 %v434, %v433
      %v438 = vpack.c.b16 %v436, %v435
      %v442 = vsel %vm286, %v428, 0
      %444 = vmatpush.bf16.msra.mxu0 0
      %445 = vmatpush.bf16.msra.mxu0 0
      %446 = vmatpush.bf16.msra.mxu0 0
      %447 = vmatpush.bf16.msra.mxu0 0
      %448 = vmatpush.bf16.msra.mxu0 0
      %449 = vmatpush.bf16.msra.mxu0 0
      %450 = vmatpush.bf16.msra.mxu0 %v438
      %451 = vmatpush.bf16.msra.mxu0 %v437
      %452 = vmatmul.bf16.gmra.mxu0 %v442
      %v453 = vpop.f32.mrf.mxu0
      %v454 = vadd.f32 0.0, %v453
      %v455 = vpop.f32.mrf.mxu0
      %456 = vdwg.mxu0
      %v457 = vadd.f32 %v411, %v454
      %v458 = vld [vmem:[%s245] sm:$0x8]
      %s459 = scalar_lea.vmem %s1, 80
      %v460 = vld [vmem:[%s459] sm:$0xf]
      %v461 = vld [vmem:[%s459 + $0x4] sm:$0xf]
      %v462 = vld [vmem:[%s459 + $0x8] sm:$0xf]
      %v463 = vld [vmem:[%s459 + $0xc] sm:$0xf]
      %v465 = vunpack.c.l.b16 %v458
      %v466 = vpack.c.b16 %v419, %v465
      %v467 = vrot.slane %v466, 3
      %v472 = vunpack.c.l.b16 %v460
      %v473 = vunpack.c.l.b16 %v461
      %v474 = vunpack.c.l.b16 %v462
      %v475 = vunpack.c.l.b16 %v463
      %v476 = vpack.c.b16 %v473, %v472
      %v477 = vpack.c.b16 %v475, %v474
      %v481 = vsel %vm286, %v467, 0
      %483 = vmatpush.bf16.msra.mxu0 0
      %484 = vmatpush.bf16.msra.mxu0 0
      %485 = vmatpush.bf16.msra.mxu0 0
      %486 = vmatpush.bf16.msra.mxu0 0
      %487 = vmatpush.bf16.msra.mxu0 0
      %488 = vmatpush.bf16.msra.mxu0 0
      %489 = vmatpush.bf16.msra.mxu0 %v477
      %490 = vmatpush.bf16.msra.mxu0 %v476
      %491 = vmatmul.bf16.gmra.mxu0 %v481
      %v492 = vpop.f32.mrf.mxu0
      %v493 = vadd.f32 0.0, %v492
      %v494 = vpop.f32.mrf.mxu0
      %495 = vdwg.mxu0
      %v496 = vadd.f32 %v457, %v493
      %v497 = vld [vmem:[%s245 + $0x4] sm:$0xf]
      %s498 = scalar_lea.vmem %s1, 96
      %v499 = vld [vmem:[%s498] sm:$0xf]
      %v500 = vld [vmem:[%s498 + $0x4] sm:$0xf]
      %v501 = vld [vmem:[%s498 + $0x8] sm:$0xf]
      %v502 = vld [vmem:[%s498 + $0xc] sm:$0xf]
      %v507 = vunpack.c.l.b16 %v499
      %v508 = vunpack.c.l.b16 %v500
      %v509 = vunpack.c.l.b16 %v501
      %v510 = vunpack.c.l.b16 %v502
      %v511 = vpack.c.b16 %v508, %v507
      %v512 = vpack.c.b16 %v510, %v509
      %v516 = vsel %vm286, %v497, 0
      %518 = vmatpush.bf16.msra.mxu0 0
      %519 = vmatpush.bf16.msra.mxu0 0
      %520 = vmatpush.bf16.msra.mxu0 0
      %521 = vmatpush.bf16.msra.mxu0 0
      %522 = vmatpush.bf16.msra.mxu0 0
      %523 = vmatpush.bf16.msra.mxu0 0
      %524 = vmatpush.bf16.msra.mxu0 %v512
      %525 = vmatpush.bf16.msra.mxu0 %v511
      %526 = vmatmul.bf16.gmra.mxu0 %v516
      %v527 = vpop.f32.mrf.mxu0
      %v528 = vadd.f32 0.0, %v527
      %v529 = vpop.f32.mrf.mxu0
      %530 = vdwg.mxu0
      %v531 = vadd.f32 %v496, %v528
      %v532 = vld [vmem:[%s245 + $0x4] sm:$0xf]
      %v533 = vld [vmem:[%s245 + $0x8] sm:$0x1]
      %s534 = scalar_lea.vmem %s1, 112
      %v535 = vld [vmem:[%s534] sm:$0xf]
      %v536 = vld [vmem:[%s534 + $0x4] sm:$0xf]
      %v537 = vld [vmem:[%s534 + $0x8] sm:$0xf]
      %v538 = vld [vmem:[%s534 + $0xc] sm:$0xf]
      %v541 = vunpack.c.l.b16 %v532
      %v542 = vunpack.c.l.b16 %v533
      %v543 = vpack.c.b16 %v542, %v541
      %v545 = vshrl.u32 %v543, 16
      %v547 = vshll.u32 %v543, 16
      %v549 = vrot.slane %v547, 1
      %v550 = vor.u32 %v545, %v549
      %v555 = vunpack.c.l.b16 %v535
      %v556 = vunpack.c.l.b16 %v536
      %v557 = vunpack.c.l.b16 %v537
      %v558 = vunpack.c.l.b16 %v538
      %v559 = vpack.c.b16 %v556, %v555
      %v560 = vpack.c.b16 %v558, %v557
      %v564 = vsel %vm286, %v550, 0
      %566 = vmatpush.bf16.msra.mxu0 0
      %567 = vmatpush.bf16.msra.mxu0 0
      %568 = vmatpush.bf16.msra.mxu0 0
      %569 = vmatpush.bf16.msra.mxu0 0
      %570 = vmatpush.bf16.msra.mxu0 0
      %571 = vmatpush.bf16.msra.mxu0 0
      %572 = vmatpush.bf16.msra.mxu0 %v560
      %573 = vmatpush.bf16.msra.mxu0 %v559
      %574 = vmatmul.bf16.gmra.mxu0 %v564
      %v575 = vpop.f32.mrf.mxu0
      %v576 = vadd.f32 0.0, %v575
      %v577 = vpop.f32.mrf.mxu0
      %578 = vdwg.mxu0
      %v579 = vadd.f32 %v531, %v576
      %v580 = vld [vmem:[%s245 + $0x4] sm:$0xe]
      %s581 = scalar_lea.vmem %s1, 128
      %v582 = vld [vmem:[%s581] sm:$0xf]
      %v583 = vld [vmem:[%s581 + $0x4] sm:$0xf]
      %v584 = vld [vmem:[%s581 + $0x8] sm:$0xf]
      %v585 = vld [vmem:[%s581 + $0xc] sm:$0xf]
      %v587 = vunpack.c.l.b16 %v580
      %v588 = vpack.c.b16 %v542, %v587
      %v589 = vrot.slane %v588, 1
      %v594 = vunpack.c.l.b16 %v582
      %v595 = vunpack.c.l.b16 %v583
      %v596 = vunpack.c.l.b16 %v584
      %v597 = vunpack.c.l.b16 %v585
      %v598 = vpack.c.b16 %v595, %v594
      %v599 = vpack.c.b16 %v597, %v596
      %v603 = vsel %vm286, %v589, 0
      %605 = vmatpush.bf16.msra.mxu0 0
      %606 = vmatpush.bf16.msra.mxu0 0
      %607 = vmatpush.bf16.msra.mxu0 0
      %608 = vmatpush.bf16.msra.mxu0 0
      %609 = vmatpush.bf16.msra.mxu0 0
      %610 = vmatpush.bf16.msra.mxu0 0
      %611 = vmatpush.bf16.msra.mxu0 %v599
      %612 = vmatpush.bf16.msra.mxu0 %v598
      %613 = vmatmul.bf16.gmra.mxu0 %v603
      %v614 = vpop.f32.mrf.mxu0
      %v615 = vadd.f32 0.0, %v614
      %v616 = vpop.f32.mrf.mxu0
      %617 = vdwg.mxu0
      %v618 = vadd.f32 %v579, %v615
      %v619 = vpack.c.bf16 %v618, %v618
      %620 = vst [vmem:[%s249] sm:$0xf] %v619
      %p621 = scmp.lt.s32.totalorder %s17, 1
      %s622 = scalar_select %p621, %s17, 1
      %s623 = smul.addr %s622, 4
      %s624 = scalar_lea.vmem %s6, %s623
      // Predicated region
      $region45: #{_lambda_.22} parent=43 // pred_check
        %p625 = pneg %p166
      $region46: #{_lambda_.22} parent=43 // pred_check_branch
        %627 = sbr.rel (%p625) target = $region48
      $region47: #{_lambda_.22} parent=43 // pred_region
        _
      $region48: #{_lambda_.22} parent=43 // pred_fallthru
        _
    $region44: #{_lambda_.22} parent=5 // pred_fallthru
      _
    %p628 = scmp.le.s32.totalorder 2, %s12
    // Predicated region
    $region49: #{_lambda_.22} parent=5 // pred_check
      %p629 = pneg %p628
    $region50: #{_lambda_.22} parent=5 // pred_check_branch
      %631 = sbr.rel (%p629) target = $region52
    $region51: #{_lambda_.22} parent=5 // pred_region
      %s632 = ssub.s32 %s12, 2
      // Predicated region
      $region53: #{_lambda_.22} parent=51 // pred_check
        %p633 = pneg %p172
      $region54: #{_lambda_.22} parent=51 // pred_check_branch
        %635 = sbr.rel (%p633) target = $region56
      $region55: #{_lambda_.22} parent=51 // pred_region
        %p636 = scmp.lt.s32.totalorder %s18, 1
        %s637 = scalar_select %p636, %s18, 1
        %s638 = smul.addr %s637, 4
        %s639 = scalar_lea.vmem %s6, %s638
      $region56: #{_lambda_.22} parent=51 // pred_fallthru
        _
    $region52: #{_lambda_.22} parent=5 // pred_fallthru
      _
  $region6: #{_lambda_.22} parent=0 // loop_footer
    %s16 = sadd.s32 1, %s12
  $region7: #{_lambda_.22} parent=0 // loop_footer_branch
    %11 = sbr.rel target = $region3
  $region8: #{_lambda_.22} parent=0 // loop_exit
    _

// kernel: _lambda_.25
$region0: #{_lambda_.25}
  #allocation0 [shape = 'u32[]', space=smem, size = 0x4, offset = 0x4, fixed_abs, tag = 'smem constant byte address 0x4 - core index']
  #allocation1 [shape = 'u32[72,128]{1,0:T(1,128)}', space=vmem, size = 0x9000, scoped, tag = 'internal scratch']
  #allocation2 [shape = 'f32[2,32]{1,0:T(2,128)}', space=vmem, size = 0x400, scoped, tag = 'scratch operand']
  %s0 = inlined_call_operand.vmem [shape: bf16[2,4,32], index: 0, kind: input, shape index: {}]
  %s1 = inlined_call_operand.vmem [shape: f32[1,32], index: 1, kind: input, shape index: {}]
  %s2 = inlined_call_operand.vmem [shape: f32[1,32], index: 2, kind: input, shape index: {}]
  %s3 = inlined_call_operand.hbm [shape: f32[2,32], index: 3, kind: output, shape index: {}]
  %s4 = sld [smem:[#allocation0]]
  $region30: #{_lambda_.25} parent=0
    _
  %s6 = ssub.s32 1, %s4
  %s7 = scalar_select 0, %s6, %s4
  $region1: #{_lambda_.25} parent=0
    #allocation3 [shape = 'u8[1024]{0}', space=vmem, size = 0x400, scoped, tag = 'output window, operand 0, single buffered']
    #allocation4 [shape = 's32[1]{0}', space=sflag, size = 0x4, scoped, tag = 'scoped memory for _lambda_.25']
    %8 = vsyncpa [#allocation4], 0
    // Predicated region
    $region2: #{_lambda_.25} parent=1 // pred_check
      _
    $region3: #{_lambda_.25} parent=1 // pred_check_branch
      %10 = sbr.rel (0) target = $region5
    $region4: #{_lambda_.25} parent=1 // pred_region
      _
    $region5: #{_lambda_.25} parent=1 // pred_fallthru
      _
    // Predicated region
    $region6: #{_lambda_.25} parent=1 // pred_check
      _
    $region7: #{_lambda_.25} parent=1 // pred_check_branch
      %12 = sbr.rel (0) target = $region9
    $region8: #{_lambda_.25} parent=1 // pred_region
      _
    $region9: #{_lambda_.25} parent=1 // pred_fallthru
      _
    // Predicated region
    $region10: #{_lambda_.25} parent=1 // pred_check
      _
    $region11: #{_lambda_.25} parent=1 // pred_check_branch
      %14 = sbr.rel (0) target = $region13
    $region12: #{_lambda_.25} parent=1 // pred_region
      _
    $region13: #{_lambda_.25} parent=1 // pred_fallthru
      _
    %p15 = scmp.eq.s32.totalorder 0, 0
    // Predicated region
    $region14: #{_lambda_.25} parent=1 // pred_check
      %p16 = pneg %p15
    $region15: #{_lambda_.25} parent=1 // pred_check_branch
      %18 = sbr.rel (%p16) target = $region17
    $region16: #{_lambda_.25} parent=1 // pred_region
      %vm19 = vcmask 254976
      %20 = vst.msk [vmem:[#allocation2] sm:$0x3] %vm19, 0.0
    $region17: #{_lambda_.25} parent=1 // pred_fallthru
      _
    %v21 = vld [vmem:[#allocation2] sm:$0x3]
    %v22 = vld [vmem:[%s0] sm:$0x3]
    %v23 = vld [vmem:[%s0 + $0x2] sm:$0x3]
    %v24 = vunpack.c.l.bf16 %v22
    %v25 = vunpack.c.l.bf16 %v23
    %vm26 = vcmask 257024
    %v27 = vsel %vm26, %v24, 0.0
    %v28 = vrot.slane %v27, 4
    %v29 = vadd.f32 %v27, %v28
    %v30 = vrot.slane %v29, 2
    %v31 = vadd.f32 %v29, %v30
    %v32 = vrot.slane %v31, 1
    %v33 = vadd.f32 %v31, %v32
    %v34 = vsel %vm26, %v25, 0.0
    %v35 = vrot.slane %v34, 4
    %v36 = vadd.f32 %v34, %v35
    %v37 = vrot.slane %v36, 2
    %v38 = vadd.f32 %v36, %v37
    %v39 = vrot.slane %v38, 1
    %v40 = vadd.f32 %v38, %v39
    %vm43 = vcmask 1041409
    %v44 = vsel %vm43, %v40, %v33
    %v46 = vadd.f32 %v21, %v44
    %vm47 = vcmask 254976
    %48 = vst.msk [vmem:[#allocation2] sm:$0x3] %vm47, %v46
    // Predicated region
    $region18: #{_lambda_.25} parent=1 // pred_check
      %p49 = pneg %p15
    $region19: #{_lambda_.25} parent=1 // pred_check_branch
      %51 = sbr.rel (%p49) target = $region21
    $region20: #{_lambda_.25} parent=1 // pred_region
      %v52 = vld [vmem:[#allocation2] sm:$0x3]
      %v53 = vmul.f32 %v52, 0.25
      %v54 = vld [vmem:[%s1] sm:$0x1]
      %v56 = vperm.slane %v54, 0
      %v58 = vmul.f32 %v53, %v56
      %v59 = vld [vmem:[%s2] sm:$0x1]
      %v61 = vperm.slane %v59, 0
      %v63 = vadd.f32 %v58, %v61
      %64 = vst.msk [vmem:[#allocation3] sm:$0x3] %vm47, %v63
    $region21: #{_lambda_.25} parent=1 // pred_fallthru
      _
    // Predicated region
    $region22: #{_lambda_.25} parent=1 // pred_check
      _
    $region23: #{_lambda_.25} parent=1 // pred_check_branch
      %66 = sbr.rel (0) target = $region25
    $region24: #{_lambda_.25} parent=1 // pred_region
      %68 = vsyncadd [#allocation4], 0
      %s70 = sshll.u32 [#allocation3], 4
      %s71 = int_to_ptr.vmem [resolvable:$true] %s70
      %s72 = sshll.u32 %s3, 4
      %s73 = int_to_ptr.hbm [resolvable:$true] %s72
      %75 = dma.vmem_to_hbm [thread:$0]  %s71, 32, %s73, [#allocation4]
    $region25: #{_lambda_.25} parent=1 // pred_fallthru
      _
    // Predicated region
    $region26: #{_lambda_.25} parent=1 // pred_check
      _
    $region27: #{_lambda_.25} parent=1 // pred_check_branch
      %77 = sbr.rel (0) target = $region29
    $region28: #{_lambda_.25} parent=1 // pred_region
      %79 = dma.done [#allocation4], 32
    $region29: #{_lambda_.25} parent=1 // pred_fallthru
      _
    %80 = vsyncpa [#allocation4], 1

// kernel: _lambda_.13
$region0: #{_lambda_.13}
  #allocation0 [shape = 'u32[]', space=smem, size = 0x4, offset = 0x4, fixed_abs, tag = 'smem constant byte address 0x4 - core index']
  #allocation1 [shape = 'u32[72,128]{1,0:T(1,128)}', space=vmem, size = 0x9000, scoped, tag = 'internal scratch']
  %s0 = inlined_call_operand.vmem [shape: bf16[2,4,132,4], index: 0, kind: input, shape index: {}]
  %s1 = inlined_call_operand.vmem [shape: bf16[49,4,128], index: 1, kind: input, shape index: {}]
  %s2 = inlined_call_operand.vmem [shape: f32[1,4], index: 2, kind: input, shape index: {}]
  %s3 = inlined_call_operand.vmem [shape: f32[1,4], index: 3, kind: input, shape index: {}]
  %s4 = inlined_call_operand.vmem [shape: f32[1,128], index: 4, kind: input, shape index: {}]
  %s5 = inlined_call_operand.vmem [shape: f32[1,128], index: 5, kind: input, shape index: {}]
  %s6 = inlined_call_operand.vmem [shape: bf16[2,88,128], index: 6, kind: output, shape index: {}]
  %s7 = sld [smem:[#allocation0]]
  $region57: #{_lambda_.13} parent=0
    _
  %s9 = ssub.s32 1, %s7
  %s10 = scalar_select 0, %s9, %s7
  loop: start=0, step=1, limit=4
  $region2: #{_lambda_.13} parent=0 // loop_pre_header
    _
  $region3: #{_lambda_.13} parent=0 // loop_header
    %s12 = sphi 0, %s16
    %p13 = scmp.ge.s32.totalorder %s12, 4
    %s22 = sphi 0, %s24
    %s25 = sphi 0, %s22
    %s26 = sphi 0, %s25
    %s42 = sphi 0, %s26
    %s46 = sphi 0, %s46
    %s48 = sphi 0, %s46
    %s49 = sphi 0, %s48
    %s63 = sphi 0, %s49
    %s67 = sphi 0, %s67
    %s69 = sphi 0, %s67
    %s70 = sphi 0, %s69
    %s84 = sphi 0, %s70
    %s88 = sphi 0, %s88
    %s90 = sphi 0, %s88
    %s91 = sphi 0, %s90
    %s105 = sphi 0, %s91
    %s109 = sphi 0, %s109
    %s111 = sphi 0, %s109
    %s112 = sphi 0, %s111
    %s126 = sphi 0, %s112
    %s130 = sphi 0, %s130
    %s132 = sphi 0, %s130
    %s133 = sphi 0, %s132
    %s147 = sphi 0, %s133
    %s153 = sphi 0, %s155
    %s156 = sphi 0, %s153
    %s157 = sphi 0, %s156
    %s173 = sphi 0, %s157
  $region4: #{_lambda_.13} parent=0 // loop_header_branch
    %15 = sbr.rel (%p13) target = $region8
  $region5: #{_lambda_.13} parent=0 // loop_body
    %s17 = ssub.s32 %s12, 1
    %s18 = ssub.s32 %s12, 2
    %s19 = sadd.s32 %s12, 1
    %s20 = ssub.s32 %s12, %s19
    %p21 = scmp.eq.s32.totalorder %s20, 0
    %s23 = sadd.s32 %s22, 1
    %s24 = scalar_select %p21, %s22, %s23
    %p27 = pneg %p21
    %p28 = scmp.eq.s32.totalorder %s12, 1
    %p29 = por %p27, %p28
    %p30 = scmp.ne.s32.totalorder %s22, %s25
    %p31 = scmp.eq.s32.totalorder %s12, 0
    %p32 = por %p30, %p31
    %p33 = scmp.ne.s32.totalorder %s22, %s25
    %p34 = scmp.eq.s32.totalorder %s17, 1
    %p35 = por %p33, %p34
    %p36 = scmp.ne.s32.totalorder %s25, %s26
    %p37 = scmp.eq.s32.totalorder %s17, 0
    %p38 = por %p36, %p37
    %p39 = scmp.ne.s32.totalorder %s25, %s26
    %p40 = scmp.eq.s32.totalorder %s18, 1
    %p41 = por %p39, %p40
    %p43 = scmp.ne.s32.totalorder %s26, %s42
    %p44 = scmp.eq.s32.totalorder %s18, 0
    %p45 = por %p43, %p44
    %s47 = sadd.s32 %s46, 1
    %p50 = scmp.eq.s32.totalorder %s12, 1
    %p51 = scmp.ne.s32.totalorder %s46, %s48
    %p52 = scmp.eq.s32.totalorder %s12, 0
    %p53 = por %p51, %p52
    %p54 = scmp.ne.s32.totalorder %s46, %s48
    %p55 = scmp.eq.s32.totalorder %s17, 1
    %p56 = por %p54, %p55
    %p57 = scmp.ne.s32.totalorder %s48, %s49
    %p58 = scmp.eq.s32.totalorder %s17, 0
    %p59 = por %p57, %p58
    %p60 = scmp.ne.s32.totalorder %s48, %s49
    %p61 = scmp.eq.s32.totalorder %s18, 1
    %p62 = por %p60, %p61
    %p64 = scmp.ne.s32.totalorder %s49, %s63
    %p65 = scmp.eq.s32.totalorder %s18, 0
    %p66 = por %p64, %p65
    %s68 = sadd.s32 %s67, 1
    %p71 = scmp.eq.s32.totalorder %s12, 1
    %p72 = scmp.ne.s32.totalorder %s67, %s69
    %p73 = scmp.eq.s32.totalorder %s12, 0
    %p74 = por %p72, %p73
    %p75 = scmp.ne.s32.totalorder %s67, %s69
    %p76 = scmp.eq.s32.totalorder %s17, 1
    %p77 = por %p75, %p76
    %p78 = scmp.ne.s32.totalorder %s69, %s70
    %p79 = scmp.eq.s32.totalorder %s17, 0
    %p80 = por %p78, %p79
    %p81 = scmp.ne.s32.totalorder %s69, %s70
    %p82 = scmp.eq.s32.totalorder %s18, 1
    %p83 = por %p81, %p82
    %p85 = scmp.ne.s32.totalorder %s70, %s84
    %p86 = scmp.eq.s32.totalorder %s18, 0
    %p87 = por %p85, %p86
    %s89 = sadd.s32 %s88, 1
    %p92 = scmp.eq.s32.totalorder %s12, 1
    %p93 = scmp.ne.s32.totalorder %s88, %s90
    %p94 = scmp.eq.s32.totalorder %s12, 0
    %p95 = por %p93, %p94
    %p96 = scmp.ne.s32.totalorder %s88, %s90
    %p97 = scmp.eq.s32.totalorder %s17, 1
    %p98 = por %p96, %p97
    %p99 = scmp.ne.s32.totalorder %s90, %s91
    %p100 = scmp.eq.s32.totalorder %s17, 0
    %p101 = por %p99, %p100
    %p102 = scmp.ne.s32.totalorder %s90, %s91
    %p103 = scmp.eq.s32.totalorder %s18, 1
    %p104 = por %p102, %p103
    %p106 = scmp.ne.s32.totalorder %s91, %s105
    %p107 = scmp.eq.s32.totalorder %s18, 0
    %p108 = por %p106, %p107
    %s110 = sadd.s32 %s109, 1
    %p113 = scmp.eq.s32.totalorder %s12, 1
    %p114 = scmp.ne.s32.totalorder %s109, %s111
    %p115 = scmp.eq.s32.totalorder %s12, 0
    %p116 = por %p114, %p115
    %p117 = scmp.ne.s32.totalorder %s109, %s111
    %p118 = scmp.eq.s32.totalorder %s17, 1
    %p119 = por %p117, %p118
    %p120 = scmp.ne.s32.totalorder %s111, %s112
    %p121 = scmp.eq.s32.totalorder %s17, 0
    %p122 = por %p120, %p121
    %p123 = scmp.ne.s32.totalorder %s111, %s112
    %p124 = scmp.eq.s32.totalorder %s18, 1
    %p125 = por %p123, %p124
    %p127 = scmp.ne.s32.totalorder %s112, %s126
    %p128 = scmp.eq.s32.totalorder %s18, 0
    %p129 = por %p127, %p128
    %s131 = sadd.s32 %s130, 1
    %p134 = scmp.eq.s32.totalorder %s12, 1
    %p135 = scmp.ne.s32.totalorder %s130, %s132
    %p136 = scmp.eq.s32.totalorder %s12, 0
    %p137 = por %p135, %p136
    %p138 = scmp.ne.s32.totalorder %s130, %s132
    %p139 = scmp.eq.s32.totalorder %s17, 1
    %p140 = por %p138, %p139
    %p141 = scmp.ne.s32.totalorder %s132, %s133
    %p142 = scmp.eq.s32.totalorder %s17, 0
    %p143 = por %p141, %p142
    %p144 = scmp.ne.s32.totalorder %s132, %s133
    %p145 = scmp.eq.s32.totalorder %s18, 1
    %p146 = por %p144, %p145
    %p148 = scmp.ne.s32.totalorder %s133, %s147
    %p149 = scmp.eq.s32.totalorder %s18, 0
    %p150 = por %p148, %p149
    %s151 = ssub.s32 %s12, %s19
    %p152 = scmp.eq.s32.totalorder %s151, 0
    %s154 = sadd.s32 %s153, 1
    %s155 = scalar_select %p152, %s153, %s154
    %p158 = pneg %p152
    %p159 = scmp.eq.s32.totalorder %s12, 1
    %p160 = por %p158, %p159
    %p161 = scmp.ne.s32.totalorder %s153, %s156
    %p162 = scmp.eq.s32.totalorder %s12, 0
    %p163 = por %p161, %p162
    %p164 = scmp.ne.s32.totalorder %s153, %s156
    %p165 = scmp.eq.s32.totalorder %s17, 1
    %p166 = por %p164, %p165
    %p167 = scmp.ne.s32.totalorder %s156, %s157
    %p168 = scmp.eq.s32.totalorder %s17, 0
    %p169 = por %p167, %p168
    %p170 = scmp.ne.s32.totalorder %s156, %s157
    %p171 = scmp.eq.s32.totalorder %s18, 1
    %p172 = por %p170, %p171
    %p174 = scmp.ne.s32.totalorder %s157, %s173
    %p175 = scmp.eq.s32.totalorder %s18, 0
    %p176 = por %p174, %p175
    %p177 = scmp.le.s32.totalorder 1, %s12
    %p178 = scmp.lt.s32.totalorder %s12, 3
    %p179 = pnand %p177, %p178
    %p180 = pneg %p179
    // Predicated region
    $region9: #{_lambda_.13} parent=5 // pred_check
      _
    $region10: #{_lambda_.13} parent=5 // pred_check_branch
      %182 = sbr.rel (%p179) target = $region12
    $region11: #{_lambda_.13} parent=5 // pred_region
      %s183 = ssub.s32 %s12, 1
      // Predicated region
      $region13: #{_lambda_.13} parent=11 // pred_check
        %p184 = pneg %p59
      $region14: #{_lambda_.13} parent=11 // pred_check_branch
        %186 = sbr.rel (%p184) target = $region16
      $region15: #{_lambda_.13} parent=11 // pred_region
        _
      $region16: #{_lambda_.13} parent=11 // pred_fallthru
        _
      // Predicated region
      $region17: #{_lambda_.13} parent=11 // pred_check
        %p187 = pneg %p80
      $region18: #{_lambda_.13} parent=11 // pred_check_branch
        %189 = sbr.rel (%p187) target = $region20
      $region19: #{_lambda_.13} parent=11 // pred_region
        _
      $region20: #{_lambda_.13} parent=11 // pred_fallthru
        _
      // Predicated region
      $region21: #{_lambda_.13} parent=11 // pred_check
        %p190 = pneg %p101
      $region22: #{_lambda_.13} parent=11 // pred_check_branch
        %192 = sbr.rel (%p190) target = $region24
      $region23: #{_lambda_.13} parent=11 // pred_region
        _
      $region24: #{_lambda_.13} parent=11 // pred_fallthru
        _
      // Predicated region
      $region25: #{_lambda_.13} parent=11 // pred_check
        %p193 = pneg %p122
      $region26: #{_lambda_.13} parent=11 // pred_check_branch
        %195 = sbr.rel (%p193) target = $region28
      $region27: #{_lambda_.13} parent=11 // pred_region
        _
      $region28: #{_lambda_.13} parent=11 // pred_fallthru
        _
      // Predicated region
      $region29: #{_lambda_.13} parent=11 // pred_check
        %p196 = pneg %p143
      $region30: #{_lambda_.13} parent=11 // pred_check_branch
        %198 = sbr.rel (%p196) target = $region32
      $region31: #{_lambda_.13} parent=11 // pred_region
        _
      $region32: #{_lambda_.13} parent=11 // pred_fallthru
        _
    $region12: #{_lambda_.13} parent=5 // pred_fallthru
      _
    %p199 = scmp.lt.s32.totalorder %s12, 2
    // Predicated region
    $region33: #{_lambda_.13} parent=5 // pred_check
      %p200 = pneg %p199
    $region34: #{_lambda_.13} parent=5 // pred_check_branch
      %202 = sbr.rel (%p200) target = $region36
    $region35: #{_lambda_.13} parent=5 // pred_region
      // Predicated region
      $region37: #{_lambda_.13} parent=35 // pred_check
        %p203 = pneg %p32
      $region38: #{_lambda_.13} parent=35 // pred_check_branch
        %205 = sbr.rel (%p203) target = $region40
      $region39: #{_lambda_.13} parent=35 // pred_region
        %p206 = scmp.lt.s32.totalorder %s12, 1
        %s207 = scalar_select %p206, %s12, 1
        %s208 = smul.addr %s207, 68
        %s209 = smul.addr %s208, 4
        %s210 = scalar_lea.vmem %s0, %s209
      $region40: #{_lambda_.13} parent=35 // pred_fallthru
        _
    $region36: #{_lambda_.13} parent=5 // pred_fallthru
      _
    %p211 = scmp.le.s32.totalorder 1, %s12
    %p212 = scmp.lt.s32.totalorder %s12, 3
    %p213 = pnand %p211, %p212
    %p214 = pneg %p213
    // Predicated region
    $region41: #{_lambda_.13} parent=5 // pred_check
      _
    $region42: #{_lambda_.13} parent=5 // pred_check_branch
      %216 = sbr.rel (%p213) target = $region44
    $region43: #{_lambda_.13} parent=5 // pred_region
      %s217 = ssub.s32 %s12, 1
      %p218 = scmp.lt.s32.totalorder %s17, 1
      %s219 = scalar_select %p218, %s17, 1
      %s220 = smul.addr %s219, 68
      %s221 = smul.addr %s220, 4
      %s222 = scalar_lea.vmem %s0, %s221
      %p223 = pneg %p38
      %p224 = pneg %p35
      %p225 = pneg %p59
      %p226 = pneg %p56
      %p227 = pneg %p80
      %p228 = pneg %p77
      %p229 = pneg %p101
      %p230 = pneg %p98
      %p231 = pneg %p122
      %p232 = pneg %p119
      %p233 = pneg %p143
      %p234 = pneg %p140
      %p235 = pneg %p169
      %p236 = pneg %p166
      %p237 = scmp.lt.s32.totalorder %s17, 1
      %s238 = scalar_select %p237, %s17, 1
      %s239 = smul.addr %s238, 11
      %s240 = smul.addr %s239, 4
      %s241 = scalar_lea.vmem %s6, %s240
      %p242 = scmp.lt.s32.totalorder %s17, 1
      %s243 = scalar_select %p242, %s17, 1
      %s244 = smul.addr %s243, 68
      %s245 = smul.addr %s244, 4
      %s246 = scalar_lea.vmem %s0, %s245
      %p247 = scmp.lt.s32.totalorder %s17, 1
      %s248 = scalar_select %p247, %s17, 1
      %s249 = smul.addr %s248, 11
      %s250 = smul.addr %s249, 4
      %s251 = scalar_lea.vmem %s6, %s250
      %v253 = vld [vmem:[%s246] sm:$0xf]
      %v254 = vld [vmem:[%s246 + $0x4] sm:$0xf]
      %v255 = vld [vmem:[%s246 + $0x8] sm:$0xf]
      %v256 = vld [vmem:[%s246 + $0xc] sm:$0xf]
      %v257 = vld [vmem:[%s246 + $0x10] sm:$0xf]
      %v258 = vld [vmem:[%s246 + $0x14] sm:$0xf]
      %v259 = vld [vmem:[%s246 + $0x18] sm:$0xf]
      %v260 = vld [vmem:[%s246 + $0x1c] sm:$0xf]
      %v261 = vld [vmem:[%s246 + $0x20] sm:$0xf]
      %v262 = vld [vmem:[%s246 + $0x24] sm:$0xf]
      %v263 = vld [vmem:[%s246 + $0x28] sm:$0xf]
      %v264 = vld [vmem:[%s1] sm:$0x3]
      %s265 = scalar_lea.vmem %s246, 68
      %v266 = vld [vmem:[%s265] sm:$0xf]
      %v267 = vld [vmem:[%s265 + $0x4] sm:$0xf]
      %v268 = vld [vmem:[%s265 + $0x8] sm:$0xf]
      %v269 = vld [vmem:[%s265 + $0xc] sm:$0xf]
      %v270 = vld [vmem:[%s265 + $0x10] sm:$0xf]
      %v271 = vld [vmem:[%s265 + $0x14] sm:$0xf]
      %v272 = vld [vmem:[%s265 + $0x18] sm:$0xf]
      %v273 = vld [vmem:[%s265 + $0x1c] sm:$0xf]
      %v274 = vld [vmem:[%s265 + $0x20] sm:$0xf]
      %v275 = vld [vmem:[%s265 + $0x24] sm:$0xf]
      %v276 = vld [vmem:[%s265 + $0x28] sm:$0xf]
      %s277 = scalar_lea.vmem %s1, 2
      %v278 = vld [vmem:[%s277] sm:$0x3]
      %v290 = vunpack.c.l.b16 %v266
      %v291 = vunpack.c.l.b16 %v267
      %v292 = vunpack.c.l.b16 %v268
      %v293 = vunpack.c.l.b16 %v269
      %v294 = vunpack.c.l.b16 %v270
      %v295 = vunpack.c.l.b16 %v271
      %v296 = vunpack.c.l.b16 %v272
      %v297 = vunpack.c.l.b16 %v273
      %v298 = vunpack.c.l.b16 %v274
      %v299 = vunpack.c.l.b16 %v275
      %v300 = vunpack.c.l.b16 %v276
      %v301 = vpack.c.b16 %v291, %v290
      %v302 = vpack.c.b16 %v293, %v292
      %v303 = vpack.c.b16 %v295, %v294
      %v304 = vpack.c.b16 %v297, %v296
      %v305 = vpack.c.b16 %v299, %v298
      %v306 = vpack.c.b16 %v300, %v300
      %vm307 = vcmask 31744
      %v309 = vsel %vm307, %v301, 0
      %v312 = vsel %vm307, %v302, 0
      %v315 = vsel %vm307, %v303, 0
      %v318 = vsel %vm307, %v304, 0
      %v321 = vsel %vm307, %v305, 0
      %v324 = vsel %vm307, %v306, 0
      %vm326 = vcmask 1041408
      %v328 = vsel %vm326, %v278, 0
      %330 = vmatpush.bf16.msra.mxu0 0
      %331 = vmatpush.bf16.msra.mxu0 0
      %332 = vmatpush.bf16.msra.mxu0 0
      %333 = vmatpush.bf16.msra.mxu0 0
      %334 = vmatpush.bf16.msra.mxu0 0
      %335 = vmatpush.bf16.msra.mxu0 0
      %336 = vmatpush.bf16.msra.mxu0 0
      %337 = vmatpush.bf16.msra.mxu0 %v328
      %338 = vmatmul.bf16.gmra.mxu0 %v309
      %v339 = vpop.f32.mrf.mxu0
      %v340 = vadd.f32 0.0, %v339
      %v341 = vpop.f32.mrf.mxu0
      %v342 = vadd.f32 0.0, %v341
      %343 = vmatmul.bf16.gmra.mxu0 %v312
      %v344 = vpop.f32.mrf.mxu0
      %v345 = vadd.f32 0.0, %v344
      %v346 = vpop.f32.mrf.mxu0
      %v347 = vadd.f32 0.0, %v346
      %348 = vmatmul.bf16.gmra.mxu0 %v315
      %v349 = vpop.f32.mrf.mxu0
      %v350 = vadd.f32 0.0, %v349
      %v351 = vpop.f32.mrf.mxu0
      %v352 = vadd.f32 0.0, %v351
      %353 = vmatmul.bf16.gmra.mxu0 %v318
      %v354 = vpop.f32.mrf.mxu0
      %v355 = vadd.f32 0.0, %v354
      %v356 = vpop.f32.mrf.mxu0
      %v357 = vadd.f32 0.0, %v356
      %358 = vmatmul.bf16.gmra.mxu0 %v321
      %v359 = vpop.f32.mrf.mxu0
      %v360 = vadd.f32 0.0, %v359
      %v361 = vpop.f32.mrf.mxu0
      %v362 = vadd.f32 0.0, %v361
      %363 = vmatmul.bf16.gmra.mxu0 %v324
      %v364 = vpop.f32.mrf.mxu0
      %v365 = vadd.f32 0.0, %v364
      %v366 = vpop.f32.mrf.mxu0
      %367 = vdwg.mxu0
      %v379 = vunpack.c.l.b16 %v253
      %v380 = vunpack.c.l.b16 %v254
      %v381 = vunpack.c.l.b16 %v255
      %v382 = vunpack.c.l.b16 %v256
      %v383 = vunpack.c.l.b16 %v257
      %v384 = vunpack.c.l.b16 %v258
      %v385 = vunpack.c.l.b16 %v259
      %v386 = vunpack.c.l.b16 %v260
      %v387 = vunpack.c.l.b16 %v261
      %v388 = vunpack.c.l.b16 %v262
      %v389 = vunpack.c.l.b16 %v263
      %v390 = vpack.c.b16 %v380, %v379
      %v391 = vpack.c.b16 %v382, %v381
      %v392 = vpack.c.b16 %v384, %v383
      %v393 = vpack.c.b16 %v386, %v385
      %v394 = vpack.c.b16 %v388, %v387
      %v395 = vpack.c.b16 %v389, %v389
      %v397 = vsel %vm307, %v390, 0
      %v400 = vsel %vm307, %v391, 0
      %v403 = vsel %vm307, %v392, 0
      %v406 = vsel %vm307, %v393, 0
      %v409 = vsel %vm307, %v394, 0
      %v412 = vsel %vm307, %v395, 0
      %v415 = vsel %vm326, %v264, 0
      %417 = vmatpush.bf16.msra.mxu0 0
      %418 = vmatpush.bf16.msra.mxu0 0
      %419 = vmatpush.bf16.msra.mxu0 0
      %420 = vmatpush.bf16.msra.mxu0 0
      %421 = vmatpush.bf16.msra.mxu0 0
      %422 = vmatpush.bf16.msra.mxu0 0
      %423 = vmatpush.bf16.msra.mxu0 0
      %424 = vmatpush.bf16.msra.mxu0 %v415
      %425 = vmatmul.bf16.gmra.mxu0 %v397
      %v426 = vpop.f32.mrf.mxu0
      %v427 = vadd.f32 %v340, %v426
      %v428 = vpop.f32.mrf.mxu0
      %v429 = vadd.f32 %v342, %v428
      %430 = vmatmul.bf16.gmra.mxu0 %v400
      %v431 = vpop.f32.mrf.mxu0
      %v432 = vadd.f32 %v345, %v431
      %v433 = vpop.f32.mrf.mxu0
      %v434 = vadd.f32 %v347, %v433
      %435 = vmatmul.bf16.gmra.mxu0 %v403
      %v436 = vpop.f32.mrf.mxu0
      %v437 = vadd.f32 %v350, %v436
      %v438 = vpop.f32.mrf.mxu0
      %v439 = vadd.f32 %v352, %v438
      %440 = vmatmul.bf16.gmra.mxu0 %v406
      %v441 = vpop.f32.mrf.mxu0
      %v442 = vadd.f32 %v355, %v441
      %v443 = vpop.f32.mrf.mxu0
      %v444 = vadd.f32 %v357, %v443
      %445 = vmatmul.bf16.gmra.mxu0 %v409
      %v446 = vpop.f32.mrf.mxu0
      %v447 = vadd.f32 %v360, %v446
      %v448 = vpop.f32.mrf.mxu0
      %v449 = vadd.f32 %v362, %v448
      %450 = vmatmul.bf16.gmra.mxu0 %v412
      %v451 = vpop.f32.mrf.mxu0
      %v452 = vadd.f32 %v365, %v451
      %v453 = vpop.f32.mrf.mxu0
      %454 = vdwg.mxu0
      %v455 = vld [vmem:[%s246] sm:$0xf]
      %v456 = vld [vmem:[%s246 + $0x4] sm:$0xf]
      %v457 = vld [vmem:[%s246 + $0x8] sm:$0xf]
      %v458 = vld [vmem:[%s246 + $0xc] sm:$0xf]
      %v459 = vld [vmem:[%s246 + $0x10] sm:$0xf]
      %v460 = vld [vmem:[%s246 + $0x14] sm:$0xf]
      %v461 = vld [vmem:[%s246 + $0x18] sm:$0xf]
      %v462 = vld [vmem:[%s246 + $0x1c] sm:$0xf]
      %v463 = vld [vmem:[%s246 + $0x20] sm:$0xf]
      %v464 = vld [vmem:[%s246 + $0x24] sm:$0xf]
      %v465 = vld [vmem:[%s246 + $0x28] sm:$0xf]
      %v466 = vld [vmem:[%s246 + $0x2c] sm:$0x1]
      %s467 = scalar_lea.vmem %s1, 4
      %v468 = vld [vmem:[%s467] sm:$0x3]
      %v481 = vunpack.c.l.b16 %v455
      %v482 = vunpack.c.l.b16 %v456
      %v483 = vunpack.c.l.b16 %v457
      %v484 = vunpack.c.l.b16 %v458
      %v485 = vunpack.c.l.b16 %v459
      %v486 = vunpack.c.l.b16 %v460
      %v487 = vunpack.c.l.b16 %v461
      %v488 = vunpack.c.l.b16 %v462
      %v489 = vunpack.c.l.b16 %v463
      %v490 = vunpack.c.l.b16 %v464
      %v491 = vunpack.c.l.b16 %v465
      %v492 = vunpack.c.l.b16 %v466
      %v493 = vpack.c.b16 %v482, %v481
      %v494 = vpack.c.b16 %v484, %v483
      %v495 = vpack.c.b16 %v486, %v485
      %v496 = vpack.c.b16 %v488, %v487
      %v497 = vpack.c.b16 %v490, %v489
      %v498 = vpack.c.b16 %v492, %v491
      %vm499 = vsmask.f32 7424
      %v501 = vshrl.u32 %v493, 16
      %v503 = vshll.u32 %v493, 16
      %v505 = vrot.slane %v503, 1
      %v506 = vor.u32 %v501, %v505
      %v508 = vshll.u32 %v494, 16
      %v510 = vrot.slane %v508, 1
      %v511 = vsel %vm499, %v506, %v510
      %v512 = vshrl.u32 %v494, 16
      %v514 = vor.u32 %v512, %v510
      %v516 = vshll.u32 %v495, 16
      %v518 = vrot.slane %v516, 1
      %v519 = vsel %vm499, %v514, %v518
      %v520 = vshrl.u32 %v495, 16
      %v522 = vor.u32 %v520, %v518
      %v524 = vshll.u32 %v496, 16
      %v526 = vrot.slane %v524, 1
      %v527 = vsel %vm499, %v522, %v526
      %v528 = vshrl.u32 %v496, 16
      %v530 = vor.u32 %v528, %v526
      %v532 = vshll.u32 %v497, 16
      %v534 = vrot.slane %v532, 1
      %v535 = vsel %vm499, %v530, %v534
      %v536 = vshrl.u32 %v497, 16
      %v538 = vor.u32 %v536, %v534
      %v540 = vshll.u32 %v498, 16
      %v542 = vrot.slane %v540, 1
      %v543 = vsel %vm499, %v538, %v542
      %v544 = vshrl.u32 %v498, 16
      %v546 = vor.u32 %v544, %v542
      %v548 = vsel %vm307, %v511, 0
      %v551 = vsel %vm307, %v519, 0
      %v554 = vsel %vm307, %v527, 0
      %v557 = vsel %vm307, %v535, 0
      %v560 = vsel %vm307, %v543, 0
      %v563 = vsel %vm307, %v546, 0
      %v566 = vsel %vm326, %v468, 0
      %568 = vmatpush.bf16.msra.mxu0 0
      %569 = vmatpush.bf16.msra.mxu0 0
      %570 = vmatpush.bf16.msra.mxu0 0
      %571 = vmatpush.bf16.msra.mxu0 0
      %572 = vmatpush.bf16.msra.mxu0 0
      %573 = vmatpush.bf16.msra.mxu0 0
      %574 = vmatpush.bf16.msra.mxu0 0
      %575 = vmatpush.bf16.msra.mxu0 %v566
      %576 = vmatmul.bf16.gmra.mxu0 %v548
      %v577 = vpop.f32.mrf.mxu0
      %v578 = vadd.f32 0.0, %v577
      %v579 = vpop.f32.mrf.mxu0
      %v580 = vadd.f32 0.0, %v579
      %581 = vmatmul.bf16.gmra.mxu0 %v551
      %v582 = vpop.f32.mrf.mxu0
      %v583 = vadd.f32 0.0, %v582
      %v584 = vpop.f32.mrf.mxu0
      %v585 = vadd.f32 0.0, %v584
      %586 = vmatmul.bf16.gmra.mxu0 %v554
      %v587 = vpop.f32.mrf.mxu0
      %v588 = vadd.f32 0.0, %v587
      %v589 = vpop.f32.mrf.mxu0
      %v590 = vadd.f32 0.0, %v589
      %591 = vmatmul.bf16.gmra.mxu0 %v557
      %v592 = vpop.f32.mrf.mxu0
      %v593 = vadd.f32 0.0, %v592
      %v594 = vpop.f32.mrf.mxu0
      %v595 = vadd.f32 0.0, %v594
      %596 = vmatmul.bf16.gmra.mxu0 %v560
      %v597 = vpop.f32.mrf.mxu0
      %v598 = vadd.f32 0.0, %v597
      %v599 = vpop.f32.mrf.mxu0
      %v600 = vadd.f32 0.0, %v599
      %601 = vmatmul.bf16.gmra.mxu0 %v563
      %v602 = vpop.f32.mrf.mxu0
      %v603 = vadd.f32 0.0, %v602
      %v604 = vpop.f32.mrf.mxu0
      %605 = vdwg.mxu0
      %v606 = vadd.f32 %v427, %v578
      %v607 = vadd.f32 %v429, %v580
      %v608 = vadd.f32 %v432, %v583
      %v609 = vadd.f32 %v434, %v585
      %v610 = vadd.f32 %v437, %v588
      %v611 = vadd.f32 %v439, %v590
      %v612 = vadd.f32 %v442, %v593
      %v613 = vadd.f32 %v444, %v595
      %v614 = vadd.f32 %v447, %v598
      %v615 = vadd.f32 %v449, %v600
      %v616 = vadd.f32 %v452, %v603
      %v617 = vld [vmem:[%s265] sm:$0xf]
      %v618 = vld [vmem:[%s265 + $0x4] sm:$0xf]
      %v619 = vld [vmem:[%s265 + $0x8] sm:$0xf]
      %v620 = vld [vmem:[%s265 + $0xc] sm:$0xf]
      %v621 = vld [vmem:[%s265 + $0x10] sm:$0xf]
      %v622 = vld [vmem:[%s265 + $0x14] sm:$0xf]
      %v623 = vld [vmem:[%s265 + $0x18] sm:$0xf]
      %v624 = vld [vmem:[%s265 + $0x1c] sm:$0xf]
      %v625 = vld [vmem:[%s265 + $0x20] sm:$0xf]
      %v626 = vld [vmem:[%s265 + $0x24] sm:$0xf]
      %v627 = vld [vmem:[%s265 + $0x28] sm:$0xf]
      %v628 = vld [vmem:[%s265 + $0x2c] sm:$0x1]
      %s629 = scalar_lea.vmem %s1, 6
      %v630 = vld [vmem:[%s629] sm:$0x3]
      %v643 = vunpack.c.l.b16 %v617
      %v644 = vunpack.c.l.b16 %v618
      %v645 = vunpack.c.l.b16 %v619
      %v646 = vunpack.c.l.b16 %v620
      %v647 = vunpack.c.l.b16 %v621
      %v648 = vunpack.c.l.b16 %v622
      %v649 = vunpack.c.l.b16 %v623
      %v650 = vunpack.c.l.b16 %v624
      %v651 = vunpack.c.l.b16 %v625
      %v652 = vunpack.c.l.b16 %v626
      %v653 = vunpack.c.l.b16 %v627
      %v654 = vunpack.c.l.b16 %v628
      %v655 = vpack.c.b16 %v644, %v643
      %v656 = vpack.c.b16 %v646, %v645
      %v657 = vpack.c.b16 %v648, %v647
      %v658 = vpack.c.b16 %v650, %v649
      %v659 = vpack.c.b16 %v652, %v651
      %v660 = vpack.c.b16 %v654, %v653
      %v662 = vshrl.u32 %v655, 16
      %v664 = vshll.u32 %v655, 16
      %v666 = vrot.slane %v664, 1
      %v667 = vor.u32 %v662, %v666
      %v669 = vshll.u32 %v656, 16
      %v671 = vrot.slane %v669, 1
      %v672 = vsel %vm499, %v667, %v671
      %v673 = vshrl.u32 %v656, 16
      %v675 = vor.u32 %v673, %v671
      %v677 = vshll.u32 %v657, 16
      %v679 = vrot.slane %v677, 1
      %v680 = vsel %vm499, %v675, %v679
      %v681 = vshrl.u32 %v657, 16
      %v683 = vor.u32 %v681, %v679
      %v685 = vshll.u32 %v658, 16
      %v687 = vrot.slane %v685, 1
      %v688 = vsel %vm499, %v683, %v687
      %v689 = vshrl.u32 %v658, 16
      %v691 = vor.u32 %v689, %v687
      %v693 = vshll.u32 %v659, 16
      %v695 = vrot.slane %v693, 1
      %v696 = vsel %vm499, %v691, %v695
      %v697 = vshrl.u32 %v659, 16
      %v699 = vor.u32 %v697, %v695
      %v701 = vshll.u32 %v660, 16
      %v703 = vrot.slane %v701, 1
      %v704 = vsel %vm499, %v699, %v703
      %v705 = vshrl.u32 %v660, 16
      %v707 = vor.u32 %v705, %v703
      %v709 = vsel %vm307, %v672, 0
      %v712 = vsel %vm307, %v680, 0
      %v715 = vsel %vm307, %v688, 0
      %v718 = vsel %vm307, %v696, 0
      %v721 = vsel %vm307, %v704, 0
      %v724 = vsel %vm307, %v707, 0
      %v727 = vsel %vm326, %v630, 0
      %729 = vmatpush.bf16.msra.mxu0 0
      %730 = vmatpush.bf16.msra.mxu0 0
      %731 = vmatpush.bf16.msra.mxu0 0
      %732 = vmatpush.bf16.msra.mxu0 0
      %733 = vmatpush.bf16.msra.mxu0 0
      %734 = vmatpush.bf16.msra.mxu0 0
      %735 = vmatpush.bf16.msra.mxu0 0
      %736 = vmatpush.bf16.msra.mxu0 %v727
      %737 = vmatmul.bf16.gmra.mxu0 %v709
      %v738 = vpop.f32.mrf.mxu0
      %v739 = vadd.f32 0.0, %v738
      %v740 = vpop.f32.mrf.mxu0
      %v741 = vadd.f32 0.0, %v740
      %742 = vmatmul.bf16.gmra.mxu0 %v712
      %v743 = vpop.f32.mrf.mxu0
      %v744 = vadd.f32 0.0, %v743
      %v745 = vpop.f32.mrf.mxu0
      %v746 = vadd.f32 0.0, %v745
      %747 = vmatmul.bf16.gmra.mxu0 %v715
      %v748 = vpop.f32.mrf.mxu0
      %v749 = vadd.f32 0.0, %v748
      %v750 = vpop.f32.mrf.mxu0
      %v751 = vadd.f32 0.0, %v750
      %752 = vmatmul.bf16.gmra.mxu0 %v718
      %v753 = vpop.f32.mrf.mxu0
      %v754 = vadd.f32 0.0, %v753
      %v755 = vpop.f32.mrf.mxu0
      %v756 = vadd.f32 0.0, %v755
      %757 = vmatmul.bf16.gmra.mxu0 %v721
      %v758 = vpop.f32.mrf.mxu0
      %v759 = vadd.f32 0.0, %v758
      %v760 = vpop.f32.mrf.mxu0
      %v761 = vadd.f32 0.0, %v760
      %762 = vmatmul.bf16.gmra.mxu0 %v724
      %v763 = vpop.f32.mrf.mxu0
      %v764 = vadd.f32 0.0, %v763
      %v765 = vpop.f32.mrf.mxu0
      %766 = vdwg.mxu0
      %v767 = vadd.f32 %v606, %v739
      %v768 = vadd.f32 %v607, %v741
      %v769 = vadd.f32 %v608, %v744
      %v770 = vadd.f32 %v609, %v746
      %v771 = vadd.f32 %v610, %v749
      %v772 = vadd.f32 %v611, %v751
      %v773 = vadd.f32 %v612, %v754
      %v774 = vadd.f32 %v613, %v756
      %v775 = vadd.f32 %v614, %v759
      %v776 = vadd.f32 %v615, %v761
      %v777 = vadd.f32 %v616, %v764
      %v778 = vld [vmem:[%s246] sm:$0xe]
      %s779 = scalar_lea.vmem %s1, 8
      %v780 = vld [vmem:[%s779] sm:$0x3]
      %v782 = vunpack.c.l.b16 %v778
      %v783 = vpack.c.b16 %v482, %v782
      %vm784 = vcmask 1046528
      %v785 = vrot.slane %v783, 1
      %v786 = vrot.slane %v494, 1
      %v787 = vsel %vm784, %v785, %v786
      %v788 = vrot.slane %v495, 1
      %v789 = vsel %vm784, %v786, %v788
      %v790 = vrot.slane %v496, 1
      %v791 = vsel %vm784, %v788, %v790
      %v792 = vrot.slane %v497, 1
      %v793 = vsel %vm784, %v790, %v792
      %v794 = vrot.slane %v498, 1
      %v795 = vsel %vm784, %v792, %v794
      %v797 = vsel %vm307, %v787, 0
      %v800 = vsel %vm307, %v789, 0
      %v803 = vsel %vm307, %v791, 0
      %v806 = vsel %vm307, %v793, 0
      %v809 = vsel %vm307, %v795, 0
      %v812 = vsel %vm307, %v794, 0
      %v815 = vsel %vm326, %v780, 0
      %817 = vmatpush.bf16.msra.mxu0 0
      %818 = vmatpush.bf16.msra.mxu0 0
      %819 = vmatpush.bf16.msra.mxu0 0
      %820 = vmatpush.bf16.msra.mxu0 0
      %821 = vmatpush.bf16.msra.mxu0 0
      %822 = vmatpush.bf16.msra.mxu0 0
      %823 = vmatpush.bf16.msra.mxu0 0
      %824 = vmatpush.bf16.msra.mxu0 %v815
      %825 = vmatmul.bf16.gmra.mxu0 %v797
      %v826 = vpop.f32.mrf.mxu0
      %v827 = vadd.f32 0.0, %v826
      %v828 = vpop.f32.mrf.mxu0
      %v829 = vadd.f32 0.0, %v828
      %830 = vmatmul.bf16.gmra.mxu0 %v800
      %v831 = vpop.f32.mrf.mxu0
      %v832 = vadd.f32 0.0, %v831
      %v833 = vpop.f32.mrf.mxu0
      %v834 = vadd.f32 0.0, %v833
      %835 = vmatmul.bf16.gmra.mxu0 %v803
      %v836 = vpop.f32.mrf.mxu0
      %v837 = vadd.f32 0.0, %v836
      %v838 = vpop.f32.mrf.mxu0
      %v839 = vadd.f32 0.0, %v838
      %840 = vmatmul.bf16.gmra.mxu0 %v806
      %v841 = vpop.f32.mrf.mxu0
      %v842 = vadd.f32 0.0, %v841
      %v843 = vpop.f32.mrf.mxu0
      %v844 = vadd.f32 0.0, %v843
      %845 = vmatmul.bf16.gmra.mxu0 %v809
      %v846 = vpop.f32.mrf.mxu0
      %v847 = vadd.f32 0.0, %v846
      %v848 = vpop.f32.mrf.mxu0
      %v849 = vadd.f32 0.0, %v848
      %850 = vmatmul.bf16.gmra.mxu0 %v812
      %v851 = vpop.f32.mrf.mxu0
      %v852 = vadd.f32 0.0, %v851
      %v853 = vpop.f32.mrf.mxu0
      %854 = vdwg.mxu0
      %v855 = vadd.f32 %v767, %v827
      %v856 = vadd.f32 %v768, %v829
      %v857 = vadd.f32 %v769, %v832
      %v858 = vadd.f32 %v770, %v834
      %v859 = vadd.f32 %v771, %v837
      %v860 = vadd.f32 %v772, %v839
      %v861 = vadd.f32 %v773, %v842
      %v862 = vadd.f32 %v774, %v844
      %v863 = vadd.f32 %v775, %v847
      %v864 = vadd.f32 %v776, %v849
      %v865 = vadd.f32 %v777, %v852
      %v866 = vld [vmem:[%s265] sm:$0xe]
      %s867 = scalar_lea.vmem %s1, 10
      %v868 = vld [vmem:[%s867] sm:$0x3]
      %v870 = vunpack.c.l.b16 %v866
      %v871 = vpack.c.b16 %v644, %v870
      %v872 = vrot.slane %v871, 1
      %v873 = vrot.slane %v656, 1
      %v874 = vsel %vm784, %v872, %v873
      %v875 = vrot.slane %v657, 1
      %v876 = vsel %vm784, %v873, %v875
      %v877 = vrot.slane %v658, 1
      %v878 = vsel %vm784, %v875, %v877
      %v879 = vrot.slane %v659, 1
      %v880 = vsel %vm784, %v877, %v879
      %v881 = vrot.slane %v660, 1
      %v882 = vsel %vm784, %v879, %v881
      %v884 = vsel %vm307, %v874, 0
      %v887 = vsel %vm307, %v876, 0
      %v890 = vsel %vm307, %v878, 0
      %v893 = vsel %vm307, %v880, 0
      %v896 = vsel %vm307, %v882, 0
      %v899 = vsel %vm307, %v881, 0
      %v902 = vsel %vm326, %v868, 0
      %904 = vmatpush.bf16.msra.mxu0 0
      %905 = vmatpush.bf16.msra.mxu0 0
      %906 = vmatpush.bf16.msra.mxu0 0
      %907 = vmatpush.bf16.msra.mxu0 0
      %908 = vmatpush.bf16.msra.mxu0 0
      %909 = vmatpush.bf16.msra.mxu0 0
      %910 = vmatpush.bf16.msra.mxu0 0
      %911 = vmatpush.bf16.msra.mxu0 %v902
      %912 = vmatmul.bf16.gmra.mxu0 %v884
      %v913 = vpop.f32.mrf.mxu0
      %v914 = vadd.f32 0.0, %v913
      %v915 = vpop.f32.mrf.mxu0
      %v916 = vadd.f32 0.0, %v915
      %917 = vmatmul.bf16.gmra.mxu0 %v887
      %v918 = vpop.f32.mrf.mxu0
      %v919 = vadd.f32 0.0, %v918
      %v920 = vpop.f32.mrf.mxu0
      %v921 = vadd.f32 0.0, %v920
      %922 = vmatmul.bf16.gmra.mxu0 %v890
      %v923 = vpop.f32.mrf.mxu0
      %v924 = vadd.f32 0.0, %v923
      %v925 = vpop.f32.mrf.mxu0
      %v926 = vadd.f32 0.0, %v925
      %927 = vmatmul.bf16.gmra.mxu0 %v893
      %v928 = vpop.f32.mrf.mxu0
      %v929 = vadd.f32 0.0, %v928
      %v930 = vpop.f32.mrf.mxu0
      %v931 = vadd.f32 0.0, %v930
      %932 = vmatmul.bf16.gmra.mxu0 %v896
      %v933 = vpop.f32.mrf.mxu0
      %v934 = vadd.f32 0.0, %v933
      %v935 = vpop.f32.mrf.mxu0
      %v936 = vadd.f32 0.0, %v935
      %937 = vmatmul.bf16.gmra.mxu0 %v899
      %v938 = vpop.f32.mrf.mxu0
      %v939 = vadd.f32 0.0, %v938
      %v940 = vpop.f32.mrf.mxu0
      %941 = vdwg.mxu0
      %v942 = vadd.f32 %v855, %v914
      %v943 = vadd.f32 %v856, %v916
      %v944 = vadd.f32 %v857, %v919
      %v945 = vadd.f32 %v858, %v921
      %v946 = vadd.f32 %v859, %v924
      %v947 = vadd.f32 %v860, %v926
      %v948 = vadd.f32 %v861, %v929
      %v949 = vadd.f32 %v862, %v931
      %v950 = vadd.f32 %v863, %v934
      %v951 = vadd.f32 %v864, %v936
      %v952 = vadd.f32 %v865, %v939
      %v953 = vld [vmem:[%s246 + $0x2c] sm:$0x3]
      %s954 = scalar_lea.vmem %s1, 12
      %v955 = vld [vmem:[%s954] sm:$0x3]
      %v957 = vunpack.c.l.b16 %v953
      %v958 = vpack.c.b16 %v957, %v491
      %vm959 = vsmask.f32 6400
      %v961 = vshrl.u32 %v783, 16
      %v963 = vrot.slane %v961, 1
      %v964 = vshll.u32 %v783, 16
      %v966 = vrot.slane %v964, 2
      %v967 = vor.u32 %v963, %v966
      %v968 = vrot.slane %v512, 1
      %v969 = vrot.slane %v508, 2
      %v970 = vor.u32 %v968, %v969
      %v971 = vsel %vm959, %v967, %v970
      %v972 = vrot.slane %v520, 1
      %v973 = vrot.slane %v516, 2
      %v974 = vor.u32 %v972, %v973
      %v975 = vsel %vm959, %v970, %v974
      %v976 = vrot.slane %v528, 1
      %v977 = vrot.slane %v524, 2
      %v978 = vor.u32 %v976, %v977
      %v979 = vsel %vm959, %v974, %v978
      %v980 = vrot.slane %v536, 1
      %v981 = vrot.slane %v532, 2
      %v982 = vor.u32 %v980, %v981
      %v983 = vsel %vm959, %v978, %v982
      %v985 = vshrl.u32 %v958, 16
      %v987 = vrot.slane %v985, 1
      %v988 = vshll.u32 %v958, 16
      %v990 = vrot.slane %v988, 2
      %v991 = vor.u32 %v987, %v990
      %v992 = vsel %vm959, %v982, %v991
      %v994 = vsel %vm307, %v971, 0
      %v997 = vsel %vm307, %v975, 0
      %v1000 = vsel %vm307, %v979, 0
      %v1003 = vsel %vm307, %v983, 0
      %v1006 = vsel %vm307, %v992, 0
      %v1009 = vsel %vm307, %v991, 0
      %v1012 = vsel %vm326, %v955, 0
      %1014 = vmatpush.bf16.msra.mxu0 0
      %1015 = vmatpush.bf16.msra.mxu0 0
      %1016 = vmatpush.bf16.msra.mxu0 0
      %1017 = vmatpush.bf16.msra.mxu0 0
      %1018 = vmatpush.bf16.msra.mxu0 0
      %1019 = vmatpush.bf16.msra.mxu0 0
      %1020 = vmatpush.bf16.msra.mxu0 0
      %1021 = vmatpush.bf16.msra.mxu0 %v1012
      %1022 = vmatmul.bf16.gmra.mxu0 %v994
      %v1023 = vpop.f32.mrf.mxu0
      %v1024 = vadd.f32 0.0, %v1023
      %v1025 = vpop.f32.mrf.mxu0
      %v1026 = vadd.f32 0.0, %v1025
      %1027 = vmatmul.bf16.gmra.mxu0 %v997
      %v1028 = vpop.f32.mrf.mxu0
      %v1029 = vadd.f32 0.0, %v1028
      %v1030 = vpop.f32.mrf.mxu0
      %v1031 = vadd.f32 0.0, %v1030
      %1032 = vmatmul.bf16.gmra.mxu0 %v1000
      %v1033 = vpop.f32.mrf.mxu0
      %v1034 = vadd.f32 0.0, %v1033
      %v1035 = vpop.f32.mrf.mxu0
      %v1036 = vadd.f32 0.0, %v1035
      %1037 = vmatmul.bf16.gmra.mxu0 %v1003
      %v1038 = vpop.f32.mrf.mxu0
      %v1039 = vadd.f32 0.0, %v1038
      %v1040 = vpop.f32.mrf.mxu0
      %v1041 = vadd.f32 0.0, %v1040
      %1042 = vmatmul.bf16.gmra.mxu0 %v1006
      %v1043 = vpop.f32.mrf.mxu0
      %v1044 = vadd.f32 0.0, %v1043
      %v1045 = vpop.f32.mrf.mxu0
      %v1046 = vadd.f32 0.0, %v1045
      %1047 = vmatmul.bf16.gmra.mxu0 %v1009
      %v1048 = vpop.f32.mrf.mxu0
      %v1049 = vadd.f32 0.0, %v1048
      %v1050 = vpop.f32.mrf.mxu0
      %1051 = vdwg.mxu0
      %v1052 = vadd.f32 %v942, %v1024
      %v1053 = vadd.f32 %v943, %v1026
      %v1054 = vadd.f32 %v944, %v1029
      %v1055 = vadd.f32 %v945, %v1031
      %v1056 = vadd.f32 %v946, %v1034
      %v1057 = vadd.f32 %v947, %v1036
      %v1058 = vadd.f32 %v948, %v1039
      %v1059 = vadd.f32 %v949, %v1041
      %v1060 = vadd.f32 %v950, %v1044
      %v1061 = vadd.f32 %v951, %v1046
      %v1062 = vadd.f32 %v952, %v1049
      %s1063 = scalar_lea.vmem %s246, 136
      %v1064 = vld [vmem:[%s1063] sm:$0xf]
      %v1065 = vld [vmem:[%s1063 + $0x4] sm:$0xf]
      %v1066 = vld [vmem:[%s1063 + $0x8] sm:$0xf]
      %v1067 = vld [vmem:[%s1063 + $0xc] sm:$0xf]
      %v1068 = vld [vmem:[%s1063 + $0x10] sm:$0xf]
      %v1069 = vld [vmem:[%s1063 + $0x14] sm:$0xf]
      %v1070 = vld [vmem:[%s1063 + $0x18] sm:$0xf]
      %v1071 = vld [vmem:[%s1063 + $0x1c] sm:$0xf]
      %v1072 = vld [vmem:[%s1063 + $0x20] sm:$0xf]
      %v1073 = vld [vmem:[%s1063 + $0x24] sm:$0xf]
      %v1074 = vld [vmem:[%s1063 + $0x28] sm:$0xf]
      %s1075 = scalar_lea.vmem %s1, 14
      %v1076 = vld [vmem:[%s1075] sm:$0x3]
      %v1088 = vunpack.c.l.b16 %v1064
      %v1089 = vunpack.c.l.b16 %v1065
      %v1090 = vunpack.c.l.b16 %v1066
      %v1091 = vunpack.c.l.b16 %v1067
      %v1092 = vunpack.c.l.b16 %v1068
      %v1093 = vunpack.c.l.b16 %v1069
      %v1094 = vunpack.c.l.b16 %v1070
      %v1095 = vunpack.c.l.b16 %v1071
      %v1096 = vunpack.c.l.b16 %v1072
      %v1097 = vunpack.c.l.b16 %v1073
      %v1098 = vunpack.c.l.b16 %v1074
      %v1099 = vpack.c.b16 %v1089, %v1088
      %v1100 = vpack.c.b16 %v1091, %v1090
      %v1101 = vpack.c.b16 %v1093, %v1092
      %v1102 = vpack.c.b16 %v1095, %v1094
      %v1103 = vpack.c.b16 %v1097, %v1096
      %v1104 = vpack.c.b16 %v1098, %v1098
      %v1106 = vsel %vm307, %v1099, 0
      %v1109 = vsel %vm307, %v1100, 0
      %v1112 = vsel %vm307, %v1101, 0
      %v1115 = vsel %vm307, %v1102, 0
      %v1118 = vsel %vm307, %v1103, 0
      %v1121 = vsel %vm307, %v1104, 0
      %v1124 = vsel %vm326, %v1076, 0
      %1126 = vmatpush.bf16.msra.mxu0 0
      %1127 = vmatpush.bf16.msra.mxu0 0
      %1128 = vmatpush.bf16.msra.mxu0 0
      %1129 = vmatpush.bf16.msra.mxu0 0
      %1130 = vmatpush.bf16.msra.mxu0 0
      %1131 = vmatpush.bf16.msra.mxu0 0
      %1132 = vmatpush.bf16.msra.mxu0 0
      %1133 = vmatpush.bf16.msra.mxu0 %v1124
      %1134 = vmatmul.bf16.gmra.mxu0 %v1106
      %v1135 = vpop.f32.mrf.mxu0
      %v1136 = vadd.f32 0.0, %v1135
      %v1137 = vpop.f32.mrf.mxu0
      %v1138 = vadd.f32 0.0, %v1137
      %1139 = vmatmul.bf16.gmra.mxu0 %v1109
      %v1140 = vpop.f32.mrf.mxu0
      %v1141 = vadd.f32 0.0, %v1140
      %v1142 = vpop.f32.mrf.mxu0
      %v1143 = vadd.f32 0.0, %v1142
      %1144 = vmatmul.bf16.gmra.mxu0 %v1112
      %v1145 = vpop.f32.mrf.mxu0
      %v1146 = vadd.f32 0.0, %v1145
      %v1147 = vpop.f32.mrf.mxu0
      %v1148 = vadd.f32 0.0, %v1147
      %1149 = vmatmul.bf16.gmra.mxu0 %v1115
      %v1150 = vpop.f32.mrf.mxu0
      %v1151 = vadd.f32 0.0, %v1150
      %v1152 = vpop.f32.mrf.mxu0
      %v1153 = vadd.f32 0.0, %v1152
      %1154 = vmatmul.bf16.gmra.mxu0 %v1118
      %v1155 = vpop.f32.mrf.mxu0
      %v1156 = vadd.f32 0.0, %v1155
      %v1157 = vpop.f32.mrf.mxu0
      %v1158 = vadd.f32 0.0, %v1157
      %1159 = vmatmul.bf16.gmra.mxu0 %v1121
      %v1160 = vpop.f32.mrf.mxu0
      %v1161 = vadd.f32 0.0, %v1160
      %v1162 = vpop.f32.mrf.mxu0
      %1163 = vdwg.mxu0
      %v1164 = vadd.f32 %v1052, %v1136
      %v1165 = vadd.f32 %v1053, %v1138
      %v1166 = vadd.f32 %v1054, %v1141
      %v1167 = vadd.f32 %v1055, %v1143
      %v1168 = vadd.f32 %v1056, %v1146
      %v1169 = vadd.f32 %v1057, %v1148
      %v1170 = vadd.f32 %v1058, %v1151
      %v1171 = vadd.f32 %v1059, %v1153
      %v1172 = vadd.f32 %v1060, %v1156
      %v1173 = vadd.f32 %v1061, %v1158
      %v1174 = vadd.f32 %v1062, %v1161
      %s1175 = scalar_lea.vmem %s246, 204
      %v1176 = vld [vmem:[%s1175] sm:$0xf]
      %v1177 = vld [vmem:[%s1175 + $0x4] sm:$0xf]
      %v1178 = vld [vmem:[%s1175 + $0x8] sm:$0xf]
      %v1179 = vld [vmem:[%s1175 + $0xc] sm:$0xf]
      %v1180 = vld [vmem:[%s1175 + $0x10] sm:$0xf]
      %v1181 = vld [vmem:[%s1175 + $0x14] sm:$0xf]
      %v1182 = vld [vmem:[%s1175 + $0x18] sm:$0xf]
      %v1183 = vld [vmem:[%s1175 + $0x1c] sm:$0xf]
      %v1184 = vld [vmem:[%s1175 + $0x20] sm:$0xf]
      %v1185 = vld [vmem:[%s1175 + $0x24] sm:$0xf]
      %v1186 = vld [vmem:[%s1175 + $0x28] sm:$0xf]
      %s1187 = scalar_lea.vmem %s1, 16
      %v1188 = vld [vmem:[%s1187] sm:$0x3]
      %v1200 = vunpack.c.l.b16 %v1176
      %v1201 = vunpack.c.l.b16 %v1177
      %v1202 = vunpack.c.l.b16 %v1178
      %v1203 = vunpack.c.l.b16 %v1179
      %v1204 = vunpack.c.l.b16 %v1180
      %v1205 = vunpack.c.l.b16 %v1181
      %v1206 = vunpack.c.l.b16 %v1182
      %v1207 = vunpack.c.l.b16 %v1183
      %v1208 = vunpack.c.l.b16 %v1184
      %v1209 = vunpack.c.l.b16 %v1185
      %v1210 = vunpack.c.l.b16 %v1186
      %v1211 = vpack.c.b16 %v1201, %v1200
      %v1212 = vpack.c.b16 %v1203, %v1202
      %v1213 = vpack.c.b16 %v1205, %v1204
      %v1214 = vpack.c.b16 %v1207, %v1206
      %v1215 = vpack.c.b16 %v1209, %v1208
      %v1216 = vpack.c.b16 %v1210, %v1210
      %v1218 = vsel %vm307, %v1211, 0
      %v1221 = vsel %vm307, %v1212, 0
      %v1224 = vsel %vm307, %v1213, 0
      %v1227 = vsel %vm307, %v1214, 0
      %v1230 = vsel %vm307, %v1215, 0
      %v1233 = vsel %vm307, %v1216, 0
      %v1236 = vsel %vm326, %v1188, 0
      %1238 = vmatpush.bf16.msra.mxu0 0
      %1239 = vmatpush.bf16.msra.mxu0 0
      %1240 = vmatpush.bf16.msra.mxu0 0
      %1241 = vmatpush.bf16.msra.mxu0 0
      %1242 = vmatpush.bf16.msra.mxu0 0
      %1243 = vmatpush.bf16.msra.mxu0 0
      %1244 = vmatpush.bf16.msra.mxu0 0
      %1245 = vmatpush.bf16.msra.mxu0 %v1236
      %1246 = vmatmul.bf16.gmra.mxu0 %v1218
      %v1247 = vpop.f32.mrf.mxu0
      %v1248 = vadd.f32 0.0, %v1247
      %v1249 = vpop.f32.mrf.mxu0
      %v1250 = vadd.f32 0.0, %v1249
      %1251 = vmatmul.bf16.gmra.mxu0 %v1221
      %v1252 = vpop.f32.mrf.mxu0
      %v1253 = vadd.f32 0.0, %v1252
      %v1254 = vpop.f32.mrf.mxu0
      %v1255 = vadd.f32 0.0, %v1254
      %1256 = vmatmul.bf16.gmra.mxu0 %v1224
      %v1257 = vpop.f32.mrf.mxu0
      %v1258 = vadd.f32 0.0, %v1257
      %v1259 = vpop.f32.mrf.mxu0
      %v1260 = vadd.f32 0.0, %v1259
      %1261 = vmatmul.bf16.gmra.mxu0 %v1227
      %v1262 = vpop.f32.mrf.mxu0
      %v1263 = vadd.f32 0.0, %v1262
      %v1264 = vpop.f32.mrf.mxu0
      %v1265 = vadd.f32 0.0, %v1264
      %1266 = vmatmul.bf16.gmra.mxu0 %v1230
      %v1267 = vpop.f32.mrf.mxu0
      %v1268 = vadd.f32 0.0, %v1267
      %v1269 = vpop.f32.mrf.mxu0
      %v1270 = vadd.f32 0.0, %v1269
      %1271 = vmatmul.bf16.gmra.mxu0 %v1233
      %v1272 = vpop.f32.mrf.mxu0
      %v1273 = vadd.f32 0.0, %v1272
      %v1274 = vpop.f32.mrf.mxu0
      %1275 = vdwg.mxu0
      %v1276 = vadd.f32 %v1164, %v1248
      %v1277 = vadd.f32 %v1165, %v1250
      %v1278 = vadd.f32 %v1166, %v1253
      %v1279 = vadd.f32 %v1167, %v1255
      %v1280 = vadd.f32 %v1168, %v1258
      %v1281 = vadd.f32 %v1169, %v1260
      %v1282 = vadd.f32 %v1170, %v1263
      %v1283 = vadd.f32 %v1171, %v1265
      %v1284 = vadd.f32 %v1172, %v1268
      %v1285 = vadd.f32 %v1173, %v1270
      %v1286 = vadd.f32 %v1174, %v1273
      %v1287 = vld [vmem:[%s1063] sm:$0xf]
      %v1288 = vld [vmem:[%s1063 + $0x4] sm:$0xf]
      %v1289 = vld [vmem:[%s1063 + $0x8] sm:$0xf]
      %v1290 = vld [vmem:[%s1063 + $0xc] sm:$0xf]
      %v1291 = vld [vmem:[%s1063 + $0x10] sm:$0xf]
      %v1292 = vld [vmem:[%s1063 + $0x14] sm:$0xf]
      %v1293 = vld [vmem:[%s1063 + $0x18] sm:$0xf]
      %v1294 = vld [vmem:[%s1063 + $0x1c] sm:$0xf]
      %v1295 = vld [vmem:[%s1063 + $0x20] sm:$0xf]
      %v1296 = vld [vmem:[%s1063 + $0x24] sm:$0xf]
      %v1297 = vld [vmem:[%s1063 + $0x28] sm:$0xf]
      %v1298 = vld [vmem:[%s1063 + $0x2c] sm:$0x1]
      %s1299 = scalar_lea.vmem %s1, 18
      %v1300 = vld [vmem:[%s1299] sm:$0x3]
      %v1313 = vunpack.c.l.b16 %v1287
      %v1314 = vunpack.c.l.b16 %v1288
      %v1315 = vunpack.c.l.b16 %v1289
      %v1316 = vunpack.c.l.b16 %v1290
      %v1317 = vunpack.c.l.b16 %v1291
      %v1318 = vunpack.c.l.b16 %v1292
      %v1319 = vunpack.c.l.b16 %v1293
      %v1320 = vunpack.c.l.b16 %v1294
      %v1321 = vunpack.c.l.b16 %v1295
      %v1322 = vunpack.c.l.b16 %v1296
      %v1323 = vunpack.c.l.b16 %v1297
      %v1324 = vunpack.c.l.b16 %v1298
      %v1325 = vpack.c.b16 %v1314, %v1313
      %v1326 = vpack.c.b16 %v1316, %v1315
      %v1327 = vpack.c.b16 %v1318, %v1317
      %v1328 = vpack.c.b16 %v1320, %v1319
      %v1329 = vpack.c.b16 %v1322, %v1321
      %v1330 = vpack.c.b16 %v1324, %v1323
      %v1332 = vshrl.u32 %v1325, 16
      %v1334 = vshll.u32 %v1325, 16
      %v1336 = vrot.slane %v1334, 1
      %v1337 = vor.u32 %v1332, %v1336
      %v1339 = vshll.u32 %v1326, 16
      %v1341 = vrot.slane %v1339, 1
      %v1342 = vsel %vm499, %v1337, %v1341
      %v1343 = vshrl.u32 %v1326, 16
      %v1345 = vor.u32 %v1343, %v1341
      %v1347 = vshll.u32 %v1327, 16
      %v1349 = vrot.slane %v1347, 1
      %v1350 = vsel %vm499, %v1345, %v1349
      %v1351 = vshrl.u32 %v1327, 16
      %v1353 = vor.u32 %v1351, %v1349
      %v1355 = vshll.u32 %v1328, 16
      %v1357 = vrot.slane %v1355, 1
      %v1358 = vsel %vm499, %v1353, %v1357
      %v1359 = vshrl.u32 %v1328, 16
      %v1361 = vor.u32 %v1359, %v1357
      %v1363 = vshll.u32 %v1329, 16
      %v1365 = vrot.slane %v1363, 1
      %v1366 = vsel %vm499, %v1361, %v1365
      %v1367 = vshrl.u32 %v1329, 16
      %v1369 = vor.u32 %v1367, %v1365
      %v1371 = vshll.u32 %v1330, 16
      %v1373 = vrot.slane %v1371, 1
      %v1374 = vsel %vm499, %v1369, %v1373
      %v1375 = vshrl.u32 %v1330, 16
      %v1377 = vor.u32 %v1375, %v1373
      %v1379 = vsel %vm307, %v1342, 0
      %v1382 = vsel %vm307, %v1350, 0
      %v1385 = vsel %vm307, %v1358, 0
      %v1388 = vsel %vm307, %v1366, 0
      %v1391 = vsel %vm307, %v1374, 0
      %v1394 = vsel %vm307, %v1377, 0
      %v1397 = vsel %vm326, %v1300, 0
      %1399 = vmatpush.bf16.msra.mxu0 0
      %1400 = vmatpush.bf16.msra.mxu0 0
      %1401 = vmatpush.bf16.msra.mxu0 0
      %1402 = vmatpush.bf16.msra.mxu0 0
      %1403 = vmatpush.bf16.msra.mxu0 0
      %1404 = vmatpush.bf16.msra.mxu0 0
      %1405 = vmatpush.bf16.msra.mxu0 0
      %1406 = vmatpush.bf16.msra.mxu0 %v1397
      %1407 = vmatmul.bf16.gmra.mxu0 %v1379
      %v1408 = vpop.f32.mrf.mxu0
      %v1409 = vadd.f32 0.0, %v1408
      %v1410 = vpop.f32.mrf.mxu0
      %v1411 = vadd.f32 0.0, %v1410
      %1412 = vmatmul.bf16.gmra.mxu0 %v1382
      %v1413 = vpop.f32.mrf.mxu0
      %v1414 = vadd.f32 0.0, %v1413
      %v1415 = vpop.f32.mrf.mxu0
      %v1416 = vadd.f32 0.0, %v1415
      %1417 = vmatmul.bf16.gmra.mxu0 %v1385
      %v1418 = vpop.f32.mrf.mxu0
      %v1419 = vadd.f32 0.0, %v1418
      %v1420 = vpop.f32.mrf.mxu0
      %v1421 = vadd.f32 0.0, %v1420
      %1422 = vmatmul.bf16.gmra.mxu0 %v1388
      %v1423 = vpop.f32.mrf.mxu0
      %v1424 = vadd.f32 0.0, %v1423
      %v1425 = vpop.f32.mrf.mxu0
      %v1426 = vadd.f32 0.0, %v1425
      %1427 = vmatmul.bf16.gmra.mxu0 %v1391
      %v1428 = vpop.f32.mrf.mxu0
      %v1429 = vadd.f32 0.0, %v1428
      %v1430 = vpop.f32.mrf.mxu0
      %v1431 = vadd.f32 0.0, %v1430
      %1432 = vmatmul.bf16.gmra.mxu0 %v1394
      %v1433 = vpop.f32.mrf.mxu0
      %v1434 = vadd.f32 0.0, %v1433
      %v1435 = vpop.f32.mrf.mxu0
      %1436 = vdwg.mxu0
      %v1437 = vadd.f32 %v1276, %v1409
      %v1438 = vadd.f32 %v1277, %v1411
      %v1439 = vadd.f32 %v1278, %v1414
      %v1440 = vadd.f32 %v1279, %v1416
      %v1441 = vadd.f32 %v1280, %v1419
      %v1442 = vadd.f32 %v1281, %v1421
      %v1443 = vadd.f32 %v1282, %v1424
      %v1444 = vadd.f32 %v1283, %v1426
      %v1445 = vadd.f32 %v1284, %v1429
      %v1446 = vadd.f32 %v1285, %v1431
      %v1447 = vadd.f32 %v1286, %v1434
      %v1448 = vld [vmem:[%s1175] sm:$0xf]
      %v1449 = vld [vmem:[%s1175 + $0x4] sm:$0xf]
      %v1450 = vld [vmem:[%s1175 + $0x8] sm:$0xf]
      %v1451 = vld [vmem:[%s1175 + $0xc] sm:$0xf]
      %v1452 = vld [vmem:[%s1175 + $0x10] sm:$0xf]
      %v1453 = vld [vmem:[%s1175 + $0x14] sm:$0xf]
      %v1454 = vld [vmem:[%s1175 + $0x18] sm:$0xf]
      %v1455 = vld [vmem:[%s1175 + $0x1c] sm:$0xf]
      %v1456 = vld [vmem:[%s1175 + $0x20] sm:$0xf]
      %v1457 = vld [vmem:[%s1175 + $0x24] sm:$0xf]
      %v1458 = vld [vmem:[%s1175 + $0x28] sm:$0xf]
      %v1459 = vld [vmem:[%s1175 + $0x2c] sm:$0x1]
      %s1460 = scalar_lea.vmem %s1, 20
      %v1461 = vld [vmem:[%s1460] sm:$0x3]
      %v1474 = vunpack.c.l.b16 %v1448
      %v1475 = vunpack.c.l.b16 %v1449
      %v1476 = vunpack.c.l.b16 %v1450
      %v1477 = vunpack.c.l.b16 %v1451
      %v1478 = vunpack.c.l.b16 %v1452
      %v1479 = vunpack.c.l.b16 %v1453
      %v1480 = vunpack.c.l.b16 %v1454
      %v1481 = vunpack.c.l.b16 %v1455
      %v1482 = vunpack.c.l.b16 %v1456
      %v1483 = vunpack.c.l.b16 %v1457
      %v1484 = vunpack.c.l.b16 %v1458
      %v1485 = vunpack.c.l.b16 %v1459
      %v1486 = vpack.c.b16 %v1475, %v1474
      %v1487 = vpack.c.b16 %v1477, %v1476
      %v1488 = vpack.c.b16 %v1479, %v1478
      %v1489 = vpack.c.b16 %v1481, %v1480
      %v1490 = vpack.c.b16 %v1483, %v1482
      %v1491 = vpack.c.b16 %v1485, %v1484
      %v1493 = vshrl.u32 %v1486, 16
      %v1495 = vshll.u32 %v1486, 16
      %v1497 = vrot.slane %v1495, 1
      %v1498 = vor.u32 %v1493, %v1497
      %v1500 = vshll.u32 %v1487, 16
      %v1502 = vrot.slane %v1500, 1
      %v1503 = vsel %vm499, %v1498, %v1502
      %v1504 = vshrl.u32 %v1487, 16
      %v1506 = vor.u32 %v1504, %v1502
      %v1508 = vshll.u32 %v1488, 16
      %v1510 = vrot.slane %v1508, 1
      %v1511 = vsel %vm499, %v1506, %v1510
      %v1512 = vshrl.u32 %v1488, 16
      %v1514 = vor.u32 %v1512, %v1510
      %v1516 = vshll.u32 %v1489, 16
      %v1518 = vrot.slane %v1516, 1
      %v1519 = vsel %vm499, %v1514, %v1518
      %v1520 = vshrl.u32 %v1489, 16
      %v1522 = vor.u32 %v1520, %v1518
      %v1524 = vshll.u32 %v1490, 16
      %v1526 = vrot.slane %v1524, 1
      %v1527 = vsel %vm499, %v1522, %v1526
      %v1528 = vshrl.u32 %v1490, 16
      %v1530 = vor.u32 %v1528, %v1526
      %v1532 = vshll.u32 %v1491, 16
      %v1534 = vrot.slane %v1532, 1
      %v1535 = vsel %vm499, %v1530, %v1534
      %v1536 = vshrl.u32 %v1491, 16
      %v1538 = vor.u32 %v1536, %v1534
      %v1540 = vsel %vm307, %v1503, 0
      %v1543 = vsel %vm307, %v1511, 0
      %v1546 = vsel %vm307, %v1519, 0
      %v1549 = vsel %vm307, %v1527, 0
      %v1552 = vsel %vm307, %v1535, 0
      %v1555 = vsel %vm307, %v1538, 0
      %v1558 = vsel %vm326, %v1461, 0
      %1560 = vmatpush.bf16.msra.mxu0 0
      %1561 = vmatpush.bf16.msra.mxu0 0
      %1562 = vmatpush.bf16.msra.mxu0 0
      %1563 = vmatpush.bf16.msra.mxu0 0
      %1564 = vmatpush.bf16.msra.mxu0 0
      %1565 = vmatpush.bf16.msra.mxu0 0
      %1566 = vmatpush.bf16.msra.mxu0 0
      %1567 = vmatpush.bf16.msra.mxu0 %v1558
      %1568 = vmatmul.bf16.gmra.mxu0 %v1540
      %v1569 = vpop.f32.mrf.mxu0
      %v1570 = vadd.f32 0.0, %v1569
      %v1571 = vpop.f32.mrf.mxu0
      %v1572 = vadd.f32 0.0, %v1571
      %1573 = vmatmul.bf16.gmra.mxu0 %v1543
      %v1574 = vpop.f32.mrf.mxu0
      %v1575 = vadd.f32 0.0, %v1574
      %v1576 = vpop.f32.mrf.mxu0
      %v1577 = vadd.f32 0.0, %v1576
      %1578 = vmatmul.bf16.gmra.mxu0 %v1546
      %v1579 = vpop.f32.mrf.mxu0
      %v1580 = vadd.f32 0.0, %v1579
      %v1581 = vpop.f32.mrf.mxu0
      %v1582 = vadd.f32 0.0, %v1581
      %1583 = vmatmul.bf16.gmra.mxu0 %v1549
      %v1584 = vpop.f32.mrf.mxu0
      %v1585 = vadd.f32 0.0, %v1584
      %v1586 = vpop.f32.mrf.mxu0
      %v1587 = vadd.f32 0.0, %v1586
      %1588 = vmatmul.bf16.gmra.mxu0 %v1552
      %v1589 = vpop.f32.mrf.mxu0
      %v1590 = vadd.f32 0.0, %v1589
      %v1591 = vpop.f32.mrf.mxu0
      %v1592 = vadd.f32 0.0, %v1591
      %1593 = vmatmul.bf16.gmra.mxu0 %v1555
      %v1594 = vpop.f32.mrf.mxu0
      %v1595 = vadd.f32 0.0, %v1594
      %v1596 = vpop.f32.mrf.mxu0
      %1597 = vdwg.mxu0
      %v1598 = vadd.f32 %v1437, %v1570
      %v1599 = vadd.f32 %v1438, %v1572
      %v1600 = vadd.f32 %v1439, %v1575
      %v1601 = vadd.f32 %v1440, %v1577
      %v1602 = vadd.f32 %v1441, %v1580
      %v1603 = vadd.f32 %v1442, %v1582
      %v1604 = vadd.f32 %v1443, %v1585
      %v1605 = vadd.f32 %v1444, %v1587
      %v1606 = vadd.f32 %v1445, %v1590
      %v1607 = vadd.f32 %v1446, %v1592
      %v1608 = vadd.f32 %v1447, %v1595
      %v1609 = vld [vmem:[%s1063] sm:$0xe]
      %s1610 = scalar_lea.vmem %s1, 22
      %v1611 = vld [vmem:[%s1610] sm:$0x3]
      %v1613 = vunpack.c.l.b16 %v1609
      %v1614 = vpack.c.b16 %v1314, %v1613
      %v1615 = vrot.slane %v1614, 1
      %v1616 = vrot.slane %v1326, 1
      %v1617 = vsel %vm784, %v1615, %v1616
      %v1618 = vrot.slane %v1327, 1
      %v1619 = vsel %vm784, %v1616, %v1618
      %v1620 = vrot.slane %v1328, 1
      %v1621 = vsel %vm784, %v1618, %v1620
      %v1622 = vrot.slane %v1329, 1
      %v1623 = vsel %vm784, %v1620, %v1622
      %v1624 = vrot.slane %v1330, 1
      %v1625 = vsel %vm784, %v1622, %v1624
      %v1627 = vsel %vm307, %v1617, 0
      %v1630 = vsel %vm307, %v1619, 0
      %v1633 = vsel %vm307, %v1621, 0
      %v1636 = vsel %vm307, %v1623, 0
      %v1639 = vsel %vm307, %v1625, 0
      %v1642 = vsel %vm307, %v1624, 0
      %v1645 = vsel %vm326, %v1611, 0
      %1647 = vmatpush.bf16.msra.mxu0 0
      %1648 = vmatpush.bf16.msra.mxu0 0
      %1649 = vmatpush.bf16.msra.mxu0 0
      %1650 = vmatpush.bf16.msra.mxu0 0
      %1651 = vmatpush.bf16.msra.mxu0 0
      %1652 = vmatpush.bf16.msra.mxu0 0
      %1653 = vmatpush.bf16.msra.mxu0 0
      %1654 = vmatpush.bf16.msra.mxu0 %v1645
      %1655 = vmatmul.bf16.gmra.mxu0 %v1627
      %v1656 = vpop.f32.mrf.mxu0
      %v1657 = vadd.f32 0.0, %v1656
      %v1658 = vpop.f32.mrf.mxu0
      %v1659 = vadd.f32 0.0, %v1658
      %1660 = vmatmul.bf16.gmra.mxu0 %v1630
      %v1661 = vpop.f32.mrf.mxu0
      %v1662 = vadd.f32 0.0, %v1661
      %v1663 = vpop.f32.mrf.mxu0
      %v1664 = vadd.f32 0.0, %v1663
      %1665 = vmatmul.bf16.gmra.mxu0 %v1633
      %v1666 = vpop.f32.mrf.mxu0
      %v1667 = vadd.f32 0.0, %v1666
      %v1668 = vpop.f32.mrf.mxu0
      %v1669 = vadd.f32 0.0, %v1668
      %1670 = vmatmul.bf16.gmra.mxu0 %v1636
      %v1671 = vpop.f32.mrf.mxu0
      %v1672 = vadd.f32 0.0, %v1671
      %v1673 = vpop.f32.mrf.mxu0
      %v1674 = vadd.f32 0.0, %v1673
      %1675 = vmatmul.bf16.gmra.mxu0 %v1639
      %v1676 = vpop.f32.mrf.mxu0
      %v1677 = vadd.f32 0.0, %v1676
      %v1678 = vpop.f32.mrf.mxu0
      %v1679 = vadd.f32 0.0, %v1678
      %1680 = vmatmul.bf16.gmra.mxu0 %v1642
      %v1681 = vpop.f32.mrf.mxu0
      %v1682 = vadd.f32 0.0, %v1681
      %v1683 = vpop.f32.mrf.mxu0
      %1684 = vdwg.mxu0
      %v1685 = vadd.f32 %v1598, %v1657
      %v1686 = vadd.f32 %v1599, %v1659
      %v1687 = vadd.f32 %v1600, %v1662
      %v1688 = vadd.f32 %v1601, %v1664
      %v1689 = vadd.f32 %v1602, %v1667
      %v1690 = vadd.f32 %v1603, %v1669
      %v1691 = vadd.f32 %v1604, %v1672
      %v1692 = vadd.f32 %v1605, %v1674
      %v1693 = vadd.f32 %v1606, %v1677
      %v1694 = vadd.f32 %v1607, %v1679
      %v1695 = vadd.f32 %v1608, %v1682
      %v1696 = vld [vmem:[%s1175] sm:$0xe]
      %s1697 = scalar_lea.vmem %s1, 24
      %v1698 = vld [vmem:[%s1697] sm:$0x3]
      %v1700 = vunpack.c.l.b16 %v1696
      %v1701 = vpack.c.b16 %v1475, %v1700
      %v1702 = vrot.slane %v1701, 1
      %v1703 = vrot.slane %v1487, 1
      %v1704 = vsel %vm784, %v1702, %v1703
      %v1705 = vrot.slane %v1488, 1
      %v1706 = vsel %vm784, %v1703, %v1705
      %v1707 = vrot.slane %v1489, 1
      %v1708 = vsel %vm784, %v1705, %v1707
      %v1709 = vrot.slane %v1490, 1
      %v1710 = vsel %vm784, %v1707, %v1709
      %v1711 = vrot.slane %v1491, 1
      %v1712 = vsel %vm784, %v1709, %v1711
      %v1714 = vsel %vm307, %v1704, 0
      %v1717 = vsel %vm307, %v1706, 0
      %v1720 = vsel %vm307, %v1708, 0
      %v1723 = vsel %vm307, %v1710, 0
      %v1726 = vsel %vm307, %v1712, 0
      %v1729 = vsel %vm307, %v1711, 0
      %v1732 = vsel %vm326, %v1698, 0
      %1734 = vmatpush.bf16.msra.mxu0 0
      %1735 = vmatpush.bf16.msra.mxu0 0
      %1736 = vmatpush.bf16.msra.mxu0 0
      %1737 = vmatpush.bf16.msra.mxu0 0
      %1738 = vmatpush.bf16.msra.mxu0 0
      %1739 = vmatpush.bf16.msra.mxu0 0
      %1740 = vmatpush.bf16.msra.mxu0 0
      %1741 = vmatpush.bf16.msra.mxu0 %v1732
      %1742 = vmatmul.bf16.gmra.mxu0 %v1714
      %v1743 = vpop.f32.mrf.mxu0
      %v1744 = vadd.f32 0.0, %v1743
      %v1745 = vpop.f32.mrf.mxu0
      %v1746 = vadd.f32 0.0, %v1745
      %1747 = vmatmul.bf16.gmra.mxu0 %v1717
      %v1748 = vpop.f32.mrf.mxu0
      %v1749 = vadd.f32 0.0, %v1748
      %v1750 = vpop.f32.mrf.mxu0
      %v1751 = vadd.f32 0.0, %v1750
      %1752 = vmatmul.bf16.gmra.mxu0 %v1720
      %v1753 = vpop.f32.mrf.mxu0
      %v1754 = vadd.f32 0.0, %v1753
      %v1755 = vpop.f32.mrf.mxu0
      %v1756 = vadd.f32 0.0, %v1755
      %1757 = vmatmul.bf16.gmra.mxu0 %v1723
      %v1758 = vpop.f32.mrf.mxu0
      %v1759 = vadd.f32 0.0, %v1758
      %v1760 = vpop.f32.mrf.mxu0
      %v1761 = vadd.f32 0.0, %v1760
      %1762 = vmatmul.bf16.gmra.mxu0 %v1726
      %v1763 = vpop.f32.mrf.mxu0
      %v1764 = vadd.f32 0.0, %v1763
      %v1765 = vpop.f32.mrf.mxu0
      %v1766 = vadd.f32 0.0, %v1765
      %1767 = vmatmul.bf16.gmra.mxu0 %v1729
      %v1768 = vpop.f32.mrf.mxu0
      %v1769 = vadd.f32 0.0, %v1768
      %v1770 = vpop.f32.mrf.mxu0
      %1771 = vdwg.mxu0
      %v1772 = vadd.f32 %v1685, %v1744
      %v1773 = vadd.f32 %v1686, %v1746
      %v1774 = vadd.f32 %v1687, %v1749
      %v1775 = vadd.f32 %v1688, %v1751
      %v1776 = vadd.f32 %v1689, %v1754
      %v1777 = vadd.f32 %v1690, %v1756
      %v1778 = vadd.f32 %v1691, %v1759
      %v1779 = vadd.f32 %v1692, %v1761
      %v1780 = vadd.f32 %v1693, %v1764
      %v1781 = vadd.f32 %v1694, %v1766
      %v1782 = vadd.f32 %v1695, %v1769
      %v1783 = vld [vmem:[%s1063 + $0x2c] sm:$0x3]
      %s1784 = scalar_lea.vmem %s1, 26
      %v1785 = vld [vmem:[%s1784] sm:$0x3]
      %v1787 = vunpack.c.l.b16 %v1783
      %v1788 = vpack.c.b16 %v1787, %v1323
      %v1790 = vshrl.u32 %v1614, 16
      %v1792 = vrot.slane %v1790, 1
      %v1793 = vshll.u32 %v1614, 16
      %v1795 = vrot.slane %v1793, 2
      %v1796 = vor.u32 %v1792, %v1795
      %v1797 = vrot.slane %v1343, 1
      %v1798 = vrot.slane %v1339, 2
      %v1799 = vor.u32 %v1797, %v1798
      %v1800 = vsel %vm959, %v1796, %v1799
      %v1801 = vrot.slane %v1351, 1
      %v1802 = vrot.slane %v1347, 2
      %v1803 = vor.u32 %v1801, %v1802
      %v1804 = vsel %vm959, %v1799, %v1803
      %v1805 = vrot.slane %v1359, 1
      %v1806 = vrot.slane %v1355, 2
      %v1807 = vor.u32 %v1805, %v1806
      %v1808 = vsel %vm959, %v1803, %v1807
      %v1809 = vrot.slane %v1367, 1
      %v1810 = vrot.slane %v1363, 2
      %v1811 = vor.u32 %v1809, %v1810
      %v1812 = vsel %vm959, %v1807, %v1811
      %v1814 = vshrl.u32 %v1788, 16
      %v1816 = vrot.slane %v1814, 1
      %v1817 = vshll.u32 %v1788, 16
      %v1819 = vrot.slane %v1817, 2
      %v1820 = vor.u32 %v1816, %v1819
      %v1821 = vsel %vm959, %v1811, %v1820
      %v1823 = vsel %vm307, %v1800, 0
      %v1826 = vsel %vm307, %v1804, 0
      %v1829 = vsel %vm307, %v1808, 0
      %v1832 = vsel %vm307, %v1812, 0
      %v1835 = vsel %vm307, %v1821, 0
      %v1838 = vsel %vm307, %v1820, 0
      %v1841 = vsel %vm326, %v1785, 0
      %1843 = vmatpush.bf16.msra.mxu0 0
      %1844 = vmatpush.bf16.msra.mxu0 0
      %1845 = vmatpush.bf16.msra.mxu0 0
      %1846 = vmatpush.bf16.msra.mxu0 0
      %1847 = vmatpush.bf16.msra.mxu0 0
      %1848 = vmatpush.bf16.msra.mxu0 0
      %1849 = vmatpush.bf16.msra.mxu0 0
      %1850 = vmatpush.bf16.msra.mxu0 %v1841
      %1851 = vmatmul.bf16.gmra.mxu0 %v1823
      %v1852 = vpop.f32.mrf.mxu0
      %v1853 = vadd.f32 0.0, %v1852
      %v1854 = vpop.f32.mrf.mxu0
      %v1855 = vadd.f32 0.0, %v1854
      %1856 = vmatmul.bf16.gmra.mxu0 %v1826
      %v1857 = vpop.f32.mrf.mxu0
      %v1858 = vadd.f32 0.0, %v1857
      %v1859 = vpop.f32.mrf.mxu0
      %v1860 = vadd.f32 0.0, %v1859
      %1861 = vmatmul.bf16.gmra.mxu0 %v1829
      %v1862 = vpop.f32.mrf.mxu0
      %v1863 = vadd.f32 0.0, %v1862
      %v1864 = vpop.f32.mrf.mxu0
      %v1865 = vadd.f32 0.0, %v1864
      %1866 = vmatmul.bf16.gmra.mxu0 %v1832
      %v1867 = vpop.f32.mrf.mxu0
      %v1868 = vadd.f32 0.0, %v1867
      %v1869 = vpop.f32.mrf.mxu0
      %v1870 = vadd.f32 0.0, %v1869
      %1871 = vmatmul.bf16.gmra.mxu0 %v1835
      %v1872 = vpop.f32.mrf.mxu0
      %v1873 = vadd.f32 0.0, %v1872
      %v1874 = vpop.f32.mrf.mxu0
      %v1875 = vadd.f32 0.0, %v1874
      %1876 = vmatmul.bf16.gmra.mxu0 %v1838
      %v1877 = vpop.f32.mrf.mxu0
      %v1878 = vadd.f32 0.0, %v1877
      %v1879 = vpop.f32.mrf.mxu0
      %1880 = vdwg.mxu0
      %v1881 = vadd.f32 %v1772, %v1853
      %v1882 = vadd.f32 %v1773, %v1855
      %v1883 = vadd.f32 %v1774, %v1858
      %v1884 = vadd.f32 %v1775, %v1860
      %v1885 = vadd.f32 %v1776, %v1863
      %v1886 = vadd.f32 %v1777, %v1865
      %v1887 = vadd.f32 %v1778, %v1868
      %v1888 = vadd.f32 %v1779, %v1870
      %v1889 = vadd.f32 %v1780, %v1873
      %v1890 = vadd.f32 %v1781, %v1875
      %v1891 = vadd.f32 %v1782, %v1878
      %v1892 = vld [vmem:[%s246 + $0x4] sm:$0xe]
      %v1893 = vld [vmem:[%s246 + $0x8] sm:$0xf]
      %v1894 = vld [vmem:[%s246 + $0xc] sm:$0xf]
      %v1895 = vld [vmem:[%s246 + $0x10] sm:$0xf]
      %v1896 = vld [vmem:[%s246 + $0x14] sm:$0xf]
      %v1897 = vld [vmem:[%s246 + $0x18] sm:$0xf]
      %v1898 = vld [vmem:[%s246 + $0x1c] sm:$0xf]
      %v1899 = vld [vmem:[%s246 + $0x20] sm:$0xf]
      %v1900 = vld [vmem:[%s246 + $0x24] sm:$0xf]
      %v1901 = vld [vmem:[%s246 + $0x28] sm:$0xf]
      %v1902 = vld [vmem:[%s246 + $0x2c] sm:$0xf]
      %v1903 = vld [vmem:[%s246 + $0x30] sm:$0x3]
      %s1904 = scalar_lea.vmem %s1, 28
      %v1905 = vld [vmem:[%s1904] sm:$0x3]
      %v1918 = vunpack.c.l.b16 %v1892
      %v1919 = vunpack.c.l.b16 %v1893
      %v1920 = vunpack.c.l.b16 %v1894
      %v1921 = vunpack.c.l.b16 %v1895
      %v1922 = vunpack.c.l.b16 %v1896
      %v1923 = vunpack.c.l.b16 %v1897
      %v1924 = vunpack.c.l.b16 %v1898
      %v1925 = vunpack.c.l.b16 %v1899
      %v1926 = vunpack.c.l.b16 %v1900
      %v1927 = vunpack.c.l.b16 %v1901
      %v1928 = vunpack.c.l.b16 %v1902
      %v1929 = vunpack.c.l.b16 %v1903
      %v1930 = vpack.c.b16 %v1919, %v1918
      %v1931 = vpack.c.b16 %v1921, %v1920
      %v1932 = vpack.c.b16 %v1923, %v1922
      %v1933 = vpack.c.b16 %v1925, %v1924
      %v1934 = vpack.c.b16 %v1927, %v1926
      %v1935 = vpack.c.b16 %v1929, %v1928
      %v1937 = vshrl.u32 %v1930, 16
      %v1939 = vrot.slane %v1937, 1
      %v1940 = vshll.u32 %v1930, 16
      %v1942 = vrot.slane %v1940, 2
      %v1943 = vor.u32 %v1939, %v1942
      %v1945 = vshrl.u32 %v1931, 16
      %v1947 = vrot.slane %v1945, 1
      %v1948 = vshll.u32 %v1931, 16
      %v1950 = vrot.slane %v1948, 2
      %v1951 = vor.u32 %v1947, %v1950
      %v1952 = vsel %vm959, %v1943, %v1951
      %v1954 = vshrl.u32 %v1932, 16
      %v1956 = vrot.slane %v1954, 1
      %v1957 = vshll.u32 %v1932, 16
      %v1959 = vrot.slane %v1957, 2
      %v1960 = vor.u32 %v1956, %v1959
      %v1961 = vsel %vm959, %v1951, %v1960
      %v1963 = vshrl.u32 %v1933, 16
      %v1965 = vrot.slane %v1963, 1
      %v1966 = vshll.u32 %v1933, 16
      %v1968 = vrot.slane %v1966, 2
      %v1969 = vor.u32 %v1965, %v1968
      %v1970 = vsel %vm959, %v1960, %v1969
      %v1972 = vshrl.u32 %v1934, 16
      %v1974 = vrot.slane %v1972, 1
      %v1975 = vshll.u32 %v1934, 16
      %v1977 = vrot.slane %v1975, 2
      %v1978 = vor.u32 %v1974, %v1977
      %v1979 = vsel %vm959, %v1969, %v1978
      %v1981 = vshrl.u32 %v1935, 16
      %v1983 = vrot.slane %v1981, 1
      %v1984 = vshll.u32 %v1935, 16
      %v1986 = vrot.slane %v1984, 2
      %v1987 = vor.u32 %v1983, %v1986
      %v1988 = vsel %vm959, %v1978, %v1987
      %v1990 = vsel %vm307, %v1952, 0
      %v1993 = vsel %vm307, %v1961, 0
      %v1996 = vsel %vm307, %v1970, 0
      %v1999 = vsel %vm307, %v1979, 0
      %v2002 = vsel %vm307, %v1988, 0
      %v2005 = vsel %vm307, %v1987, 0
      %v2008 = vsel %vm326, %v1905, 0
      %2010 = vmatpush.bf16.msra.mxu0 0
      %2011 = vmatpush.bf16.msra.mxu0 0
      %2012 = vmatpush.bf16.msra.mxu0 0
      %2013 = vmatpush.bf16.msra.mxu0 0
      %2014 = vmatpush.bf16.msra.mxu0 0
      %2015 = vmatpush.bf16.msra.mxu0 0
      %2016 = vmatpush.bf16.msra.mxu0 0
      %2017 = vmatpush.bf16.msra.mxu0 %v2008
      %2018 = vmatmul.bf16.gmra.mxu0 %v1990
      %v2019 = vpop.f32.mrf.mxu0
      %v2020 = vadd.f32 0.0, %v2019
      %v2021 = vpop.f32.mrf.mxu0
      %v2022 = vadd.f32 0.0, %v2021
      %2023 = vmatmul.bf16.gmra.mxu0 %v1993
      %v2024 = vpop.f32.mrf.mxu0
      %v2025 = vadd.f32 0.0, %v2024
      %v2026 = vpop.f32.mrf.mxu0
      %v2027 = vadd.f32 0.0, %v2026
      %2028 = vmatmul.bf16.gmra.mxu0 %v1996
      %v2029 = vpop.f32.mrf.mxu0
      %v2030 = vadd.f32 0.0, %v2029
      %v2031 = vpop.f32.mrf.mxu0
      %v2032 = vadd.f32 0.0, %v2031
      %2033 = vmatmul.bf16.gmra.mxu0 %v1999
      %v2034 = vpop.f32.mrf.mxu0
      %v2035 = vadd.f32 0.0, %v2034
      %v2036 = vpop.f32.mrf.mxu0
      %v2037 = vadd.f32 0.0, %v2036
      %2038 = vmatmul.bf16.gmra.mxu0 %v2002
      %v2039 = vpop.f32.mrf.mxu0
      %v2040 = vadd.f32 0.0, %v2039
      %v2041 = vpop.f32.mrf.mxu0
      %v2042 = vadd.f32 0.0, %v2041
      %2043 = vmatmul.bf16.gmra.mxu0 %v2005
      %v2044 = vpop.f32.mrf.mxu0
      %v2045 = vadd.f32 0.0, %v2044
      %v2046 = vpop.f32.mrf.mxu0
      %2047 = vdwg.mxu0
      %v2048 = vadd.f32 %v1881, %v2020
      %v2049 = vadd.f32 %v1882, %v2022
      %v2050 = vadd.f32 %v1883, %v2025
      %v2051 = vadd.f32 %v1884, %v2027
      %v2052 = vadd.f32 %v1885, %v2030
      %v2053 = vadd.f32 %v1886, %v2032
      %v2054 = vadd.f32 %v1887, %v2035
      %v2055 = vadd.f32 %v1888, %v2037
      %v2056 = vadd.f32 %v1889, %v2040
      %v2057 = vadd.f32 %v1890, %v2042
      %v2058 = vadd.f32 %v1891, %v2045
      %v2059 = vld [vmem:[%s265 + $0x4] sm:$0xe]
      %v2060 = vld [vmem:[%s265 + $0x8] sm:$0xf]
      %v2061 = vld [vmem:[%s265 + $0xc] sm:$0xf]
      %v2062 = vld [vmem:[%s265 + $0x10] sm:$0xf]
      %v2063 = vld [vmem:[%s265 + $0x14] sm:$0xf]
      %v2064 = vld [vmem:[%s265 + $0x18] sm:$0xf]
      %v2065 = vld [vmem:[%s265 + $0x1c] sm:$0xf]
      %v2066 = vld [vmem:[%s265 + $0x20] sm:$0xf]
      %v2067 = vld [vmem:[%s265 + $0x24] sm:$0xf]
      %v2068 = vld [vmem:[%s265 + $0x28] sm:$0xf]
      %v2069 = vld [vmem:[%s265 + $0x2c] sm:$0xf]
      %v2070 = vld [vmem:[%s265 + $0x30] sm:$0x3]
      %s2071 = scalar_lea.vmem %s1, 30
      %v2072 = vld [vmem:[%s2071] sm:$0x3]
      %v2085 = vunpack.c.l.b16 %v2059
      %v2086 = vunpack.c.l.b16 %v2060
      %v2087 = vunpack.c.l.b16 %v2061
      %v2088 = vunpack.c.l.b16 %v2062
      %v2089 = vunpack.c.l.b16 %v2063
      %v2090 = vunpack.c.l.b16 %v2064
      %v2091 = vunpack.c.l.b16 %v2065
      %v2092 = vunpack.c.l.b16 %v2066
      %v2093 = vunpack.c.l.b16 %v2067
      %v2094 = vunpack.c.l.b16 %v2068
      %v2095 = vunpack.c.l.b16 %v2069
      %v2096 = vunpack.c.l.b16 %v2070
      %v2097 = vpack.c.b16 %v2086, %v2085
      %v2098 = vpack.c.b16 %v2088, %v2087
      %v2099 = vpack.c.b16 %v2090, %v2089
      %v2100 = vpack.c.b16 %v2092, %v2091
      %v2101 = vpack.c.b16 %v2094, %v2093
      %v2102 = vpack.c.b16 %v2096, %v2095
      %v2104 = vshrl.u32 %v2097, 16
      %v2106 = vrot.slane %v2104, 1
      %v2107 = vshll.u32 %v2097, 16
      %v2109 = vrot.slane %v2107, 2
      %v2110 = vor.u32 %v2106, %v2109
      %v2112 = vshrl.u32 %v2098, 16
      %v2114 = vrot.slane %v2112, 1
      %v2115 = vshll.u32 %v2098, 16
      %v2117 = vrot.slane %v2115, 2
      %v2118 = vor.u32 %v2114, %v2117
      %v2119 = vsel %vm959, %v2110, %v2118
      %v2121 = vshrl.u32 %v2099, 16
      %v2123 = vrot.slane %v2121, 1
      %v2124 = vshll.u32 %v2099, 16
      %v2126 = vrot.slane %v2124, 2
      %v2127 = vor.u32 %v2123, %v2126
      %v2128 = vsel %vm959, %v2118, %v2127
      %v2130 = vshrl.u32 %v2100, 16
      %v2132 = vrot.slane %v2130, 1
      %v2133 = vshll.u32 %v2100, 16
      %v2135 = vrot.slane %v2133, 2
      %v2136 = vor.u32 %v2132, %v2135
      %v2137 = vsel %vm959, %v2127, %v2136
      %v2139 = vshrl.u32 %v2101, 16
      %v2141 = vrot.slane %v2139, 1
      %v2142 = vshll.u32 %v2101, 16
      %v2144 = vrot.slane %v2142, 2
      %v2145 = vor.u32 %v2141, %v2144
      %v2146 = vsel %vm959, %v2136, %v2145
      %v2148 = vshrl.u32 %v2102, 16
      %v2150 = vrot.slane %v2148, 1
      %v2151 = vshll.u32 %v2102, 16
      %v2153 = vrot.slane %v2151, 2
      %v2154 = vor.u32 %v2150, %v2153
      %v2155 = vsel %vm959, %v2145, %v2154
      %v2157 = vsel %vm307, %v2119, 0
      %v2160 = vsel %vm307, %v2128, 0
      %v2163 = vsel %vm307, %v2137, 0
      %v2166 = vsel %vm307, %v2146, 0
      %v2169 = vsel %vm307, %v2155, 0
      %v2172 = vsel %vm307, %v2154, 0
      %v2175 = vsel %vm326, %v2072, 0
      %2177 = vmatpush.bf16.msra.mxu0 0
      %2178 = vmatpush.bf16.msra.mxu0 0
      %2179 = vmatpush.bf16.msra.mxu0 0
      %2180 = vmatpush.bf16.msra.mxu0 0
      %2181 = vmatpush.bf16.msra.mxu0 0
      %2182 = vmatpush.bf16.msra.mxu0 0
      %2183 = vmatpush.bf16.msra.mxu0 0
      %2184 = vmatpush.bf16.msra.mxu0 %v2175
      %2185 = vmatmul.bf16.gmra.mxu0 %v2157
      %v2186 = vpop.f32.mrf.mxu0
      %v2187 = vadd.f32 0.0, %v2186
      %v2188 = vpop.f32.mrf.mxu0
      %v2189 = vadd.f32 0.0, %v2188
      %2190 = vmatmul.bf16.gmra.mxu0 %v2160
      %v2191 = vpop.f32.mrf.mxu0
      %v2192 = vadd.f32 0.0, %v2191
      %v2193 = vpop.f32.mrf.mxu0
      %v2194 = vadd.f32 0.0, %v2193
      %2195 = vmatmul.bf16.gmra.mxu0 %v2163
      %v2196 = vpop.f32.mrf.mxu0
      %v2197 = vadd.f32 0.0, %v2196
      %v2198 = vpop.f32.mrf.mxu0
      %v2199 = vadd.f32 0.0, %v2198
      %2200 = vmatmul.bf16.gmra.mxu0 %v2166
      %v2201 = vpop.f32.mrf.mxu0
      %v2202 = vadd.f32 0.0, %v2201
      %v2203 = vpop.f32.mrf.mxu0
      %v2204 = vadd.f32 0.0, %v2203
      %2205 = vmatmul.bf16.gmra.mxu0 %v2169
      %v2206 = vpop.f32.mrf.mxu0
      %v2207 = vadd.f32 0.0, %v2206
      %v2208 = vpop.f32.mrf.mxu0
      %v2209 = vadd.f32 0.0, %v2208
      %2210 = vmatmul.bf16.gmra.mxu0 %v2172
      %v2211 = vpop.f32.mrf.mxu0
      %v2212 = vadd.f32 0.0, %v2211
      %v2213 = vpop.f32.mrf.mxu0
      %2214 = vdwg.mxu0
      %v2215 = vadd.f32 %v2048, %v2187
      %v2216 = vadd.f32 %v2049, %v2189
      %v2217 = vadd.f32 %v2050, %v2192
      %v2218 = vadd.f32 %v2051, %v2194
      %v2219 = vadd.f32 %v2052, %v2197
      %v2220 = vadd.f32 %v2053, %v2199
      %v2221 = vadd.f32 %v2054, %v2202
      %v2222 = vadd.f32 %v2055, %v2204
      %v2223 = vadd.f32 %v2056, %v2207
      %v2224 = vadd.f32 %v2057, %v2209
      %v2225 = vadd.f32 %v2058, %v2212
      %v2226 = vld [vmem:[%s246 + $0x4] sm:$0xc]
      %s2227 = scalar_lea.vmem %s1, 32
      %v2228 = vld [vmem:[%s2227] sm:$0x3]
      %v2230 = vunpack.c.l.b16 %v2226
      %v2231 = vpack.c.b16 %v1919, %v2230
      %vm2232 = vcmask 1045504
      %v2233 = vrot.slane %v2231, 2
      %v2234 = vrot.slane %v1931, 2
      %v2235 = vsel %vm2232, %v2233, %v2234
      %v2236 = vrot.slane %v1932, 2
      %v2237 = vsel %vm2232, %v2234, %v2236
      %v2238 = vrot.slane %v1933, 2
      %v2239 = vsel %vm2232, %v2236, %v2238
      %v2240 = vrot.slane %v1934, 2
      %v2241 = vsel %vm2232, %v2238, %v2240
      %v2242 = vrot.slane %v1935, 2
      %v2243 = vsel %vm2232, %v2240, %v2242
      %v2245 = vsel %vm307, %v2235, 0
      %v2248 = vsel %vm307, %v2237, 0
      %v2251 = vsel %vm307, %v2239, 0
      %v2254 = vsel %vm307, %v2241, 0
      %v2257 = vsel %vm307, %v2243, 0
      %v2260 = vsel %vm307, %v2242, 0
      %v2263 = vsel %vm326, %v2228, 0
      %2265 = vmatpush.bf16.msra.mxu0 0
      %2266 = vmatpush.bf16.msra.mxu0 0
      %2267 = vmatpush.bf16.msra.mxu0 0
      %2268 = vmatpush.bf16.msra.mxu0 0
      %2269 = vmatpush.bf16.msra.mxu0 0
      %2270 = vmatpush.bf16.msra.mxu0 0
      %2271 = vmatpush.bf16.msra.mxu0 0
      %2272 = vmatpush.bf16.msra.mxu0 %v2263
      %2273 = vmatmul.bf16.gmra.mxu0 %v2245
      %v2274 = vpop.f32.mrf.mxu0
      %v2275 = vadd.f32 0.0, %v2274
      %v2276 = vpop.f32.mrf.mxu0
      %v2277 = vadd.f32 0.0, %v2276
      %2278 = vmatmul.bf16.gmra.mxu0 %v2248
      %v2279 = vpop.f32.mrf.mxu0
      %v2280 = vadd.f32 0.0, %v2279
      %v2281 = vpop.f32.mrf.mxu0
      %v2282 = vadd.f32 0.0, %v2281
      %2283 = vmatmul.bf16.gmra.mxu0 %v2251
      %v2284 = vpop.f32.mrf.mxu0
      %v2285 = vadd.f32 0.0, %v2284
      %v2286 = vpop.f32.mrf.mxu0
      %v2287 = vadd.f32 0.0, %v2286
      %2288 = vmatmul.bf16.gmra.mxu0 %v2254
      %v2289 = vpop.f32.mrf.mxu0
      %v2290 = vadd.f32 0.0, %v2289
      %v2291 = vpop.f32.mrf.mxu0
      %v2292 = vadd.f32 0.0, %v2291
      %2293 = vmatmul.bf16.gmra.mxu0 %v2257
      %v2294 = vpop.f32.mrf.mxu0
      %v2295 = vadd.f32 0.0, %v2294
      %v2296 = vpop.f32.mrf.mxu0
      %v2297 = vadd.f32 0.0, %v2296
      %2298 = vmatmul.bf16.gmra.mxu0 %v2260
      %v2299 = vpop.f32.mrf.mxu0
      %v2300 = vadd.f32 0.0, %v2299
      %v2301 = vpop.f32.mrf.mxu0
      %2302 = vdwg.mxu0
      %v2303 = vadd.f32 %v2215, %v2275
      %v2304 = vadd.f32 %v2216, %v2277
      %v2305 = vadd.f32 %v2217, %v2280
      %v2306 = vadd.f32 %v2218, %v2282
      %v2307 = vadd.f32 %v2219, %v2285
      %v2308 = vadd.f32 %v2220, %v2287
      %v2309 = vadd.f32 %v2221, %v2290
      %v2310 = vadd.f32 %v2222, %v2292
      %v2311 = vadd.f32 %v2223, %v2295
      %v2312 = vadd.f32 %v2224, %v2297
      %v2313 = vadd.f32 %v2225, %v2300
      %v2314 = vld [vmem:[%s265 + $0x4] sm:$0xc]
      %s2315 = scalar_lea.vmem %s1, 34
      %v2316 = vld [vmem:[%s2315] sm:$0x3]
      %v2318 = vunpack.c.l.b16 %v2314
      %v2319 = vpack.c.b16 %v2086, %v2318
      %v2320 = vrot.slane %v2319, 2
      %v2321 = vrot.slane %v2098, 2
      %v2322 = vsel %vm2232, %v2320, %v2321
      %v2323 = vrot.slane %v2099, 2
      %v2324 = vsel %vm2232, %v2321, %v2323
      %v2325 = vrot.slane %v2100, 2
      %v2326 = vsel %vm2232, %v2323, %v2325
      %v2327 = vrot.slane %v2101, 2
      %v2328 = vsel %vm2232, %v2325, %v2327
      %v2329 = vrot.slane %v2102, 2
      %v2330 = vsel %vm2232, %v2327, %v2329
      %v2332 = vsel %vm307, %v2322, 0
      %v2335 = vsel %vm307, %v2324, 0
      %v2338 = vsel %vm307, %v2326, 0
      %v2341 = vsel %vm307, %v2328, 0
      %v2344 = vsel %vm307, %v2330, 0
      %v2347 = vsel %vm307, %v2329, 0
      %v2350 = vsel %vm326, %v2316, 0
      %2352 = vmatpush.bf16.msra.mxu0 0
      %2353 = vmatpush.bf16.msra.mxu0 0
      %2354 = vmatpush.bf16.msra.mxu0 0
      %2355 = vmatpush.bf16.msra.mxu0 0
      %2356 = vmatpush.bf16.msra.mxu0 0
      %2357 = vmatpush.bf16.msra.mxu0 0
      %2358 = vmatpush.bf16.msra.mxu0 0
      %2359 = vmatpush.bf16.msra.mxu0 %v2350
      %2360 = vmatmul.bf16.gmra.mxu0 %v2332
      %v2361 = vpop.f32.mrf.mxu0
      %v2362 = vadd.f32 0.0, %v2361
      %v2363 = vpop.f32.mrf.mxu0
      %v2364 = vadd.f32 0.0, %v2363
      %2365 = vmatmul.bf16.gmra.mxu0 %v2335
      %v2366 = vpop.f32.mrf.mxu0
      %v2367 = vadd.f32 0.0, %v2366
      %v2368 = vpop.f32.mrf.mxu0
      %v2369 = vadd.f32 0.0, %v2368
      %2370 = vmatmul.bf16.gmra.mxu0 %v2338
      %v2371 = vpop.f32.mrf.mxu0
      %v2372 = vadd.f32 0.0, %v2371
      %v2373 = vpop.f32.mrf.mxu0
      %v2374 = vadd.f32 0.0, %v2373
      %2375 = vmatmul.bf16.gmra.mxu0 %v2341
      %v2376 = vpop.f32.mrf.mxu0
      %v2377 = vadd.f32 0.0, %v2376
      %v2378 = vpop.f32.mrf.mxu0
      %v2379 = vadd.f32 0.0, %v2378
      %2380 = vmatmul.bf16.gmra.mxu0 %v2344
      %v2381 = vpop.f32.mrf.mxu0
      %v2382 = vadd.f32 0.0, %v2381
      %v2383 = vpop.f32.mrf.mxu0
      %v2384 = vadd.f32 0.0, %v2383
      %2385 = vmatmul.bf16.gmra.mxu0 %v2347
      %v2386 = vpop.f32.mrf.mxu0
      %v2387 = vadd.f32 0.0, %v2386
      %v2388 = vpop.f32.mrf.mxu0
      %2389 = vdwg.mxu0
      %v2390 = vadd.f32 %v2303, %v2362
      %v2391 = vadd.f32 %v2304, %v2364
      %v2392 = vadd.f32 %v2305, %v2367
      %v2393 = vadd.f32 %v2306, %v2369
      %v2394 = vadd.f32 %v2307, %v2372
      %v2395 = vadd.f32 %v2308, %v2374
      %v2396 = vadd.f32 %v2309, %v2377
      %v2397 = vadd.f32 %v2310, %v2379
      %v2398 = vadd.f32 %v2311, %v2382
      %v2399 = vadd.f32 %v2312, %v2384
      %v2400 = vadd.f32 %v2313, %v2387
      %v2401 = vld [vmem:[%s246 + $0x30] sm:$0x7]
      %s2402 = scalar_lea.vmem %s1, 36
      %v2403 = vld [vmem:[%s2402] sm:$0x3]
      %v2405 = vunpack.c.l.b16 %v2401
      %v2406 = vpack.c.b16 %v2405, %v1928
      %vm2407 = vsmask.f32 5376
      %v2409 = vshrl.u32 %v2231, 16
      %v2411 = vrot.slane %v2409, 2
      %v2412 = vshll.u32 %v2231, 16
      %v2414 = vrot.slane %v2412, 3
      %v2415 = vor.u32 %v2411, %v2414
      %v2416 = vrot.slane %v1945, 2
      %v2417 = vrot.slane %v1948, 3
      %v2418 = vor.u32 %v2416, %v2417
      %v2419 = vsel %vm2407, %v2415, %v2418
      %v2420 = vrot.slane %v1954, 2
      %v2421 = vrot.slane %v1957, 3
      %v2422 = vor.u32 %v2420, %v2421
      %v2423 = vsel %vm2407, %v2418, %v2422
      %v2424 = vrot.slane %v1963, 2
      %v2425 = vrot.slane %v1966, 3
      %v2426 = vor.u32 %v2424, %v2425
      %v2427 = vsel %vm2407, %v2422, %v2426
      %v2428 = vrot.slane %v1972, 2
      %v2429 = vrot.slane %v1975, 3
      %v2430 = vor.u32 %v2428, %v2429
      %v2431 = vsel %vm2407, %v2426, %v2430
      %v2433 = vshrl.u32 %v2406, 16
      %v2435 = vrot.slane %v2433, 2
      %v2436 = vshll.u32 %v2406, 16
      %v2438 = vrot.slane %v2436, 3
      %v2439 = vor.u32 %v2435, %v2438
      %v2440 = vsel %vm2407, %v2430, %v2439
      %v2442 = vsel %vm307, %v2419, 0
      %v2445 = vsel %vm307, %v2423, 0
      %v2448 = vsel %vm307, %v2427, 0
      %v2451 = vsel %vm307, %v2431, 0
      %v2454 = vsel %vm307, %v2440, 0
      %v2457 = vsel %vm307, %v2439, 0
      %v2460 = vsel %vm326, %v2403, 0
      %2462 = vmatpush.bf16.msra.mxu0 0
      %2463 = vmatpush.bf16.msra.mxu0 0
      %2464 = vmatpush.bf16.msra.mxu0 0
      %2465 = vmatpush.bf16.msra.mxu0 0
      %2466 = vmatpush.bf16.msra.mxu0 0
      %2467 = vmatpush.bf16.msra.mxu0 0
      %2468 = vmatpush.bf16.msra.mxu0 0
      %2469 = vmatpush.bf16.msra.mxu0 %v2460
      %2470 = vmatmul.bf16.gmra.mxu0 %v2442
      %v2471 = vpop.f32.mrf.mxu0
      %v2472 = vadd.f32 0.0, %v2471
      %v2473 = vpop.f32.mrf.mxu0
      %v2474 = vadd.f32 0.0, %v2473
      %2475 = vmatmul.bf16.gmra.mxu0 %v2445
      %v2476 = vpop.f32.mrf.mxu0
      %v2477 = vadd.f32 0.0, %v2476
      %v2478 = vpop.f32.mrf.mxu0
      %v2479 = vadd.f32 0.0, %v2478
      %2480 = vmatmul.bf16.gmra.mxu0 %v2448
      %v2481 = vpop.f32.mrf.mxu0
      %v2482 = vadd.f32 0.0, %v2481
      %v2483 = vpop.f32.mrf.mxu0
      %v2484 = vadd.f32 0.0, %v2483
      %2485 = vmatmul.bf16.gmra.mxu0 %v2451
      %v2486 = vpop.f32.mrf.mxu0
      %v2487 = vadd.f32 0.0, %v2486
      %v2488 = vpop.f32.mrf.mxu0
      %v2489 = vadd.f32 0.0, %v2488
      %2490 = vmatmul.bf16.gmra.mxu0 %v2454
      %v2491 = vpop.f32.mrf.mxu0
      %v2492 = vadd.f32 0.0, %v2491
      %v2493 = vpop.f32.mrf.mxu0
      %v2494 = vadd.f32 0.0, %v2493
      %2495 = vmatmul.bf16.gmra.mxu0 %v2457
      %v2496 = vpop.f32.mrf.mxu0
      %v2497 = vadd.f32 0.0, %v2496
      %v2498 = vpop.f32.mrf.mxu0
      %2499 = vdwg.mxu0
      %v2500 = vadd.f32 %v2390, %v2472
      %v2501 = vadd.f32 %v2391, %v2474
      %v2502 = vadd.f32 %v2392, %v2477
      %v2503 = vadd.f32 %v2393, %v2479
      %v2504 = vadd.f32 %v2394, %v2482
      %v2505 = vadd.f32 %v2395, %v2484
      %v2506 = vadd.f32 %v2396, %v2487
      %v2507 = vadd.f32 %v2397, %v2489
      %v2508 = vadd.f32 %v2398, %v2492
      %v2509 = vadd.f32 %v2399, %v2494
      %v2510 = vadd.f32 %v2400, %v2497
      %v2511 = vld [vmem:[%s265 + $0x30] sm:$0x7]
      %s2512 = scalar_lea.vmem %s1, 38
      %v2513 = vld [vmem:[%s2512] sm:$0x3]
      %v2515 = vunpack.c.l.b16 %v2511
      %v2516 = vpack.c.b16 %v2515, %v2095
      %v2518 = vshrl.u32 %v2319, 16
      %v2520 = vrot.slane %v2518, 2
      %v2521 = vshll.u32 %v2319, 16
      %v2523 = vrot.slane %v2521, 3
      %v2524 = vor.u32 %v2520, %v2523
      %v2525 = vrot.slane %v2112, 2
      %v2526 = vrot.slane %v2115, 3
      %v2527 = vor.u32 %v2525, %v2526
      %v2528 = vsel %vm2407, %v2524, %v2527
      %v2529 = vrot.slane %v2121, 2
      %v2530 = vrot.slane %v2124, 3
      %v2531 = vor.u32 %v2529, %v2530
      %v2532 = vsel %vm2407, %v2527, %v2531
      %v2533 = vrot.slane %v2130, 2
      %v2534 = vrot.slane %v2133, 3
      %v2535 = vor.u32 %v2533, %v2534
      %v2536 = vsel %vm2407, %v2531, %v2535
      %v2537 = vrot.slane %v2139, 2
      %v2538 = vrot.slane %v2142, 3
      %v2539 = vor.u32 %v2537, %v2538
      %v2540 = vsel %vm2407, %v2535, %v2539
      %v2542 = vshrl.u32 %v2516, 16
      %v2544 = vrot.slane %v2542, 2
      %v2545 = vshll.u32 %v2516, 16
      %v2547 = vrot.slane %v2545, 3
      %v2548 = vor.u32 %v2544, %v2547
      %v2549 = vsel %vm2407, %v2539, %v2548
      %v2551 = vsel %vm307, %v2528, 0
      %v2554 = vsel %vm307, %v2532, 0
      %v2557 = vsel %vm307, %v2536, 0
      %v2560 = vsel %vm307, %v2540, 0
      %v2563 = vsel %vm307, %v2549, 0
      %v2566 = vsel %vm307, %v2548, 0
      %v2569 = vsel %vm326, %v2513, 0
      %2571 = vmatpush.bf16.msra.mxu0 0
      %2572 = vmatpush.bf16.msra.mxu0 0
      %2573 = vmatpush.bf16.msra.mxu0 0
      %2574 = vmatpush.bf16.msra.mxu0 0
      %2575 = vmatpush.bf16.msra.mxu0 0
      %2576 = vmatpush.bf16.msra.mxu0 0
      %2577 = vmatpush.bf16.msra.mxu0 0
      %2578 = vmatpush.bf16.msra.mxu0 %v2569
      %2579 = vmatmul.bf16.gmra.mxu0 %v2551
      %v2580 = vpop.f32.mrf.mxu0
      %v2581 = vadd.f32 0.0, %v2580
      %v2582 = vpop.f32.mrf.mxu0
      %v2583 = vadd.f32 0.0, %v2582
      %2584 = vmatmul.bf16.gmra.mxu0 %v2554
      %v2585 = vpop.f32.mrf.mxu0
      %v2586 = vadd.f32 0.0, %v2585
      %v2587 = vpop.f32.mrf.mxu0
      %v2588 = vadd.f32 0.0, %v2587
      %2589 = vmatmul.bf16.gmra.mxu0 %v2557
      %v2590 = vpop.f32.mrf.mxu0
      %v2591 = vadd.f32 0.0, %v2590
      %v2592 = vpop.f32.mrf.mxu0
      %v2593 = vadd.f32 0.0, %v2592
      %2594 = vmatmul.bf16.gmra.mxu0 %v2560
      %v2595 = vpop.f32.mrf.mxu0
      %v2596 = vadd.f32 0.0, %v2595
      %v2597 = vpop.f32.mrf.mxu0
      %v2598 = vadd.f32 0.0, %v2597
      %2599 = vmatmul.bf16.gmra.mxu0 %v2563
      %v2600 = vpop.f32.mrf.mxu0
      %v2601 = vadd.f32 0.0, %v2600
      %v2602 = vpop.f32.mrf.mxu0
      %v2603 = vadd.f32 0.0, %v2602
      %2604 = vmatmul.bf16.gmra.mxu0 %v2566
      %v2605 = vpop.f32.mrf.mxu0
      %v2606 = vadd.f32 0.0, %v2605
      %v2607 = vpop.f32.mrf.mxu0
      %2608 = vdwg.mxu0
      %v2609 = vadd.f32 %v2500, %v2581
      %v2610 = vadd.f32 %v2501, %v2583
      %v2611 = vadd.f32 %v2502, %v2586
      %v2612 = vadd.f32 %v2503, %v2588
      %v2613 = vadd.f32 %v2504, %v2591
      %v2614 = vadd.f32 %v2505, %v2593
      %v2615 = vadd.f32 %v2506, %v2596
      %v2616 = vadd.f32 %v2507, %v2598
      %v2617 = vadd.f32 %v2508, %v2601
      %v2618 = vadd.f32 %v2509, %v2603
      %v2619 = vadd.f32 %v2510, %v2606
      %v2620 = vld [vmem:[%s246 + $0x4] sm:$0x8]
      %s2621 = scalar_lea.vmem %s1, 40
      %v2622 = vld [vmem:[%s2621] sm:$0x3]
      %v2624 = vunpack.c.l.b16 %v2620
      %v2625 = vpack.c.b16 %v1919, %v2624
      %vm2626 = vcmask 1044480
      %v2627 = vrot.slane %v2625, 3
      %v2628 = vrot.slane %v1931, 3
      %v2629 = vsel %vm2626, %v2627, %v2628
      %v2630 = vrot.slane %v1932, 3
      %v2631 = vsel %vm2626, %v2628, %v2630
      %v2632 = vrot.slane %v1933, 3
      %v2633 = vsel %vm2626, %v2630, %v2632
      %v2634 = vrot.slane %v1934, 3
      %v2635 = vsel %vm2626, %v2632, %v2634
      %v2636 = vrot.slane %v2406, 3
      %v2637 = vsel %vm2626, %v2634, %v2636
      %v2639 = vsel %vm307, %v2629, 0
      %v2642 = vsel %vm307, %v2631, 0
      %v2645 = vsel %vm307, %v2633, 0
      %v2648 = vsel %vm307, %v2635, 0
      %v2651 = vsel %vm307, %v2637, 0
      %v2654 = vsel %vm307, %v2636, 0
      %v2657 = vsel %vm326, %v2622, 0
      %2659 = vmatpush.bf16.msra.mxu0 0
      %2660 = vmatpush.bf16.msra.mxu0 0
      %2661 = vmatpush.bf16.msra.mxu0 0
      %2662 = vmatpush.bf16.msra.mxu0 0
      %2663 = vmatpush.bf16.msra.mxu0 0
      %2664 = vmatpush.bf16.msra.mxu0 0
      %2665 = vmatpush.bf16.msra.mxu0 0
      %2666 = vmatpush.bf16.msra.mxu0 %v2657
      %2667 = vmatmul.bf16.gmra.mxu0 %v2639
      %v2668 = vpop.f32.mrf.mxu0
      %v2669 = vadd.f32 0.0, %v2668
      %v2670 = vpop.f32.mrf.mxu0
      %v2671 = vadd.f32 0.0, %v2670
      %2672 = vmatmul.bf16.gmra.mxu0 %v2642
      %v2673 = vpop.f32.mrf.mxu0
      %v2674 = vadd.f32 0.0, %v2673
      %v2675 = vpop.f32.mrf.mxu0
      %v2676 = vadd.f32 0.0, %v2675
      %2677 = vmatmul.bf16.gmra.mxu0 %v2645
      %v2678 = vpop.f32.mrf.mxu0
      %v2679 = vadd.f32 0.0, %v2678
      %v2680 = vpop.f32.mrf.mxu0
      %v2681 = vadd.f32 0.0, %v2680
      %2682 = vmatmul.bf16.gmra.mxu0 %v2648
      %v2683 = vpop.f32.mrf.mxu0
      %v2684 = vadd.f32 0.0, %v2683
      %v2685 = vpop.f32.mrf.mxu0
      %v2686 = vadd.f32 0.0, %v2685
      %2687 = vmatmul.bf16.gmra.mxu0 %v2651
      %v2688 = vpop.f32.mrf.mxu0
      %v2689 = vadd.f32 0.0, %v2688
      %v2690 = vpop.f32.mrf.mxu0
      %v2691 = vadd.f32 0.0, %v2690
      %2692 = vmatmul.bf16.gmra.mxu0 %v2654
      %v2693 = vpop.f32.mrf.mxu0
      %v2694 = vadd.f32 0.0, %v2693
      %v2695 = vpop.f32.mrf.mxu0
      %2696 = vdwg.mxu0
      %v2697 = vadd.f32 %v2609, %v2669
      %v2698 = vadd.f32 %v2610, %v2671
      %v2699 = vadd.f32 %v2611, %v2674
      %v2700 = vadd.f32 %v2612, %v2676
      %v2701 = vadd.f32 %v2613, %v2679
      %v2702 = vadd.f32 %v2614, %v2681
      %v2703 = vadd.f32 %v2615, %v2684
      %v2704 = vadd.f32 %v2616, %v2686
      %v2705 = vadd.f32 %v2617, %v2689
      %v2706 = vadd.f32 %v2618, %v2691
      %v2707 = vadd.f32 %v2619, %v2694
      %v2708 = vld [vmem:[%s1063 + $0x4] sm:$0xe]
      %v2709 = vld [vmem:[%s1063 + $0x8] sm:$0xf]
      %v2710 = vld [vmem:[%s1063 + $0xc] sm:$0xf]
      %v2711 = vld [vmem:[%s1063 + $0x10] sm:$0xf]
      %v2712 = vld [vmem:[%s1063 + $0x14] sm:$0xf]
      %v2713 = vld [vmem:[%s1063 + $0x18] sm:$0xf]
      %v2714 = vld [vmem:[%s1063 + $0x1c] sm:$0xf]
      %v2715 = vld [vmem:[%s1063 + $0x20] sm:$0xf]
      %v2716 = vld [vmem:[%s1063 + $0x24] sm:$0xf]
      %v2717 = vld [vmem:[%s1063 + $0x28] sm:$0xf]
      %v2718 = vld [vmem:[%s1063 + $0x2c] sm:$0xf]
      %v2719 = vld [vmem:[%s1063 + $0x30] sm:$0x3]
      %s2720 = scalar_lea.vmem %s1, 42
      %v2721 = vld [vmem:[%s2720] sm:$0x3]
      %v2734 = vunpack.c.l.b16 %v2708
      %v2735 = vunpack.c.l.b16 %v2709
      %v2736 = vunpack.c.l.b16 %v2710
      %v2737 = vunpack.c.l.b16 %v2711
      %v2738 = vunpack.c.l.b16 %v2712
      %v2739 = vunpack.c.l.b16 %v2713
      %v2740 = vunpack.c.l.b16 %v2714
      %v2741 = vunpack.c.l.b16 %v2715
      %v2742 = vunpack.c.l.b16 %v2716
      %v2743 = vunpack.c.l.b16 %v2717
      %v2744 = vunpack.c.l.b16 %v2718
      %v2745 = vunpack.c.l.b16 %v2719
      %v2746 = vpack.c.b16 %v2735, %v2734
      %v2747 = vpack.c.b16 %v2737, %v2736
      %v2748 = vpack.c.b16 %v2739, %v2738
      %v2749 = vpack.c.b16 %v2741, %v2740
      %v2750 = vpack.c.b16 %v2743, %v2742
      %v2751 = vpack.c.b16 %v2745, %v2744
      %v2753 = vshrl.u32 %v2746, 16
      %v2755 = vrot.slane %v2753, 1
      %v2756 = vshll.u32 %v2746, 16
      %v2758 = vrot.slane %v2756, 2
      %v2759 = vor.u32 %v2755, %v2758
      %v2761 = vshrl.u32 %v2747, 16
      %v2763 = vrot.slane %v2761, 1
      %v2764 = vshll.u32 %v2747, 16
      %v2766 = vrot.slane %v2764, 2
      %v2767 = vor.u32 %v2763, %v2766
      %v2768 = vsel %vm959, %v2759, %v2767
      %v2770 = vshrl.u32 %v2748, 16
      %v2772 = vrot.slane %v2770, 1
      %v2773 = vshll.u32 %v2748, 16
      %v2775 = vrot.slane %v2773, 2
      %v2776 = vor.u32 %v2772, %v2775
      %v2777 = vsel %vm959, %v2767, %v2776
      %v2779 = vshrl.u32 %v2749, 16
      %v2781 = vrot.slane %v2779, 1
      %v2782 = vshll.u32 %v2749, 16
      %v2784 = vrot.slane %v2782, 2
      %v2785 = vor.u32 %v2781, %v2784
      %v2786 = vsel %vm959, %v2776, %v2785
      %v2788 = vshrl.u32 %v2750, 16
      %v2790 = vrot.slane %v2788, 1
      %v2791 = vshll.u32 %v2750, 16
      %v2793 = vrot.slane %v2791, 2
      %v2794 = vor.u32 %v2790, %v2793
      %v2795 = vsel %vm959, %v2785, %v2794
      %v2797 = vshrl.u32 %v2751, 16
      %v2799 = vrot.slane %v2797, 1
      %v2800 = vshll.u32 %v2751, 16
      %v2802 = vrot.slane %v2800, 2
      %v2803 = vor.u32 %v2799, %v2802
      %v2804 = vsel %vm959, %v2794, %v2803
      %v2806 = vsel %vm307, %v2768, 0
      %v2809 = vsel %vm307, %v2777, 0
      %v2812 = vsel %vm307, %v2786, 0
      %v2815 = vsel %vm307, %v2795, 0
      %v2818 = vsel %vm307, %v2804, 0
      %v2821 = vsel %vm307, %v2803, 0
      %v2824 = vsel %vm326, %v2721, 0
      %2826 = vmatpush.bf16.msra.mxu0 0
      %2827 = vmatpush.bf16.msra.mxu0 0
      %2828 = vmatpush.bf16.msra.mxu0 0
      %2829 = vmatpush.bf16.msra.mxu0 0
      %2830 = vmatpush.bf16.msra.mxu0 0
      %2831 = vmatpush.bf16.msra.mxu0 0
      %2832 = vmatpush.bf16.msra.mxu0 0
      %2833 = vmatpush.bf16.msra.mxu0 %v2824
      %2834 = vmatmul.bf16.gmra.mxu0 %v2806
      %v2835 = vpop.f32.mrf.mxu0
      %v2836 = vadd.f32 0.0, %v2835
      %v2837 = vpop.f32.mrf.mxu0
      %v2838 = vadd.f32 0.0, %v2837
      %2839 = vmatmul.bf16.gmra.mxu0 %v2809
      %v2840 = vpop.f32.mrf.mxu0
      %v2841 = vadd.f32 0.0, %v2840
      %v2842 = vpop.f32.mrf.mxu0
      %v2843 = vadd.f32 0.0, %v2842
      %2844 = vmatmul.bf16.gmra.mxu0 %v2812
      %v2845 = vpop.f32.mrf.mxu0
      %v2846 = vadd.f32 0.0, %v2845
      %v2847 = vpop.f32.mrf.mxu0
      %v2848 = vadd.f32 0.0, %v2847
      %2849 = vmatmul.bf16.gmra.mxu0 %v2815
      %v2850 = vpop.f32.mrf.mxu0
      %v2851 = vadd.f32 0.0, %v2850
      %v2852 = vpop.f32.mrf.mxu0
      %v2853 = vadd.f32 0.0, %v2852
      %2854 = vmatmul.bf16.gmra.mxu0 %v2818
      %v2855 = vpop.f32.mrf.mxu0
      %v2856 = vadd.f32 0.0, %v2855
      %v2857 = vpop.f32.mrf.mxu0
      %v2858 = vadd.f32 0.0, %v2857
      %2859 = vmatmul.bf16.gmra.mxu0 %v2821
      %v2860 = vpop.f32.mrf.mxu0
      %v2861 = vadd.f32 0.0, %v2860
      %v2862 = vpop.f32.mrf.mxu0
      %2863 = vdwg.mxu0
      %v2864 = vadd.f32 %v2697, %v2836
      %v2865 = vadd.f32 %v2698, %v2838
      %v2866 = vadd.f32 %v2699, %v2841
      %v2867 = vadd.f32 %v2700, %v2843
      %v2868 = vadd.f32 %v2701, %v2846
      %v2869 = vadd.f32 %v2702, %v2848
      %v2870 = vadd.f32 %v2703, %v2851
      %v2871 = vadd.f32 %v2704, %v2853
      %v2872 = vadd.f32 %v2705, %v2856
      %v2873 = vadd.f32 %v2706, %v2858
      %v2874 = vadd.f32 %v2707, %v2861
      %v2875 = vld [vmem:[%s1175 + $0x4] sm:$0xe]
      %v2876 = vld [vmem:[%s1175 + $0x8] sm:$0xf]
      %v2877 = vld [vmem:[%s1175 + $0xc] sm:$0xf]
      %v2878 = vld [vmem:[%s1175 + $0x10] sm:$0xf]
      %v2879 = vld [vmem:[%s1175 + $0x14] sm:$0xf]
      %v2880 = vld [vmem:[%s1175 + $0x18] sm:$0xf]
      %v2881 = vld [vmem:[%s1175 + $0x1c] sm:$0xf]
      %v2882 = vld [vmem:[%s1175 + $0x20] sm:$0xf]
      %v2883 = vld [vmem:[%s1175 + $0x24] sm:$0xf]
      %v2884 = vld [vmem:[%s1175 + $0x28] sm:$0xf]
      %v2885 = vld [vmem:[%s1175 + $0x2c] sm:$0xf]
      %v2886 = vld [vmem:[%s1175 + $0x30] sm:$0x3]
      %s2887 = scalar_lea.vmem %s1, 44
      %v2888 = vld [vmem:[%s2887] sm:$0x3]
      %v2901 = vunpack.c.l.b16 %v2875
      %v2902 = vunpack.c.l.b16 %v2876
      %v2903 = vunpack.c.l.b16 %v2877
      %v2904 = vunpack.c.l.b16 %v2878
      %v2905 = vunpack.c.l.b16 %v2879
      %v2906 = vunpack.c.l.b16 %v2880
      %v2907 = vunpack.c.l.b16 %v2881
      %v2908 = vunpack.c.l.b16 %v2882
      %v2909 = vunpack.c.l.b16 %v2883
      %v2910 = vunpack.c.l.b16 %v2884
      %v2911 = vunpack.c.l.b16 %v2885
      %v2912 = vunpack.c.l.b16 %v2886
      %v2913 = vpack.c.b16 %v2902, %v2901
      %v2914 = vpack.c.b16 %v2904, %v2903
      %v2915 = vpack.c.b16 %v2906, %v2905
      %v2916 = vpack.c.b16 %v2908, %v2907
      %v2917 = vpack.c.b16 %v2910, %v2909
      %v2918 = vpack.c.b16 %v2912, %v2911
      %v2920 = vshrl.u32 %v2913, 16
      %v2922 = vrot.slane %v2920, 1
      %v2923 = vshll.u32 %v2913, 16
      %v2925 = vrot.slane %v2923, 2
      %v2926 = vor.u32 %v2922, %v2925
      %v2928 = vshrl.u32 %v2914, 16
      %v2930 = vrot.slane %v2928, 1
      %v2931 = vshll.u32 %v2914, 16
      %v2933 = vrot.slane %v2931, 2
      %v2934 = vor.u32 %v2930, %v2933
      %v2935 = vsel %vm959, %v2926, %v2934
      %v2937 = vshrl.u32 %v2915, 16
      %v2939 = vrot.slane %v2937, 1
      %v2940 = vshll.u32 %v2915, 16
      %v2942 = vrot.slane %v2940, 2
      %v2943 = vor.u32 %v2939, %v2942
      %v2944 = vsel %vm959, %v2934, %v2943
      %v2946 = vshrl.u32 %v2916, 16
      %v2948 = vrot.slane %v2946, 1
      %v2949 = vshll.u32 %v2916, 16
      %v2951 = vrot.slane %v2949, 2
      %v2952 = vor.u32 %v2948, %v2951
      %v2953 = vsel %vm959, %v2943, %v2952
      %v2955 = vshrl.u32 %v2917, 16
      %v2957 = vrot.slane %v2955, 1
      %v2958 = vshll.u32 %v2917, 16
      %v2960 = vrot.slane %v2958, 2
      %v2961 = vor.u32 %v2957, %v2960
      %v2962 = vsel %vm959, %v2952, %v2961
      %v2964 = vshrl.u32 %v2918, 16
      %v2966 = vrot.slane %v2964, 1
      %v2967 = vshll.u32 %v2918, 16
      %v2969 = vrot.slane %v2967, 2
      %v2970 = vor.u32 %v2966, %v2969
      %v2971 = vsel %vm959, %v2961, %v2970
      %v2973 = vsel %vm307, %v2935, 0
      %v2976 = vsel %vm307, %v2944, 0
      %v2979 = vsel %vm307, %v2953, 0
      %v2982 = vsel %vm307, %v2962, 0
      %v2985 = vsel %vm307, %v2971, 0
      %v2988 = vsel %vm307, %v2970, 0
      %v2991 = vsel %vm326, %v2888, 0
      %2993 = vmatpush.bf16.msra.mxu0 0
      %2994 = vmatpush.bf16.msra.mxu0 0
      %2995 = vmatpush.bf16.msra.mxu0 0
      %2996 = vmatpush.bf16.msra.mxu0 0
      %2997 = vmatpush.bf16.msra.mxu0 0
      %2998 = vmatpush.bf16.msra.mxu0 0
      %2999 = vmatpush.bf16.msra.mxu0 0
      %3000 = vmatpush.bf16.msra.mxu0 %v2991
      %3001 = vmatmul.bf16.gmra.mxu0 %v2973
      %v3002 = vpop.f32.mrf.mxu0
      %v3003 = vadd.f32 0.0, %v3002
      %v3004 = vpop.f32.mrf.mxu0
      %v3005 = vadd.f32 0.0, %v3004
      %3006 = vmatmul.bf16.gmra.mxu0 %v2976
      %v3007 = vpop.f32.mrf.mxu0
      %v3008 = vadd.f32 0.0, %v3007
      %v3009 = vpop.f32.mrf.mxu0
      %v3010 = vadd.f32 0.0, %v3009
      %3011 = vmatmul.bf16.gmra.mxu0 %v2979
      %v3012 = vpop.f32.mrf.mxu0
      %v3013 = vadd.f32 0.0, %v3012
      %v3014 = vpop.f32.mrf.mxu0
      %v3015 = vadd.f32 0.0, %v3014
      %3016 = vmatmul.bf16.gmra.mxu0 %v2982
      %v3017 = vpop.f32.mrf.mxu0
      %v3018 = vadd.f32 0.0, %v3017
      %v3019 = vpop.f32.mrf.mxu0
      %v3020 = vadd.f32 0.0, %v3019
      %3021 = vmatmul.bf16.gmra.mxu0 %v2985
      %v3022 = vpop.f32.mrf.mxu0
      %v3023 = vadd.f32 0.0, %v3022
      %v3024 = vpop.f32.mrf.mxu0
      %v3025 = vadd.f32 0.0, %v3024
      %3026 = vmatmul.bf16.gmra.mxu0 %v2988
      %v3027 = vpop.f32.mrf.mxu0
      %v3028 = vadd.f32 0.0, %v3027
      %v3029 = vpop.f32.mrf.mxu0
      %3030 = vdwg.mxu0
      %v3031 = vadd.f32 %v2864, %v3003
      %v3032 = vadd.f32 %v2865, %v3005
      %v3033 = vadd.f32 %v2866, %v3008
      %v3034 = vadd.f32 %v2867, %v3010
      %v3035 = vadd.f32 %v2868, %v3013
      %v3036 = vadd.f32 %v2869, %v3015
      %v3037 = vadd.f32 %v2870, %v3018
      %v3038 = vadd.f32 %v2871, %v3020
      %v3039 = vadd.f32 %v2872, %v3023
      %v3040 = vadd.f32 %v2873, %v3025
      %v3041 = vadd.f32 %v2874, %v3028
      %v3042 = vld [vmem:[%s1063 + $0x4] sm:$0xc]
      %s3043 = scalar_lea.vmem %s1, 46
      %v3044 = vld [vmem:[%s3043] sm:$0x3]
      %v3046 = vunpack.c.l.b16 %v3042
      %v3047 = vpack.c.b16 %v2735, %v3046
      %v3048 = vrot.slane %v3047, 2
      %v3049 = vrot.slane %v2747, 2
      %v3050 = vsel %vm2232, %v3048, %v3049
      %v3051 = vrot.slane %v2748, 2
      %v3052 = vsel %vm2232, %v3049, %v3051
      %v3053 = vrot.slane %v2749, 2
      %v3054 = vsel %vm2232, %v3051, %v3053
      %v3055 = vrot.slane %v2750, 2
      %v3056 = vsel %vm2232, %v3053, %v3055
      %v3057 = vrot.slane %v2751, 2
      %v3058 = vsel %vm2232, %v3055, %v3057
      %v3060 = vsel %vm307, %v3050, 0
      %v3063 = vsel %vm307, %v3052, 0
      %v3066 = vsel %vm307, %v3054, 0
      %v3069 = vsel %vm307, %v3056, 0
      %v3072 = vsel %vm307, %v3058, 0
      %v3075 = vsel %vm307, %v3057, 0
      %v3078 = vsel %vm326, %v3044, 0
      %3080 = vmatpush.bf16.msra.mxu0 0
      %3081 = vmatpush.bf16.msra.mxu0 0
      %3082 = vmatpush.bf16.msra.mxu0 0
      %3083 = vmatpush.bf16.msra.mxu0 0
      %3084 = vmatpush.bf16.msra.mxu0 0
      %3085 = vmatpush.bf16.msra.mxu0 0
      %3086 = vmatpush.bf16.msra.mxu0 0
      %3087 = vmatpush.bf16.msra.mxu0 %v3078
      %3088 = vmatmul.bf16.gmra.mxu0 %v3060
      %v3089 = vpop.f32.mrf.mxu0
      %v3090 = vadd.f32 0.0, %v3089
      %v3091 = vpop.f32.mrf.mxu0
      %v3092 = vadd.f32 0.0, %v3091
      %3093 = vmatmul.bf16.gmra.mxu0 %v3063
      %v3094 = vpop.f32.mrf.mxu0
      %v3095 = vadd.f32 0.0, %v3094
      %v3096 = vpop.f32.mrf.mxu0
      %v3097 = vadd.f32 0.0, %v3096
      %3098 = vmatmul.bf16.gmra.mxu0 %v3066
      %v3099 = vpop.f32.mrf.mxu0
      %v3100 = vadd.f32 0.0, %v3099
      %v3101 = vpop.f32.mrf.mxu0
      %v3102 = vadd.f32 0.0, %v3101
      %3103 = vmatmul.bf16.gmra.mxu0 %v3069
      %v3104 = vpop.f32.mrf.mxu0
      %v3105 = vadd.f32 0.0, %v3104
      %v3106 = vpop.f32.mrf.mxu0
      %v3107 = vadd.f32 0.0, %v3106
      %3108 = vmatmul.bf16.gmra.mxu0 %v3072
      %v3109 = vpop.f32.mrf.mxu0
      %v3110 = vadd.f32 0.0, %v3109
      %v3111 = vpop.f32.mrf.mxu0
      %v3112 = vadd.f32 0.0, %v3111
      %3113 = vmatmul.bf16.gmra.mxu0 %v3075
      %v3114 = vpop.f32.mrf.mxu0
      %v3115 = vadd.f32 0.0, %v3114
      %v3116 = vpop.f32.mrf.mxu0
      %3117 = vdwg.mxu0
      %v3118 = vadd.f32 %v3031, %v3090
      %v3119 = vadd.f32 %v3032, %v3092
      %v3120 = vadd.f32 %v3033, %v3095
      %v3121 = vadd.f32 %v3034, %v3097
      %v3122 = vadd.f32 %v3035, %v3100
      %v3123 = vadd.f32 %v3036, %v3102
      %v3124 = vadd.f32 %v3037, %v3105
      %v3125 = vadd.f32 %v3038, %v3107
      %v3126 = vadd.f32 %v3039, %v3110
      %v3127 = vadd.f32 %v3040, %v3112
      %v3128 = vadd.f32 %v3041, %v3115
      %v3129 = vld [vmem:[%s1175 + $0x4] sm:$0xc]
      %s3130 = scalar_lea.vmem %s1, 48
      %v3131 = vld [vmem:[%s3130] sm:$0x3]
      %v3133 = vunpack.c.l.b16 %v3129
      %v3134 = vpack.c.b16 %v2902, %v3133
      %v3135 = vrot.slane %v3134, 2
      %v3136 = vrot.slane %v2914, 2
      %v3137 = vsel %vm2232, %v3135, %v3136
      %v3138 = vrot.slane %v2915, 2
      %v3139 = vsel %vm2232, %v3136, %v3138
      %v3140 = vrot.slane %v2916, 2
      %v3141 = vsel %vm2232, %v3138, %v3140
      %v3142 = vrot.slane %v2917, 2
      %v3143 = vsel %vm2232, %v3140, %v3142
      %v3144 = vrot.slane %v2918, 2
      %v3145 = vsel %vm2232, %v3142, %v3144
      %v3147 = vsel %vm307, %v3137, 0
      %v3150 = vsel %vm307, %v3139, 0
      %v3153 = vsel %vm307, %v3141, 0
      %v3156 = vsel %vm307, %v3143, 0
      %v3159 = vsel %vm307, %v3145, 0
      %v3162 = vsel %vm307, %v3144, 0
      %v3165 = vsel %vm326, %v3131, 0
      %3167 = vmatpush.bf16.msra.mxu0 0
      %3168 = vmatpush.bf16.msra.mxu0 0
      %3169 = vmatpush.bf16.msra.mxu0 0
      %3170 = vmatpush.bf16.msra.mxu0 0
      %3171 = vmatpush.bf16.msra.mxu0 0
      %3172 = vmatpush.bf16.msra.mxu0 0
      %3173 = vmatpush.bf16.msra.mxu0 0
      %3174 = vmatpush.bf16.msra.mxu0 %v3165
      %3175 = vmatmul.bf16.gmra.mxu0 %v3147
      %v3176 = vpop.f32.mrf.mxu0
      %v3177 = vadd.f32 0.0, %v3176
      %v3178 = vpop.f32.mrf.mxu0
      %v3179 = vadd.f32 0.0, %v3178
      %3180 = vmatmul.bf16.gmra.mxu0 %v3150
      %v3181 = vpop.f32.mrf.mxu0
      %v3182 = vadd.f32 0.0, %v3181
      %v3183 = vpop.f32.mrf.mxu0
      %v3184 = vadd.f32 0.0, %v3183
      %3185 = vmatmul.bf16.gmra.mxu0 %v3153
      %v3186 = vpop.f32.mrf.mxu0
      %v3187 = vadd.f32 0.0, %v3186
      %v3188 = vpop.f32.mrf.mxu0
      %v3189 = vadd.f32 0.0, %v3188
      %3190 = vmatmul.bf16.gmra.mxu0 %v3156
      %v3191 = vpop.f32.mrf.mxu0
      %v3192 = vadd.f32 0.0, %v3191
      %v3193 = vpop.f32.mrf.mxu0
      %v3194 = vadd.f32 0.0, %v3193
      %3195 = vmatmul.bf16.gmra.mxu0 %v3159
      %v3196 = vpop.f32.mrf.mxu0
      %v3197 = vadd.f32 0.0, %v3196
      %v3198 = vpop.f32.mrf.mxu0
      %v3199 = vadd.f32 0.0, %v3198
      %3200 = vmatmul.bf16.gmra.mxu0 %v3162
      %v3201 = vpop.f32.mrf.mxu0
      %v3202 = vadd.f32 0.0, %v3201
      %v3203 = vpop.f32.mrf.mxu0
      %3204 = vdwg.mxu0
      %v3205 = vadd.f32 %v3118, %v3177
      %v3206 = vadd.f32 %v3119, %v3179
      %v3207 = vadd.f32 %v3120, %v3182
      %v3208 = vadd.f32 %v3121, %v3184
      %v3209 = vadd.f32 %v3122, %v3187
      %v3210 = vadd.f32 %v3123, %v3189
      %v3211 = vadd.f32 %v3124, %v3192
      %v3212 = vadd.f32 %v3125, %v3194
      %v3213 = vadd.f32 %v3126, %v3197
      %v3214 = vadd.f32 %v3127, %v3199
      %v3215 = vadd.f32 %v3128, %v3202
      %v3216 = vld [vmem:[%s1063 + $0x30] sm:$0x7]
      %s3217 = scalar_lea.vmem %s1, 50
      %v3218 = vld [vmem:[%s3217] sm:$0x3]
      %v3220 = vunpack.c.l.b16 %v3216
      %v3221 = vpack.c.b16 %v3220, %v2744
      %v3223 = vshrl.u32 %v3047, 16
      %v3225 = vrot.slane %v3223, 2
      %v3226 = vshll.u32 %v3047, 16
      %v3228 = vrot.slane %v3226, 3
      %v3229 = vor.u32 %v3225, %v3228
      %v3230 = vrot.slane %v2761, 2
      %v3231 = vrot.slane %v2764, 3
      %v3232 = vor.u32 %v3230, %v3231
      %v3233 = vsel %vm2407, %v3229, %v3232
      %v3234 = vrot.slane %v2770, 2
      %v3235 = vrot.slane %v2773, 3
      %v3236 = vor.u32 %v3234, %v3235
      %v3237 = vsel %vm2407, %v3232, %v3236
      %v3238 = vrot.slane %v2779, 2
      %v3239 = vrot.slane %v2782, 3
      %v3240 = vor.u32 %v3238, %v3239
      %v3241 = vsel %vm2407, %v3236, %v3240
      %v3242 = vrot.slane %v2788, 2
      %v3243 = vrot.slane %v2791, 3
      %v3244 = vor.u32 %v3242, %v3243
      %v3245 = vsel %vm2407, %v3240, %v3244
      %v3247 = vshrl.u32 %v3221, 16
      %v3249 = vrot.slane %v3247, 2
      %v3250 = vshll.u32 %v3221, 16
      %v3252 = vrot.slane %v3250, 3
      %v3253 = vor.u32 %v3249, %v3252
      %v3254 = vsel %vm2407, %v3244, %v3253
      %v3256 = vsel %vm307, %v3233, 0
      %v3259 = vsel %vm307, %v3237, 0
      %v3262 = vsel %vm307, %v3241, 0
      %v3265 = vsel %vm307, %v3245, 0
      %v3268 = vsel %vm307, %v3254, 0
      %v3271 = vsel %vm307, %v3253, 0
      %v3274 = vsel %vm326, %v3218, 0
      %3276 = vmatpush.bf16.msra.mxu0 0
      %3277 = vmatpush.bf16.msra.mxu0 0
      %3278 = vmatpush.bf16.msra.mxu0 0
      %3279 = vmatpush.bf16.msra.mxu0 0
      %3280 = vmatpush.bf16.msra.mxu0 0
      %3281 = vmatpush.bf16.msra.mxu0 0
      %3282 = vmatpush.bf16.msra.mxu0 0
      %3283 = vmatpush.bf16.msra.mxu0 %v3274
      %3284 = vmatmul.bf16.gmra.mxu0 %v3256
      %v3285 = vpop.f32.mrf.mxu0
      %v3286 = vadd.f32 0.0, %v3285
      %v3287 = vpop.f32.mrf.mxu0
      %v3288 = vadd.f32 0.0, %v3287
      %3289 = vmatmul.bf16.gmra.mxu0 %v3259
      %v3290 = vpop.f32.mrf.mxu0
      %v3291 = vadd.f32 0.0, %v3290
      %v3292 = vpop.f32.mrf.mxu0
      %v3293 = vadd.f32 0.0, %v3292
      %3294 = vmatmul.bf16.gmra.mxu0 %v3262
      %v3295 = vpop.f32.mrf.mxu0
      %v3296 = vadd.f32 0.0, %v3295
      %v3297 = vpop.f32.mrf.mxu0
      %v3298 = vadd.f32 0.0, %v3297
      %3299 = vmatmul.bf16.gmra.mxu0 %v3265
      %v3300 = vpop.f32.mrf.mxu0
      %v3301 = vadd.f32 0.0, %v3300
      %v3302 = vpop.f32.mrf.mxu0
      %v3303 = vadd.f32 0.0, %v3302
      %3304 = vmatmul.bf16.gmra.mxu0 %v3268
      %v3305 = vpop.f32.mrf.mxu0
      %v3306 = vadd.f32 0.0, %v3305
      %v3307 = vpop.f32.mrf.mxu0
      %v3308 = vadd.f32 0.0, %v3307
      %3309 = vmatmul.bf16.gmra.mxu0 %v3271
      %v3310 = vpop.f32.mrf.mxu0
      %v3311 = vadd.f32 0.0, %v3310
      %v3312 = vpop.f32.mrf.mxu0
      %3313 = vdwg.mxu0
      %v3314 = vadd.f32 %v3205, %v3286
      %v3315 = vadd.f32 %v3206, %v3288
      %v3316 = vadd.f32 %v3207, %v3291
      %v3317 = vadd.f32 %v3208, %v3293
      %v3318 = vadd.f32 %v3209, %v3296
      %v3319 = vadd.f32 %v3210, %v3298
      %v3320 = vadd.f32 %v3211, %v3301
      %v3321 = vadd.f32 %v3212, %v3303
      %v3322 = vadd.f32 %v3213, %v3306
      %v3323 = vadd.f32 %v3214, %v3308
      %v3324 = vadd.f32 %v3215, %v3311
      %v3325 = vld [vmem:[%s1175 + $0x30] sm:$0x7]
      %s3326 = scalar_lea.vmem %s1, 52
      %v3327 = vld [vmem:[%s3326] sm:$0x3]
      %v3329 = vunpack.c.l.b16 %v3325
      %v3330 = vpack.c.b16 %v3329, %v2911
      %v3332 = vshrl.u32 %v3134, 16
      %v3334 = vrot.slane %v3332, 2
      %v3335 = vshll.u32 %v3134, 16
      %v3337 = vrot.slane %v3335, 3
      %v3338 = vor.u32 %v3334, %v3337
      %v3339 = vrot.slane %v2928, 2
      %v3340 = vrot.slane %v2931, 3
      %v3341 = vor.u32 %v3339, %v3340
      %v3342 = vsel %vm2407, %v3338, %v3341
      %v3343 = vrot.slane %v2937, 2
      %v3344 = vrot.slane %v2940, 3
      %v3345 = vor.u32 %v3343, %v3344
      %v3346 = vsel %vm2407, %v3341, %v3345
      %v3347 = vrot.slane %v2946, 2
      %v3348 = vrot.slane %v2949, 3
      %v3349 = vor.u32 %v3347, %v3348
      %v3350 = vsel %vm2407, %v3345, %v3349
      %v3351 = vrot.slane %v2955, 2
      %v3352 = vrot.slane %v2958, 3
      %v3353 = vor.u32 %v3351, %v3352
      %v3354 = vsel %vm2407, %v3349, %v3353
      %v3356 = vshrl.u32 %v3330, 16
      %v3358 = vrot.slane %v3356, 2
      %v3359 = vshll.u32 %v3330, 16
      %v3361 = vrot.slane %v3359, 3
      %v3362 = vor.u32 %v3358, %v3361
      %v3363 = vsel %vm2407, %v3353, %v3362
      %v3365 = vsel %vm307, %v3342, 0
      %v3368 = vsel %vm307, %v3346, 0
      %v3371 = vsel %vm307, %v3350, 0
      %v3374 = vsel %vm307, %v3354, 0
      %v3377 = vsel %vm307, %v3363, 0
      %v3380 = vsel %vm307, %v3362, 0
      %v3383 = vsel %vm326, %v3327, 0
      %3385 = vmatpush.bf16.msra.mxu0 0
      %3386 = vmatpush.bf16.msra.mxu0 0
      %3387 = vmatpush.bf16.msra.mxu0 0
      %3388 = vmatpush.bf16.msra.mxu0 0
      %3389 = vmatpush.bf16.msra.mxu0 0
      %3390 = vmatpush.bf16.msra.mxu0 0
      %3391 = vmatpush.bf16.msra.mxu0 0
      %3392 = vmatpush.bf16.msra.mxu0 %v3383
      %3393 = vmatmul.bf16.gmra.mxu0 %v3365
      %v3394 = vpop.f32.mrf.mxu0
      %v3395 = vadd.f32 0.0, %v3394
      %v3396 = vpop.f32.mrf.mxu0
      %v3397 = vadd.f32 0.0, %v3396
      %3398 = vmatmul.bf16.gmra.mxu0 %v3368
      %v3399 = vpop.f32.mrf.mxu0
      %v3400 = vadd.f32 0.0, %v3399
      %v3401 = vpop.f32.mrf.mxu0
      %v3402 = vadd.f32 0.0, %v3401
      %3403 = vmatmul.bf16.gmra.mxu0 %v3371
      %v3404 = vpop.f32.mrf.mxu0
      %v3405 = vadd.f32 0.0, %v3404
      %v3406 = vpop.f32.mrf.mxu0
      %v3407 = vadd.f32 0.0, %v3406
      %3408 = vmatmul.bf16.gmra.mxu0 %v3374
      %v3409 = vpop.f32.mrf.mxu0
      %v3410 = vadd.f32 0.0, %v3409
      %v3411 = vpop.f32.mrf.mxu0
      %v3412 = vadd.f32 0.0, %v3411
      %3413 = vmatmul.bf16.gmra.mxu0 %v3377
      %v3414 = vpop.f32.mrf.mxu0
      %v3415 = vadd.f32 0.0, %v3414
      %v3416 = vpop.f32.mrf.mxu0
      %v3417 = vadd.f32 0.0, %v3416
      %3418 = vmatmul.bf16.gmra.mxu0 %v3380
      %v3419 = vpop.f32.mrf.mxu0
      %v3420 = vadd.f32 0.0, %v3419
      %v3421 = vpop.f32.mrf.mxu0
      %3422 = vdwg.mxu0
      %v3423 = vadd.f32 %v3314, %v3395
      %v3424 = vadd.f32 %v3315, %v3397
      %v3425 = vadd.f32 %v3316, %v3400
      %v3426 = vadd.f32 %v3317, %v3402
      %v3427 = vadd.f32 %v3318, %v3405
      %v3428 = vadd.f32 %v3319, %v3407
      %v3429 = vadd.f32 %v3320, %v3410
      %v3430 = vadd.f32 %v3321, %v3412
      %v3431 = vadd.f32 %v3322, %v3415
      %v3432 = vadd.f32 %v3323, %v3417
      %v3433 = vadd.f32 %v3324, %v3420
      %v3434 = vld [vmem:[%s1063 + $0x4] sm:$0x8]
      %s3435 = scalar_lea.vmem %s1, 54
      %v3436 = vld [vmem:[%s3435] sm:$0x3]
      %v3438 = vunpack.c.l.b16 %v3434
      %v3439 = vpack.c.b16 %v2735, %v3438
      %v3440 = vrot.slane %v3439, 3
      %v3441 = vrot.slane %v2747, 3
      %v3442 = vsel %vm2626, %v3440, %v3441
      %v3443 = vrot.slane %v2748, 3
      %v3444 = vsel %vm2626, %v3441, %v3443
      %v3445 = vrot.slane %v2749, 3
      %v3446 = vsel %vm2626, %v3443, %v3445
      %v3447 = vrot.slane %v2750, 3
      %v3448 = vsel %vm2626, %v3445, %v3447
      %v3449 = vrot.slane %v3221, 3
      %v3450 = vsel %vm2626, %v3447, %v3449
      %v3452 = vsel %vm307, %v3442, 0
      %v3455 = vsel %vm307, %v3444, 0
      %v3458 = vsel %vm307, %v3446, 0
      %v3461 = vsel %vm307, %v3448, 0
      %v3464 = vsel %vm307, %v3450, 0
      %v3467 = vsel %vm307, %v3449, 0
      %v3470 = vsel %vm326, %v3436, 0
      %3472 = vmatpush.bf16.msra.mxu0 0
      %3473 = vmatpush.bf16.msra.mxu0 0
      %3474 = vmatpush.bf16.msra.mxu0 0
      %3475 = vmatpush.bf16.msra.mxu0 0
      %3476 = vmatpush.bf16.msra.mxu0 0
      %3477 = vmatpush.bf16.msra.mxu0 0
      %3478 = vmatpush.bf16.msra.mxu0 0
      %3479 = vmatpush.bf16.msra.mxu0 %v3470
      %3480 = vmatmul.bf16.gmra.mxu0 %v3452
      %v3481 = vpop.f32.mrf.mxu0
      %v3482 = vadd.f32 0.0, %v3481
      %v3483 = vpop.f32.mrf.mxu0
      %v3484 = vadd.f32 0.0, %v3483
      %3485 = vmatmul.bf16.gmra.mxu0 %v3455
      %v3486 = vpop.f32.mrf.mxu0
      %v3487 = vadd.f32 0.0, %v3486
      %v3488 = vpop.f32.mrf.mxu0
      %v3489 = vadd.f32 0.0, %v3488
      %3490 = vmatmul.bf16.gmra.mxu0 %v3458
      %v3491 = vpop.f32.mrf.mxu0
      %v3492 = vadd.f32 0.0, %v3491
      %v3493 = vpop.f32.mrf.mxu0
      %v3494 = vadd.f32 0.0, %v3493
      %3495 = vmatmul.bf16.gmra.mxu0 %v3461
      %v3496 = vpop.f32.mrf.mxu0
      %v3497 = vadd.f32 0.0, %v3496
      %v3498 = vpop.f32.mrf.mxu0
      %v3499 = vadd.f32 0.0, %v3498
      %3500 = vmatmul.bf16.gmra.mxu0 %v3464
      %v3501 = vpop.f32.mrf.mxu0
      %v3502 = vadd.f32 0.0, %v3501
      %v3503 = vpop.f32.mrf.mxu0
      %v3504 = vadd.f32 0.0, %v3503
      %3505 = vmatmul.bf16.gmra.mxu0 %v3467
      %v3506 = vpop.f32.mrf.mxu0
      %v3507 = vadd.f32 0.0, %v3506
      %v3508 = vpop.f32.mrf.mxu0
      %3509 = vdwg.mxu0
      %v3510 = vadd.f32 %v3423, %v3482
      %v3511 = vadd.f32 %v3424, %v3484
      %v3512 = vadd.f32 %v3425, %v3487
      %v3513 = vadd.f32 %v3426, %v3489
      %v3514 = vadd.f32 %v3427, %v3492
      %v3515 = vadd.f32 %v3428, %v3494
      %v3516 = vadd.f32 %v3429, %v3497
      %v3517 = vadd.f32 %v3430, %v3499
      %v3518 = vadd.f32 %v3431, %v3502
      %v3519 = vadd.f32 %v3432, %v3504
      %v3520 = vadd.f32 %v3433, %v3507
      %v3521 = vld [vmem:[%s246 + $0x8] sm:$0x8]
      %v3522 = vld [vmem:[%s246 + $0xc] sm:$0xf]
      %v3523 = vld [vmem:[%s246 + $0x10] sm:$0xf]
      %v3524 = vld [vmem:[%s246 + $0x14] sm:$0xf]
      %v3525 = vld [vmem:[%s246 + $0x18] sm:$0xf]
      %v3526 = vld [vmem:[%s246 + $0x1c] sm:$0xf]
      %v3527 = vld [vmem:[%s246 + $0x20] sm:$0xf]
      %v3528 = vld [vmem:[%s246 + $0x24] sm:$0xf]
      %v3529 = vld [vmem:[%s246 + $0x28] sm:$0xf]
      %v3530 = vld [vmem:[%s246 + $0x2c] sm:$0xf]
      %v3531 = vld [vmem:[%s246 + $0x30] sm:$0xf]
      %v3532 = vld [vmem:[%s246 + $0x34] sm:$0x7]
      %s3533 = scalar_lea.vmem %s1, 56
      %v3534 = vld [vmem:[%s3533] sm:$0x3]
      %v3547 = vunpack.c.l.b16 %v3521
      %v3548 = vunpack.c.l.b16 %v3522
      %v3549 = vunpack.c.l.b16 %v3523
      %v3550 = vunpack.c.l.b16 %v3524
      %v3551 = vunpack.c.l.b16 %v3525
      %v3552 = vunpack.c.l.b16 %v3526
      %v3553 = vunpack.c.l.b16 %v3527
      %v3554 = vunpack.c.l.b16 %v3528
      %v3555 = vunpack.c.l.b16 %v3529
      %v3556 = vunpack.c.l.b16 %v3530
      %v3557 = vunpack.c.l.b16 %v3531
      %v3558 = vunpack.c.l.b16 %v3532
      %v3559 = vpack.c.b16 %v3548, %v3547
      %v3560 = vpack.c.b16 %v3550, %v3549
      %v3561 = vpack.c.b16 %v3552, %v3551
      %v3562 = vpack.c.b16 %v3554, %v3553
      %v3563 = vpack.c.b16 %v3556, %v3555
      %v3564 = vpack.c.b16 %v3558, %v3557
      %v3565 = vrot.slane %v3559, 3
      %v3566 = vrot.slane %v3560, 3
      %v3567 = vsel %vm2626, %v3565, %v3566
      %v3568 = vrot.slane %v3561, 3
      %v3569 = vsel %vm2626, %v3566, %v3568
      %v3570 = vrot.slane %v3562, 3
      %v3571 = vsel %vm2626, %v3568, %v3570
      %v3572 = vrot.slane %v3563, 3
      %v3573 = vsel %vm2626, %v3570, %v3572
      %v3574 = vrot.slane %v3564, 3
      %v3575 = vsel %vm2626, %v3572, %v3574
      %v3577 = vsel %vm307, %v3567, 0
      %v3580 = vsel %vm307, %v3569, 0
      %v3583 = vsel %vm307, %v3571, 0
      %v3586 = vsel %vm307, %v3573, 0
      %v3589 = vsel %vm307, %v3575, 0
      %v3592 = vsel %vm307, %v3574, 0
      %v3595 = vsel %vm326, %v3534, 0
      %3597 = vmatpush.bf16.msra.mxu0 0
      %3598 = vmatpush.bf16.msra.mxu0 0
      %3599 = vmatpush.bf16.msra.mxu0 0
      %3600 = vmatpush.bf16.msra.mxu0 0
      %3601 = vmatpush.bf16.msra.mxu0 0
      %3602 = vmatpush.bf16.msra.mxu0 0
      %3603 = vmatpush.bf16.msra.mxu0 0
      %3604 = vmatpush.bf16.msra.mxu0 %v3595
      %3605 = vmatmul.bf16.gmra.mxu0 %v3577
      %v3606 = vpop.f32.mrf.mxu0
      %v3607 = vadd.f32 0.0, %v3606
      %v3608 = vpop.f32.mrf.mxu0
      %v3609 = vadd.f32 0.0, %v3608
      %3610 = vmatmul.bf16.gmra.mxu0 %v3580
      %v3611 = vpop.f32.mrf.mxu0
      %v3612 = vadd.f32 0.0, %v3611
      %v3613 = vpop.f32.mrf.mxu0
      %v3614 = vadd.f32 0.0, %v3613
      %3615 = vmatmul.bf16.gmra.mxu0 %v3583
      %v3616 = vpop.f32.mrf.mxu0
      %v3617 = vadd.f32 0.0, %v3616
      %v3618 = vpop.f32.mrf.mxu0
      %v3619 = vadd.f32 0.0, %v3618
      %3620 = vmatmul.bf16.gmra.mxu0 %v3586
      %v3621 = vpop.f32.mrf.mxu0
      %v3622 = vadd.f32 0.0, %v3621
      %v3623 = vpop.f32.mrf.mxu0
      %v3624 = vadd.f32 0.0, %v3623
      %3625 = vmatmul.bf16.gmra.mxu0 %v3589
      %v3626 = vpop.f32.mrf.mxu0
      %v3627 = vadd.f32 0.0, %v3626
      %v3628 = vpop.f32.mrf.mxu0
      %v3629 = vadd.f32 0.0, %v3628
      %3630 = vmatmul.bf16.gmra.mxu0 %v3592
      %v3631 = vpop.f32.mrf.mxu0
      %v3632 = vadd.f32 0.0, %v3631
      %v3633 = vpop.f32.mrf.mxu0
      %3634 = vdwg.mxu0
      %v3635 = vadd.f32 %v3510, %v3607
      %v3636 = vadd.f32 %v3511, %v3609
      %v3637 = vadd.f32 %v3512, %v3612
      %v3638 = vadd.f32 %v3513, %v3614
      %v3639 = vadd.f32 %v3514, %v3617
      %v3640 = vadd.f32 %v3515, %v3619
      %v3641 = vadd.f32 %v3516, %v3622
      %v3642 = vadd.f32 %v3517, %v3624
      %v3643 = vadd.f32 %v3518, %v3627
      %v3644 = vadd.f32 %v3519, %v3629
      %v3645 = vadd.f32 %v3520, %v3632
      %v3646 = vld [vmem:[%s265 + $0x8] sm:$0x8]
      %v3647 = vld [vmem:[%s265 + $0xc] sm:$0xf]
      %v3648 = vld [vmem:[%s265 + $0x10] sm:$0xf]
      %v3649 = vld [vmem:[%s265 + $0x14] sm:$0xf]
      %v3650 = vld [vmem:[%s265 + $0x18] sm:$0xf]
      %v3651 = vld [vmem:[%s265 + $0x1c] sm:$0xf]
      %v3652 = vld [vmem:[%s265 + $0x20] sm:$0xf]
      %v3653 = vld [vmem:[%s265 + $0x24] sm:$0xf]
      %v3654 = vld [vmem:[%s265 + $0x28] sm:$0xf]
      %v3655 = vld [vmem:[%s265 + $0x2c] sm:$0xf]
      %v3656 = vld [vmem:[%s265 + $0x30] sm:$0xf]
      %v3657 = vld [vmem:[%s265 + $0x34] sm:$0x7]
      %s3658 = scalar_lea.vmem %s1, 58
      %v3659 = vld [vmem:[%s3658] sm:$0x3]
      %v3672 = vunpack.c.l.b16 %v3646
      %v3673 = vunpack.c.l.b16 %v3647
      %v3674 = vunpack.c.l.b16 %v3648
      %v3675 = vunpack.c.l.b16 %v3649
      %v3676 = vunpack.c.l.b16 %v3650
      %v3677 = vunpack.c.l.b16 %v3651
      %v3678 = vunpack.c.l.b16 %v3652
      %v3679 = vunpack.c.l.b16 %v3653
      %v3680 = vunpack.c.l.b16 %v3654
      %v3681 = vunpack.c.l.b16 %v3655
      %v3682 = vunpack.c.l.b16 %v3656
      %v3683 = vunpack.c.l.b16 %v3657
      %v3684 = vpack.c.b16 %v3673, %v3672
      %v3685 = vpack.c.b16 %v3675, %v3674
      %v3686 = vpack.c.b16 %v3677, %v3676
      %v3687 = vpack.c.b16 %v3679, %v3678
      %v3688 = vpack.c.b16 %v3681, %v3680
      %v3689 = vpack.c.b16 %v3683, %v3682
      %v3690 = vrot.slane %v3684, 3
      %v3691 = vrot.slane %v3685, 3
      %v3692 = vsel %vm2626, %v3690, %v3691
      %v3693 = vrot.slane %v3686, 3
      %v3694 = vsel %vm2626, %v3691, %v3693
      %v3695 = vrot.slane %v3687, 3
      %v3696 = vsel %vm2626, %v3693, %v3695
      %v3697 = vrot.slane %v3688, 3
      %v3698 = vsel %vm2626, %v3695, %v3697
      %v3699 = vrot.slane %v3689, 3
      %v3700 = vsel %vm2626, %v3697, %v3699
      %v3702 = vsel %vm307, %v3692, 0
      %v3705 = vsel %vm307, %v3694, 0
      %v3708 = vsel %vm307, %v3696, 0
      %v3711 = vsel %vm307, %v3698, 0
      %v3714 = vsel %vm307, %v3700, 0
      %v3717 = vsel %vm307, %v3699, 0
      %v3720 = vsel %vm326, %v3659, 0
      %3722 = vmatpush.bf16.msra.mxu0 0
      %3723 = vmatpush.bf16.msra.mxu0 0
      %3724 = vmatpush.bf16.msra.mxu0 0
      %3725 = vmatpush.bf16.msra.mxu0 0
      %3726 = vmatpush.bf16.msra.mxu0 0
      %3727 = vmatpush.bf16.msra.mxu0 0
      %3728 = vmatpush.bf16.msra.mxu0 0
      %3729 = vmatpush.bf16.msra.mxu0 %v3720
      %3730 = vmatmul.bf16.gmra.mxu0 %v3702
      %v3731 = vpop.f32.mrf.mxu0
      %v3732 = vadd.f32 0.0, %v3731
      %v3733 = vpop.f32.mrf.mxu0
      %v3734 = vadd.f32 0.0, %v3733
      %3735 = vmatmul.bf16.gmra.mxu0 %v3705
      %v3736 = vpop.f32.mrf.mxu0
      %v3737 = vadd.f32 0.0, %v3736
      %v3738 = vpop.f32.mrf.mxu0
      %v3739 = vadd.f32 0.0, %v3738
      %3740 = vmatmul.bf16.gmra.mxu0 %v3708
      %v3741 = vpop.f32.mrf.mxu0
      %v3742 = vadd.f32 0.0, %v3741
      %v3743 = vpop.f32.mrf.mxu0
      %v3744 = vadd.f32 0.0, %v3743
      %3745 = vmatmul.bf16.gmra.mxu0 %v3711
      %v3746 = vpop.f32.mrf.mxu0
      %v3747 = vadd.f32 0.0, %v3746
      %v3748 = vpop.f32.mrf.mxu0
      %v3749 = vadd.f32 0.0, %v3748
      %3750 = vmatmul.bf16.gmra.mxu0 %v3714
      %v3751 = vpop.f32.mrf.mxu0
      %v3752 = vadd.f32 0.0, %v3751
      %v3753 = vpop.f32.mrf.mxu0
      %v3754 = vadd.f32 0.0, %v3753
      %3755 = vmatmul.bf16.gmra.mxu0 %v3717
      %v3756 = vpop.f32.mrf.mxu0
      %v3757 = vadd.f32 0.0, %v3756
      %v3758 = vpop.f32.mrf.mxu0
      %3759 = vdwg.mxu0
      %v3760 = vadd.f32 %v3635, %v3732
      %v3761 = vadd.f32 %v3636, %v3734
      %v3762 = vadd.f32 %v3637, %v3737
      %v3763 = vadd.f32 %v3638, %v3739
      %v3764 = vadd.f32 %v3639, %v3742
      %v3765 = vadd.f32 %v3640, %v3744
      %v3766 = vadd.f32 %v3641, %v3747
      %v3767 = vadd.f32 %v3642, %v3749
      %v3768 = vadd.f32 %v3643, %v3752
      %v3769 = vadd.f32 %v3644, %v3754
      %v3770 = vadd.f32 %v3645, %v3757
      %v3771 = vld [vmem:[%s246 + $0x34] sm:$0xf]
      %s3772 = scalar_lea.vmem %s1, 60
      %v3773 = vld [vmem:[%s3772] sm:$0x3]
      %v3775 = vunpack.c.l.b16 %v3771
      %v3776 = vpack.c.b16 %v3775, %v3557
      %vm3777 = vsmask.f32 4352
      %v3779 = vshrl.u32 %v3559, 16
      %v3781 = vrot.slane %v3779, 3
      %v3782 = vshll.u32 %v3559, 16
      %v3784 = vrot.slane %v3782, 4
      %v3785 = vor.u32 %v3781, %v3784
      %v3787 = vshrl.u32 %v3560, 16
      %v3789 = vrot.slane %v3787, 3
      %v3790 = vshll.u32 %v3560, 16
      %v3792 = vrot.slane %v3790, 4
      %v3793 = vor.u32 %v3789, %v3792
      %v3794 = vsel %vm3777, %v3785, %v3793
      %v3796 = vshrl.u32 %v3561, 16
      %v3798 = vrot.slane %v3796, 3
      %v3799 = vshll.u32 %v3561, 16
      %v3801 = vrot.slane %v3799, 4
      %v3802 = vor.u32 %v3798, %v3801
      %v3803 = vsel %vm3777, %v3793, %v3802
      %v3805 = vshrl.u32 %v3562, 16
      %v3807 = vrot.slane %v3805, 3
      %v3808 = vshll.u32 %v3562, 16
      %v3810 = vrot.slane %v3808, 4
      %v3811 = vor.u32 %v3807, %v3810
      %v3812 = vsel %vm3777, %v3802, %v3811
      %v3814 = vshrl.u32 %v3563, 16
      %v3816 = vrot.slane %v3814, 3
      %v3817 = vshll.u32 %v3563, 16
      %v3819 = vrot.slane %v3817, 4
      %v3820 = vor.u32 %v3816, %v3819
      %v3821 = vsel %vm3777, %v3811, %v3820
      %v3823 = vshrl.u32 %v3776, 16
      %v3825 = vrot.slane %v3823, 3
      %v3826 = vshll.u32 %v3776, 16
      %v3828 = vrot.slane %v3826, 4
      %v3829 = vor.u32 %v3825, %v3828
      %v3830 = vsel %vm3777, %v3820, %v3829
      %v3832 = vsel %vm307, %v3794, 0
      %v3835 = vsel %vm307, %v3803, 0
      %v3838 = vsel %vm307, %v3812, 0
      %v3841 = vsel %vm307, %v3821, 0
      %v3844 = vsel %vm307, %v3830, 0
      %v3847 = vsel %vm307, %v3829, 0
      %v3850 = vsel %vm326, %v3773, 0
      %3852 = vmatpush.bf16.msra.mxu0 0
      %3853 = vmatpush.bf16.msra.mxu0 0
      %3854 = vmatpush.bf16.msra.mxu0 0
      %3855 = vmatpush.bf16.msra.mxu0 0
      %3856 = vmatpush.bf16.msra.mxu0 0
      %3857 = vmatpush.bf16.msra.mxu0 0
      %3858 = vmatpush.bf16.msra.mxu0 0
      %3859 = vmatpush.bf16.msra.mxu0 %v3850
      %3860 = vmatmul.bf16.gmra.mxu0 %v3832
      %v3861 = vpop.f32.mrf.mxu0
      %v3862 = vadd.f32 0.0, %v3861
      %v3863 = vpop.f32.mrf.mxu0
      %v3864 = vadd.f32 0.0, %v3863
      %3865 = vmatmul.bf16.gmra.mxu0 %v3835
      %v3866 = vpop.f32.mrf.mxu0
      %v3867 = vadd.f32 0.0, %v3866
      %v3868 = vpop.f32.mrf.mxu0
      %v3869 = vadd.f32 0.0, %v3868
      %3870 = vmatmul.bf16.gmra.mxu0 %v3838
      %v3871 = vpop.f32.mrf.mxu0
      %v3872 = vadd.f32 0.0, %v3871
      %v3873 = vpop.f32.mrf.mxu0
      %v3874 = vadd.f32 0.0, %v3873
      %3875 = vmatmul.bf16.gmra.mxu0 %v3841
      %v3876 = vpop.f32.mrf.mxu0
      %v3877 = vadd.f32 0.0, %v3876
      %v3878 = vpop.f32.mrf.mxu0
      %v3879 = vadd.f32 0.0, %v3878
      %3880 = vmatmul.bf16.gmra.mxu0 %v3844
      %v3881 = vpop.f32.mrf.mxu0
      %v3882 = vadd.f32 0.0, %v3881
      %v3883 = vpop.f32.mrf.mxu0
      %v3884 = vadd.f32 0.0, %v3883
      %3885 = vmatmul.bf16.gmra.mxu0 %v3847
      %v3886 = vpop.f32.mrf.mxu0
      %v3887 = vadd.f32 0.0, %v3886
      %v3888 = vpop.f32.mrf.mxu0
      %3889 = vdwg.mxu0
      %v3890 = vadd.f32 %v3760, %v3862
      %v3891 = vadd.f32 %v3761, %v3864
      %v3892 = vadd.f32 %v3762, %v3867
      %v3893 = vadd.f32 %v3763, %v3869
      %v3894 = vadd.f32 %v3764, %v3872
      %v3895 = vadd.f32 %v3765, %v3874
      %v3896 = vadd.f32 %v3766, %v3877
      %v3897 = vadd.f32 %v3767, %v3879
      %v3898 = vadd.f32 %v3768, %v3882
      %v3899 = vadd.f32 %v3769, %v3884
      %v3900 = vadd.f32 %v3770, %v3887
      %v3901 = vld [vmem:[%s265 + $0x34] sm:$0xf]
      %s3902 = scalar_lea.vmem %s1, 62
      %v3903 = vld [vmem:[%s3902] sm:$0x3]
      %v3905 = vunpack.c.l.b16 %v3901
      %v3906 = vpack.c.b16 %v3905, %v3682
      %v3908 = vshrl.u32 %v3684, 16
      %v3910 = vrot.slane %v3908, 3
      %v3911 = vshll.u32 %v3684, 16
      %v3913 = vrot.slane %v3911, 4
      %v3914 = vor.u32 %v3910, %v3913
      %v3916 = vshrl.u32 %v3685, 16
      %v3918 = vrot.slane %v3916, 3
      %v3919 = vshll.u32 %v3685, 16
      %v3921 = vrot.slane %v3919, 4
      %v3922 = vor.u32 %v3918, %v3921
      %v3923 = vsel %vm3777, %v3914, %v3922
      %v3925 = vshrl.u32 %v3686, 16
      %v3927 = vrot.slane %v3925, 3
      %v3928 = vshll.u32 %v3686, 16
      %v3930 = vrot.slane %v3928, 4
      %v3931 = vor.u32 %v3927, %v3930
      %v3932 = vsel %vm3777, %v3922, %v3931
      %v3934 = vshrl.u32 %v3687, 16
      %v3936 = vrot.slane %v3934, 3
      %v3937 = vshll.u32 %v3687, 16
      %v3939 = vrot.slane %v3937, 4
      %v3940 = vor.u32 %v3936, %v3939
      %v3941 = vsel %vm3777, %v3931, %v3940
      %v3943 = vshrl.u32 %v3688, 16
      %v3945 = vrot.slane %v3943, 3
      %v3946 = vshll.u32 %v3688, 16
      %v3948 = vrot.slane %v3946, 4
      %v3949 = vor.u32 %v3945, %v3948
      %v3950 = vsel %vm3777, %v3940, %v3949
      %v3952 = vshrl.u32 %v3906, 16
      %v3954 = vrot.slane %v3952, 3
      %v3955 = vshll.u32 %v3906, 16
      %v3957 = vrot.slane %v3955, 4
      %v3958 = vor.u32 %v3954, %v3957
      %v3959 = vsel %vm3777, %v3949, %v3958
      %v3961 = vsel %vm307, %v3923, 0
      %v3964 = vsel %vm307, %v3932, 0
      %v3967 = vsel %vm307, %v3941, 0
      %v3970 = vsel %vm307, %v3950, 0
      %v3973 = vsel %vm307, %v3959, 0
      %v3976 = vsel %vm307, %v3958, 0
      %v3979 = vsel %vm326, %v3903, 0
      %3981 = vmatpush.bf16.msra.mxu0 0
      %3982 = vmatpush.bf16.msra.mxu0 0
      %3983 = vmatpush.bf16.msra.mxu0 0
      %3984 = vmatpush.bf16.msra.mxu0 0
      %3985 = vmatpush.bf16.msra.mxu0 0
      %3986 = vmatpush.bf16.msra.mxu0 0
      %3987 = vmatpush.bf16.msra.mxu0 0
      %3988 = vmatpush.bf16.msra.mxu0 %v3979
      %3989 = vmatmul.bf16.gmra.mxu0 %v3961
      %v3990 = vpop.f32.mrf.mxu0
      %v3991 = vadd.f32 0.0, %v3990
      %v3992 = vpop.f32.mrf.mxu0
      %v3993 = vadd.f32 0.0, %v3992
      %3994 = vmatmul.bf16.gmra.mxu0 %v3964
      %v3995 = vpop.f32.mrf.mxu0
      %v3996 = vadd.f32 0.0, %v3995
      %v3997 = vpop.f32.mrf.mxu0
      %v3998 = vadd.f32 0.0, %v3997
      %3999 = vmatmul.bf16.gmra.mxu0 %v3967
      %v4000 = vpop.f32.mrf.mxu0
      %v4001 = vadd.f32 0.0, %v4000
      %v4002 = vpop.f32.mrf.mxu0
      %v4003 = vadd.f32 0.0, %v4002
      %4004 = vmatmul.bf16.gmra.mxu0 %v3970
      %v4005 = vpop.f32.mrf.mxu0
      %v4006 = vadd.f32 0.0, %v4005
      %v4007 = vpop.f32.mrf.mxu0
      %v4008 = vadd.f32 0.0, %v4007
      %4009 = vmatmul.bf16.gmra.mxu0 %v3973
      %v4010 = vpop.f32.mrf.mxu0
      %v4011 = vadd.f32 0.0, %v4010
      %v4012 = vpop.f32.mrf.mxu0
      %v4013 = vadd.f32 0.0, %v4012
      %4014 = vmatmul.bf16.gmra.mxu0 %v3976
      %v4015 = vpop.f32.mrf.mxu0
      %v4016 = vadd.f32 0.0, %v4015
      %v4017 = vpop.f32.mrf.mxu0
      %4018 = vdwg.mxu0
      %v4019 = vadd.f32 %v3890, %v3991
      %v4020 = vadd.f32 %v3891, %v3993
      %v4021 = vadd.f32 %v3892, %v3996
      %v4022 = vadd.f32 %v3893, %v3998
      %v4023 = vadd.f32 %v3894, %v4001
      %v4024 = vadd.f32 %v3895, %v4003
      %v4025 = vadd.f32 %v3896, %v4006
      %v4026 = vadd.f32 %v3897, %v4008
      %v4027 = vadd.f32 %v3898, %v4011
      %v4028 = vadd.f32 %v3899, %v4013
      %v4029 = vadd.f32 %v3900, %v4016
      %s4030 = scalar_lea.vmem %s1, 64
      %v4031 = vld [vmem:[%s4030] sm:$0x3]
      %v4032 = vpack.c.b16 %v3549, %v3548
      %v4033 = vpack.c.b16 %v3551, %v3550
      %v4034 = vpack.c.b16 %v3553, %v3552
      %v4035 = vpack.c.b16 %v3555, %v3554
      %v4036 = vpack.c.b16 %v3557, %v3556
      %v4037 = vpack.c.b16 %v3775, %v3775
      %v4039 = vsel %vm307, %v4032, 0
      %v4042 = vsel %vm307, %v4033, 0
      %v4045 = vsel %vm307, %v4034, 0
      %v4048 = vsel %vm307, %v4035, 0
      %v4051 = vsel %vm307, %v4036, 0
      %v4054 = vsel %vm307, %v4037, 0
      %v4057 = vsel %vm326, %v4031, 0
      %4059 = vmatpush.bf16.msra.mxu0 0
      %4060 = vmatpush.bf16.msra.mxu0 0
      %4061 = vmatpush.bf16.msra.mxu0 0
      %4062 = vmatpush.bf16.msra.mxu0 0
      %4063 = vmatpush.bf16.msra.mxu0 0
      %4064 = vmatpush.bf16.msra.mxu0 0
      %4065 = vmatpush.bf16.msra.mxu0 0
      %4066 = vmatpush.bf16.msra.mxu0 %v4057
      %4067 = vmatmul.bf16.gmra.mxu0 %v4039
      %v4068 = vpop.f32.mrf.mxu0
      %v4069 = vadd.f32 0.0, %v4068
      %v4070 = vpop.f32.mrf.mxu0
      %v4071 = vadd.f32 0.0, %v4070
      %4072 = vmatmul.bf16.gmra.mxu0 %v4042
      %v4073 = vpop.f32.mrf.mxu0
      %v4074 = vadd.f32 0.0, %v4073
      %v4075 = vpop.f32.mrf.mxu0
      %v4076 = vadd.f32 0.0, %v4075
      %4077 = vmatmul.bf16.gmra.mxu0 %v4045
      %v4078 = vpop.f32.mrf.mxu0
      %v4079 = vadd.f32 0.0, %v4078
      %v4080 = vpop.f32.mrf.mxu0
      %v4081 = vadd.f32 0.0, %v4080
      %4082 = vmatmul.bf16.gmra.mxu0 %v4048
      %v4083 = vpop.f32.mrf.mxu0
      %v4084 = vadd.f32 0.0, %v4083
      %v4085 = vpop.f32.mrf.mxu0
      %v4086 = vadd.f32 0.0, %v4085
      %4087 = vmatmul.bf16.gmra.mxu0 %v4051
      %v4088 = vpop.f32.mrf.mxu0
      %v4089 = vadd.f32 0.0, %v4088
      %v4090 = vpop.f32.mrf.mxu0
      %v4091 = vadd.f32 0.0, %v4090
      %4092 = vmatmul.bf16.gmra.mxu0 %v4054
      %v4093 = vpop.f32.mrf.mxu0
      %v4094 = vadd.f32 0.0, %v4093
      %v4095 = vpop.f32.mrf.mxu0
      %4096 = vdwg.mxu0
      %v4097 = vadd.f32 %v4019, %v4069
      %v4098 = vadd.f32 %v4020, %v4071
      %v4099 = vadd.f32 %v4021, %v4074
      %v4100 = vadd.f32 %v4022, %v4076
      %v4101 = vadd.f32 %v4023, %v4079
      %v4102 = vadd.f32 %v4024, %v4081
      %v4103 = vadd.f32 %v4025, %v4084
      %v4104 = vadd.f32 %v4026, %v4086
      %v4105 = vadd.f32 %v4027, %v4089
      %v4106 = vadd.f32 %v4028, %v4091
      %v4107 = vadd.f32 %v4029, %v4094
      %s4108 = scalar_lea.vmem %s1, 66
      %v4109 = vld [vmem:[%s4108] sm:$0x3]
      %v4110 = vpack.c.b16 %v3674, %v3673
      %v4111 = vpack.c.b16 %v3676, %v3675
      %v4112 = vpack.c.b16 %v3678, %v3677
      %v4113 = vpack.c.b16 %v3680, %v3679
      %v4114 = vpack.c.b16 %v3682, %v3681
      %v4115 = vpack.c.b16 %v3905, %v3905
      %v4117 = vsel %vm307, %v4110, 0
      %v4120 = vsel %vm307, %v4111, 0
      %v4123 = vsel %vm307, %v4112, 0
      %v4126 = vsel %vm307, %v4113, 0
      %v4129 = vsel %vm307, %v4114, 0
      %v4132 = vsel %vm307, %v4115, 0
      %v4135 = vsel %vm326, %v4109, 0
      %4137 = vmatpush.bf16.msra.mxu0 0
      %4138 = vmatpush.bf16.msra.mxu0 0
      %4139 = vmatpush.bf16.msra.mxu0 0
      %4140 = vmatpush.bf16.msra.mxu0 0
      %4141 = vmatpush.bf16.msra.mxu0 0
      %4142 = vmatpush.bf16.msra.mxu0 0
      %4143 = vmatpush.bf16.msra.mxu0 0
      %4144 = vmatpush.bf16.msra.mxu0 %v4135
      %4145 = vmatmul.bf16.gmra.mxu0 %v4117
      %v4146 = vpop.f32.mrf.mxu0
      %v4147 = vadd.f32 0.0, %v4146
      %v4148 = vpop.f32.mrf.mxu0
      %v4149 = vadd.f32 0.0, %v4148
      %4150 = vmatmul.bf16.gmra.mxu0 %v4120
      %v4151 = vpop.f32.mrf.mxu0
      %v4152 = vadd.f32 0.0, %v4151
      %v4153 = vpop.f32.mrf.mxu0
      %v4154 = vadd.f32 0.0, %v4153
      %4155 = vmatmul.bf16.gmra.mxu0 %v4123
      %v4156 = vpop.f32.mrf.mxu0
      %v4157 = vadd.f32 0.0, %v4156
      %v4158 = vpop.f32.mrf.mxu0
      %v4159 = vadd.f32 0.0, %v4158
      %4160 = vmatmul.bf16.gmra.mxu0 %v4126
      %v4161 = vpop.f32.mrf.mxu0
      %v4162 = vadd.f32 0.0, %v4161
      %v4163 = vpop.f32.mrf.mxu0
      %v4164 = vadd.f32 0.0, %v4163
      %4165 = vmatmul.bf16.gmra.mxu0 %v4129
      %v4166 = vpop.f32.mrf.mxu0
      %v4167 = vadd.f32 0.0, %v4166
      %v4168 = vpop.f32.mrf.mxu0
      %v4169 = vadd.f32 0.0, %v4168
      %4170 = vmatmul.bf16.gmra.mxu0 %v4132
      %v4171 = vpop.f32.mrf.mxu0
      %v4172 = vadd.f32 0.0, %v4171
      %v4173 = vpop.f32.mrf.mxu0
      %4174 = vdwg.mxu0
      %v4175 = vadd.f32 %v4097, %v4147
      %v4176 = vadd.f32 %v4098, %v4149
      %v4177 = vadd.f32 %v4099, %v4152
      %v4178 = vadd.f32 %v4100, %v4154
      %v4179 = vadd.f32 %v4101, %v4157
      %v4180 = vadd.f32 %v4102, %v4159
      %v4181 = vadd.f32 %v4103, %v4162
      %v4182 = vadd.f32 %v4104, %v4164
      %v4183 = vadd.f32 %v4105, %v4167
      %v4184 = vadd.f32 %v4106, %v4169
      %v4185 = vadd.f32 %v4107, %v4172
      %v4186 = vld [vmem:[%s246 + $0xc] sm:$0xf]
      %v4187 = vld [vmem:[%s246 + $0x10] sm:$0xf]
      %v4188 = vld [vmem:[%s246 + $0x14] sm:$0xf]
      %v4189 = vld [vmem:[%s246 + $0x18] sm:$0xf]
      %v4190 = vld [vmem:[%s246 + $0x1c] sm:$0xf]
      %v4191 = vld [vmem:[%s246 + $0x20] sm:$0xf]
      %v4192 = vld [vmem:[%s246 + $0x24] sm:$0xf]
      %v4193 = vld [vmem:[%s246 + $0x28] sm:$0xf]
      %v4194 = vld [vmem:[%s246 + $0x2c] sm:$0xf]
      %v4195 = vld [vmem:[%s246 + $0x30] sm:$0xf]
      %v4196 = vld [vmem:[%s246 + $0x34] sm:$0xf]
      %v4197 = vld [vmem:[%s246 + $0x38] sm:$0x1]
      %s4198 = scalar_lea.vmem %s1, 68
      %v4199 = vld [vmem:[%s4198] sm:$0x3]
      %v4212 = vunpack.c.l.b16 %v4186
      %v4213 = vunpack.c.l.b16 %v4187
      %v4214 = vunpack.c.l.b16 %v4188
      %v4215 = vunpack.c.l.b16 %v4189
      %v4216 = vunpack.c.l.b16 %v4190
      %v4217 = vunpack.c.l.b16 %v4191
      %v4218 = vunpack.c.l.b16 %v4192
      %v4219 = vunpack.c.l.b16 %v4193
      %v4220 = vunpack.c.l.b16 %v4194
      %v4221 = vunpack.c.l.b16 %v4195
      %v4222 = vunpack.c.l.b16 %v4196
      %v4223 = vunpack.c.l.b16 %v4197
      %v4224 = vpack.c.b16 %v4213, %v4212
      %v4225 = vpack.c.b16 %v4215, %v4214
      %v4226 = vpack.c.b16 %v4217, %v4216
      %v4227 = vpack.c.b16 %v4219, %v4218
      %v4228 = vpack.c.b16 %v4221, %v4220
      %v4229 = vpack.c.b16 %v4223, %v4222
      %v4231 = vshrl.u32 %v4224, 16
      %v4233 = vshll.u32 %v4224, 16
      %v4235 = vrot.slane %v4233, 1
      %v4236 = vor.u32 %v4231, %v4235
      %v4238 = vshll.u32 %v4225, 16
      %v4240 = vrot.slane %v4238, 1
      %v4241 = vsel %vm499, %v4236, %v4240
      %v4242 = vshrl.u32 %v4225, 16
      %v4244 = vor.u32 %v4242, %v4240
      %v4246 = vshll.u32 %v4226, 16
      %v4248 = vrot.slane %v4246, 1
      %v4249 = vsel %vm499, %v4244, %v4248
      %v4250 = vshrl.u32 %v4226, 16
      %v4252 = vor.u32 %v4250, %v4248
      %v4254 = vshll.u32 %v4227, 16
      %v4256 = vrot.slane %v4254, 1
      %v4257 = vsel %vm499, %v4252, %v4256
      %v4258 = vshrl.u32 %v4227, 16
      %v4260 = vor.u32 %v4258, %v4256
      %v4262 = vshll.u32 %v4228, 16
      %v4264 = vrot.slane %v4262, 1
      %v4265 = vsel %vm499, %v4260, %v4264
      %v4266 = vshrl.u32 %v4228, 16
      %v4268 = vor.u32 %v4266, %v4264
      %v4270 = vshll.u32 %v4229, 16
      %v4272 = vrot.slane %v4270, 1
      %v4273 = vsel %vm499, %v4268, %v4272
      %v4274 = vshrl.u32 %v4229, 16
      %v4276 = vor.u32 %v4274, %v4272
      %v4278 = vsel %vm307, %v4241, 0
      %v4281 = vsel %vm307, %v4249, 0
      %v4284 = vsel %vm307, %v4257, 0
      %v4287 = vsel %vm307, %v4265, 0
      %v4290 = vsel %vm307, %v4273, 0
      %v4293 = vsel %vm307, %v4276, 0
      %v4296 = vsel %vm326, %v4199, 0
      %4298 = vmatpush.bf16.msra.mxu0 0
      %4299 = vmatpush.bf16.msra.mxu0 0
      %4300 = vmatpush.bf16.msra.mxu0 0
      %4301 = vmatpush.bf16.msra.mxu0 0
      %4302 = vmatpush.bf16.msra.mxu0 0
      %4303 = vmatpush.bf16.msra.mxu0 0
      %4304 = vmatpush.bf16.msra.mxu0 0
      %4305 = vmatpush.bf16.msra.mxu0 %v4296
      %4306 = vmatmul.bf16.gmra.mxu0 %v4278
      %v4307 = vpop.f32.mrf.mxu0
      %v4308 = vadd.f32 0.0, %v4307
      %v4309 = vpop.f32.mrf.mxu0
      %v4310 = vadd.f32 0.0, %v4309
      %4311 = vmatmul.bf16.gmra.mxu0 %v4281
      %v4312 = vpop.f32.mrf.mxu0
      %v4313 = vadd.f32 0.0, %v4312
      %v4314 = vpop.f32.mrf.mxu0
      %v4315 = vadd.f32 0.0, %v4314
      %4316 = vmatmul.bf16.gmra.mxu0 %v4284
      %v4317 = vpop.f32.mrf.mxu0
      %v4318 = vadd.f32 0.0, %v4317
      %v4319 = vpop.f32.mrf.mxu0
      %v4320 = vadd.f32 0.0, %v4319
      %4321 = vmatmul.bf16.gmra.mxu0 %v4287
      %v4322 = vpop.f32.mrf.mxu0
      %v4323 = vadd.f32 0.0, %v4322
      %v4324 = vpop.f32.mrf.mxu0
      %v4325 = vadd.f32 0.0, %v4324
      %4326 = vmatmul.bf16.gmra.mxu0 %v4290
      %v4327 = vpop.f32.mrf.mxu0
      %v4328 = vadd.f32 0.0, %v4327
      %v4329 = vpop.f32.mrf.mxu0
      %v4330 = vadd.f32 0.0, %v4329
      %4331 = vmatmul.bf16.gmra.mxu0 %v4293
      %v4332 = vpop.f32.mrf.mxu0
      %v4333 = vadd.f32 0.0, %v4332
      %v4334 = vpop.f32.mrf.mxu0
      %4335 = vdwg.mxu0
      %v4336 = vadd.f32 %v4175, %v4308
      %v4337 = vadd.f32 %v4176, %v4310
      %v4338 = vadd.f32 %v4177, %v4313
      %v4339 = vadd.f32 %v4178, %v4315
      %v4340 = vadd.f32 %v4179, %v4318
      %v4341 = vadd.f32 %v4180, %v4320
      %v4342 = vadd.f32 %v4181, %v4323
      %v4343 = vadd.f32 %v4182, %v4325
      %v4344 = vadd.f32 %v4183, %v4328
      %v4345 = vadd.f32 %v4184, %v4330
      %v4346 = vadd.f32 %v4185, %v4333
      %v4347 = vld [vmem:[%s1063 + $0x8] sm:$0x8]
      %v4348 = vld [vmem:[%s1063 + $0xc] sm:$0xf]
      %v4349 = vld [vmem:[%s1063 + $0x10] sm:$0xf]
      %v4350 = vld [vmem:[%s1063 + $0x14] sm:$0xf]
      %v4351 = vld [vmem:[%s1063 + $0x18] sm:$0xf]
      %v4352 = vld [vmem:[%s1063 + $0x1c] sm:$0xf]
      %v4353 = vld [vmem:[%s1063 + $0x20] sm:$0xf]
      %v4354 = vld [vmem:[%s1063 + $0x24] sm:$0xf]
      %v4355 = vld [vmem:[%s1063 + $0x28] sm:$0xf]
      %v4356 = vld [vmem:[%s1063 + $0x2c] sm:$0xf]
      %v4357 = vld [vmem:[%s1063 + $0x30] sm:$0xf]
      %v4358 = vld [vmem:[%s1063 + $0x34] sm:$0x7]
      %s4359 = scalar_lea.vmem %s1, 70
      %v4360 = vld [vmem:[%s4359] sm:$0x3]
      %v4373 = vunpack.c.l.b16 %v4347
      %v4374 = vunpack.c.l.b16 %v4348
      %v4375 = vunpack.c.l.b16 %v4349
      %v4376 = vunpack.c.l.b16 %v4350
      %v4377 = vunpack.c.l.b16 %v4351
      %v4378 = vunpack.c.l.b16 %v4352
      %v4379 = vunpack.c.l.b16 %v4353
      %v4380 = vunpack.c.l.b16 %v4354
      %v4381 = vunpack.c.l.b16 %v4355
      %v4382 = vunpack.c.l.b16 %v4356
      %v4383 = vunpack.c.l.b16 %v4357
      %v4384 = vunpack.c.l.b16 %v4358
      %v4385 = vpack.c.b16 %v4374, %v4373
      %v4386 = vpack.c.b16 %v4376, %v4375
      %v4387 = vpack.c.b16 %v4378, %v4377
      %v4388 = vpack.c.b16 %v4380, %v4379
      %v4389 = vpack.c.b16 %v4382, %v4381
      %v4390 = vpack.c.b16 %v4384, %v4383
      %v4391 = vrot.slane %v4385, 3
      %v4392 = vrot.slane %v4386, 3
      %v4393 = vsel %vm2626, %v4391, %v4392
      %v4394 = vrot.slane %v4387, 3
      %v4395 = vsel %vm2626, %v4392, %v4394
      %v4396 = vrot.slane %v4388, 3
      %v4397 = vsel %vm2626, %v4394, %v4396
      %v4398 = vrot.slane %v4389, 3
      %v4399 = vsel %vm2626, %v4396, %v4398
      %v4400 = vrot.slane %v4390, 3
      %v4401 = vsel %vm2626, %v4398, %v4400
      %v4403 = vsel %vm307, %v4393, 0
      %v4406 = vsel %vm307, %v4395, 0
      %v4409 = vsel %vm307, %v4397, 0
      %v4412 = vsel %vm307, %v4399, 0
      %v4415 = vsel %vm307, %v4401, 0
      %v4418 = vsel %vm307, %v4400, 0
      %v4421 = vsel %vm326, %v4360, 0
      %4423 = vmatpush.bf16.msra.mxu0 0
      %4424 = vmatpush.bf16.msra.mxu0 0
      %4425 = vmatpush.bf16.msra.mxu0 0
      %4426 = vmatpush.bf16.msra.mxu0 0
      %4427 = vmatpush.bf16.msra.mxu0 0
      %4428 = vmatpush.bf16.msra.mxu0 0
      %4429 = vmatpush.bf16.msra.mxu0 0
      %4430 = vmatpush.bf16.msra.mxu0 %v4421
      %4431 = vmatmul.bf16.gmra.mxu0 %v4403
      %v4432 = vpop.f32.mrf.mxu0
      %v4433 = vadd.f32 0.0, %v4432
      %v4434 = vpop.f32.mrf.mxu0
      %v4435 = vadd.f32 0.0, %v4434
      %4436 = vmatmul.bf16.gmra.mxu0 %v4406
      %v4437 = vpop.f32.mrf.mxu0
      %v4438 = vadd.f32 0.0, %v4437
      %v4439 = vpop.f32.mrf.mxu0
      %v4440 = vadd.f32 0.0, %v4439
      %4441 = vmatmul.bf16.gmra.mxu0 %v4409
      %v4442 = vpop.f32.mrf.mxu0
      %v4443 = vadd.f32 0.0, %v4442
      %v4444 = vpop.f32.mrf.mxu0
      %v4445 = vadd.f32 0.0, %v4444
      %4446 = vmatmul.bf16.gmra.mxu0 %v4412
      %v4447 = vpop.f32.mrf.mxu0
      %v4448 = vadd.f32 0.0, %v4447
      %v4449 = vpop.f32.mrf.mxu0
      %v4450 = vadd.f32 0.0, %v4449
      %4451 = vmatmul.bf16.gmra.mxu0 %v4415
      %v4452 = vpop.f32.mrf.mxu0
      %v4453 = vadd.f32 0.0, %v4452
      %v4454 = vpop.f32.mrf.mxu0
      %v4455 = vadd.f32 0.0, %v4454
      %4456 = vmatmul.bf16.gmra.mxu0 %v4418
      %v4457 = vpop.f32.mrf.mxu0
      %v4458 = vadd.f32 0.0, %v4457
      %v4459 = vpop.f32.mrf.mxu0
      %4460 = vdwg.mxu0
      %v4461 = vadd.f32 %v4336, %v4433
      %v4462 = vadd.f32 %v4337, %v4435
      %v4463 = vadd.f32 %v4338, %v4438
      %v4464 = vadd.f32 %v4339, %v4440
      %v4465 = vadd.f32 %v4340, %v4443
      %v4466 = vadd.f32 %v4341, %v4445
      %v4467 = vadd.f32 %v4342, %v4448
      %v4468 = vadd.f32 %v4343, %v4450
      %v4469 = vadd.f32 %v4344, %v4453
      %v4470 = vadd.f32 %v4345, %v4455
      %v4471 = vadd.f32 %v4346, %v4458
      %v4472 = vld [vmem:[%s1175 + $0x8] sm:$0x8]
      %v4473 = vld [vmem:[%s1175 + $0xc] sm:$0xf]
      %v4474 = vld [vmem:[%s1175 + $0x10] sm:$0xf]
      %v4475 = vld [vmem:[%s1175 + $0x14] sm:$0xf]
      %v4476 = vld [vmem:[%s1175 + $0x18] sm:$0xf]
      %v4477 = vld [vmem:[%s1175 + $0x1c] sm:$0xf]
      %v4478 = vld [vmem:[%s1175 + $0x20] sm:$0xf]
      %v4479 = vld [vmem:[%s1175 + $0x24] sm:$0xf]
      %v4480 = vld [vmem:[%s1175 + $0x28] sm:$0xf]
      %v4481 = vld [vmem:[%s1175 + $0x2c] sm:$0xf]
      %v4482 = vld [vmem:[%s1175 + $0x30] sm:$0xf]
      %v4483 = vld [vmem:[%s1175 + $0x34] sm:$0x7]
      %s4484 = scalar_lea.vmem %s1, 72
      %v4485 = vld [vmem:[%s4484] sm:$0x3]
      %v4498 = vunpack.c.l.b16 %v4472
      %v4499 = vunpack.c.l.b16 %v4473
      %v4500 = vunpack.c.l.b16 %v4474
      %v4501 = vunpack.c.l.b16 %v4475
      %v4502 = vunpack.c.l.b16 %v4476
      %v4503 = vunpack.c.l.b16 %v4477
      %v4504 = vunpack.c.l.b16 %v4478
      %v4505 = vunpack.c.l.b16 %v4479
      %v4506 = vunpack.c.l.b16 %v4480
      %v4507 = vunpack.c.l.b16 %v4481
      %v4508 = vunpack.c.l.b16 %v4482
      %v4509 = vunpack.c.l.b16 %v4483
      %v4510 = vpack.c.b16 %v4499, %v4498
      %v4511 = vpack.c.b16 %v4501, %v4500
      %v4512 = vpack.c.b16 %v4503, %v4502
      %v4513 = vpack.c.b16 %v4505, %v4504
      %v4514 = vpack.c.b16 %v4507, %v4506
      %v4515 = vpack.c.b16 %v4509, %v4508
      %v4516 = vrot.slane %v4510, 3
      %v4517 = vrot.slane %v4511, 3
      %v4518 = vsel %vm2626, %v4516, %v4517
      %v4519 = vrot.slane %v4512, 3
      %v4520 = vsel %vm2626, %v4517, %v4519
      %v4521 = vrot.slane %v4513, 3
      %v4522 = vsel %vm2626, %v4519, %v4521
      %v4523 = vrot.slane %v4514, 3
      %v4524 = vsel %vm2626, %v4521, %v4523
      %v4525 = vrot.slane %v4515, 3
      %v4526 = vsel %vm2626, %v4523, %v4525
      %v4528 = vsel %vm307, %v4518, 0
      %v4531 = vsel %vm307, %v4520, 0
      %v4534 = vsel %vm307, %v4522, 0
      %v4537 = vsel %vm307, %v4524, 0
      %v4540 = vsel %vm307, %v4526, 0
      %v4543 = vsel %vm307, %v4525, 0
      %v4546 = vsel %vm326, %v4485, 0
      %4548 = vmatpush.bf16.msra.mxu0 0
      %4549 = vmatpush.bf16.msra.mxu0 0
      %4550 = vmatpush.bf16.msra.mxu0 0
      %4551 = vmatpush.bf16.msra.mxu0 0
      %4552 = vmatpush.bf16.msra.mxu0 0
      %4553 = vmatpush.bf16.msra.mxu0 0
      %4554 = vmatpush.bf16.msra.mxu0 0
      %4555 = vmatpush.bf16.msra.mxu0 %v4546
      %4556 = vmatmul.bf16.gmra.mxu0 %v4528
      %v4557 = vpop.f32.mrf.mxu0
      %v4558 = vadd.f32 0.0, %v4557
      %v4559 = vpop.f32.mrf.mxu0
      %v4560 = vadd.f32 0.0, %v4559
      %4561 = vmatmul.bf16.gmra.mxu0 %v4531
      %v4562 = vpop.f32.mrf.mxu0
      %v4563 = vadd.f32 0.0, %v4562
      %v4564 = vpop.f32.mrf.mxu0
      %v4565 = vadd.f32 0.0, %v4564
      %4566 = vmatmul.bf16.gmra.mxu0 %v4534
      %v4567 = vpop.f32.mrf.mxu0
      %v4568 = vadd.f32 0.0, %v4567
      %v4569 = vpop.f32.mrf.mxu0
      %v4570 = vadd.f32 0.0, %v4569
      %4571 = vmatmul.bf16.gmra.mxu0 %v4537
      %v4572 = vpop.f32.mrf.mxu0
      %v4573 = vadd.f32 0.0, %v4572
      %v4574 = vpop.f32.mrf.mxu0
      %v4575 = vadd.f32 0.0, %v4574
      %4576 = vmatmul.bf16.gmra.mxu0 %v4540
      %v4577 = vpop.f32.mrf.mxu0
      %v4578 = vadd.f32 0.0, %v4577
      %v4579 = vpop.f32.mrf.mxu0
      %v4580 = vadd.f32 0.0, %v4579
      %4581 = vmatmul.bf16.gmra.mxu0 %v4543
      %v4582 = vpop.f32.mrf.mxu0
      %v4583 = vadd.f32 0.0, %v4582
      %v4584 = vpop.f32.mrf.mxu0
      %4585 = vdwg.mxu0
      %v4586 = vadd.f32 %v4461, %v4558
      %v4587 = vadd.f32 %v4462, %v4560
      %v4588 = vadd.f32 %v4463, %v4563
      %v4589 = vadd.f32 %v4464, %v4565
      %v4590 = vadd.f32 %v4465, %v4568
      %v4591 = vadd.f32 %v4466, %v4570
      %v4592 = vadd.f32 %v4467, %v4573
      %v4593 = vadd.f32 %v4468, %v4575
      %v4594 = vadd.f32 %v4469, %v4578
      %v4595 = vadd.f32 %v4470, %v4580
      %v4596 = vadd.f32 %v4471, %v4583
      %v4597 = vld [vmem:[%s1063 + $0x34] sm:$0xf]
      %s4598 = scalar_lea.vmem %s1, 74
      %v4599 = vld [vmem:[%s4598] sm:$0x3]
      %v4601 = vunpack.c.l.b16 %v4597
      %v4602 = vpack.c.b16 %v4601, %v4383
      %v4604 = vshrl.u32 %v4385, 16
      %v4606 = vrot.slane %v4604, 3
      %v4607 = vshll.u32 %v4385, 16
      %v4609 = vrot.slane %v4607, 4
      %v4610 = vor.u32 %v4606, %v4609
      %v4612 = vshrl.u32 %v4386, 16
      %v4614 = vrot.slane %v4612, 3
      %v4615 = vshll.u32 %v4386, 16
      %v4617 = vrot.slane %v4615, 4
      %v4618 = vor.u32 %v4614, %v4617
      %v4619 = vsel %vm3777, %v4610, %v4618
      %v4621 = vshrl.u32 %v4387, 16
      %v4623 = vrot.slane %v4621, 3
      %v4624 = vshll.u32 %v4387, 16
      %v4626 = vrot.slane %v4624, 4
      %v4627 = vor.u32 %v4623, %v4626
      %v4628 = vsel %vm3777, %v4618, %v4627
      %v4630 = vshrl.u32 %v4388, 16
      %v4632 = vrot.slane %v4630, 3
      %v4633 = vshll.u32 %v4388, 16
      %v4635 = vrot.slane %v4633, 4
      %v4636 = vor.u32 %v4632, %v4635
      %v4637 = vsel %vm3777, %v4627, %v4636
      %v4639 = vshrl.u32 %v4389, 16
      %v4641 = vrot.slane %v4639, 3
      %v4642 = vshll.u32 %v4389, 16
      %v4644 = vrot.slane %v4642, 4
      %v4645 = vor.u32 %v4641, %v4644
      %v4646 = vsel %vm3777, %v4636, %v4645
      %v4648 = vshrl.u32 %v4602, 16
      %v4650 = vrot.slane %v4648, 3
      %v4651 = vshll.u32 %v4602, 16
      %v4653 = vrot.slane %v4651, 4
      %v4654 = vor.u32 %v4650, %v4653
      %v4655 = vsel %vm3777, %v4645, %v4654
      %v4657 = vsel %vm307, %v4619, 0
      %v4660 = vsel %vm307, %v4628, 0
      %v4663 = vsel %vm307, %v4637, 0
      %v4666 = vsel %vm307, %v4646, 0
      %v4669 = vsel %vm307, %v4655, 0
      %v4672 = vsel %vm307, %v4654, 0
      %v4675 = vsel %vm326, %v4599, 0
      %4677 = vmatpush.bf16.msra.mxu0 0
      %4678 = vmatpush.bf16.msra.mxu0 0
      %4679 = vmatpush.bf16.msra.mxu0 0
      %4680 = vmatpush.bf16.msra.mxu0 0
      %4681 = vmatpush.bf16.msra.mxu0 0
      %4682 = vmatpush.bf16.msra.mxu0 0
      %4683 = vmatpush.bf16.msra.mxu0 0
      %4684 = vmatpush.bf16.msra.mxu0 %v4675
      %4685 = vmatmul.bf16.gmra.mxu0 %v4657
      %v4686 = vpop.f32.mrf.mxu0
      %v4687 = vadd.f32 0.0, %v4686
      %v4688 = vpop.f32.mrf.mxu0
      %v4689 = vadd.f32 0.0, %v4688
      %4690 = vmatmul.bf16.gmra.mxu0 %v4660
      %v4691 = vpop.f32.mrf.mxu0
      %v4692 = vadd.f32 0.0, %v4691
      %v4693 = vpop.f32.mrf.mxu0
      %v4694 = vadd.f32 0.0, %v4693
      %4695 = vmatmul.bf16.gmra.mxu0 %v4663
      %v4696 = vpop.f32.mrf.mxu0
      %v4697 = vadd.f32 0.0, %v4696
      %v4698 = vpop.f32.mrf.mxu0
      %v4699 = vadd.f32 0.0, %v4698
      %4700 = vmatmul.bf16.gmra.mxu0 %v4666
      %v4701 = vpop.f32.mrf.mxu0
      %v4702 = vadd.f32 0.0, %v4701
      %v4703 = vpop.f32.mrf.mxu0
      %v4704 = vadd.f32 0.0, %v4703
      %4705 = vmatmul.bf16.gmra.mxu0 %v4669
      %v4706 = vpop.f32.mrf.mxu0
      %v4707 = vadd.f32 0.0, %v4706
      %v4708 = vpop.f32.mrf.mxu0
      %v4709 = vadd.f32 0.0, %v4708
      %4710 = vmatmul.bf16.gmra.mxu0 %v4672
      %v4711 = vpop.f32.mrf.mxu0
      %v4712 = vadd.f32 0.0, %v4711
      %v4713 = vpop.f32.mrf.mxu0
      %4714 = vdwg.mxu0
      %v4715 = vadd.f32 %v4586, %v4687
      %v4716 = vadd.f32 %v4587, %v4689
      %v4717 = vadd.f32 %v4588, %v4692
      %v4718 = vadd.f32 %v4589, %v4694
      %v4719 = vadd.f32 %v4590, %v4697
      %v4720 = vadd.f32 %v4591, %v4699
      %v4721 = vadd.f32 %v4592, %v4702
      %v4722 = vadd.f32 %v4593, %v4704
      %v4723 = vadd.f32 %v4594, %v4707
      %v4724 = vadd.f32 %v4595, %v4709
      %v4725 = vadd.f32 %v4596, %v4712
      %v4726 = vld [vmem:[%s1175 + $0x34] sm:$0xf]
      %s4727 = scalar_lea.vmem %s1, 76
      %v4728 = vld [vmem:[%s4727] sm:$0x3]
      %v4730 = vunpack.c.l.b16 %v4726
      %v4731 = vpack.c.b16 %v4730, %v4508
      %v4733 = vshrl.u32 %v4510, 16
      %v4735 = vrot.slane %v4733, 3
      %v4736 = vshll.u32 %v4510, 16
      %v4738 = vrot.slane %v4736, 4
      %v4739 = vor.u32 %v4735, %v4738
      %v4741 = vshrl.u32 %v4511, 16
      %v4743 = vrot.slane %v4741, 3
      %v4744 = vshll.u32 %v4511, 16
      %v4746 = vrot.slane %v4744, 4
      %v4747 = vor.u32 %v4743, %v4746
      %v4748 = vsel %vm3777, %v4739, %v4747
      %v4750 = vshrl.u32 %v4512, 16
      %v4752 = vrot.slane %v4750, 3
      %v4753 = vshll.u32 %v4512, 16
      %v4755 = vrot.slane %v4753, 4
      %v4756 = vor.u32 %v4752, %v4755
      %v4757 = vsel %vm3777, %v4747, %v4756
      %v4759 = vshrl.u32 %v4513, 16
      %v4761 = vrot.slane %v4759, 3
      %v4762 = vshll.u32 %v4513, 16
      %v4764 = vrot.slane %v4762, 4
      %v4765 = vor.u32 %v4761, %v4764
      %v4766 = vsel %vm3777, %v4756, %v4765
      %v4768 = vshrl.u32 %v4514, 16
      %v4770 = vrot.slane %v4768, 3
      %v4771 = vshll.u32 %v4514, 16
      %v4773 = vrot.slane %v4771, 4
      %v4774 = vor.u32 %v4770, %v4773
      %v4775 = vsel %vm3777, %v4765, %v4774
      %v4777 = vshrl.u32 %v4731, 16
      %v4779 = vrot.slane %v4777, 3
      %v4780 = vshll.u32 %v4731, 16
      %v4782 = vrot.slane %v4780, 4
      %v4783 = vor.u32 %v4779, %v4782
      %v4784 = vsel %vm3777, %v4774, %v4783
      %v4786 = vsel %vm307, %v4748, 0
      %v4789 = vsel %vm307, %v4757, 0
      %v4792 = vsel %vm307, %v4766, 0
      %v4795 = vsel %vm307, %v4775, 0
      %v4798 = vsel %vm307, %v4784, 0
      %v4801 = vsel %vm307, %v4783, 0
      %v4804 = vsel %vm326, %v4728, 0
      %4806 = vmatpush.bf16.msra.mxu0 0
      %4807 = vmatpush.bf16.msra.mxu0 0
      %4808 = vmatpush.bf16.msra.mxu0 0
      %4809 = vmatpush.bf16.msra.mxu0 0
      %4810 = vmatpush.bf16.msra.mxu0 0
      %4811 = vmatpush.bf16.msra.mxu0 0
      %4812 = vmatpush.bf16.msra.mxu0 0
      %4813 = vmatpush.bf16.msra.mxu0 %v4804
      %4814 = vmatmul.bf16.gmra.mxu0 %v4786
      %v4815 = vpop.f32.mrf.mxu0
      %v4816 = vadd.f32 0.0, %v4815
      %v4817 = vpop.f32.mrf.mxu0
      %v4818 = vadd.f32 0.0, %v4817
      %4819 = vmatmul.bf16.gmra.mxu0 %v4789
      %v4820 = vpop.f32.mrf.mxu0
      %v4821 = vadd.f32 0.0, %v4820
      %v4822 = vpop.f32.mrf.mxu0
      %v4823 = vadd.f32 0.0, %v4822
      %4824 = vmatmul.bf16.gmra.mxu0 %v4792
      %v4825 = vpop.f32.mrf.mxu0
      %v4826 = vadd.f32 0.0, %v4825
      %v4827 = vpop.f32.mrf.mxu0
      %v4828 = vadd.f32 0.0, %v4827
      %4829 = vmatmul.bf16.gmra.mxu0 %v4795
      %v4830 = vpop.f32.mrf.mxu0
      %v4831 = vadd.f32 0.0, %v4830
      %v4832 = vpop.f32.mrf.mxu0
      %v4833 = vadd.f32 0.0, %v4832
      %4834 = vmatmul.bf16.gmra.mxu0 %v4798
      %v4835 = vpop.f32.mrf.mxu0
      %v4836 = vadd.f32 0.0, %v4835
      %v4837 = vpop.f32.mrf.mxu0
      %v4838 = vadd.f32 0.0, %v4837
      %4839 = vmatmul.bf16.gmra.mxu0 %v4801
      %v4840 = vpop.f32.mrf.mxu0
      %v4841 = vadd.f32 0.0, %v4840
      %v4842 = vpop.f32.mrf.mxu0
      %4843 = vdwg.mxu0
      %v4844 = vadd.f32 %v4715, %v4816
      %v4845 = vadd.f32 %v4716, %v4818
      %v4846 = vadd.f32 %v4717, %v4821
      %v4847 = vadd.f32 %v4718, %v4823
      %v4848 = vadd.f32 %v4719, %v4826
      %v4849 = vadd.f32 %v4720, %v4828
      %v4850 = vadd.f32 %v4721, %v4831
      %v4851 = vadd.f32 %v4722, %v4833
      %v4852 = vadd.f32 %v4723, %v4836
      %v4853 = vadd.f32 %v4724, %v4838
      %v4854 = vadd.f32 %v4725, %v4841
      %s4855 = scalar_lea.vmem %s1, 78
      %v4856 = vld [vmem:[%s4855] sm:$0x3]
      %v4857 = vpack.c.b16 %v4375, %v4374
      %v4858 = vpack.c.b16 %v4377, %v4376
      %v4859 = vpack.c.b16 %v4379, %v4378
      %v4860 = vpack.c.b16 %v4381, %v4380
      %v4861 = vpack.c.b16 %v4383, %v4382
      %v4862 = vpack.c.b16 %v4601, %v4601
      %v4864 = vsel %vm307, %v4857, 0
      %v4867 = vsel %vm307, %v4858, 0
      %v4870 = vsel %vm307, %v4859, 0
      %v4873 = vsel %vm307, %v4860, 0
      %v4876 = vsel %vm307, %v4861, 0
      %v4879 = vsel %vm307, %v4862, 0
      %v4882 = vsel %vm326, %v4856, 0
      %4884 = vmatpush.bf16.msra.mxu0 0
      %4885 = vmatpush.bf16.msra.mxu0 0
      %4886 = vmatpush.bf16.msra.mxu0 0
      %4887 = vmatpush.bf16.msra.mxu0 0
      %4888 = vmatpush.bf16.msra.mxu0 0
      %4889 = vmatpush.bf16.msra.mxu0 0
      %4890 = vmatpush.bf16.msra.mxu0 0
      %4891 = vmatpush.bf16.msra.mxu0 %v4882
      %4892 = vmatmul.bf16.gmra.mxu0 %v4864
      %v4893 = vpop.f32.mrf.mxu0
      %v4894 = vadd.f32 0.0, %v4893
      %v4895 = vpop.f32.mrf.mxu0
      %v4896 = vadd.f32 0.0, %v4895
      %4897 = vmatmul.bf16.gmra.mxu0 %v4867
      %v4898 = vpop.f32.mrf.mxu0
      %v4899 = vadd.f32 0.0, %v4898
      %v4900 = vpop.f32.mrf.mxu0
      %v4901 = vadd.f32 0.0, %v4900
      %4902 = vmatmul.bf16.gmra.mxu0 %v4870
      %v4903 = vpop.f32.mrf.mxu0
      %v4904 = vadd.f32 0.0, %v4903
      %v4905 = vpop.f32.mrf.mxu0
      %v4906 = vadd.f32 0.0, %v4905
      %4907 = vmatmul.bf16.gmra.mxu0 %v4873
      %v4908 = vpop.f32.mrf.mxu0
      %v4909 = vadd.f32 0.0, %v4908
      %v4910 = vpop.f32.mrf.mxu0
      %v4911 = vadd.f32 0.0, %v4910
      %4912 = vmatmul.bf16.gmra.mxu0 %v4876
      %v4913 = vpop.f32.mrf.mxu0
      %v4914 = vadd.f32 0.0, %v4913
      %v4915 = vpop.f32.mrf.mxu0
      %v4916 = vadd.f32 0.0, %v4915
      %4917 = vmatmul.bf16.gmra.mxu0 %v4879
      %v4918 = vpop.f32.mrf.mxu0
      %v4919 = vadd.f32 0.0, %v4918
      %v4920 = vpop.f32.mrf.mxu0
      %4921 = vdwg.mxu0
      %v4922 = vadd.f32 %v4844, %v4894
      %v4923 = vadd.f32 %v4845, %v4896
      %v4924 = vadd.f32 %v4846, %v4899
      %v4925 = vadd.f32 %v4847, %v4901
      %v4926 = vadd.f32 %v4848, %v4904
      %v4927 = vadd.f32 %v4849, %v4906
      %v4928 = vadd.f32 %v4850, %v4909
      %v4929 = vadd.f32 %v4851, %v4911
      %v4930 = vadd.f32 %v4852, %v4914
      %v4931 = vadd.f32 %v4853, %v4916
      %v4932 = vadd.f32 %v4854, %v4919
      %s4933 = scalar_lea.vmem %s1, 80
      %v4934 = vld [vmem:[%s4933] sm:$0x3]
      %v4935 = vpack.c.b16 %v4500, %v4499
      %v4936 = vpack.c.b16 %v4502, %v4501
      %v4937 = vpack.c.b16 %v4504, %v4503
      %v4938 = vpack.c.b16 %v4506, %v4505
      %v4939 = vpack.c.b16 %v4508, %v4507
      %v4940 = vpack.c.b16 %v4730, %v4730
      %v4942 = vsel %vm307, %v4935, 0
      %v4945 = vsel %vm307, %v4936, 0
      %v4948 = vsel %vm307, %v4937, 0
      %v4951 = vsel %vm307, %v4938, 0
      %v4954 = vsel %vm307, %v4939, 0
      %v4957 = vsel %vm307, %v4940, 0
      %v4960 = vsel %vm326, %v4934, 0
      %4962 = vmatpush.bf16.msra.mxu0 0
      %4963 = vmatpush.bf16.msra.mxu0 0
      %4964 = vmatpush.bf16.msra.mxu0 0
      %4965 = vmatpush.bf16.msra.mxu0 0
      %4966 = vmatpush.bf16.msra.mxu0 0
      %4967 = vmatpush.bf16.msra.mxu0 0
      %4968 = vmatpush.bf16.msra.mxu0 0
      %4969 = vmatpush.bf16.msra.mxu0 %v4960
      %4970 = vmatmul.bf16.gmra.mxu0 %v4942
      %v4971 = vpop.f32.mrf.mxu0
      %v4972 = vadd.f32 0.0, %v4971
      %v4973 = vpop.f32.mrf.mxu0
      %v4974 = vadd.f32 0.0, %v4973
      %4975 = vmatmul.bf16.gmra.mxu0 %v4945
      %v4976 = vpop.f32.mrf.mxu0
      %v4977 = vadd.f32 0.0, %v4976
      %v4978 = vpop.f32.mrf.mxu0
      %v4979 = vadd.f32 0.0, %v4978
      %4980 = vmatmul.bf16.gmra.mxu0 %v4948
      %v4981 = vpop.f32.mrf.mxu0
      %v4982 = vadd.f32 0.0, %v4981
      %v4983 = vpop.f32.mrf.mxu0
      %v4984 = vadd.f32 0.0, %v4983
      %4985 = vmatmul.bf16.gmra.mxu0 %v4951
      %v4986 = vpop.f32.mrf.mxu0
      %v4987 = vadd.f32 0.0, %v4986
      %v4988 = vpop.f32.mrf.mxu0
      %v4989 = vadd.f32 0.0, %v4988
      %4990 = vmatmul.bf16.gmra.mxu0 %v4954
      %v4991 = vpop.f32.mrf.mxu0
      %v4992 = vadd.f32 0.0, %v4991
      %v4993 = vpop.f32.mrf.mxu0
      %v4994 = vadd.f32 0.0, %v4993
      %4995 = vmatmul.bf16.gmra.mxu0 %v4957
      %v4996 = vpop.f32.mrf.mxu0
      %v4997 = vadd.f32 0.0, %v4996
      %v4998 = vpop.f32.mrf.mxu0
      %4999 = vdwg.mxu0
      %v5000 = vadd.f32 %v4922, %v4972
      %v5001 = vadd.f32 %v4923, %v4974
      %v5002 = vadd.f32 %v4924, %v4977
      %v5003 = vadd.f32 %v4925, %v4979
      %v5004 = vadd.f32 %v4926, %v4982
      %v5005 = vadd.f32 %v4927, %v4984
      %v5006 = vadd.f32 %v4928, %v4987
      %v5007 = vadd.f32 %v4929, %v4989
      %v5008 = vadd.f32 %v4930, %v4992
      %v5009 = vadd.f32 %v4931, %v4994
      %v5010 = vadd.f32 %v4932, %v4997
      %v5011 = vld [vmem:[%s1063 + $0xc] sm:$0xf]
      %v5012 = vld [vmem:[%s1063 + $0x10] sm:$0xf]
      %v5013 = vld [vmem:[%s1063 + $0x14] sm:$0xf]
      %v5014 = vld [vmem:[%s1063 + $0x18] sm:$0xf]
      %v5015 = vld [vmem:[%s1063 + $0x1c] sm:$0xf]
      %v5016 = vld [vmem:[%s1063 + $0x20] sm:$0xf]
      %v5017 = vld [vmem:[%s1063 + $0x24] sm:$0xf]
      %v5018 = vld [vmem:[%s1063 + $0x28] sm:$0xf]
      %v5019 = vld [vmem:[%s1063 + $0x2c] sm:$0xf]
      %v5020 = vld [vmem:[%s1063 + $0x30] sm:$0xf]
      %v5021 = vld [vmem:[%s1063 + $0x34] sm:$0xf]
      %v5022 = vld [vmem:[%s1063 + $0x38] sm:$0x1]
      %s5023 = scalar_lea.vmem %s1, 82
      %v5024 = vld [vmem:[%s5023] sm:$0x3]
      %v5037 = vunpack.c.l.b16 %v5011
      %v5038 = vunpack.c.l.b16 %v5012
      %v5039 = vunpack.c.l.b16 %v5013
      %v5040 = vunpack.c.l.b16 %v5014
      %v5041 = vunpack.c.l.b16 %v5015
      %v5042 = vunpack.c.l.b16 %v5016
      %v5043 = vunpack.c.l.b16 %v5017
      %v5044 = vunpack.c.l.b16 %v5018
      %v5045 = vunpack.c.l.b16 %v5019
      %v5046 = vunpack.c.l.b16 %v5020
      %v5047 = vunpack.c.l.b16 %v5021
      %v5048 = vunpack.c.l.b16 %v5022
      %v5049 = vpack.c.b16 %v5038, %v5037
      %v5050 = vpack.c.b16 %v5040, %v5039
      %v5051 = vpack.c.b16 %v5042, %v5041
      %v5052 = vpack.c.b16 %v5044, %v5043
      %v5053 = vpack.c.b16 %v5046, %v5045
      %v5054 = vpack.c.b16 %v5048, %v5047
      %v5056 = vshrl.u32 %v5049, 16
      %v5058 = vshll.u32 %v5049, 16
      %v5060 = vrot.slane %v5058, 1
      %v5061 = vor.u32 %v5056, %v5060
      %v5063 = vshll.u32 %v5050, 16
      %v5065 = vrot.slane %v5063, 1
      %v5066 = vsel %vm499, %v5061, %v5065
      %v5067 = vshrl.u32 %v5050, 16
      %v5069 = vor.u32 %v5067, %v5065
      %v5071 = vshll.u32 %v5051, 16
      %v5073 = vrot.slane %v5071, 1
      %v5074 = vsel %vm499, %v5069, %v5073
      %v5075 = vshrl.u32 %v5051, 16
      %v5077 = vor.u32 %v5075, %v5073
      %v5079 = vshll.u32 %v5052, 16
      %v5081 = vrot.slane %v5079, 1
      %v5082 = vsel %vm499, %v5077, %v5081
      %v5083 = vshrl.u32 %v5052, 16
      %v5085 = vor.u32 %v5083, %v5081
      %v5087 = vshll.u32 %v5053, 16
      %v5089 = vrot.slane %v5087, 1
      %v5090 = vsel %vm499, %v5085, %v5089
      %v5091 = vshrl.u32 %v5053, 16
      %v5093 = vor.u32 %v5091, %v5089
      %v5095 = vshll.u32 %v5054, 16
      %v5097 = vrot.slane %v5095, 1
      %v5098 = vsel %vm499, %v5093, %v5097
      %v5099 = vshrl.u32 %v5054, 16
      %v5101 = vor.u32 %v5099, %v5097
      %v5103 = vsel %vm307, %v5066, 0
      %v5106 = vsel %vm307, %v5074, 0
      %v5109 = vsel %vm307, %v5082, 0
      %v5112 = vsel %vm307, %v5090, 0
      %v5115 = vsel %vm307, %v5098, 0
      %v5118 = vsel %vm307, %v5101, 0
      %v5121 = vsel %vm326, %v5024, 0
      %5123 = vmatpush.bf16.msra.mxu0 0
      %5124 = vmatpush.bf16.msra.mxu0 0
      %5125 = vmatpush.bf16.msra.mxu0 0
      %5126 = vmatpush.bf16.msra.mxu0 0
      %5127 = vmatpush.bf16.msra.mxu0 0
      %5128 = vmatpush.bf16.msra.mxu0 0
      %5129 = vmatpush.bf16.msra.mxu0 0
      %5130 = vmatpush.bf16.msra.mxu0 %v5121
      %5131 = vmatmul.bf16.gmra.mxu0 %v5103
      %v5132 = vpop.f32.mrf.mxu0
      %v5133 = vadd.f32 0.0, %v5132
      %v5134 = vpop.f32.mrf.mxu0
      %v5135 = vadd.f32 0.0, %v5134
      %5136 = vmatmul.bf16.gmra.mxu0 %v5106
      %v5137 = vpop.f32.mrf.mxu0
      %v5138 = vadd.f32 0.0, %v5137
      %v5139 = vpop.f32.mrf.mxu0
      %v5140 = vadd.f32 0.0, %v5139
      %5141 = vmatmul.bf16.gmra.mxu0 %v5109
      %v5142 = vpop.f32.mrf.mxu0
      %v5143 = vadd.f32 0.0, %v5142
      %v5144 = vpop.f32.mrf.mxu0
      %v5145 = vadd.f32 0.0, %v5144
      %5146 = vmatmul.bf16.gmra.mxu0 %v5112
      %v5147 = vpop.f32.mrf.mxu0
      %v5148 = vadd.f32 0.0, %v5147
      %v5149 = vpop.f32.mrf.mxu0
      %v5150 = vadd.f32 0.0, %v5149
      %5151 = vmatmul.bf16.gmra.mxu0 %v5115
      %v5152 = vpop.f32.mrf.mxu0
      %v5153 = vadd.f32 0.0, %v5152
      %v5154 = vpop.f32.mrf.mxu0
      %v5155 = vadd.f32 0.0, %v5154
      %5156 = vmatmul.bf16.gmra.mxu0 %v5118
      %v5157 = vpop.f32.mrf.mxu0
      %v5158 = vadd.f32 0.0, %v5157
      %v5159 = vpop.f32.mrf.mxu0
      %5160 = vdwg.mxu0
      %v5161 = vadd.f32 %v5000, %v5133
      %v5162 = vadd.f32 %v5001, %v5135
      %v5163 = vadd.f32 %v5002, %v5138
      %v5164 = vadd.f32 %v5003, %v5140
      %v5165 = vadd.f32 %v5004, %v5143
      %v5166 = vadd.f32 %v5005, %v5145
      %v5167 = vadd.f32 %v5006, %v5148
      %v5168 = vadd.f32 %v5007, %v5150
      %v5169 = vadd.f32 %v5008, %v5153
      %v5170 = vadd.f32 %v5009, %v5155
      %v5171 = vadd.f32 %v5010, %v5158
      %v5172 = vld [vmem:[%s246 + $0x10] sm:$0xf]
      %v5173 = vld [vmem:[%s246 + $0x14] sm:$0xf]
      %v5174 = vld [vmem:[%s246 + $0x18] sm:$0xf]
      %v5175 = vld [vmem:[%s246 + $0x1c] sm:$0xf]
      %v5176 = vld [vmem:[%s246 + $0x20] sm:$0xf]
      %v5177 = vld [vmem:[%s246 + $0x24] sm:$0xf]
      %v5178 = vld [vmem:[%s246 + $0x28] sm:$0xf]
      %v5179 = vld [vmem:[%s246 + $0x2c] sm:$0xf]
      %v5180 = vld [vmem:[%s246 + $0x30] sm:$0xf]
      %v5181 = vld [vmem:[%s246 + $0x34] sm:$0xf]
      %v5182 = vld [vmem:[%s246 + $0x38] sm:$0xf]
      %v5183 = vld [vmem:[%s246 + $0x3c] sm:$0x1]
      %s5184 = scalar_lea.vmem %s1, 84
      %v5185 = vld [vmem:[%s5184] sm:$0x3]
      %v5198 = vunpack.c.l.b16 %v5172
      %v5199 = vunpack.c.l.b16 %v5173
      %v5200 = vunpack.c.l.b16 %v5174
      %v5201 = vunpack.c.l.b16 %v5175
      %v5202 = vunpack.c.l.b16 %v5176
      %v5203 = vunpack.c.l.b16 %v5177
      %v5204 = vunpack.c.l.b16 %v5178
      %v5205 = vunpack.c.l.b16 %v5179
      %v5206 = vunpack.c.l.b16 %v5180
      %v5207 = vunpack.c.l.b16 %v5181
      %v5208 = vunpack.c.l.b16 %v5182
      %v5209 = vunpack.c.l.b16 %v5183
      %v5210 = vpack.c.b16 %v5199, %v5198
      %v5211 = vpack.c.b16 %v5201, %v5200
      %v5212 = vpack.c.b16 %v5203, %v5202
      %v5213 = vpack.c.b16 %v5205, %v5204
      %v5214 = vpack.c.b16 %v5207, %v5206
      %v5215 = vpack.c.b16 %v5209, %v5208
      %v5217 = vshrl.u32 %v5210, 16
      %v5219 = vshll.u32 %v5210, 16
      %v5221 = vrot.slane %v5219, 1
      %v5222 = vor.u32 %v5217, %v5221
      %v5224 = vshll.u32 %v5211, 16
      %v5226 = vrot.slane %v5224, 1
      %v5227 = vsel %vm499, %v5222, %v5226
      %v5228 = vshrl.u32 %v5211, 16
      %v5230 = vor.u32 %v5228, %v5226
      %v5232 = vshll.u32 %v5212, 16
      %v5234 = vrot.slane %v5232, 1
      %v5235 = vsel %vm499, %v5230, %v5234
      %v5236 = vshrl.u32 %v5212, 16
      %v5238 = vor.u32 %v5236, %v5234
      %v5240 = vshll.u32 %v5213, 16
      %v5242 = vrot.slane %v5240, 1
      %v5243 = vsel %vm499, %v5238, %v5242
      %v5244 = vshrl.u32 %v5213, 16
      %v5246 = vor.u32 %v5244, %v5242
      %v5248 = vshll.u32 %v5214, 16
      %v5250 = vrot.slane %v5248, 1
      %v5251 = vsel %vm499, %v5246, %v5250
      %v5252 = vshrl.u32 %v5214, 16
      %v5254 = vor.u32 %v5252, %v5250
      %v5256 = vshll.u32 %v5215, 16
      %v5258 = vrot.slane %v5256, 1
      %v5259 = vsel %vm499, %v5254, %v5258
      %v5260 = vshrl.u32 %v5215, 16
      %v5262 = vor.u32 %v5260, %v5258
      %v5264 = vsel %vm307, %v5227, 0
      %v5267 = vsel %vm307, %v5235, 0
      %v5270 = vsel %vm307, %v5243, 0
      %v5273 = vsel %vm307, %v5251, 0
      %v5276 = vsel %vm307, %v5259, 0
      %v5279 = vsel %vm307, %v5262, 0
      %v5282 = vsel %vm326, %v5185, 0
      %5284 = vmatpush.bf16.msra.mxu0 0
      %5285 = vmatpush.bf16.msra.mxu0 0
      %5286 = vmatpush.bf16.msra.mxu0 0
      %5287 = vmatpush.bf16.msra.mxu0 0
      %5288 = vmatpush.bf16.msra.mxu0 0
      %5289 = vmatpush.bf16.msra.mxu0 0
      %5290 = vmatpush.bf16.msra.mxu0 0
      %5291 = vmatpush.bf16.msra.mxu0 %v5282
      %5292 = vmatmul.bf16.gmra.mxu0 %v5264
      %v5293 = vpop.f32.mrf.mxu0
      %v5294 = vadd.f32 0.0, %v5293
      %v5295 = vpop.f32.mrf.mxu0
      %v5296 = vadd.f32 0.0, %v5295
      %5297 = vmatmul.bf16.gmra.mxu0 %v5267
      %v5298 = vpop.f32.mrf.mxu0
      %v5299 = vadd.f32 0.0, %v5298
      %v5300 = vpop.f32.mrf.mxu0
      %v5301 = vadd.f32 0.0, %v5300
      %5302 = vmatmul.bf16.gmra.mxu0 %v5270
      %v5303 = vpop.f32.mrf.mxu0
      %v5304 = vadd.f32 0.0, %v5303
      %v5305 = vpop.f32.mrf.mxu0
      %v5306 = vadd.f32 0.0, %v5305
      %5307 = vmatmul.bf16.gmra.mxu0 %v5273
      %v5308 = vpop.f32.mrf.mxu0
      %v5309 = vadd.f32 0.0, %v5308
      %v5310 = vpop.f32.mrf.mxu0
      %v5311 = vadd.f32 0.0, %v5310
      %5312 = vmatmul.bf16.gmra.mxu0 %v5276
      %v5313 = vpop.f32.mrf.mxu0
      %v5314 = vadd.f32 0.0, %v5313
      %v5315 = vpop.f32.mrf.mxu0
      %v5316 = vadd.f32 0.0, %v5315
      %5317 = vmatmul.bf16.gmra.mxu0 %v5279
      %v5318 = vpop.f32.mrf.mxu0
      %v5319 = vadd.f32 0.0, %v5318
      %v5320 = vpop.f32.mrf.mxu0
      %5321 = vdwg.mxu0
      %v5322 = vadd.f32 %v5161, %v5294
      %v5323 = vadd.f32 %v5162, %v5296
      %v5324 = vadd.f32 %v5163, %v5299
      %v5325 = vadd.f32 %v5164, %v5301
      %v5326 = vadd.f32 %v5165, %v5304
      %v5327 = vadd.f32 %v5166, %v5306
      %v5328 = vadd.f32 %v5167, %v5309
      %v5329 = vadd.f32 %v5168, %v5311
      %v5330 = vadd.f32 %v5169, %v5314
      %v5331 = vadd.f32 %v5170, %v5316
      %v5332 = vadd.f32 %v5171, %v5319
      %v5333 = vld [vmem:[%s265 + $0x10] sm:$0xf]
      %v5334 = vld [vmem:[%s265 + $0x14] sm:$0xf]
      %v5335 = vld [vmem:[%s265 + $0x18] sm:$0xf]
      %v5336 = vld [vmem:[%s265 + $0x1c] sm:$0xf]
      %v5337 = vld [vmem:[%s265 + $0x20] sm:$0xf]
      %v5338 = vld [vmem:[%s265 + $0x24] sm:$0xf]
      %v5339 = vld [vmem:[%s265 + $0x28] sm:$0xf]
      %v5340 = vld [vmem:[%s265 + $0x2c] sm:$0xf]
      %v5341 = vld [vmem:[%s265 + $0x30] sm:$0xf]
      %v5342 = vld [vmem:[%s265 + $0x34] sm:$0xf]
      %v5343 = vld [vmem:[%s265 + $0x38] sm:$0xf]
      %v5344 = vld [vmem:[%s265 + $0x3c] sm:$0x1]
      %s5345 = scalar_lea.vmem %s1, 86
      %v5346 = vld [vmem:[%s5345] sm:$0x3]
      %v5359 = vunpack.c.l.b16 %v5333
      %v5360 = vunpack.c.l.b16 %v5334
      %v5361 = vunpack.c.l.b16 %v5335
      %v5362 = vunpack.c.l.b16 %v5336
      %v5363 = vunpack.c.l.b16 %v5337
      %v5364 = vunpack.c.l.b16 %v5338
      %v5365 = vunpack.c.l.b16 %v5339
      %v5366 = vunpack.c.l.b16 %v5340
      %v5367 = vunpack.c.l.b16 %v5341
      %v5368 = vunpack.c.l.b16 %v5342
      %v5369 = vunpack.c.l.b16 %v5343
      %v5370 = vunpack.c.l.b16 %v5344
      %v5371 = vpack.c.b16 %v5360, %v5359
      %v5372 = vpack.c.b16 %v5362, %v5361
      %v5373 = vpack.c.b16 %v5364, %v5363
      %v5374 = vpack.c.b16 %v5366, %v5365
      %v5375 = vpack.c.b16 %v5368, %v5367
      %v5376 = vpack.c.b16 %v5370, %v5369
      %v5378 = vshrl.u32 %v5371, 16
      %v5380 = vshll.u32 %v5371, 16
      %v5382 = vrot.slane %v5380, 1
      %v5383 = vor.u32 %v5378, %v5382
      %v5385 = vshll.u32 %v5372, 16
      %v5387 = vrot.slane %v5385, 1
      %v5388 = vsel %vm499, %v5383, %v5387
      %v5389 = vshrl.u32 %v5372, 16
      %v5391 = vor.u32 %v5389, %v5387
      %v5393 = vshll.u32 %v5373, 16
      %v5395 = vrot.slane %v5393, 1
      %v5396 = vsel %vm499, %v5391, %v5395
      %v5397 = vshrl.u32 %v5373, 16
      %v5399 = vor.u32 %v5397, %v5395
      %v5401 = vshll.u32 %v5374, 16
      %v5403 = vrot.slane %v5401, 1
      %v5404 = vsel %vm499, %v5399, %v5403
      %v5405 = vshrl.u32 %v5374, 16
      %v5407 = vor.u32 %v5405, %v5403
      %v5409 = vshll.u32 %v5375, 16
      %v5411 = vrot.slane %v5409, 1
      %v5412 = vsel %vm499, %v5407, %v5411
      %v5413 = vshrl.u32 %v5375, 16
      %v5415 = vor.u32 %v5413, %v5411
      %v5417 = vshll.u32 %v5376, 16
      %v5419 = vrot.slane %v5417, 1
      %v5420 = vsel %vm499, %v5415, %v5419
      %v5421 = vshrl.u32 %v5376, 16
      %v5423 = vor.u32 %v5421, %v5419
      %v5425 = vsel %vm307, %v5388, 0
      %v5428 = vsel %vm307, %v5396, 0
      %v5431 = vsel %vm307, %v5404, 0
      %v5434 = vsel %vm307, %v5412, 0
      %v5437 = vsel %vm307, %v5420, 0
      %v5440 = vsel %vm307, %v5423, 0
      %v5443 = vsel %vm326, %v5346, 0
      %5445 = vmatpush.bf16.msra.mxu0 0
      %5446 = vmatpush.bf16.msra.mxu0 0
      %5447 = vmatpush.bf16.msra.mxu0 0
      %5448 = vmatpush.bf16.msra.mxu0 0
      %5449 = vmatpush.bf16.msra.mxu0 0
      %5450 = vmatpush.bf16.msra.mxu0 0
      %5451 = vmatpush.bf16.msra.mxu0 0
      %5452 = vmatpush.bf16.msra.mxu0 %v5443
      %5453 = vmatmul.bf16.gmra.mxu0 %v5425
      %v5454 = vpop.f32.mrf.mxu0
      %v5455 = vadd.f32 0.0, %v5454
      %v5456 = vpop.f32.mrf.mxu0
      %v5457 = vadd.f32 0.0, %v5456
      %5458 = vmatmul.bf16.gmra.mxu0 %v5428
      %v5459 = vpop.f32.mrf.mxu0
      %v5460 = vadd.f32 0.0, %v5459
      %v5461 = vpop.f32.mrf.mxu0
      %v5462 = vadd.f32 0.0, %v5461
      %5463 = vmatmul.bf16.gmra.mxu0 %v5431
      %v5464 = vpop.f32.mrf.mxu0
      %v5465 = vadd.f32 0.0, %v5464
      %v5466 = vpop.f32.mrf.mxu0
      %v5467 = vadd.f32 0.0, %v5466
      %5468 = vmatmul.bf16.gmra.mxu0 %v5434
      %v5469 = vpop.f32.mrf.mxu0
      %v5470 = vadd.f32 0.0, %v5469
      %v5471 = vpop.f32.mrf.mxu0
      %v5472 = vadd.f32 0.0, %v5471
      %5473 = vmatmul.bf16.gmra.mxu0 %v5437
      %v5474 = vpop.f32.mrf.mxu0
      %v5475 = vadd.f32 0.0, %v5474
      %v5476 = vpop.f32.mrf.mxu0
      %v5477 = vadd.f32 0.0, %v5476
      %5478 = vmatmul.bf16.gmra.mxu0 %v5440
      %v5479 = vpop.f32.mrf.mxu0
      %v5480 = vadd.f32 0.0, %v5479
      %v5481 = vpop.f32.mrf.mxu0
      %5482 = vdwg.mxu0
      %v5483 = vadd.f32 %v5322, %v5455
      %v5484 = vadd.f32 %v5323, %v5457
      %v5485 = vadd.f32 %v5324, %v5460
      %v5486 = vadd.f32 %v5325, %v5462
      %v5487 = vadd.f32 %v5326, %v5465
      %v5488 = vadd.f32 %v5327, %v5467
      %v5489 = vadd.f32 %v5328, %v5470
      %v5490 = vadd.f32 %v5329, %v5472
      %v5491 = vadd.f32 %v5330, %v5475
      %v5492 = vadd.f32 %v5331, %v5477
      %v5493 = vadd.f32 %v5332, %v5480
      %v5494 = vld [vmem:[%s246 + $0x10] sm:$0xe]
      %s5495 = scalar_lea.vmem %s1, 88
      %v5496 = vld [vmem:[%s5495] sm:$0x3]
      %v5498 = vunpack.c.l.b16 %v5494
      %v5499 = vpack.c.b16 %v5199, %v5498
      %v5500 = vrot.slane %v5499, 1
      %v5501 = vrot.slane %v5211, 1
      %v5502 = vsel %vm784, %v5500, %v5501
      %v5503 = vrot.slane %v5212, 1
      %v5504 = vsel %vm784, %v5501, %v5503
      %v5505 = vrot.slane %v5213, 1
      %v5506 = vsel %vm784, %v5503, %v5505
      %v5507 = vrot.slane %v5214, 1
      %v5508 = vsel %vm784, %v5505, %v5507
      %v5509 = vrot.slane %v5215, 1
      %v5510 = vsel %vm784, %v5507, %v5509
      %v5512 = vsel %vm307, %v5502, 0
      %v5515 = vsel %vm307, %v5504, 0
      %v5518 = vsel %vm307, %v5506, 0
      %v5521 = vsel %vm307, %v5508, 0
      %v5524 = vsel %vm307, %v5510, 0
      %v5527 = vsel %vm307, %v5509, 0
      %v5530 = vsel %vm326, %v5496, 0
      %5532 = vmatpush.bf16.msra.mxu0 0
      %5533 = vmatpush.bf16.msra.mxu0 0
      %5534 = vmatpush.bf16.msra.mxu0 0
      %5535 = vmatpush.bf16.msra.mxu0 0
      %5536 = vmatpush.bf16.msra.mxu0 0
      %5537 = vmatpush.bf16.msra.mxu0 0
      %5538 = vmatpush.bf16.msra.mxu0 0
      %5539 = vmatpush.bf16.msra.mxu0 %v5530
      %5540 = vmatmul.bf16.gmra.mxu0 %v5512
      %v5541 = vpop.f32.mrf.mxu0
      %v5542 = vadd.f32 0.0, %v5541
      %v5543 = vpop.f32.mrf.mxu0
      %v5544 = vadd.f32 0.0, %v5543
      %5545 = vmatmul.bf16.gmra.mxu0 %v5515
      %v5546 = vpop.f32.mrf.mxu0
      %v5547 = vadd.f32 0.0, %v5546
      %v5548 = vpop.f32.mrf.mxu0
      %v5549 = vadd.f32 0.0, %v5548
      %5550 = vmatmul.bf16.gmra.mxu0 %v5518
      %v5551 = vpop.f32.mrf.mxu0
      %v5552 = vadd.f32 0.0, %v5551
      %v5553 = vpop.f32.mrf.mxu0
      %v5554 = vadd.f32 0.0, %v5553
      %5555 = vmatmul.bf16.gmra.mxu0 %v5521
      %v5556 = vpop.f32.mrf.mxu0
      %v5557 = vadd.f32 0.0, %v5556
      %v5558 = vpop.f32.mrf.mxu0
      %v5559 = vadd.f32 0.0, %v5558
      %5560 = vmatmul.bf16.gmra.mxu0 %v5524
      %v5561 = vpop.f32.mrf.mxu0
      %v5562 = vadd.f32 0.0, %v5561
      %v5563 = vpop.f32.mrf.mxu0
      %v5564 = vadd.f32 0.0, %v5563
      %5565 = vmatmul.bf16.gmra.mxu0 %v5527
      %v5566 = vpop.f32.mrf.mxu0
      %v5567 = vadd.f32 0.0, %v5566
      %v5568 = vpop.f32.mrf.mxu0
      %5569 = vdwg.mxu0
      %v5570 = vadd.f32 %v5483, %v5542
      %v5571 = vadd.f32 %v5484, %v5544
      %v5572 = vadd.f32 %v5485, %v5547
      %v5573 = vadd.f32 %v5486, %v5549
      %v5574 = vadd.f32 %v5487, %v5552
      %v5575 = vadd.f32 %v5488, %v5554
      %v5576 = vadd.f32 %v5489, %v5557
      %v5577 = vadd.f32 %v5490, %v5559
      %v5578 = vadd.f32 %v5491, %v5562
      %v5579 = vadd.f32 %v5492, %v5564
      %v5580 = vadd.f32 %v5493, %v5567
      %v5581 = vld [vmem:[%s265 + $0x10] sm:$0xe]
      %s5582 = scalar_lea.vmem %s1, 90
      %v5583 = vld [vmem:[%s5582] sm:$0x3]
      %v5585 = vunpack.c.l.b16 %v5581
      %v5586 = vpack.c.b16 %v5360, %v5585
      %v5587 = vrot.slane %v5586, 1
      %v5588 = vrot.slane %v5372, 1
      %v5589 = vsel %vm784, %v5587, %v5588
      %v5590 = vrot.slane %v5373, 1
      %v5591 = vsel %vm784, %v5588, %v5590
      %v5592 = vrot.slane %v5374, 1
      %v5593 = vsel %vm784, %v5590, %v5592
      %v5594 = vrot.slane %v5375, 1
      %v5595 = vsel %vm784, %v5592, %v5594
      %v5596 = vrot.slane %v5376, 1
      %v5597 = vsel %vm784, %v5594, %v5596
      %v5599 = vsel %vm307, %v5589, 0
      %v5602 = vsel %vm307, %v5591, 0
      %v5605 = vsel %vm307, %v5593, 0
      %v5608 = vsel %vm307, %v5595, 0
      %v5611 = vsel %vm307, %v5597, 0
      %v5614 = vsel %vm307, %v5596, 0
      %v5617 = vsel %vm326, %v5583, 0
      %5619 = vmatpush.bf16.msra.mxu0 0
      %5620 = vmatpush.bf16.msra.mxu0 0
      %5621 = vmatpush.bf16.msra.mxu0 0
      %5622 = vmatpush.bf16.msra.mxu0 0
      %5623 = vmatpush.bf16.msra.mxu0 0
      %5624 = vmatpush.bf16.msra.mxu0 0
      %5625 = vmatpush.bf16.msra.mxu0 0
      %5626 = vmatpush.bf16.msra.mxu0 %v5617
      %5627 = vmatmul.bf16.gmra.mxu0 %v5599
      %v5628 = vpop.f32.mrf.mxu0
      %v5629 = vadd.f32 0.0, %v5628
      %v5630 = vpop.f32.mrf.mxu0
      %v5631 = vadd.f32 0.0, %v5630
      %5632 = vmatmul.bf16.gmra.mxu0 %v5602
      %v5633 = vpop.f32.mrf.mxu0
      %v5634 = vadd.f32 0.0, %v5633
      %v5635 = vpop.f32.mrf.mxu0
      %v5636 = vadd.f32 0.0, %v5635
      %5637 = vmatmul.bf16.gmra.mxu0 %v5605
      %v5638 = vpop.f32.mrf.mxu0
      %v5639 = vadd.f32 0.0, %v5638
      %v5640 = vpop.f32.mrf.mxu0
      %v5641 = vadd.f32 0.0, %v5640
      %5642 = vmatmul.bf16.gmra.mxu0 %v5608
      %v5643 = vpop.f32.mrf.mxu0
      %v5644 = vadd.f32 0.0, %v5643
      %v5645 = vpop.f32.mrf.mxu0
      %v5646 = vadd.f32 0.0, %v5645
      %5647 = vmatmul.bf16.gmra.mxu0 %v5611
      %v5648 = vpop.f32.mrf.mxu0
      %v5649 = vadd.f32 0.0, %v5648
      %v5650 = vpop.f32.mrf.mxu0
      %v5651 = vadd.f32 0.0, %v5650
      %5652 = vmatmul.bf16.gmra.mxu0 %v5614
      %v5653 = vpop.f32.mrf.mxu0
      %v5654 = vadd.f32 0.0, %v5653
      %v5655 = vpop.f32.mrf.mxu0
      %5656 = vdwg.mxu0
      %v5657 = vadd.f32 %v5570, %v5629
      %v5658 = vadd.f32 %v5571, %v5631
      %v5659 = vadd.f32 %v5572, %v5634
      %v5660 = vadd.f32 %v5573, %v5636
      %v5661 = vadd.f32 %v5574, %v5639
      %v5662 = vadd.f32 %v5575, %v5641
      %v5663 = vadd.f32 %v5576, %v5644
      %v5664 = vadd.f32 %v5577, %v5646
      %v5665 = vadd.f32 %v5578, %v5649
      %v5666 = vadd.f32 %v5579, %v5651
      %v5667 = vadd.f32 %v5580, %v5654
      %v5668 = vld [vmem:[%s246 + $0x3c] sm:$0x3]
      %s5669 = scalar_lea.vmem %s1, 92
      %v5670 = vld [vmem:[%s5669] sm:$0x3]
      %v5672 = vunpack.c.l.b16 %v5668
      %v5673 = vpack.c.b16 %v5672, %v5208
      %v5675 = vshrl.u32 %v5499, 16
      %v5677 = vrot.slane %v5675, 1
      %v5678 = vshll.u32 %v5499, 16
      %v5680 = vrot.slane %v5678, 2
      %v5681 = vor.u32 %v5677, %v5680
      %v5682 = vrot.slane %v5228, 1
      %v5683 = vrot.slane %v5224, 2
      %v5684 = vor.u32 %v5682, %v5683
      %v5685 = vsel %vm959, %v5681, %v5684
      %v5686 = vrot.slane %v5236, 1
      %v5687 = vrot.slane %v5232, 2
      %v5688 = vor.u32 %v5686, %v5687
      %v5689 = vsel %vm959, %v5684, %v5688
      %v5690 = vrot.slane %v5244, 1
      %v5691 = vrot.slane %v5240, 2
      %v5692 = vor.u32 %v5690, %v5691
      %v5693 = vsel %vm959, %v5688, %v5692
      %v5694 = vrot.slane %v5252, 1
      %v5695 = vrot.slane %v5248, 2
      %v5696 = vor.u32 %v5694, %v5695
      %v5697 = vsel %vm959, %v5692, %v5696
      %v5699 = vshrl.u32 %v5673, 16
      %v5701 = vrot.slane %v5699, 1
      %v5702 = vshll.u32 %v5673, 16
      %v5704 = vrot.slane %v5702, 2
      %v5705 = vor.u32 %v5701, %v5704
      %v5706 = vsel %vm959, %v5696, %v5705
      %v5708 = vsel %vm307, %v5685, 0
      %v5711 = vsel %vm307, %v5689, 0
      %v5714 = vsel %vm307, %v5693, 0
      %v5717 = vsel %vm307, %v5697, 0
      %v5720 = vsel %vm307, %v5706, 0
      %v5723 = vsel %vm307, %v5705, 0
      %v5726 = vsel %vm326, %v5670, 0
      %5728 = vmatpush.bf16.msra.mxu0 0
      %5729 = vmatpush.bf16.msra.mxu0 0
      %5730 = vmatpush.bf16.msra.mxu0 0
      %5731 = vmatpush.bf16.msra.mxu0 0
      %5732 = vmatpush.bf16.msra.mxu0 0
      %5733 = vmatpush.bf16.msra.mxu0 0
      %5734 = vmatpush.bf16.msra.mxu0 0
      %5735 = vmatpush.bf16.msra.mxu0 %v5726
      %5736 = vmatmul.bf16.gmra.mxu0 %v5708
      %v5737 = vpop.f32.mrf.mxu0
      %v5738 = vadd.f32 0.0, %v5737
      %v5739 = vpop.f32.mrf.mxu0
      %v5740 = vadd.f32 0.0, %v5739
      %5741 = vmatmul.bf16.gmra.mxu0 %v5711
      %v5742 = vpop.f32.mrf.mxu0
      %v5743 = vadd.f32 0.0, %v5742
      %v5744 = vpop.f32.mrf.mxu0
      %v5745 = vadd.f32 0.0, %v5744
      %5746 = vmatmul.bf16.gmra.mxu0 %v5714
      %v5747 = vpop.f32.mrf.mxu0
      %v5748 = vadd.f32 0.0, %v5747
      %v5749 = vpop.f32.mrf.mxu0
      %v5750 = vadd.f32 0.0, %v5749
      %5751 = vmatmul.bf16.gmra.mxu0 %v5717
      %v5752 = vpop.f32.mrf.mxu0
      %v5753 = vadd.f32 0.0, %v5752
      %v5754 = vpop.f32.mrf.mxu0
      %v5755 = vadd.f32 0.0, %v5754
      %5756 = vmatmul.bf16.gmra.mxu0 %v5720
      %v5757 = vpop.f32.mrf.mxu0
      %v5758 = vadd.f32 0.0, %v5757
      %v5759 = vpop.f32.mrf.mxu0
      %v5760 = vadd.f32 0.0, %v5759
      %5761 = vmatmul.bf16.gmra.mxu0 %v5723
      %v5762 = vpop.f32.mrf.mxu0
      %v5763 = vadd.f32 0.0, %v5762
      %v5764 = vpop.f32.mrf.mxu0
      %5765 = vdwg.mxu0
      %v5766 = vadd.f32 %v5657, %v5738
      %v5767 = vadd.f32 %v5658, %v5740
      %v5768 = vadd.f32 %v5659, %v5743
      %v5769 = vadd.f32 %v5660, %v5745
      %v5770 = vadd.f32 %v5661, %v5748
      %v5771 = vadd.f32 %v5662, %v5750
      %v5772 = vadd.f32 %v5663, %v5753
      %v5773 = vadd.f32 %v5664, %v5755
      %v5774 = vadd.f32 %v5665, %v5758
      %v5775 = vadd.f32 %v5666, %v5760
      %v5776 = vadd.f32 %v5667, %v5763
      %v5777 = vld [vmem:[%s265 + $0x3c] sm:$0x3]
      %s5778 = scalar_lea.vmem %s1, 94
      %v5779 = vld [vmem:[%s5778] sm:$0x3]
      %v5781 = vunpack.c.l.b16 %v5777
      %v5782 = vpack.c.b16 %v5781, %v5369
      %v5784 = vshrl.u32 %v5586, 16
      %v5786 = vrot.slane %v5784, 1
      %v5787 = vshll.u32 %v5586, 16
      %v5789 = vrot.slane %v5787, 2
      %v5790 = vor.u32 %v5786, %v5789
      %v5791 = vrot.slane %v5389, 1
      %v5792 = vrot.slane %v5385, 2
      %v5793 = vor.u32 %v5791, %v5792
      %v5794 = vsel %vm959, %v5790, %v5793
      %v5795 = vrot.slane %v5397, 1
      %v5796 = vrot.slane %v5393, 2
      %v5797 = vor.u32 %v5795, %v5796
      %v5798 = vsel %vm959, %v5793, %v5797
      %v5799 = vrot.slane %v5405, 1
      %v5800 = vrot.slane %v5401, 2
      %v5801 = vor.u32 %v5799, %v5800
      %v5802 = vsel %vm959, %v5797, %v5801
      %v5803 = vrot.slane %v5413, 1
      %v5804 = vrot.slane %v5409, 2
      %v5805 = vor.u32 %v5803, %v5804
      %v5806 = vsel %vm959, %v5801, %v5805
      %v5808 = vshrl.u32 %v5782, 16
      %v5810 = vrot.slane %v5808, 1
      %v5811 = vshll.u32 %v5782, 16
      %v5813 = vrot.slane %v5811, 2
      %v5814 = vor.u32 %v5810, %v5813
      %v5815 = vsel %vm959, %v5805, %v5814
      %v5817 = vsel %vm307, %v5794, 0
      %v5820 = vsel %vm307, %v5798, 0
      %v5823 = vsel %vm307, %v5802, 0
      %v5826 = vsel %vm307, %v5806, 0
      %v5829 = vsel %vm307, %v5815, 0
      %v5832 = vsel %vm307, %v5814, 0
      %v5835 = vsel %vm326, %v5779, 0
      %5837 = vmatpush.bf16.msra.mxu0 0
      %5838 = vmatpush.bf16.msra.mxu0 0
      %5839 = vmatpush.bf16.msra.mxu0 0
      %5840 = vmatpush.bf16.msra.mxu0 0
      %5841 = vmatpush.bf16.msra.mxu0 0
      %5842 = vmatpush.bf16.msra.mxu0 0
      %5843 = vmatpush.bf16.msra.mxu0 0
      %5844 = vmatpush.bf16.msra.mxu0 %v5835
      %5845 = vmatmul.bf16.gmra.mxu0 %v5817
      %v5846 = vpop.f32.mrf.mxu0
      %v5847 = vadd.f32 0.0, %v5846
      %v5848 = vpop.f32.mrf.mxu0
      %v5849 = vadd.f32 0.0, %v5848
      %5850 = vmatmul.bf16.gmra.mxu0 %v5820
      %v5851 = vpop.f32.mrf.mxu0
      %v5852 = vadd.f32 0.0, %v5851
      %v5853 = vpop.f32.mrf.mxu0
      %v5854 = vadd.f32 0.0, %v5853
      %5855 = vmatmul.bf16.gmra.mxu0 %v5823
      %v5856 = vpop.f32.mrf.mxu0
      %v5857 = vadd.f32 0.0, %v5856
      %v5858 = vpop.f32.mrf.mxu0
      %v5859 = vadd.f32 0.0, %v5858
      %5860 = vmatmul.bf16.gmra.mxu0 %v5826
      %v5861 = vpop.f32.mrf.mxu0
      %v5862 = vadd.f32 0.0, %v5861
      %v5863 = vpop.f32.mrf.mxu0
      %v5864 = vadd.f32 0.0, %v5863
      %5865 = vmatmul.bf16.gmra.mxu0 %v5829
      %v5866 = vpop.f32.mrf.mxu0
      %v5867 = vadd.f32 0.0, %v5866
      %v5868 = vpop.f32.mrf.mxu0
      %v5869 = vadd.f32 0.0, %v5868
      %5870 = vmatmul.bf16.gmra.mxu0 %v5832
      %v5871 = vpop.f32.mrf.mxu0
      %v5872 = vadd.f32 0.0, %v5871
      %v5873 = vpop.f32.mrf.mxu0
      %5874 = vdwg.mxu0
      %v5875 = vadd.f32 %v5766, %v5847
      %v5876 = vadd.f32 %v5767, %v5849
      %v5877 = vadd.f32 %v5768, %v5852
      %v5878 = vadd.f32 %v5769, %v5854
      %v5879 = vadd.f32 %v5770, %v5857
      %v5880 = vadd.f32 %v5771, %v5859
      %v5881 = vadd.f32 %v5772, %v5862
      %v5882 = vadd.f32 %v5773, %v5864
      %v5883 = vadd.f32 %v5774, %v5867
      %v5884 = vadd.f32 %v5775, %v5869
      %v5885 = vadd.f32 %v5776, %v5872
      %v5886 = vld [vmem:[%s246 + $0x10] sm:$0xc]
      %s5887 = scalar_lea.vmem %s1, 96
      %v5888 = vld [vmem:[%s5887] sm:$0x3]
      %v5890 = vunpack.c.l.b16 %v5886
      %v5891 = vpack.c.b16 %v5199, %v5890
      %v5892 = vrot.slane %v5891, 2
      %v5893 = vrot.slane %v5211, 2
      %v5894 = vsel %vm2232, %v5892, %v5893
      %v5895 = vrot.slane %v5212, 2
      %v5896 = vsel %vm2232, %v5893, %v5895
      %v5897 = vrot.slane %v5213, 2
      %v5898 = vsel %vm2232, %v5895, %v5897
      %v5899 = vrot.slane %v5214, 2
      %v5900 = vsel %vm2232, %v5897, %v5899
      %v5901 = vrot.slane %v5673, 2
      %v5902 = vsel %vm2232, %v5899, %v5901
      %v5904 = vsel %vm307, %v5894, 0
      %v5907 = vsel %vm307, %v5896, 0
      %v5910 = vsel %vm307, %v5898, 0
      %v5913 = vsel %vm307, %v5900, 0
      %v5916 = vsel %vm307, %v5902, 0
      %v5919 = vsel %vm307, %v5901, 0
      %v5922 = vsel %vm326, %v5888, 0
      %5924 = vmatpush.bf16.msra.mxu0 0
      %5925 = vmatpush.bf16.msra.mxu0 0
      %5926 = vmatpush.bf16.msra.mxu0 0
      %5927 = vmatpush.bf16.msra.mxu0 0
      %5928 = vmatpush.bf16.msra.mxu0 0
      %5929 = vmatpush.bf16.msra.mxu0 0
      %5930 = vmatpush.bf16.msra.mxu0 0
      %5931 = vmatpush.bf16.msra.mxu0 %v5922
      %5932 = vmatmul.bf16.gmra.mxu0 %v5904
      %v5933 = vpop.f32.mrf.mxu0
      %v5934 = vadd.f32 0.0, %v5933
      %v5935 = vpop.f32.mrf.mxu0
      %v5936 = vadd.f32 0.0, %v5935
      %5937 = vmatmul.bf16.gmra.mxu0 %v5907
      %v5938 = vpop.f32.mrf.mxu0
      %v5939 = vadd.f32 0.0, %v5938
      %v5940 = vpop.f32.mrf.mxu0
      %v5941 = vadd.f32 0.0, %v5940
      %5942 = vmatmul.bf16.gmra.mxu0 %v5910
      %v5943 = vpop.f32.mrf.mxu0
      %v5944 = vadd.f32 0.0, %v5943
      %v5945 = vpop.f32.mrf.mxu0
      %v5946 = vadd.f32 0.0, %v5945
      %5947 = vmatmul.bf16.gmra.mxu0 %v5913
      %v5948 = vpop.f32.mrf.mxu0
      %v5949 = vadd.f32 0.0, %v5948
      %v5950 = vpop.f32.mrf.mxu0
      %v5951 = vadd.f32 0.0, %v5950
      %5952 = vmatmul.bf16.gmra.mxu0 %v5916
      %v5953 = vpop.f32.mrf.mxu0
      %v5954 = vadd.f32 0.0, %v5953
      %v5955 = vpop.f32.mrf.mxu0
      %v5956 = vadd.f32 0.0, %v5955
      %5957 = vmatmul.bf16.gmra.mxu0 %v5919
      %v5958 = vpop.f32.mrf.mxu0
      %v5959 = vadd.f32 0.0, %v5958
      %v5960 = vpop.f32.mrf.mxu0
      %5961 = vdwg.mxu0
      %v5962 = vadd.f32 %v5875, %v5934
      %v5963 = vadd.f32 %v5876, %v5936
      %v5964 = vadd.f32 %v5877, %v5939
      %v5965 = vadd.f32 %v5878, %v5941
      %v5966 = vadd.f32 %v5879, %v5944
      %v5967 = vadd.f32 %v5880, %v5946
      %v5968 = vadd.f32 %v5881, %v5949
      %v5969 = vadd.f32 %v5882, %v5951
      %v5970 = vadd.f32 %v5883, %v5954
      %v5971 = vadd.f32 %v5884, %v5956
      %v5972 = vadd.f32 %v5885, %v5959
      %v5973 = vld [vmem:[%s4] sm:$0x1]
      %v5975 = vperm.slane %v5973, 0
      %v5977 = vmul.f32 %v5962, %v5975
      %v5978 = vmul.f32 %v5963, %v5975
      %v5979 = vmul.f32 %v5964, %v5975
      %v5980 = vmul.f32 %v5965, %v5975
      %v5981 = vmul.f32 %v5966, %v5975
      %v5982 = vmul.f32 %v5967, %v5975
      %v5983 = vmul.f32 %v5968, %v5975
      %v5984 = vmul.f32 %v5969, %v5975
      %v5985 = vmul.f32 %v5970, %v5975
      %v5986 = vmul.f32 %v5971, %v5975
      %v5987 = vmul.f32 %v5972, %v5975
      %v5988 = vld [vmem:[%s5] sm:$0x1]
      %v5990 = vperm.slane %v5988, 0
      %v5992 = vadd.f32 %v5977, %v5990
      %v5993 = vadd.f32 %v5978, %v5990
      %v5994 = vadd.f32 %v5979, %v5990
      %v5995 = vadd.f32 %v5980, %v5990
      %v5996 = vadd.f32 %v5981, %v5990
      %v5997 = vadd.f32 %v5982, %v5990
      %v5998 = vadd.f32 %v5983, %v5990
      %v5999 = vadd.f32 %v5984, %v5990
      %v6000 = vadd.f32 %v5985, %v5990
      %v6001 = vadd.f32 %v5986, %v5990
      %v6002 = vadd.f32 %v5987, %v5990
      %v6003 = vmax.f32 %v5992, 0.0
      %v6004 = vmax.f32 %v5993, 0.0
      %v6005 = vmax.f32 %v5994, 0.0
      %v6006 = vmax.f32 %v5995, 0.0
      %v6007 = vmax.f32 %v5996, 0.0
      %v6008 = vmax.f32 %v5997, 0.0
      %v6009 = vmax.f32 %v5998, 0.0
      %v6010 = vmax.f32 %v5999, 0.0
      %v6011 = vmax.f32 %v6000, 0.0
      %v6012 = vmax.f32 %v6001, 0.0
      %v6013 = vmax.f32 %v6002, 0.0
      %v6014 = vpack.c.bf16 %v6003, %v6003
      %v6015 = vpack.c.bf16 %v6004, %v6004
      %v6016 = vpack.c.bf16 %v6005, %v6005
      %v6017 = vpack.c.bf16 %v6006, %v6006
      %v6018 = vpack.c.bf16 %v6007, %v6007
      %v6019 = vpack.c.bf16 %v6008, %v6008
      %v6020 = vpack.c.bf16 %v6009, %v6009
      %v6021 = vpack.c.bf16 %v6010, %v6010
      %v6022 = vpack.c.bf16 %v6011, %v6011
      %v6023 = vpack.c.bf16 %v6012, %v6012
      %v6024 = vpack.c.bf16 %v6013, %v6013
      %6025 = vst [vmem:[%s251] sm:$0xf] %v6014
      %6026 = vst [vmem:[%s251 + $0x4] sm:$0xf] %v6015
      %6027 = vst [vmem:[%s251 + $0x8] sm:$0xf] %v6016
      %6028 = vst [vmem:[%s251 + $0xc] sm:$0xf] %v6017
      %6029 = vst [vmem:[%s251 + $0x10] sm:$0xf] %v6018
      %6030 = vst [vmem:[%s251 + $0x14] sm:$0xf] %v6019
      %6031 = vst [vmem:[%s251 + $0x18] sm:$0xf] %v6020
      %6032 = vst [vmem:[%s251 + $0x1c] sm:$0xf] %v6021
      %6033 = vst [vmem:[%s251 + $0x20] sm:$0xf] %v6022
      %6034 = vst [vmem:[%s251 + $0x24] sm:$0xf] %v6023
      %6035 = vst [vmem:[%s251 + $0x28] sm:$0xf] %v6024
      %p6036 = scmp.lt.s32.totalorder %s17, 1
      %s6037 = scalar_select %p6036, %s17, 1
      %s6038 = smul.addr %s6037, 11
      %s6039 = smul.addr %s6038, 4
      %s6040 = scalar_lea.vmem %s6, %s6039
      // Predicated region
      $region45: #{_lambda_.13} parent=43 // pred_check
        %p6041 = pneg %p166
      $region46: #{_lambda_.13} parent=43 // pred_check_branch
        %6043 = sbr.rel (%p6041) target = $region48
      $region47: #{_lambda_.13} parent=43 // pred_region
        _
      $region48: #{_lambda_.13} parent=43 // pred_fallthru
        _
    $region44: #{_lambda_.13} parent=5 // pred_fallthru
      _
    %p6044 = scmp.le.s32.totalorder 2, %s12
    // Predicated region
    $region49: #{_lambda_.13} parent=5 // pred_check
      %p6045 = pneg %p6044
    $region50: #{_lambda_.13} parent=5 // pred_check_branch
      %6047 = sbr.rel (%p6045) target = $region52
    $region51: #{_lambda_.13} parent=5 // pred_region
      %s6048 = ssub.s32 %s12, 2
      // Predicated region
      $region53: #{_lambda_.13} parent=51 // pred_check
        %p6049 = pneg %p172
      $region54: #{_lambda_.13} parent=51 // pred_check_branch
        %6051 = sbr.rel (%p6049) target = $region56
      $region55: #{_lambda_.13} parent=51 // pred_region
        %p6052 = scmp.lt.s32.totalorder %s18, 1
        %s6053 = scalar_select %p6052, %s18, 1
        %s6054 = smul.addr %s6053, 11
        %s6055 = smul.addr %s6054, 4
        %s6056 = scalar_lea.vmem %s6, %s6055
      $region56: #{_lambda_.13} parent=51 // pred_fallthru
        _
    $region52: #{_lambda_.13} parent=5 // pred_fallthru
      _
  $region6: #{_lambda_.13} parent=0 // loop_footer
    %s16 = sadd.s32 1, %s12
  $region7: #{_lambda_.13} parent=0 // loop_footer_branch
    %11 = sbr.rel target = $region3
  $region8: #{_lambda_.13} parent=0 // loop_exit
    _

</llo_original>
